<compile_context>
chip_gen: v5e
topology: v5e:2x2
jax: 0.10.0
libtpu: 0.0.40
codegen_flags: <defaults>
</compile_context>

<pallas_src>
import functools

import jax
import jax.numpy as jnp
from jax.experimental import pallas as pl
from jax.experimental.pallas import tpu as pltpu


TAU = 0.1
N_ACTIONS = 4
NUM_NETWORKS = 5
VMEM_LIMIT_BYTES = 32 * 1024 * 1024


def _pick_tm(m):
    """M-tile: full M when small (block == full dim is always legal), else 512."""
    return m if m <= 512 else 512


# ---------------------------------------------------------------------------
# Pallas kernels
# ---------------------------------------------------------------------------
def _conv1_kernel(p_ref, w_ref, o_ref):
    """relu(patches @ W_all)  — conv1 for all ensembles in one GEMM (N = E*32)."""
    o_ref[...] = jnp.maximum(
        jnp.dot(p_ref[...], w_ref[...], preferred_element_type=jnp.float32), 0.0)


def conv1_fused(patches, w_all):
    """patches (M, K) @ w_all (K, E*32), relu. Grid over M tiles."""
    M, K = patches.shape
    N = w_all.shape[1]
    tm = _pick_tm(M)
    return pl.pallas_call(
        _conv1_kernel,
        out_shape=jax.ShapeDtypeStruct((M, N), jnp.float32),
        grid=(pl.cdiv(M, tm),),
        in_specs=[
            pl.BlockSpec((tm, K), lambda i: (i, 0)),
            pl.BlockSpec((K, N), lambda i: (0, 0)),   # weight resident across M tiles
        ],
        out_specs=pl.BlockSpec((tm, N), lambda i: (i, 0)),
        compiler_params=pltpu.CompilerParams(
            dimension_semantics=("parallel",),
            vmem_limit_bytes=VMEM_LIMIT_BYTES),
    )(patches, w_all)


def _ens_mm_kernel(x_ref, w_ref, o_ref, *, relu):
    acc = jnp.dot(x_ref[0], w_ref[0], preferred_element_type=jnp.float32)
    if relu:
        acc = jnp.maximum(acc, 0.0)
    o_ref[0] = acc


def _ens_mm_bias_kernel(x_ref, w_ref, b_ref, o_ref, *, relu):
    acc = jnp.dot(x_ref[0], w_ref[0], preferred_element_type=jnp.float32)
    acc = acc + b_ref[0]
    if relu:
        acc = jnp.maximum(acc, 0.0)
    o_ref[0] = acc


def ens_matmul(x, w, b=None, *, relu=True):
    """Batched-over-ensembles GEMM: x (E,M,K) @ w (E,K,N) [+ b (E,1,N)], relu.

    One pallas_call with grid=(E, M-tiles); per-step weight streaming keeps the
    VMEM footprint at 2 weight buffers regardless of E.
    """
    E, M, K = x.shape
    N = w.shape[2]
    tm = _pick_tm(M)
    grid = (E, pl.cdiv(M, tm))

    in_specs = [
        pl.BlockSpec((1, tm, K), lambda e, i: (e, i, 0)),
        pl.BlockSpec((1, K, N), lambda e, i: (e, 0, 0)),
    ]
    args = [x, w]
    if b is not None:
        in_specs.append(pl.BlockSpec((1, 1, N), lambda e, i: (e, 0, 0)))
        args.append(b)
        kernel = functools.partial(_ens_mm_bias_kernel, relu=relu)
    else:
        kernel = functools.partial(_ens_mm_kernel, relu=relu)

    return pl.pallas_call(
        kernel,
        out_shape=jax.ShapeDtypeStruct((E, M, N), jnp.float32),
        grid=grid,
        in_specs=in_specs,
        out_specs=pl.BlockSpec((1, tm, N), lambda e, i: (e, i, 0)),
        compiler_params=pltpu.CompilerParams(
            dimension_semantics=("parallel", "parallel"),
            vmem_limit_bytes=VMEM_LIMIT_BYTES),
    )(*args)


def _fc2_policy_kernel(x_ref, w_ref, b_ref, o_ref, *, tau, n_ens):
    """Fused fc2 + softmax(q/tau) + ensemble mean (accumulate over grid axis E)."""
    e = pl.program_id(0)

    @pl.when(e == 0)
    def _():
        o_ref[...] = jnp.zeros_like(o_ref)

    q = jnp.dot(x_ref[0], w_ref[0], preferred_element_type=jnp.float32) + b_ref[0]
    s = q * (1.0 / tau)
    m = jnp.max(s, axis=-1, keepdims=True)
    ex = jnp.exp(s - m)
    denom = jnp.sum(ex, axis=-1, keepdims=True)
    o_ref[...] += ex * pl.reciprocal(denom, approx=True)

    @pl.when(e == n_ens - 1)
    def _():
        o_ref[...] *= (1.0 / n_ens)


def fc2_policy_mean(h, w, b, *, tau=TAU):
    """h (E,B,512), w (E,512,A), b (E,1,A) -> (B,A) averaged policy."""
    E, B, K = h.shape
    A = w.shape[2]
    kernel = functools.partial(_fc2_policy_kernel, tau=tau, n_ens=E)
    return pl.pallas_call(
        kernel,
        out_shape=jax.ShapeDtypeStruct((B, A), jnp.float32),
        grid=(E,),
        in_specs=[
            pl.BlockSpec((1, B, K), lambda e: (e, 0, 0)),
            pl.BlockSpec((1, K, A), lambda e: (e, 0, 0)),
            pl.BlockSpec((1, 1, A), lambda e: (e, 0, 0)),
        ],
        out_specs=pl.BlockSpec((B, A), lambda e: (0, 0)),   # accumulator across E
        compiler_params=pltpu.CompilerParams(
            dimension_semantics=("arbitrary",),
            vmem_limit_bytes=VMEM_LIMIT_BYTES),
    )(h, w, b)


# ---------------------------------------------------------------------------
# Glue: NHWC im2col via static strided slices (no gather), pure layout plumbing
# ---------------------------------------------------------------------------
def im2col_nhwc(x, k, s):
    """x: (N, H, W, C) -> (N*OH*OW, k*k*C), patch-feature order (kh, kw, c)."""
    N, H, W, C = x.shape
    OH = (H - k) // s + 1
    OW = (W - k) // s + 1
    cols = []
    for kh in range(k):
        for kw in range(k):
            sl = jax.lax.slice(
                x,
                (0, kh, kw, 0),
                (N, kh + (OH - 1) * s + 1, kw + (OW - 1) * s + 1, C),
                (1, s, s, 1))
            cols.append(sl)                               # (N, OH, OW, C)
    p = jnp.stack(cols, axis=3)                           # (N, OH, OW, k*k, C)
    return p.reshape(N * OH * OW, k * k * C), OH, OW


# ---------------------------------------------------------------------------
# Parameters: torch layouts -> GEMM layouts (scale fold, NHWC weight re-order)
# ---------------------------------------------------------------------------
def init_dqn_params_torch(key, n_actions=N_ACTIONS):
    """Kaiming-normal init in native torch layouts (conv bias=False; fc bias=0)."""
    ks = jax.random.split(key, 5)

    def kaiming(k, shape, fan_in):
        return jax.random.normal(k, shape, jnp.float32) * jnp.sqrt(2.0 / fan_in)

    return dict(
        conv1_w=kaiming(ks[0], (32, 4, 8, 8), 4 * 8 * 8),
        conv2_w=kaiming(ks[1], (64, 32, 4, 4), 32 * 4 * 4),
        conv3_w=kaiming(ks[2], (64, 64, 3, 3), 64 * 3 * 3),
        fc1_w=kaiming(ks[3], (512, 64 * 7 * 7), 64 * 7 * 7),
        fc1_b=jnp.zeros((512,), jnp.float32),
        fc2_w=kaiming(ks[4], (n_actions, 512), 512),
        fc2_b=jnp.zeros((n_actions,), jnp.float32),
    )


def _conv_w_to_gemm(w):
    """torch (Cout, Cin, kh, kw) -> NHWC-patch GEMM weight (kh*kw*Cin, Cout)."""
    cout = w.shape[0]
    return jnp.transpose(w, (2, 3, 1, 0)).reshape(-1, cout)


def _fc1_w_to_gemm_nhwc(w):
    """torch fc1 (512, 3136), columns ordered for an NCHW (c,h,w) flatten ->
    GEMM (3136, 512) with rows re-ordered for our NHWC (h,w,c) flatten."""
    wt = w.T                                              # rows = c*49 + h*7 + w
    hh = jnp.arange(7)[:, None, None]
    ww = jnp.arange(7)[None, :, None]
    cc = jnp.arange(64)[None, None, :]
    perm = (cc * 49 + hh * 7 + ww).reshape(-1)            # NHWC flat idx -> NCHW row
    return wt[perm, :]


def prepare_ens_params(torch_params_list):
    """Per-ensemble torch params -> stacked GEMM-layout params (done once)."""
    w1 = jnp.concatenate(
        [_conv_w_to_gemm(p["conv1_w"]) for p in torch_params_list], axis=1)
    w1 = w1 * (1.0 / 255.0)   # fold x.float()/255 into conv1 weights
    return dict(
        w1_all=w1,                                                        # (256, E*32)
        w2=jnp.stack([_conv_w_to_gemm(p["conv2_w"]) for p in torch_params_list]),
        w3=jnp.stack([_conv_w_to_gemm(p["conv3_w"]) for p in torch_params_list]),
        fc1_w=jnp.stack([_fc1_w_to_gemm_nhwc(p["fc1_w"]) for p in torch_params_list]),
        fc1_b=jnp.stack([p["fc1_b"].reshape(1, -1) for p in torch_params_list]),
        fc2_w=jnp.stack([p["fc2_w"].T for p in torch_params_list]),
        fc2_b=jnp.stack([p["fc2_b"].reshape(1, -1) for p in torch_params_list]),
    )


# ---------------------------------------------------------------------------
# Forward pass: ENS_DQN.forward(x)  (ens_num=None path)
# ---------------------------------------------------------------------------
def ens_dqn_forward(x, params):
    """x (B, 4, 84, 84) float32 in [0,255] -> (B, n_actions) averaged policy."""
    E = params["w2"].shape[0]
    B = x.shape[0]

    # Module boundary is NCHW; go NHWC once and stay there.
    x_nhwc = jnp.transpose(x, (0, 2, 3, 1))                       # (B, 84, 84, 4)

    # conv1 (4->32, k8, s4): shared im2col, one GEMM across all ensembles.
    patches, oh, ow = im2col_nhwc(x_nhwc, 8, 4)                   # (B*400, 256)
    h = conv1_fused(patches, params["w1_all"])                    # (B*400, E*32)
    h = h.reshape(B, oh, ow, E, 32).transpose(3, 0, 1, 2, 4)      # (E, B, 20, 20, 32)

    # conv2 (32->64, k4, s2): grid over ensembles.
    h = h.reshape(E * B, oh, ow, 32)
    patches, oh, ow = im2col_nhwc(h, 4, 2)                        # (E*B*81, 512)
    patches = patches.reshape(E, B * oh * ow, -1)
    h = ens_matmul(patches, params["w2"], relu=True)              # (E, B*81, 64)

    # conv3 (64->64, k3, s1)
    h = h.reshape(E * B, oh, ow, 64)
    patches, oh, ow = im2col_nhwc(h, 3, 1)                        # (E*B*49, 576)
    patches = patches.reshape(E, B * oh * ow, -1)
    h = ens_matmul(patches, params["w3"], relu=True)              # (E, B*49, 64)

    # fc1: NHWC flatten; fc1_w rows were pre-permuted to match torch's NCHW flatten.
    h = h.reshape(E, B, oh * ow * 64)                             # (E, B, 3136)
    h = ens_matmul(h, params["fc1_w"], params["fc1_b"], relu=True)  # (E, B, 512)

    # fc2 + softmax(q/tau) + mean over ensembles, fused into one kernel.
    return fc2_policy_mean(h, params["fc2_w"], params["fc2_b"], tau=TAU)


# ---------------------------------------------------------------------------
if __name__ == "__main__":
    key = jax.random.PRNGKey(0)
    k_params, k_x = jax.random.split(key)

    torch_params = [init_dqn_params_torch(k)
                    for k in jax.random.split(k_params, NUM_NETWORKS)]
    params = prepare_ens_params(torch_params)

    # Atari frame stack: batch=2, 4 channels, 84x84 (fc1 requires 64*7*7 inputs).
    x = jax.random.uniform(k_x, (2, 4, 84, 84), jnp.float32,
                           minval=0.0, maxval=255.0)

    fwd = jax.jit(ens_dqn_forward)
    out = jax.block_until_ready(fwd(x, params))

    assert out.shape == (2, N_ACTIONS)
    assert bool(jnp.all(jnp.isfinite(out)))
    # rows of the averaged softmax policy must each sum to ~1
    assert bool(jnp.allclose(jnp.sum(out, axis=1), 1.0, atol=1e-3))
    print("KERNEL_OK")
</pallas_src>

<mosaic_0001>
module attributes {stable_mosaic.version = 11 : i64} {
  func.func @_conv1_kernel(%arg0: i32, %arg1: memref<512x256xf32, #tpu.memory_space<vmem>>, %arg2: memref<256x160xf32, #tpu.memory_space<vmem>>, %arg3: memref<512x160xf32, #tpu.memory_space<vmem>>) attributes {dimension_semantics = [#tpu.dimension_semantics<parallel>], iteration_bounds = array<i64: 2>, scalar_prefetch = 0 : i64, scratch_operands = 0 : i64, tpu.core_type = #tpu.core_type<tc>, window_params = [{transform_indices = @transform_0, window_bounds = array<i64: 512, 256>}, {pipeline_mode = #tpu.pipeline_mode<synchronous>, transform_indices = @transform_1, window_bounds = array<i64: 256, 160>}, {transform_indices = @transform_2, window_bounds = array<i64: 512, 160>}]} {
    %c0 = arith.constant 0 : index
    %c0_0 = arith.constant 0 : index
    %0 = vector.load %arg1[%c0, %c0_0] : memref<512x256xf32, #tpu.memory_space<vmem>>, vector<512x256xf32>
    %c0_1 = arith.constant 0 : index
    %c0_2 = arith.constant 0 : index
    %1 = vector.load %arg2[%c0_1, %c0_2] : memref<256x160xf32, #tpu.memory_space<vmem>>, vector<256x160xf32>
    %cst = arith.constant dense<0.000000e+00> : vector<512x160xf32>
    %2 = tpu.matmul %0, %1, %cst {dimension_numbers = #tpu.dot_dimension_numbers<[1], [0], [0], [1], [0, 0, 1, 1], [], []>} : vector<512x256xf32>, vector<256x160xf32>, vector<512x160xf32> -> vector<512x160xf32>
    %cst_3 = arith.constant 0.000000e+00 : f32
    %3 = vector.broadcast %cst_3 : f32 to vector<512x160xf32>
    %4 = arith.maximumf %2, %3 : vector<512x160xf32>
    %c0_4 = arith.constant 0 : index
    %c0_5 = arith.constant 0 : index
    %5 = vector.load %arg3[%c0_4, %c0_5] : memref<512x160xf32, #tpu.memory_space<vmem>>, vector<512x160xf32>
    tpu.vector_store %arg3[%c0_4, %c0_5], %4 {strides = array<i32>} : memref<512x160xf32, #tpu.memory_space<vmem>>, vector<512x160xf32>,
    return
  }
  func.func @transform_0(%arg0: i32) -> (i32, i32) {
    %c0_i32 = arith.constant 0 : i32
    %c0_i32_0 = arith.constant 0 : i32
    return %arg0, %c0_i32 : i32, i32
  }
  func.func @transform_1(%arg0: i32) -> (i32, i32) {
    %c0_i32 = arith.constant 0 : i32
    %c0_i32_0 = arith.constant 0 : i32
    %c0_i32_1 = arith.constant 0 : i32
    return %c0_i32, %c0_i32_0 : i32, i32
  }
  func.func @transform_2(%arg0: i32) -> (i32, i32) {
    %c0_i32 = arith.constant 0 : i32
    %c0_i32_0 = arith.constant 0 : i32
    return %arg0, %c0_i32 : i32, i32
  }
}

module attributes {stable_mosaic.version = 11 : i64} {
  func.func @_ens_mm_kernel(%arg0: i32, %arg1: i32, %arg2: memref<1x162x512xf32, #tpu.memory_space<vmem>>, %arg3: memref<1x512x64xf32, #tpu.memory_space<vmem>>, %arg4: memref<1x162x64xf32, #tpu.memory_space<vmem>>) attributes {dimension_semantics = [#tpu.dimension_semantics<parallel>, #tpu.dimension_semantics<parallel>], iteration_bounds = array<i64: 5, 1>, scalar_prefetch = 0 : i64, scratch_operands = 0 : i64, tpu.core_type = #tpu.core_type<tc>, window_params = [{transform_indices = @transform_0, window_bounds = array<i64: 1, 162, 512>}, {transform_indices = @transform_1, window_bounds = array<i64: 1, 512, 64>}, {transform_indices = @transform_2, window_bounds = array<i64: 1, 162, 64>}]} {
    %c0 = arith.constant 0 : index
    %c0_0 = arith.constant 0 : index
    %c0_1 = arith.constant 0 : index
    %0 = vector.load %arg2[%c0, %c0_0, %c0_1] : memref<1x162x512xf32, #tpu.memory_space<vmem>>, vector<1x162x512xf32>
    %1 = vector.shape_cast %0 : vector<1x162x512xf32> to vector<162x512xf32>
    %c0_2 = arith.constant 0 : index
    %c0_3 = arith.constant 0 : index
    %c0_4 = arith.constant 0 : index
    %2 = vector.load %arg3[%c0_2, %c0_3, %c0_4] : memref<1x512x64xf32, #tpu.memory_space<vmem>>, vector<1x512x64xf32>
    %3 = vector.shape_cast %2 : vector<1x512x64xf32> to vector<512x64xf32>
    %cst = arith.constant dense<0.000000e+00> : vector<162x64xf32>
    %4 = tpu.matmul %1, %3, %cst {dimension_numbers = #tpu.dot_dimension_numbers<[1], [0], [0], [1], [0, 0, 1, 1], [], []>} : vector<162x512xf32>, vector<512x64xf32>, vector<162x64xf32> -> vector<162x64xf32>
    %cst_5 = arith.constant 0.000000e+00 : f32
    %5 = vector.broadcast %cst_5 : f32 to vector<162x64xf32>
    %6 = arith.maximumf %4, %5 : vector<162x64xf32>
    %c0_6 = arith.constant 0 : index
    %c0_7 = arith.constant 0 : index
    %c0_8 = arith.constant 0 : index
    %7 = vector.load %arg4[%c0_6, %c0_7, %c0_8] : memref<1x162x64xf32, #tpu.memory_space<vmem>>, vector<1x162x64xf32>
    %8 = vector.shape_cast %7 : vector<1x162x64xf32> to vector<162x64xf32>
    %9 = vector.shape_cast %6 : vector<162x64xf32> to vector<1x162x64xf32>
    tpu.vector_store %arg4[%c0_6, %c0_7, %c0_8], %9 {strides = array<i32>} : memref<1x162x64xf32, #tpu.memory_space<vmem>>, vector<1x162x64xf32>,
    return
  }
  func.func @transform_0(%arg0: i32, %arg1: i32) -> (i32, i32, i32) {
    %c0_i32 = arith.constant 0 : i32
    %c0_i32_0 = arith.constant 0 : i32
    return %arg0, %arg1, %c0_i32 : i32, i32, i32
  }
  func.func @transform_1(%arg0: i32, %arg1: i32) -> (i32, i32, i32) {
    %c0_i32 = arith.constant 0 : i32
    %c0_i32_0 = arith.constant 0 : i32
    %c0_i32_1 = arith.constant 0 : i32
    return %arg0, %c0_i32, %c0_i32_0 : i32, i32, i32
  }
  func.func @transform_2(%arg0: i32, %arg1: i32) -> (i32, i32, i32) {
    %c0_i32 = arith.constant 0 : i32
    %c0_i32_0 = arith.constant 0 : i32
    return %arg0, %arg1, %c0_i32 : i32, i32, i32
  }
}

module attributes {stable_mosaic.version = 11 : i64} {
  func.func @_ens_mm_kernel(%arg0: i32, %arg1: i32, %arg2: memref<1x98x576xf32, #tpu.memory_space<vmem>>, %arg3: memref<1x576x64xf32, #tpu.memory_space<vmem>>, %arg4: memref<1x98x64xf32, #tpu.memory_space<vmem>>) attributes {dimension_semantics = [#tpu.dimension_semantics<parallel>, #tpu.dimension_semantics<parallel>], iteration_bounds = array<i64: 5, 1>, scalar_prefetch = 0 : i64, scratch_operands = 0 : i64, tpu.core_type = #tpu.core_type<tc>, window_params = [{transform_indices = @transform_0, window_bounds = array<i64: 1, 98, 576>}, {transform_indices = @transform_1, window_bounds = array<i64: 1, 576, 64>}, {transform_indices = @transform_2, window_bounds = array<i64: 1, 98, 64>}]} {
    %c0 = arith.constant 0 : index
    %c0_0 = arith.constant 0 : index
    %c0_1 = arith.constant 0 : index
    %0 = vector.load %arg2[%c0, %c0_0, %c0_1] : memref<1x98x576xf32, #tpu.memory_space<vmem>>, vector<1x98x576xf32>
    %1 = vector.shape_cast %0 : vector<1x98x576xf32> to vector<98x576xf32>
    %c0_2 = arith.constant 0 : index
    %c0_3 = arith.constant 0 : index
    %c0_4 = arith.constant 0 : index
    %2 = vector.load %arg3[%c0_2, %c0_3, %c0_4] : memref<1x576x64xf32, #tpu.memory_space<vmem>>, vector<1x576x64xf32>
    %3 = vector.shape_cast %2 : vector<1x576x64xf32> to vector<576x64xf32>
    %cst = arith.constant dense<0.000000e+00> : vector<98x64xf32>
    %4 = tpu.matmul %1, %3, %cst {dimension_numbers = #tpu.dot_dimension_numbers<[1], [0], [0], [1], [0, 0, 1, 1], [], []>} : vector<98x576xf32>, vector<576x64xf32>, vector<98x64xf32> -> vector<98x64xf32>
    %cst_5 = arith.constant 0.000000e+00 : f32
    %5 = vector.broadcast %cst_5 : f32 to vector<98x64xf32>
    %6 = arith.maximumf %4, %5 : vector<98x64xf32>
    %c0_6 = arith.constant 0 : index
    %c0_7 = arith.constant 0 : index
    %c0_8 = arith.constant 0 : index
    %7 = vector.load %arg4[%c0_6, %c0_7, %c0_8] : memref<1x98x64xf32, #tpu.memory_space<vmem>>, vector<1x98x64xf32>
    %8 = vector.shape_cast %7 : vector<1x98x64xf32> to vector<98x64xf32>
    %9 = vector.shape_cast %6 : vector<98x64xf32> to vector<1x98x64xf32>
    tpu.vector_store %arg4[%c0_6, %c0_7, %c0_8], %9 {strides = array<i32>} : memref<1x98x64xf32, #tpu.memory_space<vmem>>, vector<1x98x64xf32>,
    return
  }
  func.func @transform_0(%arg0: i32, %arg1: i32) -> (i32, i32, i32) {
    %c0_i32 = arith.constant 0 : i32
    %c0_i32_0 = arith.constant 0 : i32
    return %arg0, %arg1, %c0_i32 : i32, i32, i32
  }
  func.func @transform_1(%arg0: i32, %arg1: i32) -> (i32, i32, i32) {
    %c0_i32 = arith.constant 0 : i32
    %c0_i32_0 = arith.constant 0 : i32
    %c0_i32_1 = arith.constant 0 : i32
    return %arg0, %c0_i32, %c0_i32_0 : i32, i32, i32
  }
  func.func @transform_2(%arg0: i32, %arg1: i32) -> (i32, i32, i32) {
    %c0_i32 = arith.constant 0 : i32
    %c0_i32_0 = arith.constant 0 : i32
    return %arg0, %arg1, %c0_i32 : i32, i32, i32
  }
}

module attributes {stable_mosaic.version = 11 : i64} {
  func.func @_ens_mm_bias_kernel(%arg0: i32, %arg1: i32, %arg2: memref<1x2x3136xf32, #tpu.memory_space<vmem>>, %arg3: memref<1x3136x512xf32, #tpu.memory_space<vmem>>, %arg4: memref<1x1x512xf32, #tpu.memory_space<vmem>>, %arg5: memref<1x2x512xf32, #tpu.memory_space<vmem>>) attributes {dimension_semantics = [#tpu.dimension_semantics<parallel>, #tpu.dimension_semantics<parallel>], iteration_bounds = array<i64: 5, 1>, scalar_prefetch = 0 : i64, scratch_operands = 0 : i64, tpu.core_type = #tpu.core_type<tc>, window_params = [{transform_indices = @transform_0, window_bounds = array<i64: 1, 2, 3136>}, {transform_indices = @transform_1, window_bounds = array<i64: 1, 3136, 512>}, {transform_indices = @transform_2, window_bounds = array<i64: 1, 1, 512>}, {transform_indices = @transform_3, window_bounds = array<i64: 1, 2, 512>}]} {
    %c0 = arith.constant 0 : index
    %c0_0 = arith.constant 0 : index
    %c0_1 = arith.constant 0 : index
    %0 = vector.load %arg2[%c0, %c0_0, %c0_1] : memref<1x2x3136xf32, #tpu.memory_space<vmem>>, vector<1x2x3136xf32>
    %1 = vector.shape_cast %0 : vector<1x2x3136xf32> to vector<2x3136xf32>
    %c0_2 = arith.constant 0 : index
    %c0_3 = arith.constant 0 : index
    %c0_4 = arith.constant 0 : index
    %2 = vector.load %arg3[%c0_2, %c0_3, %c0_4] : memref<1x3136x512xf32, #tpu.memory_space<vmem>>, vector<1x3136x512xf32>
    %3 = vector.shape_cast %2 : vector<1x3136x512xf32> to vector<3136x512xf32>
    %cst = arith.constant dense<0.000000e+00> : vector<2x512xf32>
    %4 = tpu.matmul %1, %3, %cst {dimension_numbers = #tpu.dot_dimension_numbers<[1], [0], [0], [1], [0, 0, 1, 1], [], []>} : vector<2x3136xf32>, vector<3136x512xf32>, vector<2x512xf32> -> vector<2x512xf32>
    %c0_5 = arith.constant 0 : index
    %c0_6 = arith.constant 0 : index
    %c0_7 = arith.constant 0 : index
    %5 = vector.load %arg4[%c0_5, %c0_6, %c0_7] : memref<1x1x512xf32, #tpu.memory_space<vmem>>, vector<1x1x512xf32>
    %6 = vector.shape_cast %5 : vector<1x1x512xf32> to vector<1x512xf32>
    %7 = vector.broadcast %6 : vector<1x512xf32> to vector<2x512xf32>
    %8 = arith.addf %4, %7 : vector<2x512xf32>
    %cst_8 = arith.constant 0.000000e+00 : f32
    %9 = vector.broadcast %cst_8 : f32 to vector<2x512xf32>
    %10 = arith.maximumf %8, %9 : vector<2x512xf32>
    %c0_9 = arith.constant 0 : index
    %c0_10 = arith.constant 0 : index
    %c0_11 = arith.constant 0 : index
    %11 = vector.load %arg5[%c0_9, %c0_10, %c0_11] : memref<1x2x512xf32, #tpu.memory_space<vmem>>, vector<1x2x512xf32>
    %12 = vector.shape_cast %11 : vector<1x2x512xf32> to vector<2x512xf32>
    %13 = vector.shape_cast %10 : vector<2x512xf32> to vector<1x2x512xf32>
    tpu.vector_store %arg5[%c0_9, %c0_10, %c0_11], %13 {strides = array<i32>} : memref<1x2x512xf32, #tpu.memory_space<vmem>>, vector<1x2x512xf32>,
    return
  }
  func.func @transform_0(%arg0: i32, %arg1: i32) -> (i32, i32, i32) {
    %c0_i32 = arith.constant 0 : i32
    %c0_i32_0 = arith.constant 0 : i32
    return %arg0, %arg1, %c0_i32 : i32, i32, i32
  }
  func.func @transform_1(%arg0: i32, %arg1: i32) -> (i32, i32, i32) {
    %c0_i32 = arith.constant 0 : i32
    %c0_i32_0 = arith.constant 0 : i32
    %c0_i32_1 = arith.constant 0 : i32
    return %arg0, %c0_i32, %c0_i32_0 : i32, i32, i32
  }
  func.func @transform_2(%arg0: i32, %arg1: i32) -> (i32, i32, i32) {
    %c0_i32 = arith.constant 0 : i32
    %c0_i32_0 = arith.constant 0 : i32
    %c0_i32_1 = arith.constant 0 : i32
    return %arg0, %c0_i32, %c0_i32_0 : i32, i32, i32
  }
  func.func @transform_3(%arg0: i32, %arg1: i32) -> (i32, i32, i32) {
    %c0_i32 = arith.constant 0 : i32
    %c0_i32_0 = arith.constant 0 : i32
    return %arg0, %arg1, %c0_i32 : i32, i32, i32
  }
}

module attributes {stable_mosaic.version = 11 : i64} {
  func.func @_fc2_policy_kernel(%arg0: i32, %arg1: memref<1x2x512xf32, #tpu.memory_space<vmem>>, %arg2: memref<1x512x4xf32, #tpu.memory_space<vmem>>, %arg3: memref<1x1x4xf32, #tpu.memory_space<vmem>>, %arg4: memref<2x4xf32, #tpu.memory_space<vmem>>) attributes {dimension_semantics = [#tpu.dimension_semantics<arbitrary>], iteration_bounds = array<i64: 5>, scalar_prefetch = 0 : i64, scratch_operands = 0 : i64, tpu.core_type = #tpu.core_type<tc>, window_params = [{transform_indices = @transform_0, window_bounds = array<i64: 1, 2, 512>}, {transform_indices = @transform_1, window_bounds = array<i64: 1, 512, 4>}, {transform_indices = @transform_2, window_bounds = array<i64: 1, 1, 4>}, {pipeline_mode = #tpu.pipeline_mode<synchronous>, transform_indices = @transform_3, window_bounds = array<i64: 2, 4>}]} {
    %c0_i32 = arith.constant 0 : i32
    %0 = arith.cmpi eq, %arg0, %c0_i32 : i32
    %1 = arith.extui %0 : i1 to i32
    %c0_i32_0 = arith.constant 0 : i32
    %2 = arith.cmpi ne, %1, %c0_i32_0 : i32
    scf.if %2 {
      %cst_17 = arith.constant 0.000000e+00 : f32
      %30 = vector.broadcast %cst_17 : f32 to vector<2x4xf32>
      %c0_18 = arith.constant 0 : index
      %c0_19 = arith.constant 0 : index
      %31 = vector.load %arg4[%c0_18, %c0_19] : memref<2x4xf32, #tpu.memory_space<vmem>>, vector<2x4xf32>
      tpu.vector_store %arg4[%c0_18, %c0_19], %30 {strides = array<i32>} : memref<2x4xf32, #tpu.memory_space<vmem>>, vector<2x4xf32>,
    } else {
    }
    %c0 = arith.constant 0 : index
    %c0_1 = arith.constant 0 : index
    %c0_2 = arith.constant 0 : index
    %3 = vector.load %arg1[%c0, %c0_1, %c0_2] : memref<1x2x512xf32, #tpu.memory_space<vmem>>, vector<1x2x512xf32>
    %4 = vector.shape_cast %3 : vector<1x2x512xf32> to vector<2x512xf32>
    %c0_3 = arith.constant 0 : index
    %c0_4 = arith.constant 0 : index
    %c0_5 = arith.constant 0 : index
    %5 = vector.load %arg2[%c0_3, %c0_4, %c0_5] : memref<1x512x4xf32, #tpu.memory_space<vmem>>, vector<1x512x4xf32>
    %6 = vector.shape_cast %5 : vector<1x512x4xf32> to vector<512x4xf32>
    %cst = arith.constant dense<0.000000e+00> : vector<2x4xf32>
    %7 = tpu.matmul %4, %6, %cst {dimension_numbers = #tpu.dot_dimension_numbers<[1], [0], [0], [1], [0, 0, 1, 1], [], []>} : vector<2x512xf32>, vector<512x4xf32>, vector<2x4xf32> -> vector<2x4xf32>
    %c0_6 = arith.constant 0 : index
    %c0_7 = arith.constant 0 : index
    %c0_8 = arith.constant 0 : index
    %8 = vector.load %arg3[%c0_6, %c0_7, %c0_8] : memref<1x1x4xf32, #tpu.memory_space<vmem>>, vector<1x1x4xf32>
    %9 = vector.shape_cast %8 : vector<1x1x4xf32> to vector<1x4xf32>
    %10 = vector.broadcast %9 : vector<1x4xf32> to vector<2x4xf32>
    %11 = arith.addf %7, %10 : vector<2x4xf32>
    %cst_9 = arith.constant 1.000000e+01 : f32
    %12 = vector.broadcast %cst_9 : f32 to vector<2x4xf32>
    %13 = arith.mulf %11, %12 : vector<2x4xf32>
    %cst_10 = arith.constant dense<0xFF800000> : vector<2xf32>
    %14 = vector.multi_reduction <maximumf>, %13, %cst_10 [1] : vector<2x4xf32> to vector<2xf32>
    %15 = vector.shape_cast %14 : vector<2xf32> to vector<2x1xf32>
    %16 = vector.broadcast %15 : vector<2x1xf32> to vector<2x4xf32>
    %17 = arith.subf %13, %16 : vector<2x4xf32>
    %18 = math.exp %17 : vector<2x4xf32>
    %cst_11 = arith.constant dense<0.000000e+00> : vector<2xf32>
    %19 = vector.multi_reduction <add>, %18, %cst_11 [1] : vector<2x4xf32> to vector<2xf32>
    %20 = vector.shape_cast %19 : vector<2xf32> to vector<2x1xf32>
    %c0_12 = arith.constant 0 : index
    %c0_13 = arith.constant 0 : index
    %21 = vector.load %arg4[%c0_12, %c0_13] : memref<2x4xf32, #tpu.memory_space<vmem>>, vector<2x4xf32>
    %22 = tpu.reciprocal %20 {approx = true} : vector<2x1xf32> -> vector<2x1xf32>
    %23 = vector.broadcast %22 : vector<2x1xf32> to vector<2x4xf32>
    %24 = arith.mulf %18, %23 : vector<2x4xf32>
    %25 = arith.addf %21, %24 : vector<2x4xf32>
    %c0_14 = arith.constant 0 : index
    %c0_15 = arith.constant 0 : index
    %26 = vector.load %arg4[%c0_14, %c0_15] : memref<2x4xf32, #tpu.memory_space<vmem>>, vector<2x4xf32>
    tpu.vector_store %arg4[%c0_14, %c0_15], %25 {strides = array<i32>} : memref<2x4xf32, #tpu.memory_space<vmem>>, vector<2x4xf32>,
    %c4_i32 = arith.constant 4 : i32
    %27 = arith.cmpi eq, %arg0, %c4_i32 : i32
    %28 = arith.extui %27 : i1 to i32
    %c0_i32_16 = arith.constant 0 : i32
    %29 = arith.cmpi ne, %28, %c0_i32_16 : i32
    scf.if %29 {
      %c0_17 = arith.constant 0 : index
      %c0_18 = arith.constant 0 : index
      %30 = vector.load %arg4[%c0_17, %c0_18] : memref<2x4xf32, #tpu.memory_space<vmem>>, vector<2x4xf32>
      %cst_19 = arith.constant 2.000000e-01 : f32
      %31 = vector.broadcast %cst_19 : f32 to vector<2x4xf32>
      %32 = arith.mulf %30, %31 : vector<2x4xf32>
      %c0_20 = arith.constant 0 : index
      %c0_21 = arith.constant 0 : index
      %33 = vector.load %arg4[%c0_20, %c0_21] : memref<2x4xf32, #tpu.memory_space<vmem>>, vector<2x4xf32>
      tpu.vector_store %arg4[%c0_20, %c0_21], %32 {strides = array<i32>} : memref<2x4xf32, #tpu.memory_space<vmem>>, vector<2x4xf32>,
    } else {
    }
    return
  }
  func.func @transform_0(%arg0: i32) -> (i32, i32, i32) {
    %c0_i32 = arith.constant 0 : i32
    %c0_i32_0 = arith.constant 0 : i32
    %c0_i32_1 = arith.constant 0 : i32
    return %arg0, %c0_i32, %c0_i32_0 : i32, i32, i32
  }
  func.func @transform_1(%arg0: i32) -> (i32, i32, i32) {
    %c0_i32 = arith.constant 0 : i32
    %c0_i32_0 = arith.constant 0 : i32
    %c0_i32_1 = arith.constant 0 : i32
    return %arg0, %c0_i32, %c0_i32_0 : i32, i32, i32
  }
  func.func @transform_2(%arg0: i32) -> (i32, i32, i32) {
    %c0_i32 = arith.constant 0 : i32
    %c0_i32_0 = arith.constant 0 : i32
    %c0_i32_1 = arith.constant 0 : i32
    return %arg0, %c0_i32, %c0_i32_0 : i32, i32, i32
  }
  func.func @transform_3(%arg0: i32) -> (i32, i32) {
    %c0_i32 = arith.constant 0 : i32
    %c0_i32_0 = arith.constant 0 : i32
    %c0_i32_1 = arith.constant 0 : i32
    return %c0_i32, %c0_i32_0 : i32, i32
  }
}

</mosaic_0001>

<llo_original>
// kernel: ens_dqn_forward.5
$region0: #{ens_dqn_forward.5}
  #allocation0 [shape = 'u32[]', space=smem, size = 0x4, offset = 0x4, fixed_abs, tag = 'smem constant byte address 0x4 - core index']
  #allocation1 [shape = 'u32[72,128]{1,0:T(1,128)}', space=vmem, size = 0x9000, scoped, tag = 'internal scratch']
  %s0 = inlined_call_operand.vmem [shape: f32[800,256], index: 0, kind: input, shape index: {}]
  %s1 = inlined_call_operand.vmem [shape: f32[256,160], index: 1, kind: input, shape index: {}]
  %s2 = inlined_call_operand.vmem [shape: f32[800,160], index: 2, kind: output, shape index: {}]
  %s3 = sld [smem:[#allocation0]]
  $region67: #{ens_dqn_forward.5} parent=0
    _
  %s5 = ssub.s32 1, %s3
  %s6 = scalar_select 0, %s5, %s3
  $region1: #{ens_dqn_forward.5} parent=0
    #allocation2 [shape = 'u8[1048576]{0}', space=vmem, size = 0x100000, scoped, tag = 'output window, operand 0']
    loop: start=0, step=1, limit=4
    $region2: #{ens_dqn_forward.5} parent=1 // loop_pre_header
      _
    $region3: #{ens_dqn_forward.5} parent=1 // loop_header
      %s8 = sphi 0, %s12
      %p9 = scmp.ge.s32.totalorder %s8, 4
      %s18 = sphi 0, %s20
      %s21 = sphi 0, %s18
      %s22 = sphi 0, %s21
      %s38 = sphi 0, %s22
      %s42 = sphi 0, %s42
      %s44 = sphi 0, %s42
      %s45 = sphi 0, %s44
      %s59 = sphi 0, %s45
      %s65 = sphi 0, %s67
      %s68 = sphi 0, %s65
      %s69 = sphi 0, %s68
      %s85 = sphi 0, %s69
    $region4: #{ens_dqn_forward.5} parent=1 // loop_header_branch
      %11 = sbr.rel (%p9) target = $region8
    $region5: #{ens_dqn_forward.5} parent=1 // loop_body
      %s13 = ssub.s32 %s8, 1
      %s14 = ssub.s32 %s8, 2
      %s15 = sadd.s32 %s8, 1
      %s16 = ssub.s32 %s8, %s15
      %p17 = scmp.eq.s32.totalorder %s16, 0
      %s19 = sadd.s32 %s18, 1
      %s20 = scalar_select %p17, %s18, %s19
      %p23 = pneg %p17
      %p24 = scmp.eq.s32.totalorder %s8, 1
      %p25 = por %p23, %p24
      %p26 = scmp.ne.s32.totalorder %s18, %s21
      %p27 = scmp.eq.s32.totalorder %s8, 0
      %p28 = por %p26, %p27
      %p29 = scmp.ne.s32.totalorder %s18, %s21
      %p30 = scmp.eq.s32.totalorder %s13, 1
      %p31 = por %p29, %p30
      %p32 = scmp.ne.s32.totalorder %s21, %s22
      %p33 = scmp.eq.s32.totalorder %s13, 0
      %p34 = por %p32, %p33
      %p35 = scmp.ne.s32.totalorder %s21, %s22
      %p36 = scmp.eq.s32.totalorder %s14, 1
      %p37 = por %p35, %p36
      %p39 = scmp.ne.s32.totalorder %s22, %s38
      %p40 = scmp.eq.s32.totalorder %s14, 0
      %p41 = por %p39, %p40
      %s43 = sadd.s32 %s42, 1
      %p46 = scmp.eq.s32.totalorder %s8, 1
      %p47 = scmp.ne.s32.totalorder %s42, %s44
      %p48 = scmp.eq.s32.totalorder %s8, 0
      %p49 = por %p47, %p48
      %p50 = scmp.ne.s32.totalorder %s42, %s44
      %p51 = scmp.eq.s32.totalorder %s13, 1
      %p52 = por %p50, %p51
      %p53 = scmp.ne.s32.totalorder %s44, %s45
      %p54 = scmp.eq.s32.totalorder %s13, 0
      %p55 = por %p53, %p54
      %p56 = scmp.ne.s32.totalorder %s44, %s45
      %p57 = scmp.eq.s32.totalorder %s14, 1
      %p58 = por %p56, %p57
      %p60 = scmp.ne.s32.totalorder %s45, %s59
      %p61 = scmp.eq.s32.totalorder %s14, 0
      %p62 = por %p60, %p61
      %s63 = ssub.s32 %s8, %s15
      %p64 = scmp.eq.s32.totalorder %s63, 0
      %s66 = sadd.s32 %s65, 1
      %s67 = scalar_select %p64, %s65, %s66
      %p70 = pneg %p64
      %p71 = scmp.eq.s32.totalorder %s8, 1
      %p72 = por %p70, %p71
      %p73 = scmp.ne.s32.totalorder %s65, %s68
      %p74 = scmp.eq.s32.totalorder %s8, 0
      %p75 = por %p73, %p74
      %p76 = scmp.ne.s32.totalorder %s65, %s68
      %p77 = scmp.eq.s32.totalorder %s13, 1
      %p78 = por %p76, %p77
      %p79 = scmp.ne.s32.totalorder %s68, %s69
      %p80 = scmp.eq.s32.totalorder %s13, 0
      %p81 = por %p79, %p80
      %p82 = scmp.ne.s32.totalorder %s68, %s69
      %p83 = scmp.eq.s32.totalorder %s14, 1
      %p84 = por %p82, %p83
      %p86 = scmp.ne.s32.totalorder %s69, %s85
      %p87 = scmp.eq.s32.totalorder %s14, 0
      %p88 = por %p86, %p87
      %p89 = scmp.le.s32.totalorder 1, %s8
      %p90 = scmp.lt.s32.totalorder %s8, 3
      %p91 = pnand %p89, %p90
      %p92 = pneg %p91
      // Predicated region
      $region9: #{ens_dqn_forward.5} parent=5 // pred_check
        _
      $region10: #{ens_dqn_forward.5} parent=5 // pred_check_branch
        %94 = sbr.rel (%p91) target = $region12
      $region11: #{ens_dqn_forward.5} parent=5 // pred_region
        %s95 = ssub.s32 %s8, 1
        // Predicated region
        $region13: #{ens_dqn_forward.5} parent=11 // pred_check
          %p96 = pneg %p55
        $region14: #{ens_dqn_forward.5} parent=11 // pred_check_branch
          %98 = sbr.rel (%p96) target = $region16
        $region15: #{ens_dqn_forward.5} parent=11 // pred_region
          _
        $region16: #{ens_dqn_forward.5} parent=11 // pred_fallthru
          _
      $region12: #{ens_dqn_forward.5} parent=5 // pred_fallthru
        _
      %p99 = scmp.lt.s32.totalorder %s8, 2
      // Predicated region
      $region17: #{ens_dqn_forward.5} parent=5 // pred_check
        %p100 = pneg %p99
      $region18: #{ens_dqn_forward.5} parent=5 // pred_check_branch
        %102 = sbr.rel (%p100) target = $region20
      $region19: #{ens_dqn_forward.5} parent=5 // pred_region
        // Predicated region
        $region21: #{ens_dqn_forward.5} parent=19 // pred_check
          %p103 = pneg %p28
        $region22: #{ens_dqn_forward.5} parent=19 // pred_check_branch
          %105 = sbr.rel (%p103) target = $region24
        $region23: #{ens_dqn_forward.5} parent=19 // pred_region
          %s106 = smul.u32 64, %s8
          %s107 = ssub.s32 100, %s106
          %p108 = scmp.lt.s32.totalorder %s107, 64
          %s109 = scalar_select %p108, %s107, 64
          %s110 = smul.u32 8, %s109
          %s111 = smul.u32 %s110, 2
          %p112 = scmp.lt.s32.totalorder %s106, 99
          %s113 = scalar_select %p112, %s106, 99
          %s114 = smul.addr %s113, 2
          %s115 = smul.addr %s114, 8
          %s116 = scalar_lea.vmem %s0, %s115
          %s117 = smul.u32 64, %s8
          %s118 = ssub.s32 100, %s117
          %p119 = scmp.lt.s32.totalorder %s118, 64
          %s120 = scalar_select %p119, %s118, 64
          %s121 = smul.u32 8, %s120
          %s122 = smul.u32 %s121, 2
        $region24: #{ens_dqn_forward.5} parent=19 // pred_fallthru
          _
      $region20: #{ens_dqn_forward.5} parent=5 // pred_fallthru
        _
      %p123 = scmp.le.s32.totalorder 1, %s8
      %p124 = scmp.lt.s32.totalorder %s8, 3
      %p125 = pnand %p123, %p124
      %p126 = pneg %p125
      // Predicated region
      $region25: #{ens_dqn_forward.5} parent=5 // pred_check
        _
      $region26: #{ens_dqn_forward.5} parent=5 // pred_check_branch
        %128 = sbr.rel (%p125) target = $region28
      $region27: #{ens_dqn_forward.5} parent=5 // pred_region
        %s129 = ssub.s32 %s8, 1
        %s130 = smul.u32 64, %s13
        %s131 = ssub.s32 100, %s130
        %p132 = scmp.lt.s32.totalorder %s131, 64
        %s133 = scalar_select %p132, %s131, 64
        %s134 = smul.u32 8, %s133
        %s135 = smul.u32 %s134, 2
        %p136 = scmp.lt.s32.totalorder %s130, 99
        %s137 = scalar_select %p136, %s130, 99
        %s138 = smul.addr %s137, 2
        %s139 = smul.addr %s138, 8
        %s140 = scalar_lea.vmem %s0, %s139
        %p141 = pneg %p34
        %p142 = pneg %p31
        %p143 = pneg %p55
        %p144 = pneg %p52
        %p145 = pneg %p81
        %p146 = pneg %p78
        %s147 = sand.u32 %s68, 1
        %s148 = sand.u32 %s68, 1
        %s149 = smul.addr %s148, 1024
        %s150 = scalar_lea.vmem [#allocation2], %s149
        %s151 = smul.u32 64, %s13
        %s152 = ssub.s32 100, %s151
        %p153 = scmp.lt.s32.totalorder %s152, 64
        %s154 = scalar_select %p153, %s152, 64
        %s155 = smul.u32 8, %s154
        %s156 = smul.u32 %s155, 2
        %p157 = scmp.lt.s32.totalorder %s151, 99
        %s158 = scalar_select %p157, %s151, 99
        %s159 = smul.addr %s158, 2
        %s160 = smul.addr %s159, 8
        %s161 = scalar_lea.vmem %s0, %s160
        %s162 = smul.u32 64, %s13
        %s163 = ssub.s32 100, %s162
        %p164 = scmp.lt.s32.totalorder %s163, 64
        %s165 = scalar_select %p164, %s163, 64
        %s166 = smul.u32 8, %s165
        %s167 = smul.u32 %s166, 2
        %s168 = smul.u32 64, %s13
        %s169 = ssub.s32 100, %s168
        %p170 = scmp.lt.s32.totalorder %s169, 64
        %s171 = scalar_select %p170, %s169, 64
        %s172 = smul.u32 8, %s171
        %s173 = smul.u32 %s172, 2
        %v174 = vld [vmem:[%s161] sm:$0xff]
        %v175 = vld [vmem:[%s161 + $0x8] sm:$0xff]
        %v176 = vld [vmem:[%s161 + $0x10] sm:$0xff]
        %v177 = vld [vmem:[%s161 + $0x18] sm:$0xff]
        %v178 = vld [vmem:[%s161 + $0x20] sm:$0xff]
        %v179 = vld [vmem:[%s161 + $0x28] sm:$0xff]
        %v180 = vld [vmem:[%s161 + $0x30] sm:$0xff]
        %v181 = vld [vmem:[%s161 + $0x38] sm:$0xff]
        %v182 = vld [vmem:[%s161 + $0x40] sm:$0xff]
        %v183 = vld [vmem:[%s161 + $0x48] sm:$0xff]
        %v184 = vld [vmem:[%s161 + $0x50] sm:$0xff]
        %v185 = vld [vmem:[%s161 + $0x58] sm:$0xff]
        %v186 = vld [vmem:[%s161 + $0x60] sm:$0xff]
        %v187 = vld [vmem:[%s161 + $0x68] sm:$0xff]
        %v188 = vld [vmem:[%s161 + $0x70] sm:$0xff]
        %v189 = vld [vmem:[%s161 + $0x78] sm:$0xff]
        %v190 = vld [vmem:[%s161 + $0x80] sm:$0xff]
        %v191 = vld [vmem:[%s161 + $0x88] sm:$0xff]
        %v192 = vld [vmem:[%s161 + $0x90] sm:$0xff]
        %v193 = vld [vmem:[%s161 + $0x98] sm:$0xff]
        %v194 = vld [vmem:[%s161 + $0xa0] sm:$0xff]
        %v195 = vld [vmem:[%s161 + $0xa8] sm:$0xff]
        %v196 = vld [vmem:[%s161 + $0xb0] sm:$0xff]
        %v197 = vld [vmem:[%s161 + $0xb8] sm:$0xff]
        %v198 = vld [vmem:[%s161 + $0xc0] sm:$0xff]
        %v199 = vld [vmem:[%s161 + $0xc8] sm:$0xff]
        %v200 = vld [vmem:[%s161 + $0xd0] sm:$0xff]
        %v201 = vld [vmem:[%s161 + $0xd8] sm:$0xff]
        %v202 = vld [vmem:[%s161 + $0xe0] sm:$0xff]
        %v203 = vld [vmem:[%s161 + $0xe8] sm:$0xff]
        %v204 = vld [vmem:[%s161 + $0xf0] sm:$0xff]
        %v205 = vld [vmem:[%s161 + $0xf8] sm:$0xff]
        %v206 = vld [vmem:[%s161 + $0x100] sm:$0xff]
        %v207 = vld [vmem:[%s161 + $0x108] sm:$0xff]
        %v208 = vld [vmem:[%s161 + $0x110] sm:$0xff]
        %v209 = vld [vmem:[%s161 + $0x118] sm:$0xff]
        %v210 = vld [vmem:[%s161 + $0x120] sm:$0xff]
        %v211 = vld [vmem:[%s161 + $0x128] sm:$0xff]
        %v212 = vld [vmem:[%s161 + $0x130] sm:$0xff]
        %v213 = vld [vmem:[%s161 + $0x138] sm:$0xff]
        %v214 = vld [vmem:[%s161 + $0x140] sm:$0xff]
        %v215 = vld [vmem:[%s161 + $0x148] sm:$0xff]
        %v216 = vld [vmem:[%s161 + $0x150] sm:$0xff]
        %v217 = vld [vmem:[%s161 + $0x158] sm:$0xff]
        %v218 = vld [vmem:[%s161 + $0x160] sm:$0xff]
        %v219 = vld [vmem:[%s161 + $0x168] sm:$0xff]
        %v220 = vld [vmem:[%s161 + $0x170] sm:$0xff]
        %v221 = vld [vmem:[%s161 + $0x178] sm:$0xff]
        %v222 = vld [vmem:[%s161 + $0x180] sm:$0xff]
        %v223 = vld [vmem:[%s161 + $0x188] sm:$0xff]
        %v224 = vld [vmem:[%s161 + $0x190] sm:$0xff]
        %v225 = vld [vmem:[%s161 + $0x198] sm:$0xff]
        %v226 = vld [vmem:[%s161 + $0x1a0] sm:$0xff]
        %v227 = vld [vmem:[%s161 + $0x1a8] sm:$0xff]
        %v228 = vld [vmem:[%s161 + $0x1b0] sm:$0xff]
        %v229 = vld [vmem:[%s161 + $0x1b8] sm:$0xff]
        %v230 = vld [vmem:[%s161 + $0x1c0] sm:$0xff]
        %v231 = vld [vmem:[%s161 + $0x1c8] sm:$0xff]
        %v232 = vld [vmem:[%s161 + $0x1d0] sm:$0xff]
        %v233 = vld [vmem:[%s161 + $0x1d8] sm:$0xff]
        %v234 = vld [vmem:[%s161 + $0x1e0] sm:$0xff]
        %v235 = vld [vmem:[%s161 + $0x1e8] sm:$0xff]
        %v236 = vld [vmem:[%s161 + $0x1f0] sm:$0xff]
        %v237 = vld [vmem:[%s161 + $0x1f8] sm:$0xff]
        %v238 = vld [vmem:[%s161 + $0x200] sm:$0xff]
        %v239 = vld [vmem:[%s161 + $0x208] sm:$0xff]
        %v240 = vld [vmem:[%s161 + $0x210] sm:$0xff]
        %v241 = vld [vmem:[%s161 + $0x218] sm:$0xff]
        %v242 = vld [vmem:[%s161 + $0x220] sm:$0xff]
        %v243 = vld [vmem:[%s161 + $0x228] sm:$0xff]
        %v244 = vld [vmem:[%s161 + $0x230] sm:$0xff]
        %v245 = vld [vmem:[%s161 + $0x238] sm:$0xff]
        %v246 = vld [vmem:[%s161 + $0x240] sm:$0xff]
        %v247 = vld [vmem:[%s161 + $0x248] sm:$0xff]
        %v248 = vld [vmem:[%s161 + $0x250] sm:$0xff]
        %v249 = vld [vmem:[%s161 + $0x258] sm:$0xff]
        %v250 = vld [vmem:[%s161 + $0x260] sm:$0xff]
        %v251 = vld [vmem:[%s161 + $0x268] sm:$0xff]
        %v252 = vld [vmem:[%s161 + $0x270] sm:$0xff]
        %v253 = vld [vmem:[%s161 + $0x278] sm:$0xff]
        %v254 = vld [vmem:[%s161 + $0x280] sm:$0xff]
        %v255 = vld [vmem:[%s161 + $0x288] sm:$0xff]
        %v256 = vld [vmem:[%s161 + $0x290] sm:$0xff]
        %v257 = vld [vmem:[%s161 + $0x298] sm:$0xff]
        %v258 = vld [vmem:[%s161 + $0x2a0] sm:$0xff]
        %v259 = vld [vmem:[%s161 + $0x2a8] sm:$0xff]
        %v260 = vld [vmem:[%s161 + $0x2b0] sm:$0xff]
        %v261 = vld [vmem:[%s161 + $0x2b8] sm:$0xff]
        %v262 = vld [vmem:[%s161 + $0x2c0] sm:$0xff]
        %v263 = vld [vmem:[%s161 + $0x2c8] sm:$0xff]
        %v264 = vld [vmem:[%s161 + $0x2d0] sm:$0xff]
        %v265 = vld [vmem:[%s161 + $0x2d8] sm:$0xff]
        %v266 = vld [vmem:[%s161 + $0x2e0] sm:$0xff]
        %v267 = vld [vmem:[%s161 + $0x2e8] sm:$0xff]
        %v268 = vld [vmem:[%s161 + $0x2f0] sm:$0xff]
        %v269 = vld [vmem:[%s161 + $0x2f8] sm:$0xff]
        %v270 = vld [vmem:[%s161 + $0x300] sm:$0xff]
        %v271 = vld [vmem:[%s161 + $0x308] sm:$0xff]
        %v272 = vld [vmem:[%s161 + $0x310] sm:$0xff]
        %v273 = vld [vmem:[%s161 + $0x318] sm:$0xff]
        %v274 = vld [vmem:[%s161 + $0x320] sm:$0xff]
        %v275 = vld [vmem:[%s161 + $0x328] sm:$0xff]
        %v276 = vld [vmem:[%s161 + $0x330] sm:$0xff]
        %v277 = vld [vmem:[%s161 + $0x338] sm:$0xff]
        %v278 = vld [vmem:[%s161 + $0x340] sm:$0xff]
        %v279 = vld [vmem:[%s161 + $0x348] sm:$0xff]
        %v280 = vld [vmem:[%s161 + $0x350] sm:$0xff]
        %v281 = vld [vmem:[%s161 + $0x358] sm:$0xff]
        %v282 = vld [vmem:[%s161 + $0x360] sm:$0xff]
        %v283 = vld [vmem:[%s161 + $0x368] sm:$0xff]
        %v284 = vld [vmem:[%s161 + $0x370] sm:$0xff]
        %v285 = vld [vmem:[%s161 + $0x378] sm:$0xff]
        %v286 = vld [vmem:[%s161 + $0x380] sm:$0xff]
        %v287 = vld [vmem:[%s161 + $0x388] sm:$0xff]
        %v288 = vld [vmem:[%s161 + $0x390] sm:$0xff]
        %v289 = vld [vmem:[%s161 + $0x398] sm:$0xff]
        %v290 = vld [vmem:[%s161 + $0x3a0] sm:$0xff]
        %v291 = vld [vmem:[%s161 + $0x3a8] sm:$0xff]
        %v292 = vld [vmem:[%s161 + $0x3b0] sm:$0xff]
        %v293 = vld [vmem:[%s161 + $0x3b8] sm:$0xff]
        %v294 = vld [vmem:[%s161 + $0x3c0] sm:$0xff]
        %v295 = vld [vmem:[%s161 + $0x3c8] sm:$0xff]
        %v296 = vld [vmem:[%s161 + $0x3d0] sm:$0xff]
        %v297 = vld [vmem:[%s161 + $0x3d8] sm:$0xff]
        %v298 = vld [vmem:[%s161 + $0x3e0] sm:$0xff]
        %v299 = vld [vmem:[%s161 + $0x3e8] sm:$0xff]
        %v300 = vld [vmem:[%s161 + $0x3f0] sm:$0xff]
        %v301 = vld [vmem:[%s161 + $0x3f8] sm:$0xff]
        %v302 = vld [vmem:[%s1] sm:$0xff]
        %v303 = vld [vmem:[%s1 + $0x8] sm:$0xff]
        %v304 = vld [vmem:[%s1 + $0x10] sm:$0xff]
        %v305 = vld [vmem:[%s1 + $0x18] sm:$0xff]
        %v306 = vld [vmem:[%s1 + $0x20] sm:$0xff]
        %v307 = vld [vmem:[%s1 + $0x28] sm:$0xff]
        %v308 = vld [vmem:[%s1 + $0x30] sm:$0xff]
        %v309 = vld [vmem:[%s1 + $0x38] sm:$0xff]
        %v310 = vld [vmem:[%s1 + $0x40] sm:$0xff]
        %v311 = vld [vmem:[%s1 + $0x48] sm:$0xff]
        %v312 = vld [vmem:[%s1 + $0x50] sm:$0xff]
        %v313 = vld [vmem:[%s1 + $0x58] sm:$0xff]
        %v314 = vld [vmem:[%s1 + $0x60] sm:$0xff]
        %v315 = vld [vmem:[%s1 + $0x68] sm:$0xff]
        %v316 = vld [vmem:[%s1 + $0x70] sm:$0xff]
        %v317 = vld [vmem:[%s1 + $0x78] sm:$0xff]
        %v318 = vld [vmem:[%s1 + $0x80] sm:$0xff]
        %v319 = vld [vmem:[%s1 + $0x88] sm:$0xff]
        %v320 = vld [vmem:[%s1 + $0x90] sm:$0xff]
        %v321 = vld [vmem:[%s1 + $0x98] sm:$0xff]
        %v322 = vld [vmem:[%s1 + $0xa0] sm:$0xff]
        %v323 = vld [vmem:[%s1 + $0xa8] sm:$0xff]
        %v324 = vld [vmem:[%s1 + $0xb0] sm:$0xff]
        %v325 = vld [vmem:[%s1 + $0xb8] sm:$0xff]
        %v326 = vld [vmem:[%s1 + $0xc0] sm:$0xff]
        %v327 = vld [vmem:[%s1 + $0xc8] sm:$0xff]
        %v328 = vld [vmem:[%s1 + $0xd0] sm:$0xff]
        %v329 = vld [vmem:[%s1 + $0xd8] sm:$0xff]
        %v330 = vld [vmem:[%s1 + $0xe0] sm:$0xff]
        %v331 = vld [vmem:[%s1 + $0xe8] sm:$0xff]
        %v332 = vld [vmem:[%s1 + $0xf0] sm:$0xff]
        %v333 = vld [vmem:[%s1 + $0xf8] sm:$0xff]
        %v334 = vld [vmem:[%s1 + $0x100] sm:$0xff]
        %v335 = vld [vmem:[%s1 + $0x108] sm:$0xff]
        %v336 = vld [vmem:[%s1 + $0x110] sm:$0xff]
        %v337 = vld [vmem:[%s1 + $0x118] sm:$0xff]
        %v338 = vld [vmem:[%s1 + $0x120] sm:$0xff]
        %v339 = vld [vmem:[%s1 + $0x128] sm:$0xff]
        %v340 = vld [vmem:[%s1 + $0x130] sm:$0xff]
        %v341 = vld [vmem:[%s1 + $0x138] sm:$0xff]
        %v342 = vld [vmem:[%s1 + $0x140] sm:$0xff]
        %v343 = vld [vmem:[%s1 + $0x148] sm:$0xff]
        %v344 = vld [vmem:[%s1 + $0x150] sm:$0xff]
        %v345 = vld [vmem:[%s1 + $0x158] sm:$0xff]
        %v346 = vld [vmem:[%s1 + $0x160] sm:$0xff]
        %v347 = vld [vmem:[%s1 + $0x168] sm:$0xff]
        %v348 = vld [vmem:[%s1 + $0x170] sm:$0xff]
        %v349 = vld [vmem:[%s1 + $0x178] sm:$0xff]
        %v350 = vld [vmem:[%s1 + $0x180] sm:$0xff]
        %v351 = vld [vmem:[%s1 + $0x188] sm:$0xff]
        %v352 = vld [vmem:[%s1 + $0x190] sm:$0xff]
        %v353 = vld [vmem:[%s1 + $0x198] sm:$0xff]
        %v354 = vld [vmem:[%s1 + $0x1a0] sm:$0xff]
        %v355 = vld [vmem:[%s1 + $0x1a8] sm:$0xff]
        %v356 = vld [vmem:[%s1 + $0x1b0] sm:$0xff]
        %v357 = vld [vmem:[%s1 + $0x1b8] sm:$0xff]
        %v358 = vld [vmem:[%s1 + $0x1c0] sm:$0xff]
        %v359 = vld [vmem:[%s1 + $0x1c8] sm:$0xff]
        %v360 = vld [vmem:[%s1 + $0x1d0] sm:$0xff]
        %v361 = vld [vmem:[%s1 + $0x1d8] sm:$0xff]
        %v362 = vld [vmem:[%s1 + $0x1e0] sm:$0xff]
        %v363 = vld [vmem:[%s1 + $0x1e8] sm:$0xff]
        %v364 = vld [vmem:[%s1 + $0x1f0] sm:$0xff]
        %v365 = vld [vmem:[%s1 + $0x1f8] sm:$0xff]
        %366 = vmatpush.msra.mxu0 %v332
        %367 = vmatpush.msra.mxu0 %v330
        %368 = vmatpush.msra.mxu0 %v328
        %369 = vmatpush.msra.mxu0 %v326
        %370 = vmatpush.msra.mxu0 %v324
        %371 = vmatpush.msra.mxu0 %v322
        %372 = vmatpush.msra.mxu0 %v320
        %373 = vmatpush.msra.mxu0 %v318
        %374 = vmatpush.msra.mxu0 %v316
        %375 = vmatpush.msra.mxu0 %v314
        %376 = vmatpush.msra.mxu0 %v312
        %377 = vmatpush.msra.mxu0 %v310
        %378 = vmatpush.msra.mxu0 %v308
        %379 = vmatpush.msra.mxu0 %v306
        %380 = vmatpush.msra.mxu0 %v304
        %381 = vmatpush.msra.mxu0 %v302
        %382 = vmatmul.f32.gmra.mxu0 %v174
        %v383 = vpop.f32.mrf.mxu0
        %v384 = vadd.f32 0.0, %v383
        %385 = vmatmul.f32.gmra.mxu0 %v176
        %v386 = vpop.f32.mrf.mxu0
        %v387 = vadd.f32 0.0, %v386
        %388 = vmatmul.f32.gmra.mxu0 %v178
        %v389 = vpop.f32.mrf.mxu0
        %v390 = vadd.f32 0.0, %v389
        %391 = vmatmul.f32.gmra.mxu0 %v180
        %v392 = vpop.f32.mrf.mxu0
        %v393 = vadd.f32 0.0, %v392
        %394 = vmatmul.f32.gmra.mxu0 %v182
        %v395 = vpop.f32.mrf.mxu0
        %v396 = vadd.f32 0.0, %v395
        %397 = vmatmul.f32.gmra.mxu0 %v184
        %v398 = vpop.f32.mrf.mxu0
        %v399 = vadd.f32 0.0, %v398
        %400 = vmatmul.f32.gmra.mxu0 %v186
        %v401 = vpop.f32.mrf.mxu0
        %v402 = vadd.f32 0.0, %v401
        %403 = vmatmul.f32.gmra.mxu0 %v188
        %v404 = vpop.f32.mrf.mxu0
        %v405 = vadd.f32 0.0, %v404
        %406 = vmatmul.f32.gmra.mxu0 %v190
        %v407 = vpop.f32.mrf.mxu0
        %v408 = vadd.f32 0.0, %v407
        %409 = vmatmul.f32.gmra.mxu0 %v192
        %v410 = vpop.f32.mrf.mxu0
        %v411 = vadd.f32 0.0, %v410
        %412 = vmatmul.f32.gmra.mxu0 %v194
        %v413 = vpop.f32.mrf.mxu0
        %v414 = vadd.f32 0.0, %v413
        %415 = vmatmul.f32.gmra.mxu0 %v196
        %v416 = vpop.f32.mrf.mxu0
        %v417 = vadd.f32 0.0, %v416
        %418 = vmatmul.f32.gmra.mxu0 %v198
        %v419 = vpop.f32.mrf.mxu0
        %v420 = vadd.f32 0.0, %v419
        %421 = vmatmul.f32.gmra.mxu0 %v200
        %v422 = vpop.f32.mrf.mxu0
        %v423 = vadd.f32 0.0, %v422
        %424 = vmatmul.f32.gmra.mxu0 %v202
        %v425 = vpop.f32.mrf.mxu0
        %v426 = vadd.f32 0.0, %v425
        %427 = vmatmul.f32.gmra.mxu0 %v204
        %v428 = vpop.f32.mrf.mxu0
        %v429 = vadd.f32 0.0, %v428
        %430 = vmatmul.f32.gmra.mxu0 %v206
        %v431 = vpop.f32.mrf.mxu0
        %v432 = vadd.f32 0.0, %v431
        %433 = vmatmul.f32.gmra.mxu0 %v208
        %v434 = vpop.f32.mrf.mxu0
        %v435 = vadd.f32 0.0, %v434
        %436 = vmatmul.f32.gmra.mxu0 %v210
        %v437 = vpop.f32.mrf.mxu0
        %v438 = vadd.f32 0.0, %v437
        %439 = vmatmul.f32.gmra.mxu0 %v212
        %v440 = vpop.f32.mrf.mxu0
        %v441 = vadd.f32 0.0, %v440
        %442 = vmatmul.f32.gmra.mxu0 %v214
        %v443 = vpop.f32.mrf.mxu0
        %v444 = vadd.f32 0.0, %v443
        %445 = vmatmul.f32.gmra.mxu0 %v216
        %v446 = vpop.f32.mrf.mxu0
        %v447 = vadd.f32 0.0, %v446
        %448 = vmatmul.f32.gmra.mxu0 %v218
        %v449 = vpop.f32.mrf.mxu0
        %v450 = vadd.f32 0.0, %v449
        %451 = vmatmul.f32.gmra.mxu0 %v220
        %v452 = vpop.f32.mrf.mxu0
        %v453 = vadd.f32 0.0, %v452
        %454 = vmatmul.f32.gmra.mxu0 %v222
        %v455 = vpop.f32.mrf.mxu0
        %v456 = vadd.f32 0.0, %v455
        %457 = vmatmul.f32.gmra.mxu0 %v224
        %v458 = vpop.f32.mrf.mxu0
        %v459 = vadd.f32 0.0, %v458
        %460 = vmatmul.f32.gmra.mxu0 %v226
        %v461 = vpop.f32.mrf.mxu0
        %v462 = vadd.f32 0.0, %v461
        %463 = vmatmul.f32.gmra.mxu0 %v228
        %v464 = vpop.f32.mrf.mxu0
        %v465 = vadd.f32 0.0, %v464
        %466 = vmatmul.f32.gmra.mxu0 %v230
        %v467 = vpop.f32.mrf.mxu0
        %v468 = vadd.f32 0.0, %v467
        %469 = vmatmul.f32.gmra.mxu0 %v232
        %v470 = vpop.f32.mrf.mxu0
        %v471 = vadd.f32 0.0, %v470
        %472 = vmatmul.f32.gmra.mxu0 %v234
        %v473 = vpop.f32.mrf.mxu0
        %v474 = vadd.f32 0.0, %v473
        %475 = vmatmul.f32.gmra.mxu0 %v236
        %v476 = vpop.f32.mrf.mxu0
        %v477 = vadd.f32 0.0, %v476
        %478 = vmatmul.f32.gmra.mxu0 %v238
        %v479 = vpop.f32.mrf.mxu0
        %v480 = vadd.f32 0.0, %v479
        %481 = vmatmul.f32.gmra.mxu0 %v240
        %v482 = vpop.f32.mrf.mxu0
        %v483 = vadd.f32 0.0, %v482
        %484 = vmatmul.f32.gmra.mxu0 %v242
        %v485 = vpop.f32.mrf.mxu0
        %v486 = vadd.f32 0.0, %v485
        %487 = vmatmul.f32.gmra.mxu0 %v244
        %v488 = vpop.f32.mrf.mxu0
        %v489 = vadd.f32 0.0, %v488
        %490 = vmatmul.f32.gmra.mxu0 %v246
        %v491 = vpop.f32.mrf.mxu0
        %v492 = vadd.f32 0.0, %v491
        %493 = vmatmul.f32.gmra.mxu0 %v248
        %v494 = vpop.f32.mrf.mxu0
        %v495 = vadd.f32 0.0, %v494
        %496 = vmatmul.f32.gmra.mxu0 %v250
        %v497 = vpop.f32.mrf.mxu0
        %v498 = vadd.f32 0.0, %v497
        %499 = vmatmul.f32.gmra.mxu0 %v252
        %v500 = vpop.f32.mrf.mxu0
        %v501 = vadd.f32 0.0, %v500
        %502 = vmatmul.f32.gmra.mxu0 %v254
        %v503 = vpop.f32.mrf.mxu0
        %v504 = vadd.f32 0.0, %v503
        %505 = vmatmul.f32.gmra.mxu0 %v256
        %v506 = vpop.f32.mrf.mxu0
        %v507 = vadd.f32 0.0, %v506
        %508 = vmatmul.f32.gmra.mxu0 %v258
        %v509 = vpop.f32.mrf.mxu0
        %v510 = vadd.f32 0.0, %v509
        %511 = vmatmul.f32.gmra.mxu0 %v260
        %v512 = vpop.f32.mrf.mxu0
        %v513 = vadd.f32 0.0, %v512
        %514 = vmatmul.f32.gmra.mxu0 %v262
        %v515 = vpop.f32.mrf.mxu0
        %v516 = vadd.f32 0.0, %v515
        %517 = vmatmul.f32.gmra.mxu0 %v264
        %v518 = vpop.f32.mrf.mxu0
        %v519 = vadd.f32 0.0, %v518
        %520 = vmatmul.f32.gmra.mxu0 %v266
        %v521 = vpop.f32.mrf.mxu0
        %v522 = vadd.f32 0.0, %v521
        %523 = vmatmul.f32.gmra.mxu0 %v268
        %v524 = vpop.f32.mrf.mxu0
        %v525 = vadd.f32 0.0, %v524
        %526 = vmatmul.f32.gmra.mxu0 %v270
        %v527 = vpop.f32.mrf.mxu0
        %v528 = vadd.f32 0.0, %v527
        %529 = vmatmul.f32.gmra.mxu0 %v272
        %v530 = vpop.f32.mrf.mxu0
        %v531 = vadd.f32 0.0, %v530
        %532 = vmatmul.f32.gmra.mxu0 %v274
        %v533 = vpop.f32.mrf.mxu0
        %v534 = vadd.f32 0.0, %v533
        %535 = vmatmul.f32.gmra.mxu0 %v276
        %v536 = vpop.f32.mrf.mxu0
        %v537 = vadd.f32 0.0, %v536
        %538 = vmatmul.f32.gmra.mxu0 %v278
        %v539 = vpop.f32.mrf.mxu0
        %v540 = vadd.f32 0.0, %v539
        %541 = vmatmul.f32.gmra.mxu0 %v280
        %v542 = vpop.f32.mrf.mxu0
        %v543 = vadd.f32 0.0, %v542
        %544 = vmatmul.f32.gmra.mxu0 %v282
        %v545 = vpop.f32.mrf.mxu0
        %v546 = vadd.f32 0.0, %v545
        %547 = vmatmul.f32.gmra.mxu0 %v284
        %v548 = vpop.f32.mrf.mxu0
        %v549 = vadd.f32 0.0, %v548
        %550 = vmatmul.f32.gmra.mxu0 %v286
        %v551 = vpop.f32.mrf.mxu0
        %v552 = vadd.f32 0.0, %v551
        %553 = vmatmul.f32.gmra.mxu0 %v288
        %v554 = vpop.f32.mrf.mxu0
        %v555 = vadd.f32 0.0, %v554
        %556 = vmatmul.f32.gmra.mxu0 %v290
        %v557 = vpop.f32.mrf.mxu0
        %v558 = vadd.f32 0.0, %v557
        %559 = vmatmul.f32.gmra.mxu0 %v292
        %v560 = vpop.f32.mrf.mxu0
        %v561 = vadd.f32 0.0, %v560
        %562 = vmatmul.f32.gmra.mxu0 %v294
        %v563 = vpop.f32.mrf.mxu0
        %v564 = vadd.f32 0.0, %v563
        %565 = vmatmul.f32.gmra.mxu0 %v296
        %v566 = vpop.f32.mrf.mxu0
        %v567 = vadd.f32 0.0, %v566
        %568 = vmatmul.f32.gmra.mxu0 %v298
        %v569 = vpop.f32.mrf.mxu0
        %v570 = vadd.f32 0.0, %v569
        %571 = vmatmul.f32.gmra.mxu0 %v300
        %v572 = vpop.f32.mrf.mxu0
        %v573 = vadd.f32 0.0, %v572
        %574 = vdwg.mxu0
        %575 = vmatpush.msra.mxu0 %v364
        %576 = vmatpush.msra.mxu0 %v362
        %577 = vmatpush.msra.mxu0 %v360
        %578 = vmatpush.msra.mxu0 %v358
        %579 = vmatpush.msra.mxu0 %v356
        %580 = vmatpush.msra.mxu0 %v354
        %581 = vmatpush.msra.mxu0 %v352
        %582 = vmatpush.msra.mxu0 %v350
        %583 = vmatpush.msra.mxu0 %v348
        %584 = vmatpush.msra.mxu0 %v346
        %585 = vmatpush.msra.mxu0 %v344
        %586 = vmatpush.msra.mxu0 %v342
        %587 = vmatpush.msra.mxu0 %v340
        %588 = vmatpush.msra.mxu0 %v338
        %589 = vmatpush.msra.mxu0 %v336
        %590 = vmatpush.msra.mxu0 %v334
        %591 = vmatmul.f32.gmra.mxu0 %v175
        %v592 = vpop.f32.mrf.mxu0
        %v593 = vadd.f32 %v384, %v592
        %594 = vmatmul.f32.gmra.mxu0 %v177
        %v595 = vpop.f32.mrf.mxu0
        %v596 = vadd.f32 %v387, %v595
        %597 = vmatmul.f32.gmra.mxu0 %v179
        %v598 = vpop.f32.mrf.mxu0
        %v599 = vadd.f32 %v390, %v598
        %600 = vmatmul.f32.gmra.mxu0 %v181
        %v601 = vpop.f32.mrf.mxu0
        %v602 = vadd.f32 %v393, %v601
        %603 = vmatmul.f32.gmra.mxu0 %v183
        %v604 = vpop.f32.mrf.mxu0
        %v605 = vadd.f32 %v396, %v604
        %606 = vmatmul.f32.gmra.mxu0 %v185
        %v607 = vpop.f32.mrf.mxu0
        %v608 = vadd.f32 %v399, %v607
        %609 = vmatmul.f32.gmra.mxu0 %v187
        %v610 = vpop.f32.mrf.mxu0
        %v611 = vadd.f32 %v402, %v610
        %612 = vmatmul.f32.gmra.mxu0 %v189
        %v613 = vpop.f32.mrf.mxu0
        %v614 = vadd.f32 %v405, %v613
        %615 = vmatmul.f32.gmra.mxu0 %v191
        %v616 = vpop.f32.mrf.mxu0
        %v617 = vadd.f32 %v408, %v616
        %618 = vmatmul.f32.gmra.mxu0 %v193
        %v619 = vpop.f32.mrf.mxu0
        %v620 = vadd.f32 %v411, %v619
        %621 = vmatmul.f32.gmra.mxu0 %v195
        %v622 = vpop.f32.mrf.mxu0
        %v623 = vadd.f32 %v414, %v622
        %624 = vmatmul.f32.gmra.mxu0 %v197
        %v625 = vpop.f32.mrf.mxu0
        %v626 = vadd.f32 %v417, %v625
        %627 = vmatmul.f32.gmra.mxu0 %v199
        %v628 = vpop.f32.mrf.mxu0
        %v629 = vadd.f32 %v420, %v628
        %630 = vmatmul.f32.gmra.mxu0 %v201
        %v631 = vpop.f32.mrf.mxu0
        %v632 = vadd.f32 %v423, %v631
        %633 = vmatmul.f32.gmra.mxu0 %v203
        %v634 = vpop.f32.mrf.mxu0
        %v635 = vadd.f32 %v426, %v634
        %636 = vmatmul.f32.gmra.mxu0 %v205
        %v637 = vpop.f32.mrf.mxu0
        %v638 = vadd.f32 %v429, %v637
        %639 = vmatmul.f32.gmra.mxu0 %v207
        %v640 = vpop.f32.mrf.mxu0
        %v641 = vadd.f32 %v432, %v640
        %642 = vmatmul.f32.gmra.mxu0 %v209
        %v643 = vpop.f32.mrf.mxu0
        %v644 = vadd.f32 %v435, %v643
        %645 = vmatmul.f32.gmra.mxu0 %v211
        %v646 = vpop.f32.mrf.mxu0
        %v647 = vadd.f32 %v438, %v646
        %648 = vmatmul.f32.gmra.mxu0 %v213
        %v649 = vpop.f32.mrf.mxu0
        %v650 = vadd.f32 %v441, %v649
        %651 = vmatmul.f32.gmra.mxu0 %v215
        %v652 = vpop.f32.mrf.mxu0
        %v653 = vadd.f32 %v444, %v652
        %654 = vmatmul.f32.gmra.mxu0 %v217
        %v655 = vpop.f32.mrf.mxu0
        %v656 = vadd.f32 %v447, %v655
        %657 = vmatmul.f32.gmra.mxu0 %v219
        %v658 = vpop.f32.mrf.mxu0
        %v659 = vadd.f32 %v450, %v658
        %660 = vmatmul.f32.gmra.mxu0 %v221
        %v661 = vpop.f32.mrf.mxu0
        %v662 = vadd.f32 %v453, %v661
        %663 = vmatmul.f32.gmra.mxu0 %v223
        %v664 = vpop.f32.mrf.mxu0
        %v665 = vadd.f32 %v456, %v664
        %666 = vmatmul.f32.gmra.mxu0 %v225
        %v667 = vpop.f32.mrf.mxu0
        %v668 = vadd.f32 %v459, %v667
        %669 = vmatmul.f32.gmra.mxu0 %v227
        %v670 = vpop.f32.mrf.mxu0
        %v671 = vadd.f32 %v462, %v670
        %672 = vmatmul.f32.gmra.mxu0 %v229
        %v673 = vpop.f32.mrf.mxu0
        %v674 = vadd.f32 %v465, %v673
        %675 = vmatmul.f32.gmra.mxu0 %v231
        %v676 = vpop.f32.mrf.mxu0
        %v677 = vadd.f32 %v468, %v676
        %678 = vmatmul.f32.gmra.mxu0 %v233
        %v679 = vpop.f32.mrf.mxu0
        %v680 = vadd.f32 %v471, %v679
        %681 = vmatmul.f32.gmra.mxu0 %v235
        %v682 = vpop.f32.mrf.mxu0
        %v683 = vadd.f32 %v474, %v682
        %684 = vmatmul.f32.gmra.mxu0 %v237
        %v685 = vpop.f32.mrf.mxu0
        %v686 = vadd.f32 %v477, %v685
        %687 = vmatmul.f32.gmra.mxu0 %v239
        %v688 = vpop.f32.mrf.mxu0
        %v689 = vadd.f32 %v480, %v688
        %690 = vmatmul.f32.gmra.mxu0 %v241
        %v691 = vpop.f32.mrf.mxu0
        %v692 = vadd.f32 %v483, %v691
        %693 = vmatmul.f32.gmra.mxu0 %v243
        %v694 = vpop.f32.mrf.mxu0
        %v695 = vadd.f32 %v486, %v694
        %696 = vmatmul.f32.gmra.mxu0 %v245
        %v697 = vpop.f32.mrf.mxu0
        %v698 = vadd.f32 %v489, %v697
        %699 = vmatmul.f32.gmra.mxu0 %v247
        %v700 = vpop.f32.mrf.mxu0
        %v701 = vadd.f32 %v492, %v700
        %702 = vmatmul.f32.gmra.mxu0 %v249
        %v703 = vpop.f32.mrf.mxu0
        %v704 = vadd.f32 %v495, %v703
        %705 = vmatmul.f32.gmra.mxu0 %v251
        %v706 = vpop.f32.mrf.mxu0
        %v707 = vadd.f32 %v498, %v706
        %708 = vmatmul.f32.gmra.mxu0 %v253
        %v709 = vpop.f32.mrf.mxu0
        %v710 = vadd.f32 %v501, %v709
        %711 = vmatmul.f32.gmra.mxu0 %v255
        %v712 = vpop.f32.mrf.mxu0
        %v713 = vadd.f32 %v504, %v712
        %714 = vmatmul.f32.gmra.mxu0 %v257
        %v715 = vpop.f32.mrf.mxu0
        %v716 = vadd.f32 %v507, %v715
        %717 = vmatmul.f32.gmra.mxu0 %v259
        %v718 = vpop.f32.mrf.mxu0
        %v719 = vadd.f32 %v510, %v718
        %720 = vmatmul.f32.gmra.mxu0 %v261
        %v721 = vpop.f32.mrf.mxu0
        %v722 = vadd.f32 %v513, %v721
        %723 = vmatmul.f32.gmra.mxu0 %v263
        %v724 = vpop.f32.mrf.mxu0
        %v725 = vadd.f32 %v516, %v724
        %726 = vmatmul.f32.gmra.mxu0 %v265
        %v727 = vpop.f32.mrf.mxu0
        %v728 = vadd.f32 %v519, %v727
        %729 = vmatmul.f32.gmra.mxu0 %v267
        %v730 = vpop.f32.mrf.mxu0
        %v731 = vadd.f32 %v522, %v730
        %732 = vmatmul.f32.gmra.mxu0 %v269
        %v733 = vpop.f32.mrf.mxu0
        %v734 = vadd.f32 %v525, %v733
        %735 = vmatmul.f32.gmra.mxu0 %v271
        %v736 = vpop.f32.mrf.mxu0
        %v737 = vadd.f32 %v528, %v736
        %738 = vmatmul.f32.gmra.mxu0 %v273
        %v739 = vpop.f32.mrf.mxu0
        %v740 = vadd.f32 %v531, %v739
        %741 = vmatmul.f32.gmra.mxu0 %v275
        %v742 = vpop.f32.mrf.mxu0
        %v743 = vadd.f32 %v534, %v742
        %744 = vmatmul.f32.gmra.mxu0 %v277
        %v745 = vpop.f32.mrf.mxu0
        %v746 = vadd.f32 %v537, %v745
        %747 = vmatmul.f32.gmra.mxu0 %v279
        %v748 = vpop.f32.mrf.mxu0
        %v749 = vadd.f32 %v540, %v748
        %750 = vmatmul.f32.gmra.mxu0 %v281
        %v751 = vpop.f32.mrf.mxu0
        %v752 = vadd.f32 %v543, %v751
        %753 = vmatmul.f32.gmra.mxu0 %v283
        %v754 = vpop.f32.mrf.mxu0
        %v755 = vadd.f32 %v546, %v754
        %756 = vmatmul.f32.gmra.mxu0 %v285
        %v757 = vpop.f32.mrf.mxu0
        %v758 = vadd.f32 %v549, %v757
        %759 = vmatmul.f32.gmra.mxu0 %v287
        %v760 = vpop.f32.mrf.mxu0
        %v761 = vadd.f32 %v552, %v760
        %762 = vmatmul.f32.gmra.mxu0 %v289
        %v763 = vpop.f32.mrf.mxu0
        %v764 = vadd.f32 %v555, %v763
        %765 = vmatmul.f32.gmra.mxu0 %v291
        %v766 = vpop.f32.mrf.mxu0
        %v767 = vadd.f32 %v558, %v766
        %768 = vmatmul.f32.gmra.mxu0 %v293
        %v769 = vpop.f32.mrf.mxu0
        %v770 = vadd.f32 %v561, %v769
        %771 = vmatmul.f32.gmra.mxu0 %v295
        %v772 = vpop.f32.mrf.mxu0
        %v773 = vadd.f32 %v564, %v772
        %774 = vmatmul.f32.gmra.mxu0 %v297
        %v775 = vpop.f32.mrf.mxu0
        %v776 = vadd.f32 %v567, %v775
        %777 = vmatmul.f32.gmra.mxu0 %v299
        %v778 = vpop.f32.mrf.mxu0
        %v779 = vadd.f32 %v570, %v778
        %780 = vmatmul.f32.gmra.mxu0 %v301
        %v781 = vpop.f32.mrf.mxu0
        %v782 = vadd.f32 %v573, %v781
        %783 = vdwg.mxu0
        %784 = vmatpush.msra.mxu0 %v333
        %785 = vmatpush.msra.mxu0 %v331
        %786 = vmatpush.msra.mxu0 %v329
        %787 = vmatpush.msra.mxu0 %v327
        %788 = vmatpush.msra.mxu0 %v325
        %789 = vmatpush.msra.mxu0 %v323
        %790 = vmatpush.msra.mxu0 %v321
        %791 = vmatpush.msra.mxu0 %v319
        %792 = vmatpush.msra.mxu0 %v317
        %793 = vmatpush.msra.mxu0 %v315
        %794 = vmatpush.msra.mxu0 %v313
        %795 = vmatpush.msra.mxu0 %v311
        %796 = vmatpush.msra.mxu0 %v309
        %797 = vmatpush.msra.mxu0 %v307
        %798 = vmatpush.msra.mxu0 %v305
        %799 = vmatpush.msra.mxu0 %v303
        %800 = vmatmul.f32.gmra.mxu0 %v174
        %v801 = vpop.f32.mrf.mxu0
        %v802 = vadd.f32 0.0, %v801
        %803 = vmatmul.f32.gmra.mxu0 %v176
        %v804 = vpop.f32.mrf.mxu0
        %v805 = vadd.f32 0.0, %v804
        %806 = vmatmul.f32.gmra.mxu0 %v178
        %v807 = vpop.f32.mrf.mxu0
        %v808 = vadd.f32 0.0, %v807
        %809 = vmatmul.f32.gmra.mxu0 %v180
        %v810 = vpop.f32.mrf.mxu0
        %v811 = vadd.f32 0.0, %v810
        %812 = vmatmul.f32.gmra.mxu0 %v182
        %v813 = vpop.f32.mrf.mxu0
        %v814 = vadd.f32 0.0, %v813
        %815 = vmatmul.f32.gmra.mxu0 %v184
        %v816 = vpop.f32.mrf.mxu0
        %v817 = vadd.f32 0.0, %v816
        %818 = vmatmul.f32.gmra.mxu0 %v186
        %v819 = vpop.f32.mrf.mxu0
        %v820 = vadd.f32 0.0, %v819
        %821 = vmatmul.f32.gmra.mxu0 %v188
        %v822 = vpop.f32.mrf.mxu0
        %v823 = vadd.f32 0.0, %v822
        %824 = vmatmul.f32.gmra.mxu0 %v190
        %v825 = vpop.f32.mrf.mxu0
        %v826 = vadd.f32 0.0, %v825
        %827 = vmatmul.f32.gmra.mxu0 %v192
        %v828 = vpop.f32.mrf.mxu0
        %v829 = vadd.f32 0.0, %v828
        %830 = vmatmul.f32.gmra.mxu0 %v194
        %v831 = vpop.f32.mrf.mxu0
        %v832 = vadd.f32 0.0, %v831
        %833 = vmatmul.f32.gmra.mxu0 %v196
        %v834 = vpop.f32.mrf.mxu0
        %v835 = vadd.f32 0.0, %v834
        %836 = vmatmul.f32.gmra.mxu0 %v198
        %v837 = vpop.f32.mrf.mxu0
        %v838 = vadd.f32 0.0, %v837
        %839 = vmatmul.f32.gmra.mxu0 %v200
        %v840 = vpop.f32.mrf.mxu0
        %v841 = vadd.f32 0.0, %v840
        %842 = vmatmul.f32.gmra.mxu0 %v202
        %v843 = vpop.f32.mrf.mxu0
        %v844 = vadd.f32 0.0, %v843
        %845 = vmatmul.f32.gmra.mxu0 %v204
        %v846 = vpop.f32.mrf.mxu0
        %v847 = vadd.f32 0.0, %v846
        %848 = vmatmul.f32.gmra.mxu0 %v206
        %v849 = vpop.f32.mrf.mxu0
        %v850 = vadd.f32 0.0, %v849
        %851 = vmatmul.f32.gmra.mxu0 %v208
        %v852 = vpop.f32.mrf.mxu0
        %v853 = vadd.f32 0.0, %v852
        %854 = vmatmul.f32.gmra.mxu0 %v210
        %v855 = vpop.f32.mrf.mxu0
        %v856 = vadd.f32 0.0, %v855
        %857 = vmatmul.f32.gmra.mxu0 %v212
        %v858 = vpop.f32.mrf.mxu0
        %v859 = vadd.f32 0.0, %v858
        %860 = vmatmul.f32.gmra.mxu0 %v214
        %v861 = vpop.f32.mrf.mxu0
        %v862 = vadd.f32 0.0, %v861
        %863 = vmatmul.f32.gmra.mxu0 %v216
        %v864 = vpop.f32.mrf.mxu0
        %v865 = vadd.f32 0.0, %v864
        %866 = vmatmul.f32.gmra.mxu0 %v218
        %v867 = vpop.f32.mrf.mxu0
        %v868 = vadd.f32 0.0, %v867
        %869 = vmatmul.f32.gmra.mxu0 %v220
        %v870 = vpop.f32.mrf.mxu0
        %v871 = vadd.f32 0.0, %v870
        %872 = vmatmul.f32.gmra.mxu0 %v222
        %v873 = vpop.f32.mrf.mxu0
        %v874 = vadd.f32 0.0, %v873
        %875 = vmatmul.f32.gmra.mxu0 %v224
        %v876 = vpop.f32.mrf.mxu0
        %v877 = vadd.f32 0.0, %v876
        %878 = vmatmul.f32.gmra.mxu0 %v226
        %v879 = vpop.f32.mrf.mxu0
        %v880 = vadd.f32 0.0, %v879
        %881 = vmatmul.f32.gmra.mxu0 %v228
        %v882 = vpop.f32.mrf.mxu0
        %v883 = vadd.f32 0.0, %v882
        %884 = vmatmul.f32.gmra.mxu0 %v230
        %v885 = vpop.f32.mrf.mxu0
        %v886 = vadd.f32 0.0, %v885
        %887 = vmatmul.f32.gmra.mxu0 %v232
        %v888 = vpop.f32.mrf.mxu0
        %v889 = vadd.f32 0.0, %v888
        %890 = vmatmul.f32.gmra.mxu0 %v234
        %v891 = vpop.f32.mrf.mxu0
        %v892 = vadd.f32 0.0, %v891
        %893 = vmatmul.f32.gmra.mxu0 %v236
        %v894 = vpop.f32.mrf.mxu0
        %v895 = vadd.f32 0.0, %v894
        %896 = vmatmul.f32.gmra.mxu0 %v238
        %v897 = vpop.f32.mrf.mxu0
        %v898 = vadd.f32 0.0, %v897
        %899 = vmatmul.f32.gmra.mxu0 %v240
        %v900 = vpop.f32.mrf.mxu0
        %v901 = vadd.f32 0.0, %v900
        %902 = vmatmul.f32.gmra.mxu0 %v242
        %v903 = vpop.f32.mrf.mxu0
        %v904 = vadd.f32 0.0, %v903
        %905 = vmatmul.f32.gmra.mxu0 %v244
        %v906 = vpop.f32.mrf.mxu0
        %v907 = vadd.f32 0.0, %v906
        %908 = vmatmul.f32.gmra.mxu0 %v246
        %v909 = vpop.f32.mrf.mxu0
        %v910 = vadd.f32 0.0, %v909
        %911 = vmatmul.f32.gmra.mxu0 %v248
        %v912 = vpop.f32.mrf.mxu0
        %v913 = vadd.f32 0.0, %v912
        %914 = vmatmul.f32.gmra.mxu0 %v250
        %v915 = vpop.f32.mrf.mxu0
        %v916 = vadd.f32 0.0, %v915
        %917 = vmatmul.f32.gmra.mxu0 %v252
        %v918 = vpop.f32.mrf.mxu0
        %v919 = vadd.f32 0.0, %v918
        %920 = vmatmul.f32.gmra.mxu0 %v254
        %v921 = vpop.f32.mrf.mxu0
        %v922 = vadd.f32 0.0, %v921
        %923 = vmatmul.f32.gmra.mxu0 %v256
        %v924 = vpop.f32.mrf.mxu0
        %v925 = vadd.f32 0.0, %v924
        %926 = vmatmul.f32.gmra.mxu0 %v258
        %v927 = vpop.f32.mrf.mxu0
        %v928 = vadd.f32 0.0, %v927
        %929 = vmatmul.f32.gmra.mxu0 %v260
        %v930 = vpop.f32.mrf.mxu0
        %v931 = vadd.f32 0.0, %v930
        %932 = vmatmul.f32.gmra.mxu0 %v262
        %v933 = vpop.f32.mrf.mxu0
        %v934 = vadd.f32 0.0, %v933
        %935 = vmatmul.f32.gmra.mxu0 %v264
        %v936 = vpop.f32.mrf.mxu0
        %v937 = vadd.f32 0.0, %v936
        %938 = vmatmul.f32.gmra.mxu0 %v266
        %v939 = vpop.f32.mrf.mxu0
        %v940 = vadd.f32 0.0, %v939
        %941 = vmatmul.f32.gmra.mxu0 %v268
        %v942 = vpop.f32.mrf.mxu0
        %v943 = vadd.f32 0.0, %v942
        %944 = vmatmul.f32.gmra.mxu0 %v270
        %v945 = vpop.f32.mrf.mxu0
        %v946 = vadd.f32 0.0, %v945
        %947 = vmatmul.f32.gmra.mxu0 %v272
        %v948 = vpop.f32.mrf.mxu0
        %v949 = vadd.f32 0.0, %v948
        %950 = vmatmul.f32.gmra.mxu0 %v274
        %v951 = vpop.f32.mrf.mxu0
        %v952 = vadd.f32 0.0, %v951
        %953 = vmatmul.f32.gmra.mxu0 %v276
        %v954 = vpop.f32.mrf.mxu0
        %v955 = vadd.f32 0.0, %v954
        %956 = vmatmul.f32.gmra.mxu0 %v278
        %v957 = vpop.f32.mrf.mxu0
        %v958 = vadd.f32 0.0, %v957
        %959 = vmatmul.f32.gmra.mxu0 %v280
        %v960 = vpop.f32.mrf.mxu0
        %v961 = vadd.f32 0.0, %v960
        %962 = vmatmul.f32.gmra.mxu0 %v282
        %v963 = vpop.f32.mrf.mxu0
        %v964 = vadd.f32 0.0, %v963
        %965 = vmatmul.f32.gmra.mxu0 %v284
        %v966 = vpop.f32.mrf.mxu0
        %v967 = vadd.f32 0.0, %v966
        %968 = vmatmul.f32.gmra.mxu0 %v286
        %v969 = vpop.f32.mrf.mxu0
        %v970 = vadd.f32 0.0, %v969
        %971 = vmatmul.f32.gmra.mxu0 %v288
        %v972 = vpop.f32.mrf.mxu0
        %v973 = vadd.f32 0.0, %v972
        %974 = vmatmul.f32.gmra.mxu0 %v290
        %v975 = vpop.f32.mrf.mxu0
        %v976 = vadd.f32 0.0, %v975
        %977 = vmatmul.f32.gmra.mxu0 %v292
        %v978 = vpop.f32.mrf.mxu0
        %v979 = vadd.f32 0.0, %v978
        %980 = vmatmul.f32.gmra.mxu0 %v294
        %v981 = vpop.f32.mrf.mxu0
        %v982 = vadd.f32 0.0, %v981
        %983 = vmatmul.f32.gmra.mxu0 %v296
        %v984 = vpop.f32.mrf.mxu0
        %v985 = vadd.f32 0.0, %v984
        %986 = vmatmul.f32.gmra.mxu0 %v298
        %v987 = vpop.f32.mrf.mxu0
        %v988 = vadd.f32 0.0, %v987
        %989 = vmatmul.f32.gmra.mxu0 %v300
        %v990 = vpop.f32.mrf.mxu0
        %v991 = vadd.f32 0.0, %v990
        %992 = vdwg.mxu0
        %993 = vmatpush.msra.mxu0 %v365
        %994 = vmatpush.msra.mxu0 %v363
        %995 = vmatpush.msra.mxu0 %v361
        %996 = vmatpush.msra.mxu0 %v359
        %997 = vmatpush.msra.mxu0 %v357
        %998 = vmatpush.msra.mxu0 %v355
        %999 = vmatpush.msra.mxu0 %v353
        %1000 = vmatpush.msra.mxu0 %v351
        %1001 = vmatpush.msra.mxu0 %v349
        %1002 = vmatpush.msra.mxu0 %v347
        %1003 = vmatpush.msra.mxu0 %v345
        %1004 = vmatpush.msra.mxu0 %v343
        %1005 = vmatpush.msra.mxu0 %v341
        %1006 = vmatpush.msra.mxu0 %v339
        %1007 = vmatpush.msra.mxu0 %v337
        %1008 = vmatpush.msra.mxu0 %v335
        %1009 = vmatmul.f32.gmra.mxu0 %v175
        %v1010 = vpop.f32.mrf.mxu0
        %v1011 = vadd.f32 %v802, %v1010
        %1012 = vmatmul.f32.gmra.mxu0 %v177
        %v1013 = vpop.f32.mrf.mxu0
        %v1014 = vadd.f32 %v805, %v1013
        %1015 = vmatmul.f32.gmra.mxu0 %v179
        %v1016 = vpop.f32.mrf.mxu0
        %v1017 = vadd.f32 %v808, %v1016
        %1018 = vmatmul.f32.gmra.mxu0 %v181
        %v1019 = vpop.f32.mrf.mxu0
        %v1020 = vadd.f32 %v811, %v1019
        %1021 = vmatmul.f32.gmra.mxu0 %v183
        %v1022 = vpop.f32.mrf.mxu0
        %v1023 = vadd.f32 %v814, %v1022
        %1024 = vmatmul.f32.gmra.mxu0 %v185
        %v1025 = vpop.f32.mrf.mxu0
        %v1026 = vadd.f32 %v817, %v1025
        %1027 = vmatmul.f32.gmra.mxu0 %v187
        %v1028 = vpop.f32.mrf.mxu0
        %v1029 = vadd.f32 %v820, %v1028
        %1030 = vmatmul.f32.gmra.mxu0 %v189
        %v1031 = vpop.f32.mrf.mxu0
        %v1032 = vadd.f32 %v823, %v1031
        %1033 = vmatmul.f32.gmra.mxu0 %v191
        %v1034 = vpop.f32.mrf.mxu0
        %v1035 = vadd.f32 %v826, %v1034
        %1036 = vmatmul.f32.gmra.mxu0 %v193
        %v1037 = vpop.f32.mrf.mxu0
        %v1038 = vadd.f32 %v829, %v1037
        %1039 = vmatmul.f32.gmra.mxu0 %v195
        %v1040 = vpop.f32.mrf.mxu0
        %v1041 = vadd.f32 %v832, %v1040
        %1042 = vmatmul.f32.gmra.mxu0 %v197
        %v1043 = vpop.f32.mrf.mxu0
        %v1044 = vadd.f32 %v835, %v1043
        %1045 = vmatmul.f32.gmra.mxu0 %v199
        %v1046 = vpop.f32.mrf.mxu0
        %v1047 = vadd.f32 %v838, %v1046
        %1048 = vmatmul.f32.gmra.mxu0 %v201
        %v1049 = vpop.f32.mrf.mxu0
        %v1050 = vadd.f32 %v841, %v1049
        %1051 = vmatmul.f32.gmra.mxu0 %v203
        %v1052 = vpop.f32.mrf.mxu0
        %v1053 = vadd.f32 %v844, %v1052
        %1054 = vmatmul.f32.gmra.mxu0 %v205
        %v1055 = vpop.f32.mrf.mxu0
        %v1056 = vadd.f32 %v847, %v1055
        %1057 = vmatmul.f32.gmra.mxu0 %v207
        %v1058 = vpop.f32.mrf.mxu0
        %v1059 = vadd.f32 %v850, %v1058
        %1060 = vmatmul.f32.gmra.mxu0 %v209
        %v1061 = vpop.f32.mrf.mxu0
        %v1062 = vadd.f32 %v853, %v1061
        %1063 = vmatmul.f32.gmra.mxu0 %v211
        %v1064 = vpop.f32.mrf.mxu0
        %v1065 = vadd.f32 %v856, %v1064
        %1066 = vmatmul.f32.gmra.mxu0 %v213
        %v1067 = vpop.f32.mrf.mxu0
        %v1068 = vadd.f32 %v859, %v1067
        %1069 = vmatmul.f32.gmra.mxu0 %v215
        %v1070 = vpop.f32.mrf.mxu0
        %v1071 = vadd.f32 %v862, %v1070
        %1072 = vmatmul.f32.gmra.mxu0 %v217
        %v1073 = vpop.f32.mrf.mxu0
        %v1074 = vadd.f32 %v865, %v1073
        %1075 = vmatmul.f32.gmra.mxu0 %v219
        %v1076 = vpop.f32.mrf.mxu0
        %v1077 = vadd.f32 %v868, %v1076
        %1078 = vmatmul.f32.gmra.mxu0 %v221
        %v1079 = vpop.f32.mrf.mxu0
        %v1080 = vadd.f32 %v871, %v1079
        %1081 = vmatmul.f32.gmra.mxu0 %v223
        %v1082 = vpop.f32.mrf.mxu0
        %v1083 = vadd.f32 %v874, %v1082
        %1084 = vmatmul.f32.gmra.mxu0 %v225
        %v1085 = vpop.f32.mrf.mxu0
        %v1086 = vadd.f32 %v877, %v1085
        %1087 = vmatmul.f32.gmra.mxu0 %v227
        %v1088 = vpop.f32.mrf.mxu0
        %v1089 = vadd.f32 %v880, %v1088
        %1090 = vmatmul.f32.gmra.mxu0 %v229
        %v1091 = vpop.f32.mrf.mxu0
        %v1092 = vadd.f32 %v883, %v1091
        %1093 = vmatmul.f32.gmra.mxu0 %v231
        %v1094 = vpop.f32.mrf.mxu0
        %v1095 = vadd.f32 %v886, %v1094
        %1096 = vmatmul.f32.gmra.mxu0 %v233
        %v1097 = vpop.f32.mrf.mxu0
        %v1098 = vadd.f32 %v889, %v1097
        %1099 = vmatmul.f32.gmra.mxu0 %v235
        %v1100 = vpop.f32.mrf.mxu0
        %v1101 = vadd.f32 %v892, %v1100
        %1102 = vmatmul.f32.gmra.mxu0 %v237
        %v1103 = vpop.f32.mrf.mxu0
        %v1104 = vadd.f32 %v895, %v1103
        %1105 = vmatmul.f32.gmra.mxu0 %v239
        %v1106 = vpop.f32.mrf.mxu0
        %v1107 = vadd.f32 %v898, %v1106
        %1108 = vmatmul.f32.gmra.mxu0 %v241
        %v1109 = vpop.f32.mrf.mxu0
        %v1110 = vadd.f32 %v901, %v1109
        %1111 = vmatmul.f32.gmra.mxu0 %v243
        %v1112 = vpop.f32.mrf.mxu0
        %v1113 = vadd.f32 %v904, %v1112
        %1114 = vmatmul.f32.gmra.mxu0 %v245
        %v1115 = vpop.f32.mrf.mxu0
        %v1116 = vadd.f32 %v907, %v1115
        %1117 = vmatmul.f32.gmra.mxu0 %v247
        %v1118 = vpop.f32.mrf.mxu0
        %v1119 = vadd.f32 %v910, %v1118
        %1120 = vmatmul.f32.gmra.mxu0 %v249
        %v1121 = vpop.f32.mrf.mxu0
        %v1122 = vadd.f32 %v913, %v1121
        %1123 = vmatmul.f32.gmra.mxu0 %v251
        %v1124 = vpop.f32.mrf.mxu0
        %v1125 = vadd.f32 %v916, %v1124
        %1126 = vmatmul.f32.gmra.mxu0 %v253
        %v1127 = vpop.f32.mrf.mxu0
        %v1128 = vadd.f32 %v919, %v1127
        %1129 = vmatmul.f32.gmra.mxu0 %v255
        %v1130 = vpop.f32.mrf.mxu0
        %v1131 = vadd.f32 %v922, %v1130
        %1132 = vmatmul.f32.gmra.mxu0 %v257
        %v1133 = vpop.f32.mrf.mxu0
        %v1134 = vadd.f32 %v925, %v1133
        %1135 = vmatmul.f32.gmra.mxu0 %v259
        %v1136 = vpop.f32.mrf.mxu0
        %v1137 = vadd.f32 %v928, %v1136
        %1138 = vmatmul.f32.gmra.mxu0 %v261
        %v1139 = vpop.f32.mrf.mxu0
        %v1140 = vadd.f32 %v931, %v1139
        %1141 = vmatmul.f32.gmra.mxu0 %v263
        %v1142 = vpop.f32.mrf.mxu0
        %v1143 = vadd.f32 %v934, %v1142
        %1144 = vmatmul.f32.gmra.mxu0 %v265
        %v1145 = vpop.f32.mrf.mxu0
        %v1146 = vadd.f32 %v937, %v1145
        %1147 = vmatmul.f32.gmra.mxu0 %v267
        %v1148 = vpop.f32.mrf.mxu0
        %v1149 = vadd.f32 %v940, %v1148
        %1150 = vmatmul.f32.gmra.mxu0 %v269
        %v1151 = vpop.f32.mrf.mxu0
        %v1152 = vadd.f32 %v943, %v1151
        %1153 = vmatmul.f32.gmra.mxu0 %v271
        %v1154 = vpop.f32.mrf.mxu0
        %v1155 = vadd.f32 %v946, %v1154
        %1156 = vmatmul.f32.gmra.mxu0 %v273
        %v1157 = vpop.f32.mrf.mxu0
        %v1158 = vadd.f32 %v949, %v1157
        %1159 = vmatmul.f32.gmra.mxu0 %v275
        %v1160 = vpop.f32.mrf.mxu0
        %v1161 = vadd.f32 %v952, %v1160
        %1162 = vmatmul.f32.gmra.mxu0 %v277
        %v1163 = vpop.f32.mrf.mxu0
        %v1164 = vadd.f32 %v955, %v1163
        %1165 = vmatmul.f32.gmra.mxu0 %v279
        %v1166 = vpop.f32.mrf.mxu0
        %v1167 = vadd.f32 %v958, %v1166
        %1168 = vmatmul.f32.gmra.mxu0 %v281
        %v1169 = vpop.f32.mrf.mxu0
        %v1170 = vadd.f32 %v961, %v1169
        %1171 = vmatmul.f32.gmra.mxu0 %v283
        %v1172 = vpop.f32.mrf.mxu0
        %v1173 = vadd.f32 %v964, %v1172
        %1174 = vmatmul.f32.gmra.mxu0 %v285
        %v1175 = vpop.f32.mrf.mxu0
        %v1176 = vadd.f32 %v967, %v1175
        %1177 = vmatmul.f32.gmra.mxu0 %v287
        %v1178 = vpop.f32.mrf.mxu0
        %v1179 = vadd.f32 %v970, %v1178
        %1180 = vmatmul.f32.gmra.mxu0 %v289
        %v1181 = vpop.f32.mrf.mxu0
        %v1182 = vadd.f32 %v973, %v1181
        %1183 = vmatmul.f32.gmra.mxu0 %v291
        %v1184 = vpop.f32.mrf.mxu0
        %v1185 = vadd.f32 %v976, %v1184
        %1186 = vmatmul.f32.gmra.mxu0 %v293
        %v1187 = vpop.f32.mrf.mxu0
        %v1188 = vadd.f32 %v979, %v1187
        %1189 = vmatmul.f32.gmra.mxu0 %v295
        %v1190 = vpop.f32.mrf.mxu0
        %v1191 = vadd.f32 %v982, %v1190
        %1192 = vmatmul.f32.gmra.mxu0 %v297
        %v1193 = vpop.f32.mrf.mxu0
        %v1194 = vadd.f32 %v985, %v1193
        %1195 = vmatmul.f32.gmra.mxu0 %v299
        %v1196 = vpop.f32.mrf.mxu0
        %v1197 = vadd.f32 %v988, %v1196
        %1198 = vmatmul.f32.gmra.mxu0 %v301
        %v1199 = vpop.f32.mrf.mxu0
        %v1200 = vadd.f32 %v991, %v1199
        %1201 = vdwg.mxu0
        %v1202 = vmax.f32 %v593, 0.0
        %v1203 = vmax.f32 %v1011, 0.0
        %v1204 = vmax.f32 %v596, 0.0
        %v1205 = vmax.f32 %v1014, 0.0
        %v1206 = vmax.f32 %v599, 0.0
        %v1207 = vmax.f32 %v1017, 0.0
        %v1208 = vmax.f32 %v602, 0.0
        %v1209 = vmax.f32 %v1020, 0.0
        %v1210 = vmax.f32 %v605, 0.0
        %v1211 = vmax.f32 %v1023, 0.0
        %v1212 = vmax.f32 %v608, 0.0
        %v1213 = vmax.f32 %v1026, 0.0
        %v1214 = vmax.f32 %v611, 0.0
        %v1215 = vmax.f32 %v1029, 0.0
        %v1216 = vmax.f32 %v614, 0.0
        %v1217 = vmax.f32 %v1032, 0.0
        %v1218 = vmax.f32 %v617, 0.0
        %v1219 = vmax.f32 %v1035, 0.0
        %v1220 = vmax.f32 %v620, 0.0
        %v1221 = vmax.f32 %v1038, 0.0
        %v1222 = vmax.f32 %v623, 0.0
        %v1223 = vmax.f32 %v1041, 0.0
        %v1224 = vmax.f32 %v626, 0.0
        %v1225 = vmax.f32 %v1044, 0.0
        %v1226 = vmax.f32 %v629, 0.0
        %v1227 = vmax.f32 %v1047, 0.0
        %v1228 = vmax.f32 %v632, 0.0
        %v1229 = vmax.f32 %v1050, 0.0
        %v1230 = vmax.f32 %v635, 0.0
        %v1231 = vmax.f32 %v1053, 0.0
        %v1232 = vmax.f32 %v638, 0.0
        %v1233 = vmax.f32 %v1056, 0.0
        %v1234 = vmax.f32 %v641, 0.0
        %v1235 = vmax.f32 %v1059, 0.0
        %v1236 = vmax.f32 %v644, 0.0
        %v1237 = vmax.f32 %v1062, 0.0
        %v1238 = vmax.f32 %v647, 0.0
        %v1239 = vmax.f32 %v1065, 0.0
        %v1240 = vmax.f32 %v650, 0.0
        %v1241 = vmax.f32 %v1068, 0.0
        %v1242 = vmax.f32 %v653, 0.0
        %v1243 = vmax.f32 %v1071, 0.0
        %v1244 = vmax.f32 %v656, 0.0
        %v1245 = vmax.f32 %v1074, 0.0
        %v1246 = vmax.f32 %v659, 0.0
        %v1247 = vmax.f32 %v1077, 0.0
        %v1248 = vmax.f32 %v662, 0.0
        %v1249 = vmax.f32 %v1080, 0.0
        %v1250 = vmax.f32 %v665, 0.0
        %v1251 = vmax.f32 %v1083, 0.0
        %v1252 = vmax.f32 %v668, 0.0
        %v1253 = vmax.f32 %v1086, 0.0
        %v1254 = vmax.f32 %v671, 0.0
        %v1255 = vmax.f32 %v1089, 0.0
        %v1256 = vmax.f32 %v674, 0.0
        %v1257 = vmax.f32 %v1092, 0.0
        %v1258 = vmax.f32 %v677, 0.0
        %v1259 = vmax.f32 %v1095, 0.0
        %v1260 = vmax.f32 %v680, 0.0
        %v1261 = vmax.f32 %v1098, 0.0
        %v1262 = vmax.f32 %v683, 0.0
        %v1263 = vmax.f32 %v1101, 0.0
        %v1264 = vmax.f32 %v686, 0.0
        %v1265 = vmax.f32 %v1104, 0.0
        %v1266 = vmax.f32 %v689, 0.0
        %v1267 = vmax.f32 %v1107, 0.0
        %v1268 = vmax.f32 %v692, 0.0
        %v1269 = vmax.f32 %v1110, 0.0
        %v1270 = vmax.f32 %v695, 0.0
        %v1271 = vmax.f32 %v1113, 0.0
        %v1272 = vmax.f32 %v698, 0.0
        %v1273 = vmax.f32 %v1116, 0.0
        %v1274 = vmax.f32 %v701, 0.0
        %v1275 = vmax.f32 %v1119, 0.0
        %v1276 = vmax.f32 %v704, 0.0
        %v1277 = vmax.f32 %v1122, 0.0
        %v1278 = vmax.f32 %v707, 0.0
        %v1279 = vmax.f32 %v1125, 0.0
        %v1280 = vmax.f32 %v710, 0.0
        %v1281 = vmax.f32 %v1128, 0.0
        %v1282 = vmax.f32 %v713, 0.0
        %v1283 = vmax.f32 %v1131, 0.0
        %v1284 = vmax.f32 %v716, 0.0
        %v1285 = vmax.f32 %v1134, 0.0
        %v1286 = vmax.f32 %v719, 0.0
        %v1287 = vmax.f32 %v1137, 0.0
        %v1288 = vmax.f32 %v722, 0.0
        %v1289 = vmax.f32 %v1140, 0.0
        %v1290 = vmax.f32 %v725, 0.0
        %v1291 = vmax.f32 %v1143, 0.0
        %v1292 = vmax.f32 %v728, 0.0
        %v1293 = vmax.f32 %v1146, 0.0
        %v1294 = vmax.f32 %v731, 0.0
        %v1295 = vmax.f32 %v1149, 0.0
        %v1296 = vmax.f32 %v734, 0.0
        %v1297 = vmax.f32 %v1152, 0.0
        %v1298 = vmax.f32 %v737, 0.0
        %v1299 = vmax.f32 %v1155, 0.0
        %v1300 = vmax.f32 %v740, 0.0
        %v1301 = vmax.f32 %v1158, 0.0
        %v1302 = vmax.f32 %v743, 0.0
        %v1303 = vmax.f32 %v1161, 0.0
        %v1304 = vmax.f32 %v746, 0.0
        %v1305 = vmax.f32 %v1164, 0.0
        %v1306 = vmax.f32 %v749, 0.0
        %v1307 = vmax.f32 %v1167, 0.0
        %v1308 = vmax.f32 %v752, 0.0
        %v1309 = vmax.f32 %v1170, 0.0
        %v1310 = vmax.f32 %v755, 0.0
        %v1311 = vmax.f32 %v1173, 0.0
        %v1312 = vmax.f32 %v758, 0.0
        %v1313 = vmax.f32 %v1176, 0.0
        %v1314 = vmax.f32 %v761, 0.0
        %v1315 = vmax.f32 %v1179, 0.0
        %v1316 = vmax.f32 %v764, 0.0
        %v1317 = vmax.f32 %v1182, 0.0
        %v1318 = vmax.f32 %v767, 0.0
        %v1319 = vmax.f32 %v1185, 0.0
        %v1320 = vmax.f32 %v770, 0.0
        %v1321 = vmax.f32 %v1188, 0.0
        %v1322 = vmax.f32 %v773, 0.0
        %v1323 = vmax.f32 %v1191, 0.0
        %v1324 = vmax.f32 %v776, 0.0
        %v1325 = vmax.f32 %v1194, 0.0
        %v1326 = vmax.f32 %v779, 0.0
        %v1327 = vmax.f32 %v1197, 0.0
        %v1328 = vmax.f32 %v782, 0.0
        %v1329 = vmax.f32 %v1200, 0.0
        %1330 = vst [vmem:[%s150] sm:$0xff] %v1202
        %vm1331 = vcmask 261120
        %1332 = vst.msk [vmem:[%s150 + $0x8] sm:$0xff] %vm1331, %v1203
        %1333 = vst [vmem:[%s150 + $0x10] sm:$0xff] %v1204
        %1334 = vst.msk [vmem:[%s150 + $0x18] sm:$0xff] %vm1331, %v1205
        %1335 = vst [vmem:[%s150 + $0x20] sm:$0xff] %v1206
        %1336 = vst.msk [vmem:[%s150 + $0x28] sm:$0xff] %vm1331, %v1207
        %1337 = vst [vmem:[%s150 + $0x30] sm:$0xff] %v1208
        %1338 = vst.msk [vmem:[%s150 + $0x38] sm:$0xff] %vm1331, %v1209
        %1339 = vst [vmem:[%s150 + $0x40] sm:$0xff] %v1210
        %1340 = vst.msk [vmem:[%s150 + $0x48] sm:$0xff] %vm1331, %v1211
        %1341 = vst [vmem:[%s150 + $0x50] sm:$0xff] %v1212
        %1342 = vst.msk [vmem:[%s150 + $0x58] sm:$0xff] %vm1331, %v1213
        %1343 = vst [vmem:[%s150 + $0x60] sm:$0xff] %v1214
        %1344 = vst.msk [vmem:[%s150 + $0x68] sm:$0xff] %vm1331, %v1215
        %1345 = vst [vmem:[%s150 + $0x70] sm:$0xff] %v1216
        %1346 = vst.msk [vmem:[%s150 + $0x78] sm:$0xff] %vm1331, %v1217
        %1347 = vst [vmem:[%s150 + $0x80] sm:$0xff] %v1218
        %1348 = vst.msk [vmem:[%s150 + $0x88] sm:$0xff] %vm1331, %v1219
        %1349 = vst [vmem:[%s150 + $0x90] sm:$0xff] %v1220
        %1350 = vst.msk [vmem:[%s150 + $0x98] sm:$0xff] %vm1331, %v1221
        %1351 = vst [vmem:[%s150 + $0xa0] sm:$0xff] %v1222
        %1352 = vst.msk [vmem:[%s150 + $0xa8] sm:$0xff] %vm1331, %v1223
        %1353 = vst [vmem:[%s150 + $0xb0] sm:$0xff] %v1224
        %1354 = vst.msk [vmem:[%s150 + $0xb8] sm:$0xff] %vm1331, %v1225
        %1355 = vst [vmem:[%s150 + $0xc0] sm:$0xff] %v1226
        %1356 = vst.msk [vmem:[%s150 + $0xc8] sm:$0xff] %vm1331, %v1227
        %1357 = vst [vmem:[%s150 + $0xd0] sm:$0xff] %v1228
        %1358 = vst.msk [vmem:[%s150 + $0xd8] sm:$0xff] %vm1331, %v1229
        %1359 = vst [vmem:[%s150 + $0xe0] sm:$0xff] %v1230
        %1360 = vst.msk [vmem:[%s150 + $0xe8] sm:$0xff] %vm1331, %v1231
        %1361 = vst [vmem:[%s150 + $0xf0] sm:$0xff] %v1232
        %1362 = vst.msk [vmem:[%s150 + $0xf8] sm:$0xff] %vm1331, %v1233
        %1363 = vst [vmem:[%s150 + $0x100] sm:$0xff] %v1234
        %1364 = vst.msk [vmem:[%s150 + $0x108] sm:$0xff] %vm1331, %v1235
        %1365 = vst [vmem:[%s150 + $0x110] sm:$0xff] %v1236
        %1366 = vst.msk [vmem:[%s150 + $0x118] sm:$0xff] %vm1331, %v1237
        %1367 = vst [vmem:[%s150 + $0x120] sm:$0xff] %v1238
        %1368 = vst.msk [vmem:[%s150 + $0x128] sm:$0xff] %vm1331, %v1239
        %1369 = vst [vmem:[%s150 + $0x130] sm:$0xff] %v1240
        %1370 = vst.msk [vmem:[%s150 + $0x138] sm:$0xff] %vm1331, %v1241
        %1371 = vst [vmem:[%s150 + $0x140] sm:$0xff] %v1242
        %1372 = vst.msk [vmem:[%s150 + $0x148] sm:$0xff] %vm1331, %v1243
        %1373 = vst [vmem:[%s150 + $0x150] sm:$0xff] %v1244
        %1374 = vst.msk [vmem:[%s150 + $0x158] sm:$0xff] %vm1331, %v1245
        %1375 = vst [vmem:[%s150 + $0x160] sm:$0xff] %v1246
        %1376 = vst.msk [vmem:[%s150 + $0x168] sm:$0xff] %vm1331, %v1247
        %1377 = vst [vmem:[%s150 + $0x170] sm:$0xff] %v1248
        %1378 = vst.msk [vmem:[%s150 + $0x178] sm:$0xff] %vm1331, %v1249
        %1379 = vst [vmem:[%s150 + $0x180] sm:$0xff] %v1250
        %1380 = vst.msk [vmem:[%s150 + $0x188] sm:$0xff] %vm1331, %v1251
        %1381 = vst [vmem:[%s150 + $0x190] sm:$0xff] %v1252
        %1382 = vst.msk [vmem:[%s150 + $0x198] sm:$0xff] %vm1331, %v1253
        %1383 = vst [vmem:[%s150 + $0x1a0] sm:$0xff] %v1254
        %1384 = vst.msk [vmem:[%s150 + $0x1a8] sm:$0xff] %vm1331, %v1255
        %1385 = vst [vmem:[%s150 + $0x1b0] sm:$0xff] %v1256
        %1386 = vst.msk [vmem:[%s150 + $0x1b8] sm:$0xff] %vm1331, %v1257
        %1387 = vst [vmem:[%s150 + $0x1c0] sm:$0xff] %v1258
        %1388 = vst.msk [vmem:[%s150 + $0x1c8] sm:$0xff] %vm1331, %v1259
        %1389 = vst [vmem:[%s150 + $0x1d0] sm:$0xff] %v1260
        %1390 = vst.msk [vmem:[%s150 + $0x1d8] sm:$0xff] %vm1331, %v1261
        %1391 = vst [vmem:[%s150 + $0x1e0] sm:$0xff] %v1262
        %1392 = vst.msk [vmem:[%s150 + $0x1e8] sm:$0xff] %vm1331, %v1263
        %1393 = vst [vmem:[%s150 + $0x1f0] sm:$0xff] %v1264
        %1394 = vst.msk [vmem:[%s150 + $0x1f8] sm:$0xff] %vm1331, %v1265
        %1395 = vst [vmem:[%s150 + $0x200] sm:$0xff] %v1266
        %1396 = vst.msk [vmem:[%s150 + $0x208] sm:$0xff] %vm1331, %v1267
        %1397 = vst [vmem:[%s150 + $0x210] sm:$0xff] %v1268
        %1398 = vst.msk [vmem:[%s150 + $0x218] sm:$0xff] %vm1331, %v1269
        %1399 = vst [vmem:[%s150 + $0x220] sm:$0xff] %v1270
        %1400 = vst.msk [vmem:[%s150 + $0x228] sm:$0xff] %vm1331, %v1271
        %1401 = vst [vmem:[%s150 + $0x230] sm:$0xff] %v1272
        %1402 = vst.msk [vmem:[%s150 + $0x238] sm:$0xff] %vm1331, %v1273
        %1403 = vst [vmem:[%s150 + $0x240] sm:$0xff] %v1274
        %1404 = vst.msk [vmem:[%s150 + $0x248] sm:$0xff] %vm1331, %v1275
        %1405 = vst [vmem:[%s150 + $0x250] sm:$0xff] %v1276
        %1406 = vst.msk [vmem:[%s150 + $0x258] sm:$0xff] %vm1331, %v1277
        %1407 = vst [vmem:[%s150 + $0x260] sm:$0xff] %v1278
        %1408 = vst.msk [vmem:[%s150 + $0x268] sm:$0xff] %vm1331, %v1279
        %1409 = vst [vmem:[%s150 + $0x270] sm:$0xff] %v1280
        %1410 = vst.msk [vmem:[%s150 + $0x278] sm:$0xff] %vm1331, %v1281
        %1411 = vst [vmem:[%s150 + $0x280] sm:$0xff] %v1282
        %1412 = vst.msk [vmem:[%s150 + $0x288] sm:$0xff] %vm1331, %v1283
        %1413 = vst [vmem:[%s150 + $0x290] sm:$0xff] %v1284
        %1414 = vst.msk [vmem:[%s150 + $0x298] sm:$0xff] %vm1331, %v1285
        %1415 = vst [vmem:[%s150 + $0x2a0] sm:$0xff] %v1286
        %1416 = vst.msk [vmem:[%s150 + $0x2a8] sm:$0xff] %vm1331, %v1287
        %1417 = vst [vmem:[%s150 + $0x2b0] sm:$0xff] %v1288
        %1418 = vst.msk [vmem:[%s150 + $0x2b8] sm:$0xff] %vm1331, %v1289
        %1419 = vst [vmem:[%s150 + $0x2c0] sm:$0xff] %v1290
        %1420 = vst.msk [vmem:[%s150 + $0x2c8] sm:$0xff] %vm1331, %v1291
        %1421 = vst [vmem:[%s150 + $0x2d0] sm:$0xff] %v1292
        %1422 = vst.msk [vmem:[%s150 + $0x2d8] sm:$0xff] %vm1331, %v1293
        %1423 = vst [vmem:[%s150 + $0x2e0] sm:$0xff] %v1294
        %1424 = vst.msk [vmem:[%s150 + $0x2e8] sm:$0xff] %vm1331, %v1295
        %1425 = vst [vmem:[%s150 + $0x2f0] sm:$0xff] %v1296
        %1426 = vst.msk [vmem:[%s150 + $0x2f8] sm:$0xff] %vm1331, %v1297
        %1427 = vst [vmem:[%s150 + $0x300] sm:$0xff] %v1298
        %1428 = vst.msk [vmem:[%s150 + $0x308] sm:$0xff] %vm1331, %v1299
        %1429 = vst [vmem:[%s150 + $0x310] sm:$0xff] %v1300
        %1430 = vst.msk [vmem:[%s150 + $0x318] sm:$0xff] %vm1331, %v1301
        %1431 = vst [vmem:[%s150 + $0x320] sm:$0xff] %v1302
        %1432 = vst.msk [vmem:[%s150 + $0x328] sm:$0xff] %vm1331, %v1303
        %1433 = vst [vmem:[%s150 + $0x330] sm:$0xff] %v1304
        %1434 = vst.msk [vmem:[%s150 + $0x338] sm:$0xff] %vm1331, %v1305
        %1435 = vst [vmem:[%s150 + $0x340] sm:$0xff] %v1306
        %1436 = vst.msk [vmem:[%s150 + $0x348] sm:$0xff] %vm1331, %v1307
        %1437 = vst [vmem:[%s150 + $0x350] sm:$0xff] %v1308
        %1438 = vst.msk [vmem:[%s150 + $0x358] sm:$0xff] %vm1331, %v1309
        %1439 = vst [vmem:[%s150 + $0x360] sm:$0xff] %v1310
        %1440 = vst.msk [vmem:[%s150 + $0x368] sm:$0xff] %vm1331, %v1311
        %1441 = vst [vmem:[%s150 + $0x370] sm:$0xff] %v1312
        %1442 = vst.msk [vmem:[%s150 + $0x378] sm:$0xff] %vm1331, %v1313
        %1443 = vst [vmem:[%s150 + $0x380] sm:$0xff] %v1314
        %1444 = vst.msk [vmem:[%s150 + $0x388] sm:$0xff] %vm1331, %v1315
        %1445 = vst [vmem:[%s150 + $0x390] sm:$0xff] %v1316
        %1446 = vst.msk [vmem:[%s150 + $0x398] sm:$0xff] %vm1331, %v1317
        %1447 = vst [vmem:[%s150 + $0x3a0] sm:$0xff] %v1318
        %1448 = vst.msk [vmem:[%s150 + $0x3a8] sm:$0xff] %vm1331, %v1319
        %1449 = vst [vmem:[%s150 + $0x3b0] sm:$0xff] %v1320
        %1450 = vst.msk [vmem:[%s150 + $0x3b8] sm:$0xff] %vm1331, %v1321
        %1451 = vst [vmem:[%s150 + $0x3c0] sm:$0xff] %v1322
        %1452 = vst.msk [vmem:[%s150 + $0x3c8] sm:$0xff] %vm1331, %v1323
        %1453 = vst [vmem:[%s150 + $0x3d0] sm:$0xff] %v1324
        %1454 = vst.msk [vmem:[%s150 + $0x3d8] sm:$0xff] %vm1331, %v1325
        %1455 = vst [vmem:[%s150 + $0x3e0] sm:$0xff] %v1326
        %1456 = vst.msk [vmem:[%s150 + $0x3e8] sm:$0xff] %vm1331, %v1327
        %1457 = vst [vmem:[%s150 + $0x3f0] sm:$0xff] %v1328
        %1458 = vst.msk [vmem:[%s150 + $0x3f8] sm:$0xff] %vm1331, %v1329
        %s1459 = sand.u32 %s68, 1
        %s1460 = sand.u32 %s68, 1
        %s1461 = smul.addr %s1460, 1024
        %s1462 = scalar_lea.vmem [#allocation2], %s1461
        // Predicated region
        $region29: #{ens_dqn_forward.5} parent=27 // pred_check
          %p1463 = pneg %p78
        $region30: #{ens_dqn_forward.5} parent=27 // pred_check_branch
          %1465 = sbr.rel (%p1463) target = $region32
        $region31: #{ens_dqn_forward.5} parent=27 // pred_region
          %s1466 = smul.u32 64, %s13
          %s1467 = ssub.s32 100, %s1466
          %p1468 = scmp.lt.s32.totalorder %s1467, 64
          %s1469 = scalar_select %p1468, %s1467, 64
          %s1470 = smul.u32 8, %s1469
          %s1471 = smul.u32 %s1470, 2
          %p1472 = scmp.ne.s32.totalorder 0, %s1471
          %s1473 = smul.addr %s1466, 2
          %s1474 = smul.addr %s1473, 8
          %s1475 = scalar_lea.vmem %s2, %s1474
          // Predicated region
          $region33: #{ens_dqn_forward.5} parent=31 // pred_check
            %p1476 = pneg %p1472
          $region34: #{ens_dqn_forward.5} parent=31 // pred_check_branch
            %1478 = sbr.rel (%p1476) target = $region36
          $region35: #{ens_dqn_forward.5} parent=31 // pred_region
            // Predicated region
            $region37: #{ens_dqn_forward.5} parent=35 // pred_check
              _
            $region38: #{ens_dqn_forward.5} parent=35 // pred_check_branch
              %1480 = sbr.rel (0) target = $region40
            $region39: #{ens_dqn_forward.5} parent=35 // pred_region
              %s1481 = sshrl.u32 %s1469, 4
              // While loop
              $region41: #{ens_dqn_forward.5} parent=39 // loop_pre_header
                _
              $region42: #{ens_dqn_forward.5} parent=39 // loop_header
                %s1483 = sphi 0, %s1485
                %p1484 = scmp.ge.s32.totalorder %s1483, %s1481
                %s1488 = sphi 0, %s1557
                %s1489 = sphi %s1462, %s1560
                %s1490 = sphi %s1475, %s1561
              $region43: #{ens_dqn_forward.5} parent=39 // loop_header_branch
                %1487 = sbr.rel (%p1484) target = $region47
              $region44: #{ens_dqn_forward.5} parent=39 // loop_body
                %v1491 = vld [vmem:[%s1489] sm:$0xff]
                %1492 = vst [vmem:[%s1490] sm:$0xff] %v1491
                %v1493 = vld [vmem:[%s1489 + $0x10] sm:$0xff]
                %1494 = vst [vmem:[%s1490 + $0x10] sm:$0xff] %v1493
                %v1495 = vld [vmem:[%s1489 + $0x20] sm:$0xff]
                %1496 = vst [vmem:[%s1490 + $0x20] sm:$0xff] %v1495
                %v1497 = vld [vmem:[%s1489 + $0x30] sm:$0xff]
                %1498 = vst [vmem:[%s1490 + $0x30] sm:$0xff] %v1497
                %v1499 = vld [vmem:[%s1489 + $0x40] sm:$0xff]
                %1500 = vst [vmem:[%s1490 + $0x40] sm:$0xff] %v1499
                %v1501 = vld [vmem:[%s1489 + $0x50] sm:$0xff]
                %1502 = vst [vmem:[%s1490 + $0x50] sm:$0xff] %v1501
                %v1503 = vld [vmem:[%s1489 + $0x60] sm:$0xff]
                %1504 = vst [vmem:[%s1490 + $0x60] sm:$0xff] %v1503
                %v1505 = vld [vmem:[%s1489 + $0x70] sm:$0xff]
                %1506 = vst [vmem:[%s1490 + $0x70] sm:$0xff] %v1505
                %v1507 = vld [vmem:[%s1489 + $0x80] sm:$0xff]
                %1508 = vst [vmem:[%s1490 + $0x80] sm:$0xff] %v1507
                %v1509 = vld [vmem:[%s1489 + $0x90] sm:$0xff]
                %1510 = vst [vmem:[%s1490 + $0x90] sm:$0xff] %v1509
                %v1511 = vld [vmem:[%s1489 + $0xa0] sm:$0xff]
                %1512 = vst [vmem:[%s1490 + $0xa0] sm:$0xff] %v1511
                %v1513 = vld [vmem:[%s1489 + $0xb0] sm:$0xff]
                %1514 = vst [vmem:[%s1490 + $0xb0] sm:$0xff] %v1513
                %v1515 = vld [vmem:[%s1489 + $0xc0] sm:$0xff]
                %1516 = vst [vmem:[%s1490 + $0xc0] sm:$0xff] %v1515
                %v1517 = vld [vmem:[%s1489 + $0xd0] sm:$0xff]
                %1518 = vst [vmem:[%s1490 + $0xd0] sm:$0xff] %v1517
                %v1519 = vld [vmem:[%s1489 + $0xe0] sm:$0xff]
                %1520 = vst [vmem:[%s1490 + $0xe0] sm:$0xff] %v1519
                %v1521 = vld [vmem:[%s1489 + $0xf0] sm:$0xff]
                %1522 = vst [vmem:[%s1490 + $0xf0] sm:$0xff] %v1521
                %v1523 = vld [vmem:[%s1489 + $0x8] sm:$0xff]
                %1524 = vst [vmem:[%s1490 + $0x8] sm:$0xff] %v1523
                %v1525 = vld [vmem:[%s1489 + $0x18] sm:$0xff]
                %1526 = vst [vmem:[%s1490 + $0x18] sm:$0xff] %v1525
                %v1527 = vld [vmem:[%s1489 + $0x28] sm:$0xff]
                %1528 = vst [vmem:[%s1490 + $0x28] sm:$0xff] %v1527
                %v1529 = vld [vmem:[%s1489 + $0x38] sm:$0xff]
                %1530 = vst [vmem:[%s1490 + $0x38] sm:$0xff] %v1529
                %v1531 = vld [vmem:[%s1489 + $0x48] sm:$0xff]
                %1532 = vst [vmem:[%s1490 + $0x48] sm:$0xff] %v1531
                %v1533 = vld [vmem:[%s1489 + $0x58] sm:$0xff]
                %1534 = vst [vmem:[%s1490 + $0x58] sm:$0xff] %v1533
                %v1535 = vld [vmem:[%s1489 + $0x68] sm:$0xff]
                %1536 = vst [vmem:[%s1490 + $0x68] sm:$0xff] %v1535
                %v1537 = vld [vmem:[%s1489 + $0x78] sm:$0xff]
                %1538 = vst [vmem:[%s1490 + $0x78] sm:$0xff] %v1537
                %v1539 = vld [vmem:[%s1489 + $0x88] sm:$0xff]
                %1540 = vst [vmem:[%s1490 + $0x88] sm:$0xff] %v1539
                %v1541 = vld [vmem:[%s1489 + $0x98] sm:$0xff]
                %1542 = vst [vmem:[%s1490 + $0x98] sm:$0xff] %v1541
                %v1543 = vld [vmem:[%s1489 + $0xa8] sm:$0xff]
                %1544 = vst [vmem:[%s1490 + $0xa8] sm:$0xff] %v1543
                %v1545 = vld [vmem:[%s1489 + $0xb8] sm:$0xff]
                %1546 = vst [vmem:[%s1490 + $0xb8] sm:$0xff] %v1545
                %v1547 = vld [vmem:[%s1489 + $0xc8] sm:$0xff]
                %1548 = vst [vmem:[%s1490 + $0xc8] sm:$0xff] %v1547
                %v1549 = vld [vmem:[%s1489 + $0xd8] sm:$0xff]
                %1550 = vst [vmem:[%s1490 + $0xd8] sm:$0xff] %v1549
                %v1551 = vld [vmem:[%s1489 + $0xe8] sm:$0xff]
                %1552 = vst [vmem:[%s1490 + $0xe8] sm:$0xff] %v1551
                %v1553 = vld [vmem:[%s1489 + $0xf8] sm:$0xff]
                %1554 = vst [vmem:[%s1490 + $0xf8] sm:$0xff] %v1553
                %s1555 = sadd.s32 1, %s1488
                %p1556 = scmp.ge.s32.totalorder %s1555, %s1481
                %s1557 = scalar_select %p1556, 0, %s1555
                %s1558 = smul.u32 %s1557, 256
                %s1559 = smul.u32 %s1557, 256
                %s1560 = scalar_lea.vmem %s1462, %s1558 [#allocation2]
                %s1561 = scalar_lea.vmem %s1475, %s1559
              $region45: #{ens_dqn_forward.5} parent=39 // loop_footer
                %s1485 = sadd.s32 %s1483, 1
              $region46: #{ens_dqn_forward.5} parent=39 // loop_footer_branch
                %1482 = sbr.rel target = $region42
              $region47: #{ens_dqn_forward.5} parent=39 // loop_exit
                _
              %s1562 = sshrl.u32 %s1469, 4
              %s1563 = sand.u32 %s1469, 15
              %s1564 = smul.u32 %s1562, 16
              %s1565 = smul.u32 16, %s1564
              %s1566 = scalar_lea.vmem %s1462, %s1565 [#allocation2]
              %s1567 = smul.u32 16, %s1564
              %s1568 = scalar_lea.vmem %s1475, %s1567
              // While loop
              $region48: #{ens_dqn_forward.5} parent=39 // loop_pre_header
                _
              $region49: #{ens_dqn_forward.5} parent=39 // loop_header
                %s1570 = sphi 0, %s1572
                %p1571 = scmp.ge.s32.totalorder %s1570, %s1563
                %s1575 = sphi 0, %s1584
                %s1576 = sphi %s1566, %s1587
                %s1577 = sphi %s1568, %s1588
              $region50: #{ens_dqn_forward.5} parent=39 // loop_header_branch
                %1574 = sbr.rel (%p1571) target = $region54
              $region51: #{ens_dqn_forward.5} parent=39 // loop_body
                %v1578 = vld [vmem:[%s1576] sm:$0xff]
                %1579 = vst [vmem:[%s1577] sm:$0xff] %v1578
                %v1580 = vld [vmem:[%s1576 + $0x8] sm:$0xff]
                %1581 = vst [vmem:[%s1577 + $0x8] sm:$0xff] %v1580
                %s1582 = sadd.s32 1, %s1575
                %p1583 = scmp.ge.s32.totalorder %s1582, %s1563
                %s1584 = scalar_select %p1583, 0, %s1582
                %s1585 = smul.u32 %s1584, 16
                %s1586 = smul.u32 %s1584, 16
                %s1587 = scalar_lea.vmem %s1566, %s1585 [#allocation2]
                %s1588 = scalar_lea.vmem %s1568, %s1586
              $region52: #{ens_dqn_forward.5} parent=39 // loop_footer
                %s1572 = sadd.s32 %s1570, 1
              $region53: #{ens_dqn_forward.5} parent=39 // loop_footer_branch
                %1569 = sbr.rel target = $region49
              $region54: #{ens_dqn_forward.5} parent=39 // loop_exit
                _
            $region40: #{ens_dqn_forward.5} parent=35 // pred_fallthru
              _
            // Predicated region
            $region55: #{ens_dqn_forward.5} parent=35 // pred_check
              _
            $region56: #{ens_dqn_forward.5} parent=35 // pred_check_branch
              %1590 = sbr.rel target = $region58
            $region57: #{ens_dqn_forward.5} parent=35 // pred_region
              _
            $region58: #{ens_dqn_forward.5} parent=35 // pred_fallthru
              _
          $region36: #{ens_dqn_forward.5} parent=31 // pred_fallthru
            _
          %1591 = vnop
        $region32: #{ens_dqn_forward.5} parent=27 // pred_fallthru
          _
      $region28: #{ens_dqn_forward.5} parent=5 // pred_fallthru
        _
      %p1592 = scmp.le.s32.totalorder 2, %s8
      // Predicated region
      $region59: #{ens_dqn_forward.5} parent=5 // pred_check
        %p1593 = pneg %p1592
      $region60: #{ens_dqn_forward.5} parent=5 // pred_check_branch
        %1595 = sbr.rel (%p1593) target = $region62
      $region61: #{ens_dqn_forward.5} parent=5 // pred_region
        %s1596 = ssub.s32 %s8, 2
        // Predicated region
        $region63: #{ens_dqn_forward.5} parent=61 // pred_check
          %p1597 = pneg %p84
        $region64: #{ens_dqn_forward.5} parent=61 // pred_check_branch
          %1599 = sbr.rel (%p1597) target = $region66
        $region65: #{ens_dqn_forward.5} parent=61 // pred_region
          %s1600 = sand.u32 %s69, 1
          %s1601 = sand.u32 %s69, 1
          %s1602 = smul.addr %s1601, 1024
          %s1603 = scalar_lea.vmem [#allocation2], %s1602
        $region66: #{ens_dqn_forward.5} parent=61 // pred_fallthru
          _
      $region62: #{ens_dqn_forward.5} parent=5 // pred_fallthru
        _
    $region6: #{ens_dqn_forward.5} parent=1 // loop_footer
      %s12 = sadd.s32 1, %s8
    $region7: #{ens_dqn_forward.5} parent=1 // loop_footer_branch
      %7 = sbr.rel target = $region3
    $region8: #{ens_dqn_forward.5} parent=1 // loop_exit
      _

// kernel: ens_dqn_forward.6
$region0: #{ens_dqn_forward.6}
  #allocation0 [shape = 'u32[]', space=smem, size = 0x4, offset = 0x4, fixed_abs, tag = 'smem constant byte address 0x4 - core index']
  #allocation1 [shape = 'u32[72,128]{1,0:T(1,128)}', space=vmem, size = 0x9000, scoped, tag = 'internal scratch']
  %s0 = inlined_call_operand.vmem [shape: f32[5,162,512], index: 0, kind: input, shape index: {}]
  %s1 = inlined_call_operand.vmem [shape: f32[5,512,64], index: 1, kind: input, shape index: {}]
  %s2 = inlined_call_operand.vmem [shape: f32[5,162,64], index: 2, kind: output, shape index: {}]
  %s3 = sld [smem:[#allocation0]]
  $region41: #{ens_dqn_forward.6} parent=0
    _
  %s5 = ssub.s32 1, %s3
  %s6 = scalar_select 0, %s5, %s3
  loop: start=0, step=1, limit=7
  $region2: #{ens_dqn_forward.6} parent=0 // loop_pre_header
    _
  $region3: #{ens_dqn_forward.6} parent=0 // loop_header
    %s8 = sphi 0, %s12
    %p9 = scmp.ge.s32.totalorder %s8, 7
    %s15 = sphi 0, %s27
    %s16 = sphi 0, %s23
    %s17 = sphi 0, %s15
    %s18 = sphi 0, %s16
    %s19 = sphi 0, %s17
    %s20 = sphi 0, %s18
    %s32 = sphi 0, %s34
    %s35 = sphi 0, %s32
    %s36 = sphi 0, %s35
    %s52 = sphi 0, %s36
    %s58 = sphi 0, %s60
    %s61 = sphi 0, %s58
    %s62 = sphi 0, %s61
    %s78 = sphi 0, %s62
    %s86 = sphi 0, %s88
    %s89 = sphi 0, %s86
    %s90 = sphi 0, %s89
    %s106 = sphi 0, %s90
  $region4: #{ens_dqn_forward.6} parent=0 // loop_header_branch
    %11 = sbr.rel (%p9) target = $region8
  $region5: #{ens_dqn_forward.6} parent=0 // loop_body
    %s13 = ssub.s32 %s8, 1
    %s14 = ssub.s32 %s8, 2
    %s21 = sadd.s32 1, %s16
    %p22 = scmp.ge.s32.totalorder %s21, 1
    %s23 = scalar_select %p22, 0, %s21
    %s24 = sadd.s32 1, %s15
    %s25 = scalar_select %p22, %s24, %s15
    %p26 = scmp.ge.s32.totalorder %s25, 5
    %s27 = scalar_select %p26, 0, %s25
    %s28 = ssub.s32 %s15, %s27
    %s29 = ssub.s32 %s16, %s23
    %s30 = sor.u32 %s28, %s29
    %p31 = scmp.eq.s32.totalorder %s30, 0
    %s33 = sadd.s32 %s32, 1
    %s34 = scalar_select %p31, %s32, %s33
    %p37 = pneg %p31
    %p38 = scmp.eq.s32.totalorder %s8, 4
    %p39 = por %p37, %p38
    %p40 = scmp.ne.s32.totalorder %s32, %s35
    %p41 = scmp.eq.s32.totalorder %s8, 0
    %p42 = por %p40, %p41
    %p43 = scmp.ne.s32.totalorder %s32, %s35
    %p44 = scmp.eq.s32.totalorder %s13, 4
    %p45 = por %p43, %p44
    %p46 = scmp.ne.s32.totalorder %s35, %s36
    %p47 = scmp.eq.s32.totalorder %s13, 0
    %p48 = por %p46, %p47
    %p49 = scmp.ne.s32.totalorder %s35, %s36
    %p50 = scmp.eq.s32.totalorder %s14, 4
    %p51 = por %p49, %p50
    %p53 = scmp.ne.s32.totalorder %s36, %s52
    %p54 = scmp.eq.s32.totalorder %s14, 0
    %p55 = por %p53, %p54
    %s56 = ssub.s32 %s15, %s27
    %p57 = scmp.eq.s32.totalorder %s56, 0
    %s59 = sadd.s32 %s58, 1
    %s60 = scalar_select %p57, %s58, %s59
    %p63 = pneg %p57
    %p64 = scmp.eq.s32.totalorder %s8, 4
    %p65 = por %p63, %p64
    %p66 = scmp.ne.s32.totalorder %s58, %s61
    %p67 = scmp.eq.s32.totalorder %s8, 0
    %p68 = por %p66, %p67
    %p69 = scmp.ne.s32.totalorder %s58, %s61
    %p70 = scmp.eq.s32.totalorder %s13, 4
    %p71 = por %p69, %p70
    %p72 = scmp.ne.s32.totalorder %s61, %s62
    %p73 = scmp.eq.s32.totalorder %s13, 0
    %p74 = por %p72, %p73
    %p75 = scmp.ne.s32.totalorder %s61, %s62
    %p76 = scmp.eq.s32.totalorder %s14, 4
    %p77 = por %p75, %p76
    %p79 = scmp.ne.s32.totalorder %s62, %s78
    %p80 = scmp.eq.s32.totalorder %s14, 0
    %p81 = por %p79, %p80
    %s82 = ssub.s32 %s15, %s27
    %s83 = ssub.s32 %s16, %s23
    %s84 = sor.u32 %s82, %s83
    %p85 = scmp.eq.s32.totalorder %s84, 0
    %s87 = sadd.s32 %s86, 1
    %s88 = scalar_select %p85, %s86, %s87
    %p91 = pneg %p85
    %p92 = scmp.eq.s32.totalorder %s8, 4
    %p93 = por %p91, %p92
    %p94 = scmp.ne.s32.totalorder %s86, %s89
    %p95 = scmp.eq.s32.totalorder %s8, 0
    %p96 = por %p94, %p95
    %p97 = scmp.ne.s32.totalorder %s86, %s89
    %p98 = scmp.eq.s32.totalorder %s13, 4
    %p99 = por %p97, %p98
    %p100 = scmp.ne.s32.totalorder %s89, %s90
    %p101 = scmp.eq.s32.totalorder %s13, 0
    %p102 = por %p100, %p101
    %p103 = scmp.ne.s32.totalorder %s89, %s90
    %p104 = scmp.eq.s32.totalorder %s14, 4
    %p105 = por %p103, %p104
    %p107 = scmp.ne.s32.totalorder %s90, %s106
    %p108 = scmp.eq.s32.totalorder %s14, 0
    %p109 = por %p107, %p108
    %p110 = scmp.le.s32.totalorder 1, %s8
    %p111 = scmp.lt.s32.totalorder %s8, 6
    %p112 = pnand %p110, %p111
    %p113 = pneg %p112
    // Predicated region
    $region9: #{ens_dqn_forward.6} parent=5 // pred_check
      _
    $region10: #{ens_dqn_forward.6} parent=5 // pred_check_branch
      %115 = sbr.rel (%p112) target = $region12
    $region11: #{ens_dqn_forward.6} parent=5 // pred_region
      %s116 = ssub.s32 %s8, 1
    $region12: #{ens_dqn_forward.6} parent=5 // pred_fallthru
      _
    %p117 = scmp.lt.s32.totalorder %s8, 5
    // Predicated region
    $region13: #{ens_dqn_forward.6} parent=5 // pred_check
      %p118 = pneg %p117
    $region14: #{ens_dqn_forward.6} parent=5 // pred_check_branch
      %120 = sbr.rel (%p118) target = $region16
    $region15: #{ens_dqn_forward.6} parent=5 // pred_region
      // Predicated region
      $region17: #{ens_dqn_forward.6} parent=15 // pred_check
        %p121 = pneg %p42
      $region18: #{ens_dqn_forward.6} parent=15 // pred_check_branch
        %123 = sbr.rel (%p121) target = $region20
      $region19: #{ens_dqn_forward.6} parent=15 // pred_region
        %s124 = smul.u32 21, %s16
        %p125 = scmp.lt.s32.totalorder %s15, 4
        %s126 = scalar_select %p125, %s15, 4
        %p127 = scmp.lt.s32.totalorder %s124, 20
        %s128 = scalar_select %p127, %s124, 20
        %s129 = smul.addr %s128, 4
        %s130 = smul.addr %s126, 84
        %s131 = sadd.s32 %s129, %s130
        %s132 = smul.addr %s131, 8
        %s133 = scalar_lea.vmem %s0, %s132
        %s134 = smul.u32 21, %s16
      $region20: #{ens_dqn_forward.6} parent=15 // pred_fallthru
        _
      // Predicated region
      $region21: #{ens_dqn_forward.6} parent=15 // pred_check
        %p135 = pneg %p68
      $region22: #{ens_dqn_forward.6} parent=15 // pred_check_branch
        %137 = sbr.rel (%p135) target = $region24
      $region23: #{ens_dqn_forward.6} parent=15 // pred_region
        %p138 = scmp.lt.s32.totalorder %s15, 4
        %s139 = scalar_select %p138, %s15, 4
        %s140 = smul.addr %s139, 64
        %s141 = smul.addr %s140, 8
        %s142 = scalar_lea.vmem %s1, %s141
      $region24: #{ens_dqn_forward.6} parent=15 // pred_fallthru
        _
    $region16: #{ens_dqn_forward.6} parent=5 // pred_fallthru
      _
    %p143 = scmp.le.s32.totalorder 1, %s8
    %p144 = scmp.lt.s32.totalorder %s8, 6
    %p145 = pnand %p143, %p144
    %p146 = pneg %p145
    // Predicated region
    $region25: #{ens_dqn_forward.6} parent=5 // pred_check
      _
    $region26: #{ens_dqn_forward.6} parent=5 // pred_check_branch
      %148 = sbr.rel (%p145) target = $region28
    $region27: #{ens_dqn_forward.6} parent=5 // pred_region
      %s149 = ssub.s32 %s8, 1
      %s150 = smul.u32 21, %s18
      %p151 = scmp.lt.s32.totalorder %s17, 4
      %s152 = scalar_select %p151, %s17, 4
      %p153 = scmp.lt.s32.totalorder %s150, 20
      %s154 = scalar_select %p153, %s150, 20
      %s155 = smul.addr %s154, 4
      %s156 = smul.addr %s152, 84
      %s157 = sadd.s32 %s155, %s156
      %s158 = smul.addr %s157, 8
      %s159 = scalar_lea.vmem %s0, %s158
      %p160 = pneg %p48
      %p161 = pneg %p45
      %p162 = scmp.lt.s32.totalorder %s17, 4
      %s163 = scalar_select %p162, %s17, 4
      %s164 = smul.addr %s163, 64
      %s165 = smul.addr %s164, 8
      %s166 = scalar_lea.vmem %s1, %s165
      %p167 = pneg %p74
      %p168 = pneg %p71
      %p169 = pneg %p102
      %p170 = pneg %p99
      %s171 = smul.u32 21, %s18
      %p172 = scmp.lt.s32.totalorder %s17, 4
      %s173 = scalar_select %p172, %s17, 4
      %p174 = scmp.lt.s32.totalorder %s171, 20
      %s175 = scalar_select %p174, %s171, 20
      %s176 = smul.addr %s173, 21
      %s177 = sadd.s32 %s175, %s176
      %s178 = smul.addr %s177, 8
      %s179 = scalar_lea.vmem %s2, %s178
      %s180 = smul.u32 21, %s18
      %p181 = scmp.lt.s32.totalorder %s17, 4
      %s182 = scalar_select %p181, %s17, 4
      %p183 = scmp.lt.s32.totalorder %s180, 20
      %s184 = scalar_select %p183, %s180, 20
      %s185 = smul.addr %s184, 4
      %s186 = smul.addr %s182, 84
      %s187 = sadd.s32 %s185, %s186
      %s188 = smul.addr %s187, 8
      %s189 = scalar_lea.vmem %s0, %s188
      %s190 = smul.u32 21, %s18
      %p191 = scmp.lt.s32.totalorder %s17, 4
      %s192 = scalar_select %p191, %s17, 4
      %s193 = smul.addr %s192, 64
      %s194 = smul.addr %s193, 8
      %s195 = scalar_lea.vmem %s1, %s194
      %s196 = smul.u32 21, %s18
      %p197 = scmp.lt.s32.totalorder %s17, 4
      %s198 = scalar_select %p197, %s17, 4
      %p199 = scmp.lt.s32.totalorder %s196, 20
      %s200 = scalar_select %p199, %s196, 20
      %s201 = smul.addr %s198, 21
      %s202 = sadd.s32 %s200, %s201
      %s203 = smul.addr %s202, 8
      %s204 = scalar_lea.vmem %s2, %s203
      %s205 = smul.u32 21, %s18
      %v206 = vld [vmem:[%s189] sm:$0xff]
      %v207 = vld [vmem:[%s189 + $0x8] sm:$0xff]
      %v208 = vld [vmem:[%s189 + $0x10] sm:$0xff]
      %v209 = vld [vmem:[%s189 + $0x18] sm:$0xff]
      %v210 = vld [vmem:[%s189 + $0x20] sm:$0xff]
      %v211 = vld [vmem:[%s189 + $0x28] sm:$0xff]
      %v212 = vld [vmem:[%s189 + $0x30] sm:$0xff]
      %v213 = vld [vmem:[%s189 + $0x38] sm:$0xff]
      %v214 = vld [vmem:[%s189 + $0x40] sm:$0xff]
      %v215 = vld [vmem:[%s189 + $0x48] sm:$0xff]
      %v216 = vld [vmem:[%s189 + $0x50] sm:$0xff]
      %v217 = vld [vmem:[%s189 + $0x58] sm:$0xff]
      %v218 = vld [vmem:[%s189 + $0x60] sm:$0xff]
      %v219 = vld [vmem:[%s189 + $0x68] sm:$0xff]
      %v220 = vld [vmem:[%s189 + $0x70] sm:$0xff]
      %v221 = vld [vmem:[%s189 + $0x78] sm:$0xff]
      %v222 = vld [vmem:[%s189 + $0x80] sm:$0xff]
      %v223 = vld [vmem:[%s189 + $0x88] sm:$0xff]
      %v224 = vld [vmem:[%s189 + $0x90] sm:$0xff]
      %v225 = vld [vmem:[%s189 + $0x98] sm:$0xff]
      %v226 = vld [vmem:[%s189 + $0xa0] sm:$0xff]
      %v227 = vld [vmem:[%s189 + $0xa8] sm:$0xff]
      %v228 = vld [vmem:[%s189 + $0xb0] sm:$0xff]
      %v229 = vld [vmem:[%s189 + $0xb8] sm:$0xff]
      %v230 = vld [vmem:[%s189 + $0xc0] sm:$0xff]
      %v231 = vld [vmem:[%s189 + $0xc8] sm:$0xff]
      %v232 = vld [vmem:[%s189 + $0xd0] sm:$0xff]
      %v233 = vld [vmem:[%s189 + $0xd8] sm:$0xff]
      %v234 = vld [vmem:[%s189 + $0xe0] sm:$0xff]
      %v235 = vld [vmem:[%s189 + $0xe8] sm:$0xff]
      %v236 = vld [vmem:[%s189 + $0xf0] sm:$0xff]
      %v237 = vld [vmem:[%s189 + $0xf8] sm:$0xff]
      %v238 = vld [vmem:[%s189 + $0x100] sm:$0xff]
      %v239 = vld [vmem:[%s189 + $0x108] sm:$0xff]
      %v240 = vld [vmem:[%s189 + $0x110] sm:$0xff]
      %v241 = vld [vmem:[%s189 + $0x118] sm:$0xff]
      %v242 = vld [vmem:[%s189 + $0x120] sm:$0xff]
      %v243 = vld [vmem:[%s189 + $0x128] sm:$0xff]
      %v244 = vld [vmem:[%s189 + $0x130] sm:$0xff]
      %v245 = vld [vmem:[%s189 + $0x138] sm:$0xff]
      %v246 = vld [vmem:[%s189 + $0x140] sm:$0xff]
      %v247 = vld [vmem:[%s189 + $0x148] sm:$0xff]
      %v248 = vld [vmem:[%s189 + $0x150] sm:$0xff]
      %v249 = vld [vmem:[%s189 + $0x158] sm:$0xff]
      %v250 = vld [vmem:[%s189 + $0x160] sm:$0xff]
      %v251 = vld [vmem:[%s189 + $0x168] sm:$0xff]
      %v252 = vld [vmem:[%s189 + $0x170] sm:$0xff]
      %v253 = vld [vmem:[%s189 + $0x178] sm:$0xff]
      %v254 = vld [vmem:[%s189 + $0x180] sm:$0xff]
      %v255 = vld [vmem:[%s189 + $0x188] sm:$0xff]
      %v256 = vld [vmem:[%s189 + $0x190] sm:$0xff]
      %v257 = vld [vmem:[%s189 + $0x198] sm:$0xff]
      %v258 = vld [vmem:[%s189 + $0x1a0] sm:$0xff]
      %v259 = vld [vmem:[%s189 + $0x1a8] sm:$0xff]
      %v260 = vld [vmem:[%s189 + $0x1b0] sm:$0xff]
      %v261 = vld [vmem:[%s189 + $0x1b8] sm:$0xff]
      %v262 = vld [vmem:[%s189 + $0x1c0] sm:$0xff]
      %v263 = vld [vmem:[%s189 + $0x1c8] sm:$0xff]
      %v264 = vld [vmem:[%s189 + $0x1d0] sm:$0xff]
      %v265 = vld [vmem:[%s189 + $0x1d8] sm:$0xff]
      %v266 = vld [vmem:[%s189 + $0x1e0] sm:$0xff]
      %v267 = vld [vmem:[%s189 + $0x1e8] sm:$0xff]
      %v268 = vld [vmem:[%s189 + $0x1f0] sm:$0xff]
      %v269 = vld [vmem:[%s189 + $0x1f8] sm:$0xff]
      %v270 = vld [vmem:[%s189 + $0x200] sm:$0xff]
      %v271 = vld [vmem:[%s189 + $0x208] sm:$0xff]
      %v272 = vld [vmem:[%s189 + $0x210] sm:$0xff]
      %v273 = vld [vmem:[%s189 + $0x218] sm:$0xff]
      %v274 = vld [vmem:[%s189 + $0x220] sm:$0xff]
      %v275 = vld [vmem:[%s189 + $0x228] sm:$0xff]
      %v276 = vld [vmem:[%s189 + $0x230] sm:$0xff]
      %v277 = vld [vmem:[%s189 + $0x238] sm:$0xff]
      %v278 = vld [vmem:[%s189 + $0x240] sm:$0xff]
      %v279 = vld [vmem:[%s189 + $0x248] sm:$0xff]
      %v280 = vld [vmem:[%s189 + $0x250] sm:$0xff]
      %v281 = vld [vmem:[%s189 + $0x258] sm:$0xff]
      %v282 = vld [vmem:[%s189 + $0x260] sm:$0xff]
      %v283 = vld [vmem:[%s189 + $0x268] sm:$0xff]
      %v284 = vld [vmem:[%s189 + $0x270] sm:$0xff]
      %v285 = vld [vmem:[%s189 + $0x278] sm:$0xff]
      %v286 = vld [vmem:[%s189 + $0x280] sm:$0x3]
      %v287 = vld [vmem:[%s189 + $0x288] sm:$0x3]
      %v288 = vld [vmem:[%s189 + $0x290] sm:$0x3]
      %v289 = vld [vmem:[%s189 + $0x298] sm:$0x3]
      %v290 = vld [vmem:[%s195] sm:$0xff]
      %v291 = vld [vmem:[%s195 + $0x8] sm:$0xff]
      %v292 = vld [vmem:[%s195 + $0x10] sm:$0xff]
      %v293 = vld [vmem:[%s195 + $0x18] sm:$0xff]
      %v294 = vld [vmem:[%s195 + $0x20] sm:$0xff]
      %v295 = vld [vmem:[%s195 + $0x28] sm:$0xff]
      %v296 = vld [vmem:[%s195 + $0x30] sm:$0xff]
      %v297 = vld [vmem:[%s195 + $0x38] sm:$0xff]
      %v298 = vld [vmem:[%s195 + $0x40] sm:$0xff]
      %v299 = vld [vmem:[%s195 + $0x48] sm:$0xff]
      %v300 = vld [vmem:[%s195 + $0x50] sm:$0xff]
      %v301 = vld [vmem:[%s195 + $0x58] sm:$0xff]
      %v302 = vld [vmem:[%s195 + $0x60] sm:$0xff]
      %v303 = vld [vmem:[%s195 + $0x68] sm:$0xff]
      %v304 = vld [vmem:[%s195 + $0x70] sm:$0xff]
      %v305 = vld [vmem:[%s195 + $0x78] sm:$0xff]
      %v306 = vld [vmem:[%s195 + $0x80] sm:$0xff]
      %v307 = vld [vmem:[%s195 + $0x88] sm:$0xff]
      %v308 = vld [vmem:[%s195 + $0x90] sm:$0xff]
      %v309 = vld [vmem:[%s195 + $0x98] sm:$0xff]
      %v310 = vld [vmem:[%s195 + $0xa0] sm:$0xff]
      %v311 = vld [vmem:[%s195 + $0xa8] sm:$0xff]
      %v312 = vld [vmem:[%s195 + $0xb0] sm:$0xff]
      %v313 = vld [vmem:[%s195 + $0xb8] sm:$0xff]
      %v314 = vld [vmem:[%s195 + $0xc0] sm:$0xff]
      %v315 = vld [vmem:[%s195 + $0xc8] sm:$0xff]
      %v316 = vld [vmem:[%s195 + $0xd0] sm:$0xff]
      %v317 = vld [vmem:[%s195 + $0xd8] sm:$0xff]
      %v318 = vld [vmem:[%s195 + $0xe0] sm:$0xff]
      %v319 = vld [vmem:[%s195 + $0xe8] sm:$0xff]
      %v320 = vld [vmem:[%s195 + $0xf0] sm:$0xff]
      %v321 = vld [vmem:[%s195 + $0xf8] sm:$0xff]
      %v322 = vld [vmem:[%s195 + $0x100] sm:$0xff]
      %v323 = vld [vmem:[%s195 + $0x108] sm:$0xff]
      %v324 = vld [vmem:[%s195 + $0x110] sm:$0xff]
      %v325 = vld [vmem:[%s195 + $0x118] sm:$0xff]
      %v326 = vld [vmem:[%s195 + $0x120] sm:$0xff]
      %v327 = vld [vmem:[%s195 + $0x128] sm:$0xff]
      %v328 = vld [vmem:[%s195 + $0x130] sm:$0xff]
      %v329 = vld [vmem:[%s195 + $0x138] sm:$0xff]
      %v330 = vld [vmem:[%s195 + $0x140] sm:$0xff]
      %v331 = vld [vmem:[%s195 + $0x148] sm:$0xff]
      %v332 = vld [vmem:[%s195 + $0x150] sm:$0xff]
      %v333 = vld [vmem:[%s195 + $0x158] sm:$0xff]
      %v334 = vld [vmem:[%s195 + $0x160] sm:$0xff]
      %v335 = vld [vmem:[%s195 + $0x168] sm:$0xff]
      %v336 = vld [vmem:[%s195 + $0x170] sm:$0xff]
      %v337 = vld [vmem:[%s195 + $0x178] sm:$0xff]
      %v338 = vld [vmem:[%s195 + $0x180] sm:$0xff]
      %v339 = vld [vmem:[%s195 + $0x188] sm:$0xff]
      %v340 = vld [vmem:[%s195 + $0x190] sm:$0xff]
      %v341 = vld [vmem:[%s195 + $0x198] sm:$0xff]
      %v342 = vld [vmem:[%s195 + $0x1a0] sm:$0xff]
      %v343 = vld [vmem:[%s195 + $0x1a8] sm:$0xff]
      %v344 = vld [vmem:[%s195 + $0x1b0] sm:$0xff]
      %v345 = vld [vmem:[%s195 + $0x1b8] sm:$0xff]
      %v346 = vld [vmem:[%s195 + $0x1c0] sm:$0xff]
      %v347 = vld [vmem:[%s195 + $0x1c8] sm:$0xff]
      %v348 = vld [vmem:[%s195 + $0x1d0] sm:$0xff]
      %v349 = vld [vmem:[%s195 + $0x1d8] sm:$0xff]
      %v350 = vld [vmem:[%s195 + $0x1e0] sm:$0xff]
      %v351 = vld [vmem:[%s195 + $0x1e8] sm:$0xff]
      %v352 = vld [vmem:[%s195 + $0x1f0] sm:$0xff]
      %v353 = vld [vmem:[%s195 + $0x1f8] sm:$0xff]
      %354 = vmatpush.msra.mxu0 %v305
      %355 = vmatpush.msra.mxu0 %v304
      %356 = vmatpush.msra.mxu0 %v303
      %357 = vmatpush.msra.mxu0 %v302
      %358 = vmatpush.msra.mxu0 %v301
      %359 = vmatpush.msra.mxu0 %v300
      %360 = vmatpush.msra.mxu0 %v299
      %361 = vmatpush.msra.mxu0 %v298
      %362 = vmatpush.msra.mxu0 %v297
      %363 = vmatpush.msra.mxu0 %v296
      %364 = vmatpush.msra.mxu0 %v295
      %365 = vmatpush.msra.mxu0 %v294
      %366 = vmatpush.msra.mxu0 %v293
      %367 = vmatpush.msra.mxu0 %v292
      %368 = vmatpush.msra.mxu0 %v291
      %369 = vmatpush.msra.mxu0 %v290
      %370 = vmatmul.f32.gmra.mxu0 %v206
      %v371 = vpop.f32.mrf.mxu0
      %v372 = vadd.f32 0.0, %v371
      %373 = vmatmul.f32.gmra.mxu0 %v210
      %v374 = vpop.f32.mrf.mxu0
      %v375 = vadd.f32 0.0, %v374
      %376 = vmatmul.f32.gmra.mxu0 %v214
      %v377 = vpop.f32.mrf.mxu0
      %v378 = vadd.f32 0.0, %v377
      %379 = vmatmul.f32.gmra.mxu0 %v218
      %v380 = vpop.f32.mrf.mxu0
      %v381 = vadd.f32 0.0, %v380
      %382 = vmatmul.f32.gmra.mxu0 %v222
      %v383 = vpop.f32.mrf.mxu0
      %v384 = vadd.f32 0.0, %v383
      %385 = vmatmul.f32.gmra.mxu0 %v226
      %v386 = vpop.f32.mrf.mxu0
      %v387 = vadd.f32 0.0, %v386
      %388 = vmatmul.f32.gmra.mxu0 %v230
      %v389 = vpop.f32.mrf.mxu0
      %v390 = vadd.f32 0.0, %v389
      %391 = vmatmul.f32.gmra.mxu0 %v234
      %v392 = vpop.f32.mrf.mxu0
      %v393 = vadd.f32 0.0, %v392
      %394 = vmatmul.f32.gmra.mxu0 %v238
      %v395 = vpop.f32.mrf.mxu0
      %v396 = vadd.f32 0.0, %v395
      %397 = vmatmul.f32.gmra.mxu0 %v242
      %v398 = vpop.f32.mrf.mxu0
      %v399 = vadd.f32 0.0, %v398
      %400 = vmatmul.f32.gmra.mxu0 %v246
      %v401 = vpop.f32.mrf.mxu0
      %v402 = vadd.f32 0.0, %v401
      %403 = vmatmul.f32.gmra.mxu0 %v250
      %v404 = vpop.f32.mrf.mxu0
      %v405 = vadd.f32 0.0, %v404
      %406 = vmatmul.f32.gmra.mxu0 %v254
      %v407 = vpop.f32.mrf.mxu0
      %v408 = vadd.f32 0.0, %v407
      %409 = vmatmul.f32.gmra.mxu0 %v258
      %v410 = vpop.f32.mrf.mxu0
      %v411 = vadd.f32 0.0, %v410
      %412 = vmatmul.f32.gmra.mxu0 %v262
      %v413 = vpop.f32.mrf.mxu0
      %v414 = vadd.f32 0.0, %v413
      %415 = vmatmul.f32.gmra.mxu0 %v266
      %v416 = vpop.f32.mrf.mxu0
      %v417 = vadd.f32 0.0, %v416
      %418 = vmatmul.f32.gmra.mxu0 %v270
      %v419 = vpop.f32.mrf.mxu0
      %v420 = vadd.f32 0.0, %v419
      %421 = vmatmul.f32.gmra.mxu0 %v274
      %v422 = vpop.f32.mrf.mxu0
      %v423 = vadd.f32 0.0, %v422
      %424 = vmatmul.f32.gmra.mxu0 %v278
      %v425 = vpop.f32.mrf.mxu0
      %v426 = vadd.f32 0.0, %v425
      %427 = vmatmul.f32.gmra.mxu0 %v282
      %v428 = vpop.f32.mrf.mxu0
      %v429 = vadd.f32 0.0, %v428
      %430 = vmatmul.f32.gmra.mxu0 %v286
      %v431 = vpop.f32.mrf.mxu0
      %v432 = vadd.f32 0.0, %v431
      %433 = vdwg.mxu0
      %434 = vmatpush.msra.mxu0 %v321
      %435 = vmatpush.msra.mxu0 %v320
      %436 = vmatpush.msra.mxu0 %v319
      %437 = vmatpush.msra.mxu0 %v318
      %438 = vmatpush.msra.mxu0 %v317
      %439 = vmatpush.msra.mxu0 %v316
      %440 = vmatpush.msra.mxu0 %v315
      %441 = vmatpush.msra.mxu0 %v314
      %442 = vmatpush.msra.mxu0 %v313
      %443 = vmatpush.msra.mxu0 %v312
      %444 = vmatpush.msra.mxu0 %v311
      %445 = vmatpush.msra.mxu0 %v310
      %446 = vmatpush.msra.mxu0 %v309
      %447 = vmatpush.msra.mxu0 %v308
      %448 = vmatpush.msra.mxu0 %v307
      %449 = vmatpush.msra.mxu0 %v306
      %450 = vmatmul.f32.gmra.mxu0 %v207
      %v451 = vpop.f32.mrf.mxu0
      %v452 = vadd.f32 %v372, %v451
      %453 = vmatmul.f32.gmra.mxu0 %v211
      %v454 = vpop.f32.mrf.mxu0
      %v455 = vadd.f32 %v375, %v454
      %456 = vmatmul.f32.gmra.mxu0 %v215
      %v457 = vpop.f32.mrf.mxu0
      %v458 = vadd.f32 %v378, %v457
      %459 = vmatmul.f32.gmra.mxu0 %v219
      %v460 = vpop.f32.mrf.mxu0
      %v461 = vadd.f32 %v381, %v460
      %462 = vmatmul.f32.gmra.mxu0 %v223
      %v463 = vpop.f32.mrf.mxu0
      %v464 = vadd.f32 %v384, %v463
      %465 = vmatmul.f32.gmra.mxu0 %v227
      %v466 = vpop.f32.mrf.mxu0
      %v467 = vadd.f32 %v387, %v466
      %468 = vmatmul.f32.gmra.mxu0 %v231
      %v469 = vpop.f32.mrf.mxu0
      %v470 = vadd.f32 %v390, %v469
      %471 = vmatmul.f32.gmra.mxu0 %v235
      %v472 = vpop.f32.mrf.mxu0
      %v473 = vadd.f32 %v393, %v472
      %474 = vmatmul.f32.gmra.mxu0 %v239
      %v475 = vpop.f32.mrf.mxu0
      %v476 = vadd.f32 %v396, %v475
      %477 = vmatmul.f32.gmra.mxu0 %v243
      %v478 = vpop.f32.mrf.mxu0
      %v479 = vadd.f32 %v399, %v478
      %480 = vmatmul.f32.gmra.mxu0 %v247
      %v481 = vpop.f32.mrf.mxu0
      %v482 = vadd.f32 %v402, %v481
      %483 = vmatmul.f32.gmra.mxu0 %v251
      %v484 = vpop.f32.mrf.mxu0
      %v485 = vadd.f32 %v405, %v484
      %486 = vmatmul.f32.gmra.mxu0 %v255
      %v487 = vpop.f32.mrf.mxu0
      %v488 = vadd.f32 %v408, %v487
      %489 = vmatmul.f32.gmra.mxu0 %v259
      %v490 = vpop.f32.mrf.mxu0
      %v491 = vadd.f32 %v411, %v490
      %492 = vmatmul.f32.gmra.mxu0 %v263
      %v493 = vpop.f32.mrf.mxu0
      %v494 = vadd.f32 %v414, %v493
      %495 = vmatmul.f32.gmra.mxu0 %v267
      %v496 = vpop.f32.mrf.mxu0
      %v497 = vadd.f32 %v417, %v496
      %498 = vmatmul.f32.gmra.mxu0 %v271
      %v499 = vpop.f32.mrf.mxu0
      %v500 = vadd.f32 %v420, %v499
      %501 = vmatmul.f32.gmra.mxu0 %v275
      %v502 = vpop.f32.mrf.mxu0
      %v503 = vadd.f32 %v423, %v502
      %504 = vmatmul.f32.gmra.mxu0 %v279
      %v505 = vpop.f32.mrf.mxu0
      %v506 = vadd.f32 %v426, %v505
      %507 = vmatmul.f32.gmra.mxu0 %v283
      %v508 = vpop.f32.mrf.mxu0
      %v509 = vadd.f32 %v429, %v508
      %510 = vmatmul.f32.gmra.mxu0 %v287
      %v511 = vpop.f32.mrf.mxu0
      %v512 = vadd.f32 %v432, %v511
      %513 = vdwg.mxu0
      %514 = vmatpush.msra.mxu0 %v337
      %515 = vmatpush.msra.mxu0 %v336
      %516 = vmatpush.msra.mxu0 %v335
      %517 = vmatpush.msra.mxu0 %v334
      %518 = vmatpush.msra.mxu0 %v333
      %519 = vmatpush.msra.mxu0 %v332
      %520 = vmatpush.msra.mxu0 %v331
      %521 = vmatpush.msra.mxu0 %v330
      %522 = vmatpush.msra.mxu0 %v329
      %523 = vmatpush.msra.mxu0 %v328
      %524 = vmatpush.msra.mxu0 %v327
      %525 = vmatpush.msra.mxu0 %v326
      %526 = vmatpush.msra.mxu0 %v325
      %527 = vmatpush.msra.mxu0 %v324
      %528 = vmatpush.msra.mxu0 %v323
      %529 = vmatpush.msra.mxu0 %v322
      %530 = vmatmul.f32.gmra.mxu0 %v208
      %v531 = vpop.f32.mrf.mxu0
      %v532 = vadd.f32 %v452, %v531
      %533 = vmatmul.f32.gmra.mxu0 %v212
      %v534 = vpop.f32.mrf.mxu0
      %v535 = vadd.f32 %v455, %v534
      %536 = vmatmul.f32.gmra.mxu0 %v216
      %v537 = vpop.f32.mrf.mxu0
      %v538 = vadd.f32 %v458, %v537
      %539 = vmatmul.f32.gmra.mxu0 %v220
      %v540 = vpop.f32.mrf.mxu0
      %v541 = vadd.f32 %v461, %v540
      %542 = vmatmul.f32.gmra.mxu0 %v224
      %v543 = vpop.f32.mrf.mxu0
      %v544 = vadd.f32 %v464, %v543
      %545 = vmatmul.f32.gmra.mxu0 %v228
      %v546 = vpop.f32.mrf.mxu0
      %v547 = vadd.f32 %v467, %v546
      %548 = vmatmul.f32.gmra.mxu0 %v232
      %v549 = vpop.f32.mrf.mxu0
      %v550 = vadd.f32 %v470, %v549
      %551 = vmatmul.f32.gmra.mxu0 %v236
      %v552 = vpop.f32.mrf.mxu0
      %v553 = vadd.f32 %v473, %v552
      %554 = vmatmul.f32.gmra.mxu0 %v240
      %v555 = vpop.f32.mrf.mxu0
      %v556 = vadd.f32 %v476, %v555
      %557 = vmatmul.f32.gmra.mxu0 %v244
      %v558 = vpop.f32.mrf.mxu0
      %v559 = vadd.f32 %v479, %v558
      %560 = vmatmul.f32.gmra.mxu0 %v248
      %v561 = vpop.f32.mrf.mxu0
      %v562 = vadd.f32 %v482, %v561
      %563 = vmatmul.f32.gmra.mxu0 %v252
      %v564 = vpop.f32.mrf.mxu0
      %v565 = vadd.f32 %v485, %v564
      %566 = vmatmul.f32.gmra.mxu0 %v256
      %v567 = vpop.f32.mrf.mxu0
      %v568 = vadd.f32 %v488, %v567
      %569 = vmatmul.f32.gmra.mxu0 %v260
      %v570 = vpop.f32.mrf.mxu0
      %v571 = vadd.f32 %v491, %v570
      %572 = vmatmul.f32.gmra.mxu0 %v264
      %v573 = vpop.f32.mrf.mxu0
      %v574 = vadd.f32 %v494, %v573
      %575 = vmatmul.f32.gmra.mxu0 %v268
      %v576 = vpop.f32.mrf.mxu0
      %v577 = vadd.f32 %v497, %v576
      %578 = vmatmul.f32.gmra.mxu0 %v272
      %v579 = vpop.f32.mrf.mxu0
      %v580 = vadd.f32 %v500, %v579
      %581 = vmatmul.f32.gmra.mxu0 %v276
      %v582 = vpop.f32.mrf.mxu0
      %v583 = vadd.f32 %v503, %v582
      %584 = vmatmul.f32.gmra.mxu0 %v280
      %v585 = vpop.f32.mrf.mxu0
      %v586 = vadd.f32 %v506, %v585
      %587 = vmatmul.f32.gmra.mxu0 %v284
      %v588 = vpop.f32.mrf.mxu0
      %v589 = vadd.f32 %v509, %v588
      %590 = vmatmul.f32.gmra.mxu0 %v288
      %v591 = vpop.f32.mrf.mxu0
      %v592 = vadd.f32 %v512, %v591
      %593 = vdwg.mxu0
      %594 = vmatpush.msra.mxu0 %v353
      %595 = vmatpush.msra.mxu0 %v352
      %596 = vmatpush.msra.mxu0 %v351
      %597 = vmatpush.msra.mxu0 %v350
      %598 = vmatpush.msra.mxu0 %v349
      %599 = vmatpush.msra.mxu0 %v348
      %600 = vmatpush.msra.mxu0 %v347
      %601 = vmatpush.msra.mxu0 %v346
      %602 = vmatpush.msra.mxu0 %v345
      %603 = vmatpush.msra.mxu0 %v344
      %604 = vmatpush.msra.mxu0 %v343
      %605 = vmatpush.msra.mxu0 %v342
      %606 = vmatpush.msra.mxu0 %v341
      %607 = vmatpush.msra.mxu0 %v340
      %608 = vmatpush.msra.mxu0 %v339
      %609 = vmatpush.msra.mxu0 %v338
      %610 = vmatmul.f32.gmra.mxu0 %v209
      %v611 = vpop.f32.mrf.mxu0
      %v612 = vadd.f32 %v532, %v611
      %613 = vmatmul.f32.gmra.mxu0 %v213
      %v614 = vpop.f32.mrf.mxu0
      %v615 = vadd.f32 %v535, %v614
      %616 = vmatmul.f32.gmra.mxu0 %v217
      %v617 = vpop.f32.mrf.mxu0
      %v618 = vadd.f32 %v538, %v617
      %619 = vmatmul.f32.gmra.mxu0 %v221
      %v620 = vpop.f32.mrf.mxu0
      %v621 = vadd.f32 %v541, %v620
      %622 = vmatmul.f32.gmra.mxu0 %v225
      %v623 = vpop.f32.mrf.mxu0
      %v624 = vadd.f32 %v544, %v623
      %625 = vmatmul.f32.gmra.mxu0 %v229
      %v626 = vpop.f32.mrf.mxu0
      %v627 = vadd.f32 %v547, %v626
      %628 = vmatmul.f32.gmra.mxu0 %v233
      %v629 = vpop.f32.mrf.mxu0
      %v630 = vadd.f32 %v550, %v629
      %631 = vmatmul.f32.gmra.mxu0 %v237
      %v632 = vpop.f32.mrf.mxu0
      %v633 = vadd.f32 %v553, %v632
      %634 = vmatmul.f32.gmra.mxu0 %v241
      %v635 = vpop.f32.mrf.mxu0
      %v636 = vadd.f32 %v556, %v635
      %637 = vmatmul.f32.gmra.mxu0 %v245
      %v638 = vpop.f32.mrf.mxu0
      %v639 = vadd.f32 %v559, %v638
      %640 = vmatmul.f32.gmra.mxu0 %v249
      %v641 = vpop.f32.mrf.mxu0
      %v642 = vadd.f32 %v562, %v641
      %643 = vmatmul.f32.gmra.mxu0 %v253
      %v644 = vpop.f32.mrf.mxu0
      %v645 = vadd.f32 %v565, %v644
      %646 = vmatmul.f32.gmra.mxu0 %v257
      %v647 = vpop.f32.mrf.mxu0
      %v648 = vadd.f32 %v568, %v647
      %649 = vmatmul.f32.gmra.mxu0 %v261
      %v650 = vpop.f32.mrf.mxu0
      %v651 = vadd.f32 %v571, %v650
      %652 = vmatmul.f32.gmra.mxu0 %v265
      %v653 = vpop.f32.mrf.mxu0
      %v654 = vadd.f32 %v574, %v653
      %655 = vmatmul.f32.gmra.mxu0 %v269
      %v656 = vpop.f32.mrf.mxu0
      %v657 = vadd.f32 %v577, %v656
      %658 = vmatmul.f32.gmra.mxu0 %v273
      %v659 = vpop.f32.mrf.mxu0
      %v660 = vadd.f32 %v580, %v659
      %661 = vmatmul.f32.gmra.mxu0 %v277
      %v662 = vpop.f32.mrf.mxu0
      %v663 = vadd.f32 %v583, %v662
      %664 = vmatmul.f32.gmra.mxu0 %v281
      %v665 = vpop.f32.mrf.mxu0
      %v666 = vadd.f32 %v586, %v665
      %667 = vmatmul.f32.gmra.mxu0 %v285
      %v668 = vpop.f32.mrf.mxu0
      %v669 = vadd.f32 %v589, %v668
      %670 = vmatmul.f32.gmra.mxu0 %v289
      %v671 = vpop.f32.mrf.mxu0
      %v672 = vadd.f32 %v592, %v671
      %673 = vdwg.mxu0
      %v674 = vmax.f32 %v612, 0.0
      %v675 = vmax.f32 %v615, 0.0
      %v676 = vmax.f32 %v618, 0.0
      %v677 = vmax.f32 %v621, 0.0
      %v678 = vmax.f32 %v624, 0.0
      %v679 = vmax.f32 %v627, 0.0
      %v680 = vmax.f32 %v630, 0.0
      %v681 = vmax.f32 %v633, 0.0
      %v682 = vmax.f32 %v636, 0.0
      %v683 = vmax.f32 %v639, 0.0
      %v684 = vmax.f32 %v642, 0.0
      %v685 = vmax.f32 %v645, 0.0
      %v686 = vmax.f32 %v648, 0.0
      %v687 = vmax.f32 %v651, 0.0
      %v688 = vmax.f32 %v654, 0.0
      %v689 = vmax.f32 %v657, 0.0
      %v690 = vmax.f32 %v660, 0.0
      %v691 = vmax.f32 %v663, 0.0
      %v692 = vmax.f32 %v666, 0.0
      %v693 = vmax.f32 %v669, 0.0
      %v694 = vmax.f32 %v672, 0.0
      %vm695 = vcmask 523264
      %696 = vst.msk [vmem:[%s204] sm:$0xff] %vm695, %v674
      %697 = vst.msk [vmem:[%s204 + $0x8] sm:$0xff] %vm695, %v675
      %698 = vst.msk [vmem:[%s204 + $0x10] sm:$0xff] %vm695, %v676
      %699 = vst.msk [vmem:[%s204 + $0x18] sm:$0xff] %vm695, %v677
      %700 = vst.msk [vmem:[%s204 + $0x20] sm:$0xff] %vm695, %v678
      %701 = vst.msk [vmem:[%s204 + $0x28] sm:$0xff] %vm695, %v679
      %702 = vst.msk [vmem:[%s204 + $0x30] sm:$0xff] %vm695, %v680
      %703 = vst.msk [vmem:[%s204 + $0x38] sm:$0xff] %vm695, %v681
      %704 = vst.msk [vmem:[%s204 + $0x40] sm:$0xff] %vm695, %v682
      %705 = vst.msk [vmem:[%s204 + $0x48] sm:$0xff] %vm695, %v683
      %706 = vst.msk [vmem:[%s204 + $0x50] sm:$0xff] %vm695, %v684
      %707 = vst.msk [vmem:[%s204 + $0x58] sm:$0xff] %vm695, %v685
      %708 = vst.msk [vmem:[%s204 + $0x60] sm:$0xff] %vm695, %v686
      %709 = vst.msk [vmem:[%s204 + $0x68] sm:$0xff] %vm695, %v687
      %710 = vst.msk [vmem:[%s204 + $0x70] sm:$0xff] %vm695, %v688
      %711 = vst.msk [vmem:[%s204 + $0x78] sm:$0xff] %vm695, %v689
      %712 = vst.msk [vmem:[%s204 + $0x80] sm:$0xff] %vm695, %v690
      %713 = vst.msk [vmem:[%s204 + $0x88] sm:$0xff] %vm695, %v691
      %714 = vst.msk [vmem:[%s204 + $0x90] sm:$0xff] %vm695, %v692
      %715 = vst.msk [vmem:[%s204 + $0x98] sm:$0xff] %vm695, %v693
      %vm716 = vcmask 517120
      %717 = vst.msk [vmem:[%s204 + $0xa0] sm:$0x3] %vm716, %v694
      %s718 = smul.u32 21, %s18
      %p719 = scmp.lt.s32.totalorder %s17, 4
      %s720 = scalar_select %p719, %s17, 4
      %p721 = scmp.lt.s32.totalorder %s718, 20
      %s722 = scalar_select %p721, %s718, 20
      %s723 = smul.addr %s720, 21
      %s724 = sadd.s32 %s722, %s723
      %s725 = smul.addr %s724, 8
      %s726 = scalar_lea.vmem %s2, %s725
      // Predicated region
      $region29: #{ens_dqn_forward.6} parent=27 // pred_check
        %p727 = pneg %p99
      $region30: #{ens_dqn_forward.6} parent=27 // pred_check_branch
        %729 = sbr.rel (%p727) target = $region32
      $region31: #{ens_dqn_forward.6} parent=27 // pred_region
        %s730 = smul.u32 21, %s18
      $region32: #{ens_dqn_forward.6} parent=27 // pred_fallthru
        _
    $region28: #{ens_dqn_forward.6} parent=5 // pred_fallthru
      _
    %p731 = scmp.le.s32.totalorder 2, %s8
    // Predicated region
    $region33: #{ens_dqn_forward.6} parent=5 // pred_check
      %p732 = pneg %p731
    $region34: #{ens_dqn_forward.6} parent=5 // pred_check_branch
      %734 = sbr.rel (%p732) target = $region36
    $region35: #{ens_dqn_forward.6} parent=5 // pred_region
      %s735 = ssub.s32 %s8, 2
      // Predicated region
      $region37: #{ens_dqn_forward.6} parent=35 // pred_check
        %p736 = pneg %p105
      $region38: #{ens_dqn_forward.6} parent=35 // pred_check_branch
        %738 = sbr.rel (%p736) target = $region40
      $region39: #{ens_dqn_forward.6} parent=35 // pred_region
        %s739 = smul.u32 21, %s20
        %p740 = scmp.lt.s32.totalorder %s19, 4
        %s741 = scalar_select %p740, %s19, 4
        %p742 = scmp.lt.s32.totalorder %s739, 20
        %s743 = scalar_select %p742, %s739, 20
        %s744 = smul.addr %s741, 21
        %s745 = sadd.s32 %s743, %s744
        %s746 = smul.addr %s745, 8
        %s747 = scalar_lea.vmem %s2, %s746
      $region40: #{ens_dqn_forward.6} parent=35 // pred_fallthru
        _
    $region36: #{ens_dqn_forward.6} parent=5 // pred_fallthru
      _
  $region6: #{ens_dqn_forward.6} parent=0 // loop_footer
    %s12 = sadd.s32 1, %s8
  $region7: #{ens_dqn_forward.6} parent=0 // loop_footer_branch
    %7 = sbr.rel target = $region3
  $region8: #{ens_dqn_forward.6} parent=0 // loop_exit
    _

// kernel: ens_dqn_forward.7
$region0: #{ens_dqn_forward.7}
  #allocation0 [shape = 'u32[]', space=smem, size = 0x4, offset = 0x4, fixed_abs, tag = 'smem constant byte address 0x4 - core index']
  #allocation1 [shape = 'u32[72,128]{1,0:T(1,128)}', space=vmem, size = 0x9000, scoped, tag = 'internal scratch']
  %s0 = inlined_call_operand.vmem [shape: f32[5,98,576], index: 0, kind: input, shape index: {}]
  %s1 = inlined_call_operand.vmem [shape: f32[5,576,64], index: 1, kind: input, shape index: {}]
  %s2 = inlined_call_operand.vmem [shape: f32[5,98,64], index: 2, kind: output, shape index: {}]
  %s3 = sld [smem:[#allocation0]]
  $region41: #{ens_dqn_forward.7} parent=0
    _
  %s5 = ssub.s32 1, %s3
  %s6 = scalar_select 0, %s5, %s3
  loop: start=0, step=1, limit=7
  $region2: #{ens_dqn_forward.7} parent=0 // loop_pre_header
    _
  $region3: #{ens_dqn_forward.7} parent=0 // loop_header
    %s8 = sphi 0, %s12
    %p9 = scmp.ge.s32.totalorder %s8, 7
    %s15 = sphi 0, %s27
    %s16 = sphi 0, %s23
    %s17 = sphi 0, %s15
    %s18 = sphi 0, %s16
    %s19 = sphi 0, %s17
    %s20 = sphi 0, %s18
    %s32 = sphi 0, %s34
    %s35 = sphi 0, %s32
    %s36 = sphi 0, %s35
    %s52 = sphi 0, %s36
    %s58 = sphi 0, %s60
    %s61 = sphi 0, %s58
    %s62 = sphi 0, %s61
    %s78 = sphi 0, %s62
    %s86 = sphi 0, %s88
    %s89 = sphi 0, %s86
    %s90 = sphi 0, %s89
    %s106 = sphi 0, %s90
  $region4: #{ens_dqn_forward.7} parent=0 // loop_header_branch
    %11 = sbr.rel (%p9) target = $region8
  $region5: #{ens_dqn_forward.7} parent=0 // loop_body
    %s13 = ssub.s32 %s8, 1
    %s14 = ssub.s32 %s8, 2
    %s21 = sadd.s32 1, %s16
    %p22 = scmp.ge.s32.totalorder %s21, 1
    %s23 = scalar_select %p22, 0, %s21
    %s24 = sadd.s32 1, %s15
    %s25 = scalar_select %p22, %s24, %s15
    %p26 = scmp.ge.s32.totalorder %s25, 5
    %s27 = scalar_select %p26, 0, %s25
    %s28 = ssub.s32 %s15, %s27
    %s29 = ssub.s32 %s16, %s23
    %s30 = sor.u32 %s28, %s29
    %p31 = scmp.eq.s32.totalorder %s30, 0
    %s33 = sadd.s32 %s32, 1
    %s34 = scalar_select %p31, %s32, %s33
    %p37 = pneg %p31
    %p38 = scmp.eq.s32.totalorder %s8, 4
    %p39 = por %p37, %p38
    %p40 = scmp.ne.s32.totalorder %s32, %s35
    %p41 = scmp.eq.s32.totalorder %s8, 0
    %p42 = por %p40, %p41
    %p43 = scmp.ne.s32.totalorder %s32, %s35
    %p44 = scmp.eq.s32.totalorder %s13, 4
    %p45 = por %p43, %p44
    %p46 = scmp.ne.s32.totalorder %s35, %s36
    %p47 = scmp.eq.s32.totalorder %s13, 0
    %p48 = por %p46, %p47
    %p49 = scmp.ne.s32.totalorder %s35, %s36
    %p50 = scmp.eq.s32.totalorder %s14, 4
    %p51 = por %p49, %p50
    %p53 = scmp.ne.s32.totalorder %s36, %s52
    %p54 = scmp.eq.s32.totalorder %s14, 0
    %p55 = por %p53, %p54
    %s56 = ssub.s32 %s15, %s27
    %p57 = scmp.eq.s32.totalorder %s56, 0
    %s59 = sadd.s32 %s58, 1
    %s60 = scalar_select %p57, %s58, %s59
    %p63 = pneg %p57
    %p64 = scmp.eq.s32.totalorder %s8, 4
    %p65 = por %p63, %p64
    %p66 = scmp.ne.s32.totalorder %s58, %s61
    %p67 = scmp.eq.s32.totalorder %s8, 0
    %p68 = por %p66, %p67
    %p69 = scmp.ne.s32.totalorder %s58, %s61
    %p70 = scmp.eq.s32.totalorder %s13, 4
    %p71 = por %p69, %p70
    %p72 = scmp.ne.s32.totalorder %s61, %s62
    %p73 = scmp.eq.s32.totalorder %s13, 0
    %p74 = por %p72, %p73
    %p75 = scmp.ne.s32.totalorder %s61, %s62
    %p76 = scmp.eq.s32.totalorder %s14, 4
    %p77 = por %p75, %p76
    %p79 = scmp.ne.s32.totalorder %s62, %s78
    %p80 = scmp.eq.s32.totalorder %s14, 0
    %p81 = por %p79, %p80
    %s82 = ssub.s32 %s15, %s27
    %s83 = ssub.s32 %s16, %s23
    %s84 = sor.u32 %s82, %s83
    %p85 = scmp.eq.s32.totalorder %s84, 0
    %s87 = sadd.s32 %s86, 1
    %s88 = scalar_select %p85, %s86, %s87
    %p91 = pneg %p85
    %p92 = scmp.eq.s32.totalorder %s8, 4
    %p93 = por %p91, %p92
    %p94 = scmp.ne.s32.totalorder %s86, %s89
    %p95 = scmp.eq.s32.totalorder %s8, 0
    %p96 = por %p94, %p95
    %p97 = scmp.ne.s32.totalorder %s86, %s89
    %p98 = scmp.eq.s32.totalorder %s13, 4
    %p99 = por %p97, %p98
    %p100 = scmp.ne.s32.totalorder %s89, %s90
    %p101 = scmp.eq.s32.totalorder %s13, 0
    %p102 = por %p100, %p101
    %p103 = scmp.ne.s32.totalorder %s89, %s90
    %p104 = scmp.eq.s32.totalorder %s14, 4
    %p105 = por %p103, %p104
    %p107 = scmp.ne.s32.totalorder %s90, %s106
    %p108 = scmp.eq.s32.totalorder %s14, 0
    %p109 = por %p107, %p108
    %p110 = scmp.le.s32.totalorder 1, %s8
    %p111 = scmp.lt.s32.totalorder %s8, 6
    %p112 = pnand %p110, %p111
    %p113 = pneg %p112
    // Predicated region
    $region9: #{ens_dqn_forward.7} parent=5 // pred_check
      _
    $region10: #{ens_dqn_forward.7} parent=5 // pred_check_branch
      %115 = sbr.rel (%p112) target = $region12
    $region11: #{ens_dqn_forward.7} parent=5 // pred_region
      %s116 = ssub.s32 %s8, 1
    $region12: #{ens_dqn_forward.7} parent=5 // pred_fallthru
      _
    %p117 = scmp.lt.s32.totalorder %s8, 5
    // Predicated region
    $region13: #{ens_dqn_forward.7} parent=5 // pred_check
      %p118 = pneg %p117
    $region14: #{ens_dqn_forward.7} parent=5 // pred_check_branch
      %120 = sbr.rel (%p118) target = $region16
    $region15: #{ens_dqn_forward.7} parent=5 // pred_region
      // Predicated region
      $region17: #{ens_dqn_forward.7} parent=15 // pred_check
        %p121 = pneg %p42
      $region18: #{ens_dqn_forward.7} parent=15 // pred_check_branch
        %123 = sbr.rel (%p121) target = $region20
      $region19: #{ens_dqn_forward.7} parent=15 // pred_region
        %s124 = smul.u32 13, %s16
        %p125 = scmp.lt.s32.totalorder %s15, 4
        %s126 = scalar_select %p125, %s15, 4
        %p127 = scmp.lt.s32.totalorder %s124, 12
        %s128 = scalar_select %p127, %s124, 12
        %s129 = smul.addr %s128, 5
        %s130 = smul.addr %s126, 65
        %s131 = sadd.s32 %s129, %s130
        %s132 = smul.addr %s131, 8
        %s133 = scalar_lea.vmem %s0, %s132
        %s134 = smul.u32 13, %s16
      $region20: #{ens_dqn_forward.7} parent=15 // pred_fallthru
        _
      // Predicated region
      $region21: #{ens_dqn_forward.7} parent=15 // pred_check
        %p135 = pneg %p68
      $region22: #{ens_dqn_forward.7} parent=15 // pred_check_branch
        %137 = sbr.rel (%p135) target = $region24
      $region23: #{ens_dqn_forward.7} parent=15 // pred_region
        %p138 = scmp.lt.s32.totalorder %s15, 4
        %s139 = scalar_select %p138, %s15, 4
        %s140 = smul.addr %s139, 72
        %s141 = smul.addr %s140, 8
        %s142 = scalar_lea.vmem %s1, %s141
      $region24: #{ens_dqn_forward.7} parent=15 // pred_fallthru
        _
    $region16: #{ens_dqn_forward.7} parent=5 // pred_fallthru
      _
    %p143 = scmp.le.s32.totalorder 1, %s8
    %p144 = scmp.lt.s32.totalorder %s8, 6
    %p145 = pnand %p143, %p144
    %p146 = pneg %p145
    // Predicated region
    $region25: #{ens_dqn_forward.7} parent=5 // pred_check
      _
    $region26: #{ens_dqn_forward.7} parent=5 // pred_check_branch
      %148 = sbr.rel (%p145) target = $region28
    $region27: #{ens_dqn_forward.7} parent=5 // pred_region
      %s149 = ssub.s32 %s8, 1
      %s150 = smul.u32 13, %s18
      %p151 = scmp.lt.s32.totalorder %s17, 4
      %s152 = scalar_select %p151, %s17, 4
      %p153 = scmp.lt.s32.totalorder %s150, 12
      %s154 = scalar_select %p153, %s150, 12
      %s155 = smul.addr %s154, 5
      %s156 = smul.addr %s152, 65
      %s157 = sadd.s32 %s155, %s156
      %s158 = smul.addr %s157, 8
      %s159 = scalar_lea.vmem %s0, %s158
      %p160 = pneg %p48
      %p161 = pneg %p45
      %p162 = scmp.lt.s32.totalorder %s17, 4
      %s163 = scalar_select %p162, %s17, 4
      %s164 = smul.addr %s163, 72
      %s165 = smul.addr %s164, 8
      %s166 = scalar_lea.vmem %s1, %s165
      %p167 = pneg %p74
      %p168 = pneg %p71
      %p169 = pneg %p102
      %p170 = pneg %p99
      %s171 = smul.u32 13, %s18
      %p172 = scmp.lt.s32.totalorder %s17, 4
      %s173 = scalar_select %p172, %s17, 4
      %p174 = scmp.lt.s32.totalorder %s171, 12
      %s175 = scalar_select %p174, %s171, 12
      %s176 = smul.addr %s173, 13
      %s177 = sadd.s32 %s175, %s176
      %s178 = smul.addr %s177, 8
      %s179 = scalar_lea.vmem %s2, %s178
      %s180 = smul.u32 13, %s18
      %p181 = scmp.lt.s32.totalorder %s17, 4
      %s182 = scalar_select %p181, %s17, 4
      %p183 = scmp.lt.s32.totalorder %s180, 12
      %s184 = scalar_select %p183, %s180, 12
      %s185 = smul.addr %s184, 5
      %s186 = smul.addr %s182, 65
      %s187 = sadd.s32 %s185, %s186
      %s188 = smul.addr %s187, 8
      %s189 = scalar_lea.vmem %s0, %s188
      %s190 = smul.u32 13, %s18
      %p191 = scmp.lt.s32.totalorder %s17, 4
      %s192 = scalar_select %p191, %s17, 4
      %s193 = smul.addr %s192, 72
      %s194 = smul.addr %s193, 8
      %s195 = scalar_lea.vmem %s1, %s194
      %s196 = smul.u32 13, %s18
      %p197 = scmp.lt.s32.totalorder %s17, 4
      %s198 = scalar_select %p197, %s17, 4
      %p199 = scmp.lt.s32.totalorder %s196, 12
      %s200 = scalar_select %p199, %s196, 12
      %s201 = smul.addr %s198, 13
      %s202 = sadd.s32 %s200, %s201
      %s203 = smul.addr %s202, 8
      %s204 = scalar_lea.vmem %s2, %s203
      %s205 = smul.u32 13, %s18
      %v206 = vld [vmem:[%s189] sm:$0xff]
      %v207 = vld [vmem:[%s189 + $0x8] sm:$0xff]
      %v208 = vld [vmem:[%s189 + $0x10] sm:$0xff]
      %v209 = vld [vmem:[%s189 + $0x18] sm:$0xff]
      %v210 = vld [vmem:[%s189 + $0x20] sm:$0xff]
      %v211 = vld [vmem:[%s189 + $0x28] sm:$0xff]
      %v212 = vld [vmem:[%s189 + $0x30] sm:$0xff]
      %v213 = vld [vmem:[%s189 + $0x38] sm:$0xff]
      %v214 = vld [vmem:[%s189 + $0x40] sm:$0xff]
      %v215 = vld [vmem:[%s189 + $0x48] sm:$0xff]
      %v216 = vld [vmem:[%s189 + $0x50] sm:$0xff]
      %v217 = vld [vmem:[%s189 + $0x58] sm:$0xff]
      %v218 = vld [vmem:[%s189 + $0x60] sm:$0xff]
      %v219 = vld [vmem:[%s189 + $0x68] sm:$0xff]
      %v220 = vld [vmem:[%s189 + $0x70] sm:$0xff]
      %v221 = vld [vmem:[%s189 + $0x78] sm:$0xff]
      %v222 = vld [vmem:[%s189 + $0x80] sm:$0xff]
      %v223 = vld [vmem:[%s189 + $0x88] sm:$0xff]
      %v224 = vld [vmem:[%s189 + $0x90] sm:$0xff]
      %v225 = vld [vmem:[%s189 + $0x98] sm:$0xff]
      %v226 = vld [vmem:[%s189 + $0xa0] sm:$0xff]
      %v227 = vld [vmem:[%s189 + $0xa8] sm:$0xff]
      %v228 = vld [vmem:[%s189 + $0xb0] sm:$0xff]
      %v229 = vld [vmem:[%s189 + $0xb8] sm:$0xff]
      %v230 = vld [vmem:[%s189 + $0xc0] sm:$0xff]
      %v231 = vld [vmem:[%s189 + $0xc8] sm:$0xff]
      %v232 = vld [vmem:[%s189 + $0xd0] sm:$0xff]
      %v233 = vld [vmem:[%s189 + $0xd8] sm:$0xff]
      %v234 = vld [vmem:[%s189 + $0xe0] sm:$0xff]
      %v235 = vld [vmem:[%s189 + $0xe8] sm:$0xff]
      %v236 = vld [vmem:[%s189 + $0xf0] sm:$0xff]
      %v237 = vld [vmem:[%s189 + $0xf8] sm:$0xff]
      %v238 = vld [vmem:[%s189 + $0x100] sm:$0xff]
      %v239 = vld [vmem:[%s189 + $0x108] sm:$0xff]
      %v240 = vld [vmem:[%s189 + $0x110] sm:$0xff]
      %v241 = vld [vmem:[%s189 + $0x118] sm:$0xff]
      %v242 = vld [vmem:[%s189 + $0x120] sm:$0xff]
      %v243 = vld [vmem:[%s189 + $0x128] sm:$0xff]
      %v244 = vld [vmem:[%s189 + $0x130] sm:$0xff]
      %v245 = vld [vmem:[%s189 + $0x138] sm:$0xff]
      %v246 = vld [vmem:[%s189 + $0x140] sm:$0xff]
      %v247 = vld [vmem:[%s189 + $0x148] sm:$0xff]
      %v248 = vld [vmem:[%s189 + $0x150] sm:$0xff]
      %v249 = vld [vmem:[%s189 + $0x158] sm:$0xff]
      %v250 = vld [vmem:[%s189 + $0x160] sm:$0xff]
      %v251 = vld [vmem:[%s189 + $0x168] sm:$0xff]
      %v252 = vld [vmem:[%s189 + $0x170] sm:$0xff]
      %v253 = vld [vmem:[%s189 + $0x178] sm:$0xff]
      %v254 = vld [vmem:[%s189 + $0x180] sm:$0xff]
      %v255 = vld [vmem:[%s189 + $0x188] sm:$0xff]
      %v256 = vld [vmem:[%s189 + $0x190] sm:$0xff]
      %v257 = vld [vmem:[%s189 + $0x198] sm:$0xff]
      %v258 = vld [vmem:[%s189 + $0x1a0] sm:$0xff]
      %v259 = vld [vmem:[%s189 + $0x1a8] sm:$0xff]
      %v260 = vld [vmem:[%s189 + $0x1b0] sm:$0xff]
      %v261 = vld [vmem:[%s189 + $0x1b8] sm:$0xff]
      %v262 = vld [vmem:[%s189 + $0x1c0] sm:$0xff]
      %v263 = vld [vmem:[%s189 + $0x1c8] sm:$0xff]
      %v264 = vld [vmem:[%s189 + $0x1d0] sm:$0xff]
      %v265 = vld [vmem:[%s189 + $0x1d8] sm:$0xff]
      %v266 = vld [vmem:[%s189 + $0x1e0] sm:$0x3]
      %v267 = vld [vmem:[%s189 + $0x1e8] sm:$0x3]
      %v268 = vld [vmem:[%s189 + $0x1f0] sm:$0x3]
      %v269 = vld [vmem:[%s189 + $0x1f8] sm:$0x3]
      %v270 = vld [vmem:[%s189 + $0x200] sm:$0x3]
      %v271 = vld [vmem:[%s195] sm:$0xff]
      %v272 = vld [vmem:[%s195 + $0x8] sm:$0xff]
      %v273 = vld [vmem:[%s195 + $0x10] sm:$0xff]
      %v274 = vld [vmem:[%s195 + $0x18] sm:$0xff]
      %v275 = vld [vmem:[%s195 + $0x20] sm:$0xff]
      %v276 = vld [vmem:[%s195 + $0x28] sm:$0xff]
      %v277 = vld [vmem:[%s195 + $0x30] sm:$0xff]
      %v278 = vld [vmem:[%s195 + $0x38] sm:$0xff]
      %v279 = vld [vmem:[%s195 + $0x40] sm:$0xff]
      %v280 = vld [vmem:[%s195 + $0x48] sm:$0xff]
      %v281 = vld [vmem:[%s195 + $0x50] sm:$0xff]
      %v282 = vld [vmem:[%s195 + $0x58] sm:$0xff]
      %v283 = vld [vmem:[%s195 + $0x60] sm:$0xff]
      %v284 = vld [vmem:[%s195 + $0x68] sm:$0xff]
      %v285 = vld [vmem:[%s195 + $0x70] sm:$0xff]
      %v286 = vld [vmem:[%s195 + $0x78] sm:$0xff]
      %v287 = vld [vmem:[%s195 + $0x80] sm:$0xff]
      %v288 = vld [vmem:[%s195 + $0x88] sm:$0xff]
      %v289 = vld [vmem:[%s195 + $0x90] sm:$0xff]
      %v290 = vld [vmem:[%s195 + $0x98] sm:$0xff]
      %v291 = vld [vmem:[%s195 + $0xa0] sm:$0xff]
      %v292 = vld [vmem:[%s195 + $0xa8] sm:$0xff]
      %v293 = vld [vmem:[%s195 + $0xb0] sm:$0xff]
      %v294 = vld [vmem:[%s195 + $0xb8] sm:$0xff]
      %v295 = vld [vmem:[%s195 + $0xc0] sm:$0xff]
      %v296 = vld [vmem:[%s195 + $0xc8] sm:$0xff]
      %v297 = vld [vmem:[%s195 + $0xd0] sm:$0xff]
      %v298 = vld [vmem:[%s195 + $0xd8] sm:$0xff]
      %v299 = vld [vmem:[%s195 + $0xe0] sm:$0xff]
      %v300 = vld [vmem:[%s195 + $0xe8] sm:$0xff]
      %v301 = vld [vmem:[%s195 + $0xf0] sm:$0xff]
      %v302 = vld [vmem:[%s195 + $0xf8] sm:$0xff]
      %v303 = vld [vmem:[%s195 + $0x100] sm:$0xff]
      %v304 = vld [vmem:[%s195 + $0x108] sm:$0xff]
      %v305 = vld [vmem:[%s195 + $0x110] sm:$0xff]
      %v306 = vld [vmem:[%s195 + $0x118] sm:$0xff]
      %v307 = vld [vmem:[%s195 + $0x120] sm:$0xff]
      %v308 = vld [vmem:[%s195 + $0x128] sm:$0xff]
      %v309 = vld [vmem:[%s195 + $0x130] sm:$0xff]
      %v310 = vld [vmem:[%s195 + $0x138] sm:$0xff]
      %v311 = vld [vmem:[%s195 + $0x140] sm:$0xff]
      %v312 = vld [vmem:[%s195 + $0x148] sm:$0xff]
      %v313 = vld [vmem:[%s195 + $0x150] sm:$0xff]
      %v314 = vld [vmem:[%s195 + $0x158] sm:$0xff]
      %v315 = vld [vmem:[%s195 + $0x160] sm:$0xff]
      %v316 = vld [vmem:[%s195 + $0x168] sm:$0xff]
      %v317 = vld [vmem:[%s195 + $0x170] sm:$0xff]
      %v318 = vld [vmem:[%s195 + $0x178] sm:$0xff]
      %v319 = vld [vmem:[%s195 + $0x180] sm:$0xff]
      %v320 = vld [vmem:[%s195 + $0x188] sm:$0xff]
      %v321 = vld [vmem:[%s195 + $0x190] sm:$0xff]
      %v322 = vld [vmem:[%s195 + $0x198] sm:$0xff]
      %v323 = vld [vmem:[%s195 + $0x1a0] sm:$0xff]
      %v324 = vld [vmem:[%s195 + $0x1a8] sm:$0xff]
      %v325 = vld [vmem:[%s195 + $0x1b0] sm:$0xff]
      %v326 = vld [vmem:[%s195 + $0x1b8] sm:$0xff]
      %v327 = vld [vmem:[%s195 + $0x1c0] sm:$0xff]
      %v328 = vld [vmem:[%s195 + $0x1c8] sm:$0xff]
      %v329 = vld [vmem:[%s195 + $0x1d0] sm:$0xff]
      %v330 = vld [vmem:[%s195 + $0x1d8] sm:$0xff]
      %v331 = vld [vmem:[%s195 + $0x1e0] sm:$0xff]
      %v332 = vld [vmem:[%s195 + $0x1e8] sm:$0xff]
      %v333 = vld [vmem:[%s195 + $0x1f0] sm:$0xff]
      %v334 = vld [vmem:[%s195 + $0x1f8] sm:$0xff]
      %v335 = vld [vmem:[%s195 + $0x200] sm:$0xff]
      %v336 = vld [vmem:[%s195 + $0x208] sm:$0xff]
      %v337 = vld [vmem:[%s195 + $0x210] sm:$0xff]
      %v338 = vld [vmem:[%s195 + $0x218] sm:$0xff]
      %v339 = vld [vmem:[%s195 + $0x220] sm:$0xff]
      %v340 = vld [vmem:[%s195 + $0x228] sm:$0xff]
      %v341 = vld [vmem:[%s195 + $0x230] sm:$0xff]
      %v342 = vld [vmem:[%s195 + $0x238] sm:$0xff]
      %vm343 = vcmask 523264
      %v345 = vsel %vm343, %v210, 0
      %v348 = vsel %vm343, %v215, 0
      %v351 = vsel %vm343, %v220, 0
      %v354 = vsel %vm343, %v225, 0
      %v357 = vsel %vm343, %v230, 0
      %v360 = vsel %vm343, %v235, 0
      %v363 = vsel %vm343, %v240, 0
      %v366 = vsel %vm343, %v245, 0
      %v369 = vsel %vm343, %v250, 0
      %v372 = vsel %vm343, %v255, 0
      %v375 = vsel %vm343, %v260, 0
      %v378 = vsel %vm343, %v265, 0
      %v381 = vsel %vm343, %v270, 0
      %383 = vmatpush.msra.mxu0 %v286
      %384 = vmatpush.msra.mxu0 %v285
      %385 = vmatpush.msra.mxu0 %v284
      %386 = vmatpush.msra.mxu0 %v283
      %387 = vmatpush.msra.mxu0 %v282
      %388 = vmatpush.msra.mxu0 %v281
      %389 = vmatpush.msra.mxu0 %v280
      %390 = vmatpush.msra.mxu0 %v279
      %391 = vmatpush.msra.mxu0 %v278
      %392 = vmatpush.msra.mxu0 %v277
      %393 = vmatpush.msra.mxu0 %v276
      %394 = vmatpush.msra.mxu0 %v275
      %395 = vmatpush.msra.mxu0 %v274
      %396 = vmatpush.msra.mxu0 %v273
      %397 = vmatpush.msra.mxu0 %v272
      %398 = vmatpush.msra.mxu0 %v271
      %399 = vmatmul.f32.gmra.mxu0 %v206
      %v400 = vpop.f32.mrf.mxu0
      %v401 = vadd.f32 0.0, %v400
      %402 = vmatmul.f32.gmra.mxu0 %v211
      %v403 = vpop.f32.mrf.mxu0
      %v404 = vadd.f32 0.0, %v403
      %405 = vmatmul.f32.gmra.mxu0 %v216
      %v406 = vpop.f32.mrf.mxu0
      %v407 = vadd.f32 0.0, %v406
      %408 = vmatmul.f32.gmra.mxu0 %v221
      %v409 = vpop.f32.mrf.mxu0
      %v410 = vadd.f32 0.0, %v409
      %411 = vmatmul.f32.gmra.mxu0 %v226
      %v412 = vpop.f32.mrf.mxu0
      %v413 = vadd.f32 0.0, %v412
      %414 = vmatmul.f32.gmra.mxu0 %v231
      %v415 = vpop.f32.mrf.mxu0
      %v416 = vadd.f32 0.0, %v415
      %417 = vmatmul.f32.gmra.mxu0 %v236
      %v418 = vpop.f32.mrf.mxu0
      %v419 = vadd.f32 0.0, %v418
      %420 = vmatmul.f32.gmra.mxu0 %v241
      %v421 = vpop.f32.mrf.mxu0
      %v422 = vadd.f32 0.0, %v421
      %423 = vmatmul.f32.gmra.mxu0 %v246
      %v424 = vpop.f32.mrf.mxu0
      %v425 = vadd.f32 0.0, %v424
      %426 = vmatmul.f32.gmra.mxu0 %v251
      %v427 = vpop.f32.mrf.mxu0
      %v428 = vadd.f32 0.0, %v427
      %429 = vmatmul.f32.gmra.mxu0 %v256
      %v430 = vpop.f32.mrf.mxu0
      %v431 = vadd.f32 0.0, %v430
      %432 = vmatmul.f32.gmra.mxu0 %v261
      %v433 = vpop.f32.mrf.mxu0
      %v434 = vadd.f32 0.0, %v433
      %435 = vmatmul.f32.gmra.mxu0 %v266
      %v436 = vpop.f32.mrf.mxu0
      %v437 = vadd.f32 0.0, %v436
      %438 = vdwg.mxu0
      %439 = vmatpush.msra.mxu0 %v302
      %440 = vmatpush.msra.mxu0 %v301
      %441 = vmatpush.msra.mxu0 %v300
      %442 = vmatpush.msra.mxu0 %v299
      %443 = vmatpush.msra.mxu0 %v298
      %444 = vmatpush.msra.mxu0 %v297
      %445 = vmatpush.msra.mxu0 %v296
      %446 = vmatpush.msra.mxu0 %v295
      %447 = vmatpush.msra.mxu0 %v294
      %448 = vmatpush.msra.mxu0 %v293
      %449 = vmatpush.msra.mxu0 %v292
      %450 = vmatpush.msra.mxu0 %v291
      %451 = vmatpush.msra.mxu0 %v290
      %452 = vmatpush.msra.mxu0 %v289
      %453 = vmatpush.msra.mxu0 %v288
      %454 = vmatpush.msra.mxu0 %v287
      %455 = vmatmul.f32.gmra.mxu0 %v207
      %v456 = vpop.f32.mrf.mxu0
      %v457 = vadd.f32 %v401, %v456
      %458 = vmatmul.f32.gmra.mxu0 %v212
      %v459 = vpop.f32.mrf.mxu0
      %v460 = vadd.f32 %v404, %v459
      %461 = vmatmul.f32.gmra.mxu0 %v217
      %v462 = vpop.f32.mrf.mxu0
      %v463 = vadd.f32 %v407, %v462
      %464 = vmatmul.f32.gmra.mxu0 %v222
      %v465 = vpop.f32.mrf.mxu0
      %v466 = vadd.f32 %v410, %v465
      %467 = vmatmul.f32.gmra.mxu0 %v227
      %v468 = vpop.f32.mrf.mxu0
      %v469 = vadd.f32 %v413, %v468
      %470 = vmatmul.f32.gmra.mxu0 %v232
      %v471 = vpop.f32.mrf.mxu0
      %v472 = vadd.f32 %v416, %v471
      %473 = vmatmul.f32.gmra.mxu0 %v237
      %v474 = vpop.f32.mrf.mxu0
      %v475 = vadd.f32 %v419, %v474
      %476 = vmatmul.f32.gmra.mxu0 %v242
      %v477 = vpop.f32.mrf.mxu0
      %v478 = vadd.f32 %v422, %v477
      %479 = vmatmul.f32.gmra.mxu0 %v247
      %v480 = vpop.f32.mrf.mxu0
      %v481 = vadd.f32 %v425, %v480
      %482 = vmatmul.f32.gmra.mxu0 %v252
      %v483 = vpop.f32.mrf.mxu0
      %v484 = vadd.f32 %v428, %v483
      %485 = vmatmul.f32.gmra.mxu0 %v257
      %v486 = vpop.f32.mrf.mxu0
      %v487 = vadd.f32 %v431, %v486
      %488 = vmatmul.f32.gmra.mxu0 %v262
      %v489 = vpop.f32.mrf.mxu0
      %v490 = vadd.f32 %v434, %v489
      %491 = vmatmul.f32.gmra.mxu0 %v267
      %v492 = vpop.f32.mrf.mxu0
      %v493 = vadd.f32 %v437, %v492
      %494 = vdwg.mxu0
      %495 = vmatpush.msra.mxu0 %v318
      %496 = vmatpush.msra.mxu0 %v317
      %497 = vmatpush.msra.mxu0 %v316
      %498 = vmatpush.msra.mxu0 %v315
      %499 = vmatpush.msra.mxu0 %v314
      %500 = vmatpush.msra.mxu0 %v313
      %501 = vmatpush.msra.mxu0 %v312
      %502 = vmatpush.msra.mxu0 %v311
      %503 = vmatpush.msra.mxu0 %v310
      %504 = vmatpush.msra.mxu0 %v309
      %505 = vmatpush.msra.mxu0 %v308
      %506 = vmatpush.msra.mxu0 %v307
      %507 = vmatpush.msra.mxu0 %v306
      %508 = vmatpush.msra.mxu0 %v305
      %509 = vmatpush.msra.mxu0 %v304
      %510 = vmatpush.msra.mxu0 %v303
      %511 = vmatmul.f32.gmra.mxu0 %v208
      %v512 = vpop.f32.mrf.mxu0
      %v513 = vadd.f32 %v457, %v512
      %514 = vmatmul.f32.gmra.mxu0 %v213
      %v515 = vpop.f32.mrf.mxu0
      %v516 = vadd.f32 %v460, %v515
      %517 = vmatmul.f32.gmra.mxu0 %v218
      %v518 = vpop.f32.mrf.mxu0
      %v519 = vadd.f32 %v463, %v518
      %520 = vmatmul.f32.gmra.mxu0 %v223
      %v521 = vpop.f32.mrf.mxu0
      %v522 = vadd.f32 %v466, %v521
      %523 = vmatmul.f32.gmra.mxu0 %v228
      %v524 = vpop.f32.mrf.mxu0
      %v525 = vadd.f32 %v469, %v524
      %526 = vmatmul.f32.gmra.mxu0 %v233
      %v527 = vpop.f32.mrf.mxu0
      %v528 = vadd.f32 %v472, %v527
      %529 = vmatmul.f32.gmra.mxu0 %v238
      %v530 = vpop.f32.mrf.mxu0
      %v531 = vadd.f32 %v475, %v530
      %532 = vmatmul.f32.gmra.mxu0 %v243
      %v533 = vpop.f32.mrf.mxu0
      %v534 = vadd.f32 %v478, %v533
      %535 = vmatmul.f32.gmra.mxu0 %v248
      %v536 = vpop.f32.mrf.mxu0
      %v537 = vadd.f32 %v481, %v536
      %538 = vmatmul.f32.gmra.mxu0 %v253
      %v539 = vpop.f32.mrf.mxu0
      %v540 = vadd.f32 %v484, %v539
      %541 = vmatmul.f32.gmra.mxu0 %v258
      %v542 = vpop.f32.mrf.mxu0
      %v543 = vadd.f32 %v487, %v542
      %544 = vmatmul.f32.gmra.mxu0 %v263
      %v545 = vpop.f32.mrf.mxu0
      %v546 = vadd.f32 %v490, %v545
      %547 = vmatmul.f32.gmra.mxu0 %v268
      %v548 = vpop.f32.mrf.mxu0
      %v549 = vadd.f32 %v493, %v548
      %550 = vdwg.mxu0
      %551 = vmatpush.msra.mxu0 %v334
      %552 = vmatpush.msra.mxu0 %v333
      %553 = vmatpush.msra.mxu0 %v332
      %554 = vmatpush.msra.mxu0 %v331
      %555 = vmatpush.msra.mxu0 %v330
      %556 = vmatpush.msra.mxu0 %v329
      %557 = vmatpush.msra.mxu0 %v328
      %558 = vmatpush.msra.mxu0 %v327
      %559 = vmatpush.msra.mxu0 %v326
      %560 = vmatpush.msra.mxu0 %v325
      %561 = vmatpush.msra.mxu0 %v324
      %562 = vmatpush.msra.mxu0 %v323
      %563 = vmatpush.msra.mxu0 %v322
      %564 = vmatpush.msra.mxu0 %v321
      %565 = vmatpush.msra.mxu0 %v320
      %566 = vmatpush.msra.mxu0 %v319
      %567 = vmatmul.f32.gmra.mxu0 %v209
      %v568 = vpop.f32.mrf.mxu0
      %v569 = vadd.f32 %v513, %v568
      %570 = vmatmul.f32.gmra.mxu0 %v214
      %v571 = vpop.f32.mrf.mxu0
      %v572 = vadd.f32 %v516, %v571
      %573 = vmatmul.f32.gmra.mxu0 %v219
      %v574 = vpop.f32.mrf.mxu0
      %v575 = vadd.f32 %v519, %v574
      %576 = vmatmul.f32.gmra.mxu0 %v224
      %v577 = vpop.f32.mrf.mxu0
      %v578 = vadd.f32 %v522, %v577
      %579 = vmatmul.f32.gmra.mxu0 %v229
      %v580 = vpop.f32.mrf.mxu0
      %v581 = vadd.f32 %v525, %v580
      %582 = vmatmul.f32.gmra.mxu0 %v234
      %v583 = vpop.f32.mrf.mxu0
      %v584 = vadd.f32 %v528, %v583
      %585 = vmatmul.f32.gmra.mxu0 %v239
      %v586 = vpop.f32.mrf.mxu0
      %v587 = vadd.f32 %v531, %v586
      %588 = vmatmul.f32.gmra.mxu0 %v244
      %v589 = vpop.f32.mrf.mxu0
      %v590 = vadd.f32 %v534, %v589
      %591 = vmatmul.f32.gmra.mxu0 %v249
      %v592 = vpop.f32.mrf.mxu0
      %v593 = vadd.f32 %v537, %v592
      %594 = vmatmul.f32.gmra.mxu0 %v254
      %v595 = vpop.f32.mrf.mxu0
      %v596 = vadd.f32 %v540, %v595
      %597 = vmatmul.f32.gmra.mxu0 %v259
      %v598 = vpop.f32.mrf.mxu0
      %v599 = vadd.f32 %v543, %v598
      %600 = vmatmul.f32.gmra.mxu0 %v264
      %v601 = vpop.f32.mrf.mxu0
      %v602 = vadd.f32 %v546, %v601
      %603 = vmatmul.f32.gmra.mxu0 %v269
      %v604 = vpop.f32.mrf.mxu0
      %v605 = vadd.f32 %v549, %v604
      %606 = vdwg.mxu0
      %607 = vmatpush.msra.mxu0 0.0
      %608 = vmatpush.msra.mxu0 0.0
      %609 = vmatpush.msra.mxu0 0.0
      %610 = vmatpush.msra.mxu0 0.0
      %611 = vmatpush.msra.mxu0 0.0
      %612 = vmatpush.msra.mxu0 0.0
      %613 = vmatpush.msra.mxu0 0.0
      %614 = vmatpush.msra.mxu0 0.0
      %615 = vmatpush.msra.mxu0 %v342
      %616 = vmatpush.msra.mxu0 %v341
      %617 = vmatpush.msra.mxu0 %v340
      %618 = vmatpush.msra.mxu0 %v339
      %619 = vmatpush.msra.mxu0 %v338
      %620 = vmatpush.msra.mxu0 %v337
      %621 = vmatpush.msra.mxu0 %v336
      %622 = vmatpush.msra.mxu0 %v335
      %623 = vmatmul.f32.gmra.mxu0 %v345
      %v624 = vpop.f32.mrf.mxu0
      %v625 = vadd.f32 %v569, %v624
      %626 = vmatmul.f32.gmra.mxu0 %v348
      %v627 = vpop.f32.mrf.mxu0
      %v628 = vadd.f32 %v572, %v627
      %629 = vmatmul.f32.gmra.mxu0 %v351
      %v630 = vpop.f32.mrf.mxu0
      %v631 = vadd.f32 %v575, %v630
      %632 = vmatmul.f32.gmra.mxu0 %v354
      %v633 = vpop.f32.mrf.mxu0
      %v634 = vadd.f32 %v578, %v633
      %635 = vmatmul.f32.gmra.mxu0 %v357
      %v636 = vpop.f32.mrf.mxu0
      %v637 = vadd.f32 %v581, %v636
      %638 = vmatmul.f32.gmra.mxu0 %v360
      %v639 = vpop.f32.mrf.mxu0
      %v640 = vadd.f32 %v584, %v639
      %641 = vmatmul.f32.gmra.mxu0 %v363
      %v642 = vpop.f32.mrf.mxu0
      %v643 = vadd.f32 %v587, %v642
      %644 = vmatmul.f32.gmra.mxu0 %v366
      %v645 = vpop.f32.mrf.mxu0
      %v646 = vadd.f32 %v590, %v645
      %647 = vmatmul.f32.gmra.mxu0 %v369
      %v648 = vpop.f32.mrf.mxu0
      %v649 = vadd.f32 %v593, %v648
      %650 = vmatmul.f32.gmra.mxu0 %v372
      %v651 = vpop.f32.mrf.mxu0
      %v652 = vadd.f32 %v596, %v651
      %653 = vmatmul.f32.gmra.mxu0 %v375
      %v654 = vpop.f32.mrf.mxu0
      %v655 = vadd.f32 %v599, %v654
      %656 = vmatmul.f32.gmra.mxu0 %v378
      %v657 = vpop.f32.mrf.mxu0
      %v658 = vadd.f32 %v602, %v657
      %659 = vmatmul.f32.gmra.mxu0 %v381
      %v660 = vpop.f32.mrf.mxu0
      %v661 = vadd.f32 %v605, %v660
      %662 = vdwg.mxu0
      %v663 = vmax.f32 %v625, 0.0
      %v664 = vmax.f32 %v628, 0.0
      %v665 = vmax.f32 %v631, 0.0
      %v666 = vmax.f32 %v634, 0.0
      %v667 = vmax.f32 %v637, 0.0
      %v668 = vmax.f32 %v640, 0.0
      %v669 = vmax.f32 %v643, 0.0
      %v670 = vmax.f32 %v646, 0.0
      %v671 = vmax.f32 %v649, 0.0
      %v672 = vmax.f32 %v652, 0.0
      %v673 = vmax.f32 %v655, 0.0
      %v674 = vmax.f32 %v658, 0.0
      %v675 = vmax.f32 %v661, 0.0
      %676 = vst.msk [vmem:[%s204] sm:$0xff] %vm343, %v663
      %677 = vst.msk [vmem:[%s204 + $0x8] sm:$0xff] %vm343, %v664
      %678 = vst.msk [vmem:[%s204 + $0x10] sm:$0xff] %vm343, %v665
      %679 = vst.msk [vmem:[%s204 + $0x18] sm:$0xff] %vm343, %v666
      %680 = vst.msk [vmem:[%s204 + $0x20] sm:$0xff] %vm343, %v667
      %681 = vst.msk [vmem:[%s204 + $0x28] sm:$0xff] %vm343, %v668
      %682 = vst.msk [vmem:[%s204 + $0x30] sm:$0xff] %vm343, %v669
      %683 = vst.msk [vmem:[%s204 + $0x38] sm:$0xff] %vm343, %v670
      %684 = vst.msk [vmem:[%s204 + $0x40] sm:$0xff] %vm343, %v671
      %685 = vst.msk [vmem:[%s204 + $0x48] sm:$0xff] %vm343, %v672
      %686 = vst.msk [vmem:[%s204 + $0x50] sm:$0xff] %vm343, %v673
      %687 = vst.msk [vmem:[%s204 + $0x58] sm:$0xff] %vm343, %v674
      %vm688 = vcmask 517120
      %689 = vst.msk [vmem:[%s204 + $0x60] sm:$0x3] %vm688, %v675
      %s690 = smul.u32 13, %s18
      %p691 = scmp.lt.s32.totalorder %s17, 4
      %s692 = scalar_select %p691, %s17, 4
      %p693 = scmp.lt.s32.totalorder %s690, 12
      %s694 = scalar_select %p693, %s690, 12
      %s695 = smul.addr %s692, 13
      %s696 = sadd.s32 %s694, %s695
      %s697 = smul.addr %s696, 8
      %s698 = scalar_lea.vmem %s2, %s697
      // Predicated region
      $region29: #{ens_dqn_forward.7} parent=27 // pred_check
        %p699 = pneg %p99
      $region30: #{ens_dqn_forward.7} parent=27 // pred_check_branch
        %701 = sbr.rel (%p699) target = $region32
      $region31: #{ens_dqn_forward.7} parent=27 // pred_region
        %s702 = smul.u32 13, %s18
      $region32: #{ens_dqn_forward.7} parent=27 // pred_fallthru
        _
    $region28: #{ens_dqn_forward.7} parent=5 // pred_fallthru
      _
    %p703 = scmp.le.s32.totalorder 2, %s8
    // Predicated region
    $region33: #{ens_dqn_forward.7} parent=5 // pred_check
      %p704 = pneg %p703
    $region34: #{ens_dqn_forward.7} parent=5 // pred_check_branch
      %706 = sbr.rel (%p704) target = $region36
    $region35: #{ens_dqn_forward.7} parent=5 // pred_region
      %s707 = ssub.s32 %s8, 2
      // Predicated region
      $region37: #{ens_dqn_forward.7} parent=35 // pred_check
        %p708 = pneg %p105
      $region38: #{ens_dqn_forward.7} parent=35 // pred_check_branch
        %710 = sbr.rel (%p708) target = $region40
      $region39: #{ens_dqn_forward.7} parent=35 // pred_region
        %s711 = smul.u32 13, %s20
        %p712 = scmp.lt.s32.totalorder %s19, 4
        %s713 = scalar_select %p712, %s19, 4
        %p714 = scmp.lt.s32.totalorder %s711, 12
        %s715 = scalar_select %p714, %s711, 12
        %s716 = smul.addr %s713, 13
        %s717 = sadd.s32 %s715, %s716
        %s718 = smul.addr %s717, 8
        %s719 = scalar_lea.vmem %s2, %s718
      $region40: #{ens_dqn_forward.7} parent=35 // pred_fallthru
        _
    $region36: #{ens_dqn_forward.7} parent=5 // pred_fallthru
      _
  $region6: #{ens_dqn_forward.7} parent=0 // loop_footer
    %s12 = sadd.s32 1, %s8
  $region7: #{ens_dqn_forward.7} parent=0 // loop_footer_branch
    %7 = sbr.rel target = $region3
  $region8: #{ens_dqn_forward.7} parent=0 // loop_exit
    _

// kernel: ens_dqn_forward.9
$region0: #{ens_dqn_forward.9}
  #allocation0 [shape = 'u32[]', space=smem, size = 0x4, offset = 0x4, fixed_abs, tag = 'smem constant byte address 0x4 - core index']
  #allocation1 [shape = 'u32[72,128]{1,0:T(1,128)}', space=vmem, size = 0x9000, scoped, tag = 'internal scratch']
  %s0 = inlined_call_operand.vmem [shape: f32[5,2,512], index: 0, kind: input, shape index: {}]
  %s1 = inlined_call_operand.vmem [shape: f32[5,512,4], index: 1, kind: input, shape index: {}]
  %s2 = inlined_call_operand.vmem [shape: f32[5,1,4], index: 2, kind: input, shape index: {}]
  %s3 = inlined_call_operand.hbm [shape: f32[2,4], index: 3, kind: output, shape index: {}]
  %s4 = sld [smem:[#allocation0]]
  $region53: #{ens_dqn_forward.9} parent=0
    _
  %s6 = ssub.s32 1, %s4
  %s7 = scalar_select 0, %s6, %s4
  $region1: #{ens_dqn_forward.9} parent=0
    #allocation2 [shape = 'u8[1024]{0}', space=vmem, size = 0x400, scoped, tag = 'output window, operand 0, single buffered']
    #allocation3 [shape = 's32[2]{0}', space=sflag, size = 0x8, scoped, tag = 'scoped memory for ens_dqn_forward.9']
    %8 = vsyncpa [#allocation3], 0
    loop: start=0, step=1, limit=7
    $region2: #{ens_dqn_forward.9} parent=1 // loop_pre_header
      _
    $region3: #{ens_dqn_forward.9} parent=1 // loop_header
      %s10 = sphi 0, %s14
      %p11 = scmp.ge.s32.totalorder %s10, 7
      %s20 = sphi 0, %s22
      %s23 = sphi 0, %s20
      %s24 = sphi 0, %s23
      %s40 = sphi 0, %s24
      %s46 = sphi 0, %s48
      %s49 = sphi 0, %s46
      %s50 = sphi 0, %s49
      %s66 = sphi 0, %s50
      %s72 = sphi 0, %s74
      %s75 = sphi 0, %s72
      %s76 = sphi 0, %s75
      %s92 = sphi 0, %s76
      %s96 = sphi 0, %s96
      %s98 = sphi 0, %s96
      %s99 = sphi 0, %s98
      %s113 = sphi 0, %s99
    $region4: #{ens_dqn_forward.9} parent=1 // loop_header_branch
      %13 = sbr.rel (%p11) target = $region8
    $region5: #{ens_dqn_forward.9} parent=1 // loop_body
      %s15 = ssub.s32 %s10, 1
      %s16 = ssub.s32 %s10, 2
      %s17 = sadd.s32 %s10, 1
      %s18 = ssub.s32 %s10, %s17
      %p19 = scmp.eq.s32.totalorder %s18, 0
      %s21 = sadd.s32 %s20, 1
      %s22 = scalar_select %p19, %s20, %s21
      %p25 = pneg %p19
      %p26 = scmp.eq.s32.totalorder %s10, 4
      %p27 = por %p25, %p26
      %p28 = scmp.ne.s32.totalorder %s20, %s23
      %p29 = scmp.eq.s32.totalorder %s10, 0
      %p30 = por %p28, %p29
      %p31 = scmp.ne.s32.totalorder %s20, %s23
      %p32 = scmp.eq.s32.totalorder %s15, 4
      %p33 = por %p31, %p32
      %p34 = scmp.ne.s32.totalorder %s23, %s24
      %p35 = scmp.eq.s32.totalorder %s15, 0
      %p36 = por %p34, %p35
      %p37 = scmp.ne.s32.totalorder %s23, %s24
      %p38 = scmp.eq.s32.totalorder %s16, 4
      %p39 = por %p37, %p38
      %p41 = scmp.ne.s32.totalorder %s24, %s40
      %p42 = scmp.eq.s32.totalorder %s16, 0
      %p43 = por %p41, %p42
      %s44 = ssub.s32 %s10, %s17
      %p45 = scmp.eq.s32.totalorder %s44, 0
      %s47 = sadd.s32 %s46, 1
      %s48 = scalar_select %p45, %s46, %s47
      %p51 = pneg %p45
      %p52 = scmp.eq.s32.totalorder %s10, 4
      %p53 = por %p51, %p52
      %p54 = scmp.ne.s32.totalorder %s46, %s49
      %p55 = scmp.eq.s32.totalorder %s10, 0
      %p56 = por %p54, %p55
      %p57 = scmp.ne.s32.totalorder %s46, %s49
      %p58 = scmp.eq.s32.totalorder %s15, 4
      %p59 = por %p57, %p58
      %p60 = scmp.ne.s32.totalorder %s49, %s50
      %p61 = scmp.eq.s32.totalorder %s15, 0
      %p62 = por %p60, %p61
      %p63 = scmp.ne.s32.totalorder %s49, %s50
      %p64 = scmp.eq.s32.totalorder %s16, 4
      %p65 = por %p63, %p64
      %p67 = scmp.ne.s32.totalorder %s50, %s66
      %p68 = scmp.eq.s32.totalorder %s16, 0
      %p69 = por %p67, %p68
      %s70 = ssub.s32 %s10, %s17
      %p71 = scmp.eq.s32.totalorder %s70, 0
      %s73 = sadd.s32 %s72, 1
      %s74 = scalar_select %p71, %s72, %s73
      %p77 = pneg %p71
      %p78 = scmp.eq.s32.totalorder %s10, 4
      %p79 = por %p77, %p78
      %p80 = scmp.ne.s32.totalorder %s72, %s75
      %p81 = scmp.eq.s32.totalorder %s10, 0
      %p82 = por %p80, %p81
      %p83 = scmp.ne.s32.totalorder %s72, %s75
      %p84 = scmp.eq.s32.totalorder %s15, 4
      %p85 = por %p83, %p84
      %p86 = scmp.ne.s32.totalorder %s75, %s76
      %p87 = scmp.eq.s32.totalorder %s15, 0
      %p88 = por %p86, %p87
      %p89 = scmp.ne.s32.totalorder %s75, %s76
      %p90 = scmp.eq.s32.totalorder %s16, 4
      %p91 = por %p89, %p90
      %p93 = scmp.ne.s32.totalorder %s76, %s92
      %p94 = scmp.eq.s32.totalorder %s16, 0
      %p95 = por %p93, %p94
      %s97 = sadd.s32 %s96, 1
      %p100 = scmp.eq.s32.totalorder %s10, 4
      %p101 = scmp.ne.s32.totalorder %s96, %s98
      %p102 = scmp.eq.s32.totalorder %s10, 0
      %p103 = por %p101, %p102
      %p104 = scmp.ne.s32.totalorder %s96, %s98
      %p105 = scmp.eq.s32.totalorder %s15, 4
      %p106 = por %p104, %p105
      %p107 = scmp.ne.s32.totalorder %s98, %s99
      %p108 = scmp.eq.s32.totalorder %s15, 0
      %p109 = por %p107, %p108
      %p110 = scmp.ne.s32.totalorder %s98, %s99
      %p111 = scmp.eq.s32.totalorder %s16, 4
      %p112 = por %p110, %p111
      %p114 = scmp.ne.s32.totalorder %s99, %s113
      %p115 = scmp.eq.s32.totalorder %s16, 0
      %p116 = por %p114, %p115
      %p117 = scmp.le.s32.totalorder 1, %s10
      %p118 = scmp.lt.s32.totalorder %s10, 6
      %p119 = pnand %p117, %p118
      %p120 = pneg %p119
      // Predicated region
      $region9: #{ens_dqn_forward.9} parent=5 // pred_check
        _
      $region10: #{ens_dqn_forward.9} parent=5 // pred_check_branch
        %122 = sbr.rel (%p119) target = $region12
      $region11: #{ens_dqn_forward.9} parent=5 // pred_region
        %s123 = ssub.s32 %s10, 1
      $region12: #{ens_dqn_forward.9} parent=5 // pred_fallthru
        _
      %p124 = scmp.lt.s32.totalorder %s10, 5
      // Predicated region
      $region13: #{ens_dqn_forward.9} parent=5 // pred_check
        %p125 = pneg %p124
      $region14: #{ens_dqn_forward.9} parent=5 // pred_check_branch
        %127 = sbr.rel (%p125) target = $region16
      $region15: #{ens_dqn_forward.9} parent=5 // pred_region
        // Predicated region
        $region17: #{ens_dqn_forward.9} parent=15 // pred_check
          %p128 = pneg %p30
        $region18: #{ens_dqn_forward.9} parent=15 // pred_check_branch
          %130 = sbr.rel (%p128) target = $region20
        $region19: #{ens_dqn_forward.9} parent=15 // pred_region
          %p131 = scmp.lt.s32.totalorder %s10, 4
          %s132 = scalar_select %p131, %s10, 4
          %s133 = smul.addr %s132, 4
          %s134 = smul.addr %s133, 2
          %s135 = scalar_lea.vmem %s0, %s134
        $region20: #{ens_dqn_forward.9} parent=15 // pred_fallthru
          _
        // Predicated region
        $region21: #{ens_dqn_forward.9} parent=15 // pred_check
          %p136 = pneg %p56
        $region22: #{ens_dqn_forward.9} parent=15 // pred_check_branch
          %138 = sbr.rel (%p136) target = $region24
        $region23: #{ens_dqn_forward.9} parent=15 // pred_region
          %p139 = scmp.lt.s32.totalorder %s10, 4
          %s140 = scalar_select %p139, %s10, 4
          %s141 = smul.addr %s140, 64
          %s142 = smul.addr %s141, 8
          %s143 = scalar_lea.vmem %s1, %s142
        $region24: #{ens_dqn_forward.9} parent=15 // pred_fallthru
          _
        // Predicated region
        $region25: #{ens_dqn_forward.9} parent=15 // pred_check
          %p144 = pneg %p82
        $region26: #{ens_dqn_forward.9} parent=15 // pred_check_branch
          %146 = sbr.rel (%p144) target = $region28
        $region27: #{ens_dqn_forward.9} parent=15 // pred_region
          %p147 = scmp.lt.s32.totalorder %s10, 4
          %s148 = scalar_select %p147, %s10, 4
          %s149 = scalar_lea.vmem %s2, %s148
        $region28: #{ens_dqn_forward.9} parent=15 // pred_fallthru
          _
      $region16: #{ens_dqn_forward.9} parent=5 // pred_fallthru
        _
      %p150 = scmp.le.s32.totalorder 1, %s10
      %p151 = scmp.lt.s32.totalorder %s10, 6
      %p152 = pnand %p150, %p151
      %p153 = pneg %p152
      // Predicated region
      $region29: #{ens_dqn_forward.9} parent=5 // pred_check
        _
      $region30: #{ens_dqn_forward.9} parent=5 // pred_check_branch
        %155 = sbr.rel (%p152) target = $region32
      $region31: #{ens_dqn_forward.9} parent=5 // pred_region
        %s156 = ssub.s32 %s10, 1
        %p157 = scmp.lt.s32.totalorder %s15, 4
        %s158 = scalar_select %p157, %s15, 4
        %s159 = smul.addr %s158, 4
        %s160 = smul.addr %s159, 2
        %s161 = scalar_lea.vmem %s0, %s160
        %p162 = pneg %p36
        %p163 = pneg %p33
        %p164 = scmp.lt.s32.totalorder %s15, 4
        %s165 = scalar_select %p164, %s15, 4
        %s166 = smul.addr %s165, 64
        %s167 = smul.addr %s166, 8
        %s168 = scalar_lea.vmem %s1, %s167
        %p169 = pneg %p62
        %p170 = pneg %p59
        %p171 = scmp.lt.s32.totalorder %s15, 4
        %s172 = scalar_select %p171, %s15, 4
        %s173 = scalar_lea.vmem %s2, %s172
        %p174 = pneg %p88
        %p175 = pneg %p85
        %p176 = pneg %p109
        %p177 = pneg %p106
        %p178 = scmp.lt.s32.totalorder %s15, 4
        %s179 = scalar_select %p178, %s15, 4
        %s180 = smul.addr %s179, 4
        %s181 = smul.addr %s180, 2
        %s182 = scalar_lea.vmem %s0, %s181
        %p183 = scmp.lt.s32.totalorder %s15, 4
        %s184 = scalar_select %p183, %s15, 4
        %s185 = smul.addr %s184, 64
        %s186 = smul.addr %s185, 8
        %s187 = scalar_lea.vmem %s1, %s186
        %p188 = scmp.lt.s32.totalorder %s15, 4
        %s189 = scalar_select %p188, %s15, 4
        %s190 = scalar_lea.vmem %s2, %s189
        %p191 = scmp.eq.s32.totalorder %s15, 0
        // Predicated region
        $region33: #{ens_dqn_forward.9} parent=31 // pred_check
          %p192 = pneg %p191
        $region34: #{ens_dqn_forward.9} parent=31 // pred_check_branch
          %194 = sbr.rel (%p192) target = $region36
        $region35: #{ens_dqn_forward.9} parent=31 // pred_region
          %vm195 = vcmask 25600
          %196 = vst.msk [vmem:[#allocation2] sm:$0x3] %vm195, 0.0
        $region36: #{ens_dqn_forward.9} parent=31 // pred_fallthru
          _
        %v197 = vld [vmem:[%s182] sm:$0xff]
        %v198 = vld [vmem:[%s187] sm:$0xff]
        %v199 = vld [vmem:[%s187 + $0x8] sm:$0xff]
        %v200 = vld [vmem:[%s187 + $0x10] sm:$0xff]
        %v201 = vld [vmem:[%s187 + $0x18] sm:$0xff]
        %v202 = vld [vmem:[%s187 + $0x20] sm:$0xff]
        %v203 = vld [vmem:[%s187 + $0x28] sm:$0xff]
        %v204 = vld [vmem:[%s187 + $0x30] sm:$0xff]
        %v205 = vld [vmem:[%s187 + $0x38] sm:$0xff]
        %v206 = vld [vmem:[%s187 + $0x40] sm:$0xff]
        %v207 = vld [vmem:[%s187 + $0x48] sm:$0xff]
        %v208 = vld [vmem:[%s187 + $0x50] sm:$0xff]
        %v209 = vld [vmem:[%s187 + $0x58] sm:$0xff]
        %v210 = vld [vmem:[%s187 + $0x60] sm:$0xff]
        %v211 = vld [vmem:[%s187 + $0x68] sm:$0xff]
        %v212 = vld [vmem:[%s187 + $0x70] sm:$0xff]
        %v213 = vld [vmem:[%s187 + $0x78] sm:$0xff]
        %v214 = vld [vmem:[%s187 + $0x80] sm:$0xff]
        %v215 = vld [vmem:[%s187 + $0x88] sm:$0xff]
        %v216 = vld [vmem:[%s187 + $0x90] sm:$0xff]
        %v217 = vld [vmem:[%s187 + $0x98] sm:$0xff]
        %v218 = vld [vmem:[%s187 + $0xa0] sm:$0xff]
        %v219 = vld [vmem:[%s187 + $0xa8] sm:$0xff]
        %v220 = vld [vmem:[%s187 + $0xb0] sm:$0xff]
        %v221 = vld [vmem:[%s187 + $0xb8] sm:$0xff]
        %v222 = vld [vmem:[%s187 + $0xc0] sm:$0xff]
        %v223 = vld [vmem:[%s187 + $0xc8] sm:$0xff]
        %v224 = vld [vmem:[%s187 + $0xd0] sm:$0xff]
        %v225 = vld [vmem:[%s187 + $0xd8] sm:$0xff]
        %v226 = vld [vmem:[%s187 + $0xe0] sm:$0xff]
        %v227 = vld [vmem:[%s187 + $0xe8] sm:$0xff]
        %v228 = vld [vmem:[%s187 + $0xf0] sm:$0xff]
        %v229 = vld [vmem:[%s187 + $0xf8] sm:$0xff]
        %v230 = vld [vmem:[%s187 + $0x100] sm:$0xff]
        %v231 = vld [vmem:[%s187 + $0x108] sm:$0xff]
        %v232 = vld [vmem:[%s187 + $0x110] sm:$0xff]
        %v233 = vld [vmem:[%s187 + $0x118] sm:$0xff]
        %v234 = vld [vmem:[%s187 + $0x120] sm:$0xff]
        %v235 = vld [vmem:[%s187 + $0x128] sm:$0xff]
        %v236 = vld [vmem:[%s187 + $0x130] sm:$0xff]
        %v237 = vld [vmem:[%s187 + $0x138] sm:$0xff]
        %v238 = vld [vmem:[%s187 + $0x140] sm:$0xff]
        %v239 = vld [vmem:[%s187 + $0x148] sm:$0xff]
        %v240 = vld [vmem:[%s187 + $0x150] sm:$0xff]
        %v241 = vld [vmem:[%s187 + $0x158] sm:$0xff]
        %v242 = vld [vmem:[%s187 + $0x160] sm:$0xff]
        %v243 = vld [vmem:[%s187 + $0x168] sm:$0xff]
        %v244 = vld [vmem:[%s187 + $0x170] sm:$0xff]
        %v245 = vld [vmem:[%s187 + $0x178] sm:$0xff]
        %v246 = vld [vmem:[%s187 + $0x180] sm:$0xff]
        %v247 = vld [vmem:[%s187 + $0x188] sm:$0xff]
        %v248 = vld [vmem:[%s187 + $0x190] sm:$0xff]
        %v249 = vld [vmem:[%s187 + $0x198] sm:$0xff]
        %v250 = vld [vmem:[%s187 + $0x1a0] sm:$0xff]
        %v251 = vld [vmem:[%s187 + $0x1a8] sm:$0xff]
        %v252 = vld [vmem:[%s187 + $0x1b0] sm:$0xff]
        %v253 = vld [vmem:[%s187 + $0x1b8] sm:$0xff]
        %v254 = vld [vmem:[%s187 + $0x1c0] sm:$0xff]
        %v255 = vld [vmem:[%s187 + $0x1c8] sm:$0xff]
        %v256 = vld [vmem:[%s187 + $0x1d0] sm:$0xff]
        %v257 = vld [vmem:[%s187 + $0x1d8] sm:$0xff]
        %v258 = vld [vmem:[%s187 + $0x1e0] sm:$0xff]
        %v259 = vld [vmem:[%s187 + $0x1e8] sm:$0xff]
        %v260 = vld [vmem:[%s187 + $0x1f0] sm:$0xff]
        %v261 = vld [vmem:[%s187 + $0x1f8] sm:$0xff]
        %v262 = vld [vmem:[%s190] sm:$0x1]
        %v264 = vperm.slane %v262, 0
        %267 = vst [vmem:[#allocation1] ss:$4 sm:$0xff] %v197
        %v268 = vld.sshfl [vmem:[#allocation1] sm:$0xff pattern:$0x73625140]
        %v269 = vld.sshfl [vmem:[#allocation1 + $0x8] sm:$0xff pattern:$0x73625140]
        %v270 = vld.sshfl [vmem:[#allocation1 + $0x10] sm:$0xff pattern:$0x73625140]
        %v271 = vld.sshfl [vmem:[#allocation1 + $0x18] sm:$0xff pattern:$0x73625140]
        %276 = vmatpush.msra.mxu0 %v213
        %277 = vmatpush.msra.mxu0 %v212
        %278 = vmatpush.msra.mxu0 %v211
        %279 = vmatpush.msra.mxu0 %v210
        %280 = vmatpush.msra.mxu0 %v209
        %281 = vmatpush.msra.mxu0 %v208
        %282 = vmatpush.msra.mxu0 %v207
        %283 = vmatpush.msra.mxu0 %v206
        %284 = vmatpush.msra.mxu0 %v205
        %285 = vmatpush.msra.mxu0 %v204
        %286 = vmatpush.msra.mxu0 %v203
        %287 = vmatpush.msra.mxu0 %v202
        %288 = vmatpush.msra.mxu0 %v201
        %289 = vmatpush.msra.mxu0 %v200
        %290 = vmatpush.msra.mxu0 %v199
        %291 = vmatpush.msra.mxu0 %v198
        %292 = vmatmul.f32.gmra.mxu0 %v268
        %v293 = vpop.f32.mrf.mxu0
        %v294 = vadd.f32 %v264, %v293
        %295 = vdwg.mxu0
        %296 = vmatpush.msra.mxu0 %v229
        %297 = vmatpush.msra.mxu0 %v228
        %298 = vmatpush.msra.mxu0 %v227
        %299 = vmatpush.msra.mxu0 %v226
        %300 = vmatpush.msra.mxu0 %v225
        %301 = vmatpush.msra.mxu0 %v224
        %302 = vmatpush.msra.mxu0 %v223
        %303 = vmatpush.msra.mxu0 %v222
        %304 = vmatpush.msra.mxu0 %v221
        %305 = vmatpush.msra.mxu0 %v220
        %306 = vmatpush.msra.mxu0 %v219
        %307 = vmatpush.msra.mxu0 %v218
        %308 = vmatpush.msra.mxu0 %v217
        %309 = vmatpush.msra.mxu0 %v216
        %310 = vmatpush.msra.mxu0 %v215
        %311 = vmatpush.msra.mxu0 %v214
        %312 = vmatmul.f32.gmra.mxu0 %v269
        %v313 = vpop.f32.mrf.mxu0
        %v314 = vadd.f32 %v294, %v313
        %315 = vdwg.mxu0
        %316 = vmatpush.msra.mxu0 %v245
        %317 = vmatpush.msra.mxu0 %v244
        %318 = vmatpush.msra.mxu0 %v243
        %319 = vmatpush.msra.mxu0 %v242
        %320 = vmatpush.msra.mxu0 %v241
        %321 = vmatpush.msra.mxu0 %v240
        %322 = vmatpush.msra.mxu0 %v239
        %323 = vmatpush.msra.mxu0 %v238
        %324 = vmatpush.msra.mxu0 %v237
        %325 = vmatpush.msra.mxu0 %v236
        %326 = vmatpush.msra.mxu0 %v235
        %327 = vmatpush.msra.mxu0 %v234
        %328 = vmatpush.msra.mxu0 %v233
        %329 = vmatpush.msra.mxu0 %v232
        %330 = vmatpush.msra.mxu0 %v231
        %331 = vmatpush.msra.mxu0 %v230
        %332 = vmatmul.f32.gmra.mxu0 %v270
        %v333 = vpop.f32.mrf.mxu0
        %v334 = vadd.f32 %v314, %v333
        %335 = vdwg.mxu0
        %336 = vmatpush.msra.mxu0 %v261
        %337 = vmatpush.msra.mxu0 %v260
        %338 = vmatpush.msra.mxu0 %v259
        %339 = vmatpush.msra.mxu0 %v258
        %340 = vmatpush.msra.mxu0 %v257
        %341 = vmatpush.msra.mxu0 %v256
        %342 = vmatpush.msra.mxu0 %v255
        %343 = vmatpush.msra.mxu0 %v254
        %344 = vmatpush.msra.mxu0 %v253
        %345 = vmatpush.msra.mxu0 %v252
        %346 = vmatpush.msra.mxu0 %v251
        %347 = vmatpush.msra.mxu0 %v250
        %348 = vmatpush.msra.mxu0 %v249
        %349 = vmatpush.msra.mxu0 %v248
        %350 = vmatpush.msra.mxu0 %v247
        %351 = vmatpush.msra.mxu0 %v246
        %352 = vmatmul.f32.gmra.mxu0 %v271
        %v353 = vpop.f32.mrf.mxu0
        %v354 = vadd.f32 %v334, %v353
        %355 = vdwg.mxu0
        %v356 = vmul.f32 %v354, 10.0
        %vm357 = vcmask 25600
        %v358 = vsel %vm357, %v356, -inf
        %359 = vmax.xlane.f32.xlu0 %v358
        %v360 = vpop.xlane.xlu0 %359
        %v361 = vsub.f32 %v356, %v360
        %v362 = vmul.f32 %v361, 1.442695
        %v363 = vpow.pop %v362
        %v364 = vsel %vm357, %v363, 0.0
        %365 = vadd.xlane.f32.xlu0 %v364
        %v366 = vpop.xlane.xlu0 %365
        %v367 = vld [vmem:[#allocation2] sm:$0x3]
        %v368 = vrcp.pop %v366
        %v369 = vmul.f32 %v363, %v368
        %v370 = vadd.f32 %v367, %v369
        %371 = vst.msk [vmem:[#allocation2] sm:$0x3] %vm357, %v370
        %p372 = scmp.eq.s32.totalorder %s15, 4
        // Predicated region
        $region37: #{ens_dqn_forward.9} parent=31 // pred_check
          %p373 = pneg %p372
        $region38: #{ens_dqn_forward.9} parent=31 // pred_check_branch
          %375 = sbr.rel (%p373) target = $region40
        $region39: #{ens_dqn_forward.9} parent=31 // pred_region
          %v376 = vld [vmem:[#allocation2] sm:$0x3]
          %v377 = vmul.f32 %v376, 0.2
          %378 = vst.msk [vmem:[#allocation2] sm:$0x3] %vm357, %v377
        $region40: #{ens_dqn_forward.9} parent=31 // pred_fallthru
          _
        // Predicated region
        $region41: #{ens_dqn_forward.9} parent=31 // pred_check
          %p379 = pneg %p106
        $region42: #{ens_dqn_forward.9} parent=31 // pred_check_branch
          %381 = sbr.rel (%p379) target = $region44
        $region43: #{ens_dqn_forward.9} parent=31 // pred_region
          %383 = vsyncadd [#allocation3], 0
          %s385 = sshll.u32 [#allocation2], 4
          %s386 = int_to_ptr.vmem [resolvable:$true] %s385
          %s387 = sshll.u32 %s3, 4
          %s388 = int_to_ptr.hbm [resolvable:$true] %s387
          %390 = dma.vmem_to_hbm [thread:$0]  %s386, 32, %s388, [#allocation3]
        $region44: #{ens_dqn_forward.9} parent=31 // pred_fallthru
          _
        // Predicated region
        $region45: #{ens_dqn_forward.9} parent=31 // pred_check
          %p391 = pneg %p106
        $region46: #{ens_dqn_forward.9} parent=31 // pred_check_branch
          %393 = sbr.rel (%p391) target = $region48
        $region47: #{ens_dqn_forward.9} parent=31 // pred_region
          %395 = dma.done [#allocation3], 32
        $region48: #{ens_dqn_forward.9} parent=31 // pred_fallthru
          _
      $region32: #{ens_dqn_forward.9} parent=5 // pred_fallthru
        _
      %p396 = scmp.le.s32.totalorder 2, %s10
      // Predicated region
      $region49: #{ens_dqn_forward.9} parent=5 // pred_check
        %p397 = pneg %p396
      $region50: #{ens_dqn_forward.9} parent=5 // pred_check_branch
        %399 = sbr.rel (%p397) target = $region52
      $region51: #{ens_dqn_forward.9} parent=5 // pred_region
        %s400 = ssub.s32 %s10, 2
      $region52: #{ens_dqn_forward.9} parent=5 // pred_fallthru
        _
    $region6: #{ens_dqn_forward.9} parent=1 // loop_footer
      %s14 = sadd.s32 1, %s10
    $region7: #{ens_dqn_forward.9} parent=1 // loop_footer_branch
      %9 = sbr.rel target = $region3
    $region8: #{ens_dqn_forward.9} parent=1 // loop_exit
      _
    %401 = vsyncpa [#allocation3], 1
    %s402 = scalar_lea.sflag [#allocation3], 1
    %403 = vsyncpa %s402, 1

// kernel: ens_dqn_forward.8
$region0: #{ens_dqn_forward.8}
  #allocation0 [shape = 'u32[]', space=smem, size = 0x4, offset = 0x4, fixed_abs, tag = 'smem constant byte address 0x4 - core index']
  #allocation1 [shape = 'u32[72,128]{1,0:T(1,128)}', space=vmem, size = 0x9000, scoped, tag = 'internal scratch']
  %s0 = inlined_call_operand.vmem [shape: f32[5,2,3136], index: 0, kind: input, shape index: {}]
  %s1 = inlined_call_operand.vmem [shape: f32[5,3136,512], index: 1, kind: input, shape index: {}]
  %s2 = inlined_call_operand.vmem [shape: f32[5,1,512], index: 2, kind: input, shape index: {}]
  %s3 = inlined_call_operand.vmem [shape: f32[5,2,512], index: 3, kind: output, shape index: {}]
  %s4 = sld [smem:[#allocation0]]
  $region45: #{ens_dqn_forward.8} parent=0
    _
  %s6 = ssub.s32 1, %s4
  %s7 = scalar_select 0, %s6, %s4
  loop: start=0, step=1, limit=7
  $region2: #{ens_dqn_forward.8} parent=0 // loop_pre_header
    _
  $region3: #{ens_dqn_forward.8} parent=0 // loop_header
    %s9 = sphi 0, %s13
    %p10 = scmp.ge.s32.totalorder %s9, 7
    %s16 = sphi 0, %s28
    %s17 = sphi 0, %s24
    %s18 = sphi 0, %s16
    %s19 = sphi 0, %s17
    %s20 = sphi 0, %s18
    %s21 = sphi 0, %s19
    %s33 = sphi 0, %s35
    %s36 = sphi 0, %s33
    %s37 = sphi 0, %s36
    %s53 = sphi 0, %s37
    %s59 = sphi 0, %s61
    %s62 = sphi 0, %s59
    %s63 = sphi 0, %s62
    %s79 = sphi 0, %s63
    %s85 = sphi 0, %s87
    %s88 = sphi 0, %s85
    %s89 = sphi 0, %s88
    %s105 = sphi 0, %s89
    %s113 = sphi 0, %s115
    %s116 = sphi 0, %s113
    %s117 = sphi 0, %s116
    %s133 = sphi 0, %s117
  $region4: #{ens_dqn_forward.8} parent=0 // loop_header_branch
    %12 = sbr.rel (%p10) target = $region8
  $region5: #{ens_dqn_forward.8} parent=0 // loop_body
    %s14 = ssub.s32 %s9, 1
    %s15 = ssub.s32 %s9, 2
    %s22 = sadd.s32 1, %s17
    %p23 = scmp.ge.s32.totalorder %s22, 1
    %s24 = scalar_select %p23, 0, %s22
    %s25 = sadd.s32 1, %s16
    %s26 = scalar_select %p23, %s25, %s16
    %p27 = scmp.ge.s32.totalorder %s26, 5
    %s28 = scalar_select %p27, 0, %s26
    %s29 = ssub.s32 %s16, %s28
    %s30 = ssub.s32 %s17, %s24
    %s31 = sor.u32 %s29, %s30
    %p32 = scmp.eq.s32.totalorder %s31, 0
    %s34 = sadd.s32 %s33, 1
    %s35 = scalar_select %p32, %s33, %s34
    %p38 = pneg %p32
    %p39 = scmp.eq.s32.totalorder %s9, 4
    %p40 = por %p38, %p39
    %p41 = scmp.ne.s32.totalorder %s33, %s36
    %p42 = scmp.eq.s32.totalorder %s9, 0
    %p43 = por %p41, %p42
    %p44 = scmp.ne.s32.totalorder %s33, %s36
    %p45 = scmp.eq.s32.totalorder %s14, 4
    %p46 = por %p44, %p45
    %p47 = scmp.ne.s32.totalorder %s36, %s37
    %p48 = scmp.eq.s32.totalorder %s14, 0
    %p49 = por %p47, %p48
    %p50 = scmp.ne.s32.totalorder %s36, %s37
    %p51 = scmp.eq.s32.totalorder %s15, 4
    %p52 = por %p50, %p51
    %p54 = scmp.ne.s32.totalorder %s37, %s53
    %p55 = scmp.eq.s32.totalorder %s15, 0
    %p56 = por %p54, %p55
    %s57 = ssub.s32 %s16, %s28
    %p58 = scmp.eq.s32.totalorder %s57, 0
    %s60 = sadd.s32 %s59, 1
    %s61 = scalar_select %p58, %s59, %s60
    %p64 = pneg %p58
    %p65 = scmp.eq.s32.totalorder %s9, 4
    %p66 = por %p64, %p65
    %p67 = scmp.ne.s32.totalorder %s59, %s62
    %p68 = scmp.eq.s32.totalorder %s9, 0
    %p69 = por %p67, %p68
    %p70 = scmp.ne.s32.totalorder %s59, %s62
    %p71 = scmp.eq.s32.totalorder %s14, 4
    %p72 = por %p70, %p71
    %p73 = scmp.ne.s32.totalorder %s62, %s63
    %p74 = scmp.eq.s32.totalorder %s14, 0
    %p75 = por %p73, %p74
    %p76 = scmp.ne.s32.totalorder %s62, %s63
    %p77 = scmp.eq.s32.totalorder %s15, 4
    %p78 = por %p76, %p77
    %p80 = scmp.ne.s32.totalorder %s63, %s79
    %p81 = scmp.eq.s32.totalorder %s15, 0
    %p82 = por %p80, %p81
    %s83 = ssub.s32 %s16, %s28
    %p84 = scmp.eq.s32.totalorder %s83, 0
    %s86 = sadd.s32 %s85, 1
    %s87 = scalar_select %p84, %s85, %s86
    %p90 = pneg %p84
    %p91 = scmp.eq.s32.totalorder %s9, 4
    %p92 = por %p90, %p91
    %p93 = scmp.ne.s32.totalorder %s85, %s88
    %p94 = scmp.eq.s32.totalorder %s9, 0
    %p95 = por %p93, %p94
    %p96 = scmp.ne.s32.totalorder %s85, %s88
    %p97 = scmp.eq.s32.totalorder %s14, 4
    %p98 = por %p96, %p97
    %p99 = scmp.ne.s32.totalorder %s88, %s89
    %p100 = scmp.eq.s32.totalorder %s14, 0
    %p101 = por %p99, %p100
    %p102 = scmp.ne.s32.totalorder %s88, %s89
    %p103 = scmp.eq.s32.totalorder %s15, 4
    %p104 = por %p102, %p103
    %p106 = scmp.ne.s32.totalorder %s89, %s105
    %p107 = scmp.eq.s32.totalorder %s15, 0
    %p108 = por %p106, %p107
    %s109 = ssub.s32 %s16, %s28
    %s110 = ssub.s32 %s17, %s24
    %s111 = sor.u32 %s109, %s110
    %p112 = scmp.eq.s32.totalorder %s111, 0
    %s114 = sadd.s32 %s113, 1
    %s115 = scalar_select %p112, %s113, %s114
    %p118 = pneg %p112
    %p119 = scmp.eq.s32.totalorder %s9, 4
    %p120 = por %p118, %p119
    %p121 = scmp.ne.s32.totalorder %s113, %s116
    %p122 = scmp.eq.s32.totalorder %s9, 0
    %p123 = por %p121, %p122
    %p124 = scmp.ne.s32.totalorder %s113, %s116
    %p125 = scmp.eq.s32.totalorder %s14, 4
    %p126 = por %p124, %p125
    %p127 = scmp.ne.s32.totalorder %s116, %s117
    %p128 = scmp.eq.s32.totalorder %s14, 0
    %p129 = por %p127, %p128
    %p130 = scmp.ne.s32.totalorder %s116, %s117
    %p131 = scmp.eq.s32.totalorder %s15, 4
    %p132 = por %p130, %p131
    %p134 = scmp.ne.s32.totalorder %s117, %s133
    %p135 = scmp.eq.s32.totalorder %s15, 0
    %p136 = por %p134, %p135
    %p137 = scmp.le.s32.totalorder 1, %s9
    %p138 = scmp.lt.s32.totalorder %s9, 6
    %p139 = pnand %p137, %p138
    %p140 = pneg %p139
    // Predicated region
    $region9: #{ens_dqn_forward.8} parent=5 // pred_check
      _
    $region10: #{ens_dqn_forward.8} parent=5 // pred_check_branch
      %142 = sbr.rel (%p139) target = $region12
    $region11: #{ens_dqn_forward.8} parent=5 // pred_region
      %s143 = ssub.s32 %s9, 1
    $region12: #{ens_dqn_forward.8} parent=5 // pred_fallthru
      _
    %p144 = scmp.lt.s32.totalorder %s9, 5
    // Predicated region
    $region13: #{ens_dqn_forward.8} parent=5 // pred_check
      %p145 = pneg %p144
    $region14: #{ens_dqn_forward.8} parent=5 // pred_check_branch
      %147 = sbr.rel (%p145) target = $region16
    $region15: #{ens_dqn_forward.8} parent=5 // pred_region
      // Predicated region
      $region17: #{ens_dqn_forward.8} parent=15 // pred_check
        %p148 = pneg %p43
      $region18: #{ens_dqn_forward.8} parent=15 // pred_check_branch
        %150 = sbr.rel (%p148) target = $region20
      $region19: #{ens_dqn_forward.8} parent=15 // pred_region
        %p151 = scmp.lt.s32.totalorder %s16, 4
        %s152 = scalar_select %p151, %s16, 4
        %p153 = scmp.lt.s32.totalorder %s17, 0
        %s154 = scalar_select %p153, %s17, 0
        %s155 = smul.addr %s154, 25
        %s156 = smul.addr %s152, 25
        %s157 = sadd.s32 %s155, %s156
        %s158 = smul.addr %s157, 2
        %s159 = scalar_lea.vmem %s0, %s158
      $region20: #{ens_dqn_forward.8} parent=15 // pred_fallthru
        _
      // Predicated region
      $region21: #{ens_dqn_forward.8} parent=15 // pred_check
        %p160 = pneg %p69
      $region22: #{ens_dqn_forward.8} parent=15 // pred_check_branch
        %162 = sbr.rel (%p160) target = $region24
      $region23: #{ens_dqn_forward.8} parent=15 // pred_region
        %p163 = scmp.lt.s32.totalorder %s16, 4
        %s164 = scalar_select %p163, %s16, 4
        %s165 = smul.addr %s164, 1568
        %s166 = smul.addr %s165, 8
        %s167 = scalar_lea.vmem %s1, %s166
      $region24: #{ens_dqn_forward.8} parent=15 // pred_fallthru
        _
      // Predicated region
      $region25: #{ens_dqn_forward.8} parent=15 // pred_check
        %p168 = pneg %p95
      $region26: #{ens_dqn_forward.8} parent=15 // pred_check_branch
        %170 = sbr.rel (%p168) target = $region28
      $region27: #{ens_dqn_forward.8} parent=15 // pred_region
        %p171 = scmp.lt.s32.totalorder %s16, 4
        %s172 = scalar_select %p171, %s16, 4
        %s173 = smul.addr %s172, 4
        %s174 = scalar_lea.vmem %s2, %s173
      $region28: #{ens_dqn_forward.8} parent=15 // pred_fallthru
        _
    $region16: #{ens_dqn_forward.8} parent=5 // pred_fallthru
      _
    %p175 = scmp.le.s32.totalorder 1, %s9
    %p176 = scmp.lt.s32.totalorder %s9, 6
    %p177 = pnand %p175, %p176
    %p178 = pneg %p177
    // Predicated region
    $region29: #{ens_dqn_forward.8} parent=5 // pred_check
      _
    $region30: #{ens_dqn_forward.8} parent=5 // pred_check_branch
      %180 = sbr.rel (%p177) target = $region32
    $region31: #{ens_dqn_forward.8} parent=5 // pred_region
      %s181 = ssub.s32 %s9, 1
      %p182 = scmp.lt.s32.totalorder %s18, 4
      %s183 = scalar_select %p182, %s18, 4
      %p184 = scmp.lt.s32.totalorder %s19, 0
      %s185 = scalar_select %p184, %s19, 0
      %s186 = smul.addr %s185, 25
      %s187 = smul.addr %s183, 25
      %s188 = sadd.s32 %s186, %s187
      %s189 = smul.addr %s188, 2
      %s190 = scalar_lea.vmem %s0, %s189
      %p191 = pneg %p49
      %p192 = pneg %p46
      %p193 = scmp.lt.s32.totalorder %s18, 4
      %s194 = scalar_select %p193, %s18, 4
      %s195 = smul.addr %s194, 1568
      %s196 = smul.addr %s195, 8
      %s197 = scalar_lea.vmem %s1, %s196
      %p198 = pneg %p75
      %p199 = pneg %p72
      %p200 = scmp.lt.s32.totalorder %s18, 4
      %s201 = scalar_select %p200, %s18, 4
      %s202 = smul.addr %s201, 4
      %s203 = scalar_lea.vmem %s2, %s202
      %p204 = pneg %p101
      %p205 = pneg %p98
      %p206 = pneg %p129
      %p207 = pneg %p126
      %p208 = scmp.lt.s32.totalorder %s18, 4
      %s209 = scalar_select %p208, %s18, 4
      %p210 = scmp.lt.s32.totalorder %s19, 0
      %s211 = scalar_select %p210, %s19, 0
      %s212 = smul.addr %s211, 4
      %s213 = smul.addr %s209, 4
      %s214 = sadd.s32 %s212, %s213
      %s215 = smul.addr %s214, 2
      %s216 = scalar_lea.vmem %s3, %s215
      %p217 = scmp.lt.s32.totalorder %s18, 4
      %s218 = scalar_select %p217, %s18, 4
      %p219 = scmp.lt.s32.totalorder %s19, 0
      %s220 = scalar_select %p219, %s19, 0
      %s221 = smul.addr %s220, 25
      %s222 = smul.addr %s218, 25
      %s223 = sadd.s32 %s221, %s222
      %s224 = smul.addr %s223, 2
      %s225 = scalar_lea.vmem %s0, %s224
      %p226 = scmp.lt.s32.totalorder %s18, 4
      %s227 = scalar_select %p226, %s18, 4
      %s228 = smul.addr %s227, 1568
      %s229 = smul.addr %s228, 8
      %s230 = scalar_lea.vmem %s1, %s229
      %p231 = scmp.lt.s32.totalorder %s18, 4
      %s232 = scalar_select %p231, %s18, 4
      %s233 = smul.addr %s232, 4
      %s234 = scalar_lea.vmem %s2, %s233
      %p235 = scmp.lt.s32.totalorder %s18, 4
      %s236 = scalar_select %p235, %s18, 4
      %p237 = scmp.lt.s32.totalorder %s19, 0
      %s238 = scalar_select %p237, %s19, 0
      %s239 = smul.addr %s238, 4
      %s240 = smul.addr %s236, 4
      %s241 = sadd.s32 %s239, %s240
      %s242 = smul.addr %s241, 2
      %s243 = scalar_lea.vmem %s3, %s242
      %v244 = vld [vmem:[%s225] sm:$0xff]
      %v245 = vld [vmem:[%s225 + $0x8] sm:$0xff]
      %v246 = vld [vmem:[%s225 + $0x10] sm:$0xff]
      %v247 = vld [vmem:[%s225 + $0x18] sm:$0xff]
      %v248 = vld [vmem:[%s225 + $0x20] sm:$0xff]
      %v249 = vld [vmem:[%s225 + $0x28] sm:$0xff]
      %v250 = vld [vmem:[%s225 + $0x30] sm:$0x3]
      %v251 = vld [vmem:[%s230] sm:$0xff]
      %v252 = vld [vmem:[%s230 + $0x8] sm:$0xff]
      %v253 = vld [vmem:[%s230 + $0x10] sm:$0xff]
      %v254 = vld [vmem:[%s230 + $0x18] sm:$0xff]
      %v255 = vld [vmem:[%s230 + $0x20] sm:$0xff]
      %v256 = vld [vmem:[%s230 + $0x28] sm:$0xff]
      %v257 = vld [vmem:[%s230 + $0x30] sm:$0xff]
      %v258 = vld [vmem:[%s230 + $0x38] sm:$0xff]
      %v259 = vld [vmem:[%s230 + $0x40] sm:$0xff]
      %v260 = vld [vmem:[%s230 + $0x48] sm:$0xff]
      %v261 = vld [vmem:[%s230 + $0x50] sm:$0xff]
      %v262 = vld [vmem:[%s230 + $0x58] sm:$0xff]
      %v263 = vld [vmem:[%s230 + $0x60] sm:$0xff]
      %v264 = vld [vmem:[%s230 + $0x68] sm:$0xff]
      %v265 = vld [vmem:[%s230 + $0x70] sm:$0xff]
      %v266 = vld [vmem:[%s230 + $0x78] sm:$0xff]
      %v267 = vld [vmem:[%s230 + $0x80] sm:$0xff]
      %v268 = vld [vmem:[%s230 + $0x88] sm:$0xff]
      %v269 = vld [vmem:[%s230 + $0x90] sm:$0xff]
      %v270 = vld [vmem:[%s230 + $0x98] sm:$0xff]
      %v271 = vld [vmem:[%s230 + $0xa0] sm:$0xff]
      %v272 = vld [vmem:[%s230 + $0xa8] sm:$0xff]
      %v273 = vld [vmem:[%s230 + $0xb0] sm:$0xff]
      %v274 = vld [vmem:[%s230 + $0xb8] sm:$0xff]
      %v275 = vld [vmem:[%s230 + $0xc0] sm:$0xff]
      %v276 = vld [vmem:[%s230 + $0xc8] sm:$0xff]
      %v277 = vld [vmem:[%s230 + $0xd0] sm:$0xff]
      %v278 = vld [vmem:[%s230 + $0xd8] sm:$0xff]
      %v279 = vld [vmem:[%s230 + $0xe0] sm:$0xff]
      %v280 = vld [vmem:[%s230 + $0xe8] sm:$0xff]
      %v281 = vld [vmem:[%s230 + $0xf0] sm:$0xff]
      %v282 = vld [vmem:[%s230 + $0xf8] sm:$0xff]
      %v283 = vld [vmem:[%s230 + $0x100] sm:$0xff]
      %v284 = vld [vmem:[%s230 + $0x108] sm:$0xff]
      %v285 = vld [vmem:[%s230 + $0x110] sm:$0xff]
      %v286 = vld [vmem:[%s230 + $0x118] sm:$0xff]
      %v287 = vld [vmem:[%s230 + $0x120] sm:$0xff]
      %v288 = vld [vmem:[%s230 + $0x128] sm:$0xff]
      %v289 = vld [vmem:[%s230 + $0x130] sm:$0xff]
      %v290 = vld [vmem:[%s230 + $0x138] sm:$0xff]
      %v291 = vld [vmem:[%s230 + $0x140] sm:$0xff]
      %v292 = vld [vmem:[%s230 + $0x148] sm:$0xff]
      %v293 = vld [vmem:[%s230 + $0x150] sm:$0xff]
      %v294 = vld [vmem:[%s230 + $0x158] sm:$0xff]
      %v295 = vld [vmem:[%s230 + $0x160] sm:$0xff]
      %v296 = vld [vmem:[%s230 + $0x168] sm:$0xff]
      %v297 = vld [vmem:[%s230 + $0x170] sm:$0xff]
      %v298 = vld [vmem:[%s230 + $0x178] sm:$0xff]
      %v299 = vld [vmem:[%s230 + $0x180] sm:$0xff]
      %v300 = vld [vmem:[%s230 + $0x188] sm:$0xff]
      %v301 = vld [vmem:[%s230 + $0x190] sm:$0xff]
      %v302 = vld [vmem:[%s230 + $0x198] sm:$0xff]
      %v303 = vld [vmem:[%s230 + $0x1a0] sm:$0xff]
      %v304 = vld [vmem:[%s230 + $0x1a8] sm:$0xff]
      %v305 = vld [vmem:[%s230 + $0x1b0] sm:$0xff]
      %v306 = vld [vmem:[%s230 + $0x1b8] sm:$0xff]
      %v307 = vld [vmem:[%s230 + $0x1c0] sm:$0xff]
      %v308 = vld [vmem:[%s230 + $0x1c8] sm:$0xff]
      %v309 = vld [vmem:[%s230 + $0x1d0] sm:$0xff]
      %v310 = vld [vmem:[%s230 + $0x1d8] sm:$0xff]
      %v311 = vld [vmem:[%s230 + $0x1e0] sm:$0xff]
      %v312 = vld [vmem:[%s230 + $0x1e8] sm:$0xff]
      %v313 = vld [vmem:[%s230 + $0x1f0] sm:$0xff]
      %v314 = vld [vmem:[%s230 + $0x1f8] sm:$0xff]
      %v315 = vld [vmem:[%s230 + $0x200] sm:$0xff]
      %v316 = vld [vmem:[%s230 + $0x208] sm:$0xff]
      %v317 = vld [vmem:[%s230 + $0x210] sm:$0xff]
      %v318 = vld [vmem:[%s230 + $0x218] sm:$0xff]
      %v319 = vld [vmem:[%s230 + $0x220] sm:$0xff]
      %v320 = vld [vmem:[%s230 + $0x228] sm:$0xff]
      %v321 = vld [vmem:[%s230 + $0x230] sm:$0xff]
      %v322 = vld [vmem:[%s230 + $0x238] sm:$0xff]
      %v323 = vld [vmem:[%s230 + $0x240] sm:$0xff]
      %v324 = vld [vmem:[%s230 + $0x248] sm:$0xff]
      %v325 = vld [vmem:[%s230 + $0x250] sm:$0xff]
      %v326 = vld [vmem:[%s230 + $0x258] sm:$0xff]
      %v327 = vld [vmem:[%s230 + $0x260] sm:$0xff]
      %v328 = vld [vmem:[%s230 + $0x268] sm:$0xff]
      %v329 = vld [vmem:[%s230 + $0x270] sm:$0xff]
      %v330 = vld [vmem:[%s230 + $0x278] sm:$0xff]
      %v331 = vld [vmem:[%s230 + $0x280] sm:$0xff]
      %v332 = vld [vmem:[%s230 + $0x288] sm:$0xff]
      %v333 = vld [vmem:[%s230 + $0x290] sm:$0xff]
      %v334 = vld [vmem:[%s230 + $0x298] sm:$0xff]
      %v335 = vld [vmem:[%s230 + $0x2a0] sm:$0xff]
      %v336 = vld [vmem:[%s230 + $0x2a8] sm:$0xff]
      %v337 = vld [vmem:[%s230 + $0x2b0] sm:$0xff]
      %v338 = vld [vmem:[%s230 + $0x2b8] sm:$0xff]
      %v339 = vld [vmem:[%s230 + $0x2c0] sm:$0xff]
      %v340 = vld [vmem:[%s230 + $0x2c8] sm:$0xff]
      %v341 = vld [vmem:[%s230 + $0x2d0] sm:$0xff]
      %v342 = vld [vmem:[%s230 + $0x2d8] sm:$0xff]
      %v343 = vld [vmem:[%s230 + $0x2e0] sm:$0xff]
      %v344 = vld [vmem:[%s230 + $0x2e8] sm:$0xff]
      %v345 = vld [vmem:[%s230 + $0x2f0] sm:$0xff]
      %v346 = vld [vmem:[%s230 + $0x2f8] sm:$0xff]
      %v347 = vld [vmem:[%s230 + $0x300] sm:$0xff]
      %v348 = vld [vmem:[%s230 + $0x308] sm:$0xff]
      %v349 = vld [vmem:[%s230 + $0x310] sm:$0xff]
      %v350 = vld [vmem:[%s230 + $0x318] sm:$0xff]
      %v351 = vld [vmem:[%s230 + $0x320] sm:$0xff]
      %v352 = vld [vmem:[%s230 + $0x328] sm:$0xff]
      %v353 = vld [vmem:[%s230 + $0x330] sm:$0xff]
      %v354 = vld [vmem:[%s230 + $0x338] sm:$0xff]
      %v355 = vld [vmem:[%s230 + $0x340] sm:$0xff]
      %v356 = vld [vmem:[%s230 + $0x348] sm:$0xff]
      %v357 = vld [vmem:[%s230 + $0x350] sm:$0xff]
      %v358 = vld [vmem:[%s230 + $0x358] sm:$0xff]
      %v359 = vld [vmem:[%s230 + $0x360] sm:$0xff]
      %v360 = vld [vmem:[%s230 + $0x368] sm:$0xff]
      %v361 = vld [vmem:[%s230 + $0x370] sm:$0xff]
      %v362 = vld [vmem:[%s230 + $0x378] sm:$0xff]
      %v363 = vld [vmem:[%s230 + $0x380] sm:$0xff]
      %v364 = vld [vmem:[%s230 + $0x388] sm:$0xff]
      %v365 = vld [vmem:[%s230 + $0x390] sm:$0xff]
      %v366 = vld [vmem:[%s230 + $0x398] sm:$0xff]
      %v367 = vld [vmem:[%s230 + $0x3a0] sm:$0xff]
      %v368 = vld [vmem:[%s230 + $0x3a8] sm:$0xff]
      %v369 = vld [vmem:[%s230 + $0x3b0] sm:$0xff]
      %v370 = vld [vmem:[%s230 + $0x3b8] sm:$0xff]
      %v371 = vld [vmem:[%s230 + $0x3c0] sm:$0xff]
      %v372 = vld [vmem:[%s230 + $0x3c8] sm:$0xff]
      %v373 = vld [vmem:[%s230 + $0x3d0] sm:$0xff]
      %v374 = vld [vmem:[%s230 + $0x3d8] sm:$0xff]
      %v375 = vld [vmem:[%s230 + $0x3e0] sm:$0xff]
      %v376 = vld [vmem:[%s230 + $0x3e8] sm:$0xff]
      %v377 = vld [vmem:[%s230 + $0x3f0] sm:$0xff]
      %v378 = vld [vmem:[%s230 + $0x3f8] sm:$0xff]
      %v379 = vld [vmem:[%s230 + $0x400] sm:$0xff]
      %v380 = vld [vmem:[%s230 + $0x408] sm:$0xff]
      %v381 = vld [vmem:[%s230 + $0x410] sm:$0xff]
      %v382 = vld [vmem:[%s230 + $0x418] sm:$0xff]
      %v383 = vld [vmem:[%s230 + $0x420] sm:$0xff]
      %v384 = vld [vmem:[%s230 + $0x428] sm:$0xff]
      %v385 = vld [vmem:[%s230 + $0x430] sm:$0xff]
      %v386 = vld [vmem:[%s230 + $0x438] sm:$0xff]
      %v387 = vld [vmem:[%s230 + $0x440] sm:$0xff]
      %v388 = vld [vmem:[%s230 + $0x448] sm:$0xff]
      %v389 = vld [vmem:[%s230 + $0x450] sm:$0xff]
      %v390 = vld [vmem:[%s230 + $0x458] sm:$0xff]
      %v391 = vld [vmem:[%s230 + $0x460] sm:$0xff]
      %v392 = vld [vmem:[%s230 + $0x468] sm:$0xff]
      %v393 = vld [vmem:[%s230 + $0x470] sm:$0xff]
      %v394 = vld [vmem:[%s230 + $0x478] sm:$0xff]
      %v395 = vld [vmem:[%s230 + $0x480] sm:$0xff]
      %v396 = vld [vmem:[%s230 + $0x488] sm:$0xff]
      %v397 = vld [vmem:[%s230 + $0x490] sm:$0xff]
      %v398 = vld [vmem:[%s230 + $0x498] sm:$0xff]
      %v399 = vld [vmem:[%s230 + $0x4a0] sm:$0xff]
      %v400 = vld [vmem:[%s230 + $0x4a8] sm:$0xff]
      %v401 = vld [vmem:[%s230 + $0x4b0] sm:$0xff]
      %v402 = vld [vmem:[%s230 + $0x4b8] sm:$0xff]
      %v403 = vld [vmem:[%s230 + $0x4c0] sm:$0xff]
      %v404 = vld [vmem:[%s230 + $0x4c8] sm:$0xff]
      %v405 = vld [vmem:[%s230 + $0x4d0] sm:$0xff]
      %v406 = vld [vmem:[%s230 + $0x4d8] sm:$0xff]
      %v407 = vld [vmem:[%s230 + $0x4e0] sm:$0xff]
      %v408 = vld [vmem:[%s230 + $0x4e8] sm:$0xff]
      %v409 = vld [vmem:[%s230 + $0x4f0] sm:$0xff]
      %v410 = vld [vmem:[%s230 + $0x4f8] sm:$0xff]
      %v411 = vld [vmem:[%s230 + $0x500] sm:$0xff]
      %v412 = vld [vmem:[%s230 + $0x508] sm:$0xff]
      %v413 = vld [vmem:[%s230 + $0x510] sm:$0xff]
      %v414 = vld [vmem:[%s230 + $0x518] sm:$0xff]
      %v415 = vld [vmem:[%s230 + $0x520] sm:$0xff]
      %v416 = vld [vmem:[%s230 + $0x528] sm:$0xff]
      %v417 = vld [vmem:[%s230 + $0x530] sm:$0xff]
      %v418 = vld [vmem:[%s230 + $0x538] sm:$0xff]
      %v419 = vld [vmem:[%s230 + $0x540] sm:$0xff]
      %v420 = vld [vmem:[%s230 + $0x548] sm:$0xff]
      %v421 = vld [vmem:[%s230 + $0x550] sm:$0xff]
      %v422 = vld [vmem:[%s230 + $0x558] sm:$0xff]
      %v423 = vld [vmem:[%s230 + $0x560] sm:$0xff]
      %v424 = vld [vmem:[%s230 + $0x568] sm:$0xff]
      %v425 = vld [vmem:[%s230 + $0x570] sm:$0xff]
      %v426 = vld [vmem:[%s230 + $0x578] sm:$0xff]
      %v427 = vld [vmem:[%s230 + $0x580] sm:$0xff]
      %v428 = vld [vmem:[%s230 + $0x588] sm:$0xff]
      %v429 = vld [vmem:[%s230 + $0x590] sm:$0xff]
      %v430 = vld [vmem:[%s230 + $0x598] sm:$0xff]
      %v431 = vld [vmem:[%s230 + $0x5a0] sm:$0xff]
      %v432 = vld [vmem:[%s230 + $0x5a8] sm:$0xff]
      %v433 = vld [vmem:[%s230 + $0x5b0] sm:$0xff]
      %v434 = vld [vmem:[%s230 + $0x5b8] sm:$0xff]
      %v435 = vld [vmem:[%s230 + $0x5c0] sm:$0xff]
      %v436 = vld [vmem:[%s230 + $0x5c8] sm:$0xff]
      %v437 = vld [vmem:[%s230 + $0x5d0] sm:$0xff]
      %v438 = vld [vmem:[%s230 + $0x5d8] sm:$0xff]
      %v439 = vld [vmem:[%s230 + $0x5e0] sm:$0xff]
      %v440 = vld [vmem:[%s230 + $0x5e8] sm:$0xff]
      %v441 = vld [vmem:[%s230 + $0x5f0] sm:$0xff]
      %v442 = vld [vmem:[%s230 + $0x5f8] sm:$0xff]
      %v443 = vld [vmem:[%s230 + $0x600] sm:$0xff]
      %v444 = vld [vmem:[%s230 + $0x608] sm:$0xff]
      %v445 = vld [vmem:[%s230 + $0x610] sm:$0xff]
      %v446 = vld [vmem:[%s230 + $0x618] sm:$0xff]
      %v447 = vld [vmem:[%s230 + $0x620] sm:$0xff]
      %v448 = vld [vmem:[%s230 + $0x628] sm:$0xff]
      %v449 = vld [vmem:[%s230 + $0x630] sm:$0xff]
      %v450 = vld [vmem:[%s230 + $0x638] sm:$0xff]
      %v451 = vld [vmem:[%s230 + $0x640] sm:$0xff]
      %v452 = vld [vmem:[%s230 + $0x648] sm:$0xff]
      %v453 = vld [vmem:[%s230 + $0x650] sm:$0xff]
      %v454 = vld [vmem:[%s230 + $0x658] sm:$0xff]
      %v455 = vld [vmem:[%s230 + $0x660] sm:$0xff]
      %v456 = vld [vmem:[%s230 + $0x668] sm:$0xff]
      %v457 = vld [vmem:[%s230 + $0x670] sm:$0xff]
      %v458 = vld [vmem:[%s230 + $0x678] sm:$0xff]
      %v459 = vld [vmem:[%s230 + $0x680] sm:$0xff]
      %v460 = vld [vmem:[%s230 + $0x688] sm:$0xff]
      %v461 = vld [vmem:[%s230 + $0x690] sm:$0xff]
      %v462 = vld [vmem:[%s230 + $0x698] sm:$0xff]
      %v463 = vld [vmem:[%s230 + $0x6a0] sm:$0xff]
      %v464 = vld [vmem:[%s230 + $0x6a8] sm:$0xff]
      %v465 = vld [vmem:[%s230 + $0x6b0] sm:$0xff]
      %v466 = vld [vmem:[%s230 + $0x6b8] sm:$0xff]
      %v467 = vld [vmem:[%s230 + $0x6c0] sm:$0xff]
      %v468 = vld [vmem:[%s230 + $0x6c8] sm:$0xff]
      %v469 = vld [vmem:[%s230 + $0x6d0] sm:$0xff]
      %v470 = vld [vmem:[%s230 + $0x6d8] sm:$0xff]
      %v471 = vld [vmem:[%s230 + $0x6e0] sm:$0xff]
      %v472 = vld [vmem:[%s230 + $0x6e8] sm:$0xff]
      %v473 = vld [vmem:[%s230 + $0x6f0] sm:$0xff]
      %v474 = vld [vmem:[%s230 + $0x6f8] sm:$0xff]
      %v475 = vld [vmem:[%s230 + $0x700] sm:$0xff]
      %v476 = vld [vmem:[%s230 + $0x708] sm:$0xff]
      %v477 = vld [vmem:[%s230 + $0x710] sm:$0xff]
      %v478 = vld [vmem:[%s230 + $0x718] sm:$0xff]
      %v479 = vld [vmem:[%s230 + $0x720] sm:$0xff]
      %v480 = vld [vmem:[%s230 + $0x728] sm:$0xff]
      %v481 = vld [vmem:[%s230 + $0x730] sm:$0xff]
      %v482 = vld [vmem:[%s230 + $0x738] sm:$0xff]
      %v483 = vld [vmem:[%s230 + $0x740] sm:$0xff]
      %v484 = vld [vmem:[%s230 + $0x748] sm:$0xff]
      %v485 = vld [vmem:[%s230 + $0x750] sm:$0xff]
      %v486 = vld [vmem:[%s230 + $0x758] sm:$0xff]
      %v487 = vld [vmem:[%s230 + $0x760] sm:$0xff]
      %v488 = vld [vmem:[%s230 + $0x768] sm:$0xff]
      %v489 = vld [vmem:[%s230 + $0x770] sm:$0xff]
      %v490 = vld [vmem:[%s230 + $0x778] sm:$0xff]
      %v491 = vld [vmem:[%s230 + $0x780] sm:$0xff]
      %v492 = vld [vmem:[%s230 + $0x788] sm:$0xff]
      %v493 = vld [vmem:[%s230 + $0x790] sm:$0xff]
      %v494 = vld [vmem:[%s230 + $0x798] sm:$0xff]
      %v495 = vld [vmem:[%s230 + $0x7a0] sm:$0xff]
      %v496 = vld [vmem:[%s230 + $0x7a8] sm:$0xff]
      %v497 = vld [vmem:[%s230 + $0x7b0] sm:$0xff]
      %v498 = vld [vmem:[%s230 + $0x7b8] sm:$0xff]
      %v499 = vld [vmem:[%s230 + $0x7c0] sm:$0xff]
      %v500 = vld [vmem:[%s230 + $0x7c8] sm:$0xff]
      %v501 = vld [vmem:[%s230 + $0x7d0] sm:$0xff]
      %v502 = vld [vmem:[%s230 + $0x7d8] sm:$0xff]
      %v503 = vld [vmem:[%s230 + $0x7e0] sm:$0xff]
      %v504 = vld [vmem:[%s230 + $0x7e8] sm:$0xff]
      %v505 = vld [vmem:[%s230 + $0x7f0] sm:$0xff]
      %v506 = vld [vmem:[%s230 + $0x7f8] sm:$0xff]
      %v507 = vld [vmem:[%s230 + $0x800] sm:$0xff]
      %v508 = vld [vmem:[%s230 + $0x808] sm:$0xff]
      %v509 = vld [vmem:[%s230 + $0x810] sm:$0xff]
      %v510 = vld [vmem:[%s230 + $0x818] sm:$0xff]
      %v511 = vld [vmem:[%s230 + $0x820] sm:$0xff]
      %v512 = vld [vmem:[%s230 + $0x828] sm:$0xff]
      %v513 = vld [vmem:[%s230 + $0x830] sm:$0xff]
      %v514 = vld [vmem:[%s230 + $0x838] sm:$0xff]
      %v515 = vld [vmem:[%s230 + $0x840] sm:$0xff]
      %v516 = vld [vmem:[%s230 + $0x848] sm:$0xff]
      %v517 = vld [vmem:[%s230 + $0x850] sm:$0xff]
      %v518 = vld [vmem:[%s230 + $0x858] sm:$0xff]
      %v519 = vld [vmem:[%s230 + $0x860] sm:$0xff]
      %v520 = vld [vmem:[%s230 + $0x868] sm:$0xff]
      %v521 = vld [vmem:[%s230 + $0x870] sm:$0xff]
      %v522 = vld [vmem:[%s230 + $0x878] sm:$0xff]
      %v523 = vld [vmem:[%s230 + $0x880] sm:$0xff]
      %v524 = vld [vmem:[%s230 + $0x888] sm:$0xff]
      %v525 = vld [vmem:[%s230 + $0x890] sm:$0xff]
      %v526 = vld [vmem:[%s230 + $0x898] sm:$0xff]
      %v527 = vld [vmem:[%s230 + $0x8a0] sm:$0xff]
      %v528 = vld [vmem:[%s230 + $0x8a8] sm:$0xff]
      %v529 = vld [vmem:[%s230 + $0x8b0] sm:$0xff]
      %v530 = vld [vmem:[%s230 + $0x8b8] sm:$0xff]
      %v531 = vld [vmem:[%s230 + $0x8c0] sm:$0xff]
      %v532 = vld [vmem:[%s230 + $0x8c8] sm:$0xff]
      %v533 = vld [vmem:[%s230 + $0x8d0] sm:$0xff]
      %v534 = vld [vmem:[%s230 + $0x8d8] sm:$0xff]
      %v535 = vld [vmem:[%s230 + $0x8e0] sm:$0xff]
      %v536 = vld [vmem:[%s230 + $0x8e8] sm:$0xff]
      %v537 = vld [vmem:[%s230 + $0x8f0] sm:$0xff]
      %v538 = vld [vmem:[%s230 + $0x8f8] sm:$0xff]
      %v539 = vld [vmem:[%s230 + $0x900] sm:$0xff]
      %v540 = vld [vmem:[%s230 + $0x908] sm:$0xff]
      %v541 = vld [vmem:[%s230 + $0x910] sm:$0xff]
      %v542 = vld [vmem:[%s230 + $0x918] sm:$0xff]
      %v543 = vld [vmem:[%s230 + $0x920] sm:$0xff]
      %v544 = vld [vmem:[%s230 + $0x928] sm:$0xff]
      %v545 = vld [vmem:[%s230 + $0x930] sm:$0xff]
      %v546 = vld [vmem:[%s230 + $0x938] sm:$0xff]
      %v547 = vld [vmem:[%s230 + $0x940] sm:$0xff]
      %v548 = vld [vmem:[%s230 + $0x948] sm:$0xff]
      %v549 = vld [vmem:[%s230 + $0x950] sm:$0xff]
      %v550 = vld [vmem:[%s230 + $0x958] sm:$0xff]
      %v551 = vld [vmem:[%s230 + $0x960] sm:$0xff]
      %v552 = vld [vmem:[%s230 + $0x968] sm:$0xff]
      %v553 = vld [vmem:[%s230 + $0x970] sm:$0xff]
      %v554 = vld [vmem:[%s230 + $0x978] sm:$0xff]
      %v555 = vld [vmem:[%s230 + $0x980] sm:$0xff]
      %v556 = vld [vmem:[%s230 + $0x988] sm:$0xff]
      %v557 = vld [vmem:[%s230 + $0x990] sm:$0xff]
      %v558 = vld [vmem:[%s230 + $0x998] sm:$0xff]
      %v559 = vld [vmem:[%s230 + $0x9a0] sm:$0xff]
      %v560 = vld [vmem:[%s230 + $0x9a8] sm:$0xff]
      %v561 = vld [vmem:[%s230 + $0x9b0] sm:$0xff]
      %v562 = vld [vmem:[%s230 + $0x9b8] sm:$0xff]
      %v563 = vld [vmem:[%s230 + $0x9c0] sm:$0xff]
      %v564 = vld [vmem:[%s230 + $0x9c8] sm:$0xff]
      %v565 = vld [vmem:[%s230 + $0x9d0] sm:$0xff]
      %v566 = vld [vmem:[%s230 + $0x9d8] sm:$0xff]
      %v567 = vld [vmem:[%s230 + $0x9e0] sm:$0xff]
      %v568 = vld [vmem:[%s230 + $0x9e8] sm:$0xff]
      %v569 = vld [vmem:[%s230 + $0x9f0] sm:$0xff]
      %v570 = vld [vmem:[%s230 + $0x9f8] sm:$0xff]
      %v571 = vld [vmem:[%s230 + $0xa00] sm:$0xff]
      %v572 = vld [vmem:[%s230 + $0xa08] sm:$0xff]
      %v573 = vld [vmem:[%s230 + $0xa10] sm:$0xff]
      %v574 = vld [vmem:[%s230 + $0xa18] sm:$0xff]
      %v575 = vld [vmem:[%s230 + $0xa20] sm:$0xff]
      %v576 = vld [vmem:[%s230 + $0xa28] sm:$0xff]
      %v577 = vld [vmem:[%s230 + $0xa30] sm:$0xff]
      %v578 = vld [vmem:[%s230 + $0xa38] sm:$0xff]
      %v579 = vld [vmem:[%s230 + $0xa40] sm:$0xff]
      %v580 = vld [vmem:[%s230 + $0xa48] sm:$0xff]
      %v581 = vld [vmem:[%s230 + $0xa50] sm:$0xff]
      %v582 = vld [vmem:[%s230 + $0xa58] sm:$0xff]
      %v583 = vld [vmem:[%s230 + $0xa60] sm:$0xff]
      %v584 = vld [vmem:[%s230 + $0xa68] sm:$0xff]
      %v585 = vld [vmem:[%s230 + $0xa70] sm:$0xff]
      %v586 = vld [vmem:[%s230 + $0xa78] sm:$0xff]
      %v587 = vld [vmem:[%s230 + $0xa80] sm:$0xff]
      %v588 = vld [vmem:[%s230 + $0xa88] sm:$0xff]
      %v589 = vld [vmem:[%s230 + $0xa90] sm:$0xff]
      %v590 = vld [vmem:[%s230 + $0xa98] sm:$0xff]
      %v591 = vld [vmem:[%s230 + $0xaa0] sm:$0xff]
      %v592 = vld [vmem:[%s230 + $0xaa8] sm:$0xff]
      %v593 = vld [vmem:[%s230 + $0xab0] sm:$0xff]
      %v594 = vld [vmem:[%s230 + $0xab8] sm:$0xff]
      %v595 = vld [vmem:[%s230 + $0xac0] sm:$0xff]
      %v596 = vld [vmem:[%s230 + $0xac8] sm:$0xff]
      %v597 = vld [vmem:[%s230 + $0xad0] sm:$0xff]
      %v598 = vld [vmem:[%s230 + $0xad8] sm:$0xff]
      %v599 = vld [vmem:[%s230 + $0xae0] sm:$0xff]
      %v600 = vld [vmem:[%s230 + $0xae8] sm:$0xff]
      %v601 = vld [vmem:[%s230 + $0xaf0] sm:$0xff]
      %v602 = vld [vmem:[%s230 + $0xaf8] sm:$0xff]
      %v603 = vld [vmem:[%s230 + $0xb00] sm:$0xff]
      %v604 = vld [vmem:[%s230 + $0xb08] sm:$0xff]
      %v605 = vld [vmem:[%s230 + $0xb10] sm:$0xff]
      %v606 = vld [vmem:[%s230 + $0xb18] sm:$0xff]
      %v607 = vld [vmem:[%s230 + $0xb20] sm:$0xff]
      %v608 = vld [vmem:[%s230 + $0xb28] sm:$0xff]
      %v609 = vld [vmem:[%s230 + $0xb30] sm:$0xff]
      %v610 = vld [vmem:[%s230 + $0xb38] sm:$0xff]
      %v611 = vld [vmem:[%s230 + $0xb40] sm:$0xff]
      %v612 = vld [vmem:[%s230 + $0xb48] sm:$0xff]
      %v613 = vld [vmem:[%s230 + $0xb50] sm:$0xff]
      %v614 = vld [vmem:[%s230 + $0xb58] sm:$0xff]
      %v615 = vld [vmem:[%s230 + $0xb60] sm:$0xff]
      %v616 = vld [vmem:[%s230 + $0xb68] sm:$0xff]
      %v617 = vld [vmem:[%s230 + $0xb70] sm:$0xff]
      %v618 = vld [vmem:[%s230 + $0xb78] sm:$0xff]
      %v619 = vld [vmem:[%s230 + $0xb80] sm:$0xff]
      %v620 = vld [vmem:[%s230 + $0xb88] sm:$0xff]
      %v621 = vld [vmem:[%s230 + $0xb90] sm:$0xff]
      %v622 = vld [vmem:[%s230 + $0xb98] sm:$0xff]
      %v623 = vld [vmem:[%s230 + $0xba0] sm:$0xff]
      %v624 = vld [vmem:[%s230 + $0xba8] sm:$0xff]
      %v625 = vld [vmem:[%s230 + $0xbb0] sm:$0xff]
      %v626 = vld [vmem:[%s230 + $0xbb8] sm:$0xff]
      %v627 = vld [vmem:[%s230 + $0xbc0] sm:$0xff]
      %v628 = vld [vmem:[%s230 + $0xbc8] sm:$0xff]
      %v629 = vld [vmem:[%s230 + $0xbd0] sm:$0xff]
      %v630 = vld [vmem:[%s230 + $0xbd8] sm:$0xff]
      %v631 = vld [vmem:[%s230 + $0xbe0] sm:$0xff]
      %v632 = vld [vmem:[%s230 + $0xbe8] sm:$0xff]
      %v633 = vld [vmem:[%s230 + $0xbf0] sm:$0xff]
      %v634 = vld [vmem:[%s230 + $0xbf8] sm:$0xff]
      %v635 = vld [vmem:[%s230 + $0xc00] sm:$0xff]
      %v636 = vld [vmem:[%s230 + $0xc08] sm:$0xff]
      %v637 = vld [vmem:[%s230 + $0xc10] sm:$0xff]
      %v638 = vld [vmem:[%s230 + $0xc18] sm:$0xff]
      %v639 = vld [vmem:[%s230 + $0xc20] sm:$0xff]
      %v640 = vld [vmem:[%s230 + $0xc28] sm:$0xff]
      %v641 = vld [vmem:[%s230 + $0xc30] sm:$0xff]
      %v642 = vld [vmem:[%s230 + $0xc38] sm:$0xff]
      %v643 = vld [vmem:[%s230 + $0xc40] sm:$0xff]
      %v644 = vld [vmem:[%s230 + $0xc48] sm:$0xff]
      %v645 = vld [vmem:[%s230 + $0xc50] sm:$0xff]
      %v646 = vld [vmem:[%s230 + $0xc58] sm:$0xff]
      %v647 = vld [vmem:[%s230 + $0xc60] sm:$0xff]
      %v648 = vld [vmem:[%s230 + $0xc68] sm:$0xff]
      %v649 = vld [vmem:[%s230 + $0xc70] sm:$0xff]
      %v650 = vld [vmem:[%s230 + $0xc78] sm:$0xff]
      %v651 = vld [vmem:[%s230 + $0xc80] sm:$0xff]
      %v652 = vld [vmem:[%s230 + $0xc88] sm:$0xff]
      %v653 = vld [vmem:[%s230 + $0xc90] sm:$0xff]
      %v654 = vld [vmem:[%s230 + $0xc98] sm:$0xff]
      %v655 = vld [vmem:[%s230 + $0xca0] sm:$0xff]
      %v656 = vld [vmem:[%s230 + $0xca8] sm:$0xff]
      %v657 = vld [vmem:[%s230 + $0xcb0] sm:$0xff]
      %v658 = vld [vmem:[%s230 + $0xcb8] sm:$0xff]
      %v659 = vld [vmem:[%s230 + $0xcc0] sm:$0xff]
      %v660 = vld [vmem:[%s230 + $0xcc8] sm:$0xff]
      %v661 = vld [vmem:[%s230 + $0xcd0] sm:$0xff]
      %v662 = vld [vmem:[%s230 + $0xcd8] sm:$0xff]
      %v663 = vld [vmem:[%s230 + $0xce0] sm:$0xff]
      %v664 = vld [vmem:[%s230 + $0xce8] sm:$0xff]
      %v665 = vld [vmem:[%s230 + $0xcf0] sm:$0xff]
      %v666 = vld [vmem:[%s230 + $0xcf8] sm:$0xff]
      %v667 = vld [vmem:[%s230 + $0xd00] sm:$0xff]
      %v668 = vld [vmem:[%s230 + $0xd08] sm:$0xff]
      %v669 = vld [vmem:[%s230 + $0xd10] sm:$0xff]
      %v670 = vld [vmem:[%s230 + $0xd18] sm:$0xff]
      %v671 = vld [vmem:[%s230 + $0xd20] sm:$0xff]
      %v672 = vld [vmem:[%s230 + $0xd28] sm:$0xff]
      %v673 = vld [vmem:[%s230 + $0xd30] sm:$0xff]
      %v674 = vld [vmem:[%s230 + $0xd38] sm:$0xff]
      %v675 = vld [vmem:[%s230 + $0xd40] sm:$0xff]
      %v676 = vld [vmem:[%s230 + $0xd48] sm:$0xff]
      %v677 = vld [vmem:[%s230 + $0xd50] sm:$0xff]
      %v678 = vld [vmem:[%s230 + $0xd58] sm:$0xff]
      %v679 = vld [vmem:[%s230 + $0xd60] sm:$0xff]
      %v680 = vld [vmem:[%s230 + $0xd68] sm:$0xff]
      %v681 = vld [vmem:[%s230 + $0xd70] sm:$0xff]
      %v682 = vld [vmem:[%s230 + $0xd78] sm:$0xff]
      %v683 = vld [vmem:[%s230 + $0xd80] sm:$0xff]
      %v684 = vld [vmem:[%s230 + $0xd88] sm:$0xff]
      %v685 = vld [vmem:[%s230 + $0xd90] sm:$0xff]
      %v686 = vld [vmem:[%s230 + $0xd98] sm:$0xff]
      %v687 = vld [vmem:[%s230 + $0xda0] sm:$0xff]
      %v688 = vld [vmem:[%s230 + $0xda8] sm:$0xff]
      %v689 = vld [vmem:[%s230 + $0xdb0] sm:$0xff]
      %v690 = vld [vmem:[%s230 + $0xdb8] sm:$0xff]
      %v691 = vld [vmem:[%s230 + $0xdc0] sm:$0xff]
      %v692 = vld [vmem:[%s230 + $0xdc8] sm:$0xff]
      %v693 = vld [vmem:[%s230 + $0xdd0] sm:$0xff]
      %v694 = vld [vmem:[%s230 + $0xdd8] sm:$0xff]
      %v695 = vld [vmem:[%s230 + $0xde0] sm:$0xff]
      %v696 = vld [vmem:[%s230 + $0xde8] sm:$0xff]
      %v697 = vld [vmem:[%s230 + $0xdf0] sm:$0xff]
      %v698 = vld [vmem:[%s230 + $0xdf8] sm:$0xff]
      %v699 = vld [vmem:[%s230 + $0xe00] sm:$0xff]
      %v700 = vld [vmem:[%s230 + $0xe08] sm:$0xff]
      %v701 = vld [vmem:[%s230 + $0xe10] sm:$0xff]
      %v702 = vld [vmem:[%s230 + $0xe18] sm:$0xff]
      %v703 = vld [vmem:[%s230 + $0xe20] sm:$0xff]
      %v704 = vld [vmem:[%s230 + $0xe28] sm:$0xff]
      %v705 = vld [vmem:[%s230 + $0xe30] sm:$0xff]
      %v706 = vld [vmem:[%s230 + $0xe38] sm:$0xff]
      %v707 = vld [vmem:[%s230 + $0xe40] sm:$0xff]
      %v708 = vld [vmem:[%s230 + $0xe48] sm:$0xff]
      %v709 = vld [vmem:[%s230 + $0xe50] sm:$0xff]
      %v710 = vld [vmem:[%s230 + $0xe58] sm:$0xff]
      %v711 = vld [vmem:[%s230 + $0xe60] sm:$0xff]
      %v712 = vld [vmem:[%s230 + $0xe68] sm:$0xff]
      %v713 = vld [vmem:[%s230 + $0xe70] sm:$0xff]
      %v714 = vld [vmem:[%s230 + $0xe78] sm:$0xff]
      %v715 = vld [vmem:[%s230 + $0xe80] sm:$0xff]
      %v716 = vld [vmem:[%s230 + $0xe88] sm:$0xff]
      %v717 = vld [vmem:[%s230 + $0xe90] sm:$0xff]
      %v718 = vld [vmem:[%s230 + $0xe98] sm:$0xff]
      %v719 = vld [vmem:[%s230 + $0xea0] sm:$0xff]
      %v720 = vld [vmem:[%s230 + $0xea8] sm:$0xff]
      %v721 = vld [vmem:[%s230 + $0xeb0] sm:$0xff]
      %v722 = vld [vmem:[%s230 + $0xeb8] sm:$0xff]
      %v723 = vld [vmem:[%s230 + $0xec0] sm:$0xff]
      %v724 = vld [vmem:[%s230 + $0xec8] sm:$0xff]
      %v725 = vld [vmem:[%s230 + $0xed0] sm:$0xff]
      %v726 = vld [vmem:[%s230 + $0xed8] sm:$0xff]
      %v727 = vld [vmem:[%s230 + $0xee0] sm:$0xff]
      %v728 = vld [vmem:[%s230 + $0xee8] sm:$0xff]
      %v729 = vld [vmem:[%s230 + $0xef0] sm:$0xff]
      %v730 = vld [vmem:[%s230 + $0xef8] sm:$0xff]
      %v731 = vld [vmem:[%s230 + $0xf00] sm:$0xff]
      %v732 = vld [vmem:[%s230 + $0xf08] sm:$0xff]
      %v733 = vld [vmem:[%s230 + $0xf10] sm:$0xff]
      %v734 = vld [vmem:[%s230 + $0xf18] sm:$0xff]
      %v735 = vld [vmem:[%s230 + $0xf20] sm:$0xff]
      %v736 = vld [vmem:[%s230 + $0xf28] sm:$0xff]
      %v737 = vld [vmem:[%s230 + $0xf30] sm:$0xff]
      %v738 = vld [vmem:[%s230 + $0xf38] sm:$0xff]
      %v739 = vld [vmem:[%s230 + $0xf40] sm:$0xff]
      %v740 = vld [vmem:[%s230 + $0xf48] sm:$0xff]
      %v741 = vld [vmem:[%s230 + $0xf50] sm:$0xff]
      %v742 = vld [vmem:[%s230 + $0xf58] sm:$0xff]
      %v743 = vld [vmem:[%s230 + $0xf60] sm:$0xff]
      %v744 = vld [vmem:[%s230 + $0xf68] sm:$0xff]
      %v745 = vld [vmem:[%s230 + $0xf70] sm:$0xff]
      %v746 = vld [vmem:[%s230 + $0xf78] sm:$0xff]
      %v747 = vld [vmem:[%s230 + $0xf80] sm:$0xff]
      %v748 = vld [vmem:[%s230 + $0xf88] sm:$0xff]
      %v749 = vld [vmem:[%s230 + $0xf90] sm:$0xff]
      %v750 = vld [vmem:[%s230 + $0xf98] sm:$0xff]
      %v751 = vld [vmem:[%s230 + $0xfa0] sm:$0xff]
      %v752 = vld [vmem:[%s230 + $0xfa8] sm:$0xff]
      %v753 = vld [vmem:[%s230 + $0xfb0] sm:$0xff]
      %v754 = vld [vmem:[%s230 + $0xfb8] sm:$0xff]
      %v755 = vld [vmem:[%s230 + $0xfc0] sm:$0xff]
      %v756 = vld [vmem:[%s230 + $0xfc8] sm:$0xff]
      %v757 = vld [vmem:[%s230 + $0xfd0] sm:$0xff]
      %v758 = vld [vmem:[%s230 + $0xfd8] sm:$0xff]
      %v759 = vld [vmem:[%s230 + $0xfe0] sm:$0xff]
      %v760 = vld [vmem:[%s230 + $0xfe8] sm:$0xff]
      %v761 = vld [vmem:[%s230 + $0xff0] sm:$0xff]
      %v762 = vld [vmem:[%s230 + $0xff8] sm:$0xff]
      %v763 = vld [vmem:[%s230 + $0x1000] sm:$0xff]
      %v764 = vld [vmem:[%s230 + $0x1008] sm:$0xff]
      %v765 = vld [vmem:[%s230 + $0x1010] sm:$0xff]
      %v766 = vld [vmem:[%s230 + $0x1018] sm:$0xff]
      %v767 = vld [vmem:[%s230 + $0x1020] sm:$0xff]
      %v768 = vld [vmem:[%s230 + $0x1028] sm:$0xff]
      %v769 = vld [vmem:[%s230 + $0x1030] sm:$0xff]
      %v770 = vld [vmem:[%s230 + $0x1038] sm:$0xff]
      %v771 = vld [vmem:[%s230 + $0x1040] sm:$0xff]
      %v772 = vld [vmem:[%s230 + $0x1048] sm:$0xff]
      %v773 = vld [vmem:[%s230 + $0x1050] sm:$0xff]
      %v774 = vld [vmem:[%s230 + $0x1058] sm:$0xff]
      %v775 = vld [vmem:[%s230 + $0x1060] sm:$0xff]
      %v776 = vld [vmem:[%s230 + $0x1068] sm:$0xff]
      %v777 = vld [vmem:[%s230 + $0x1070] sm:$0xff]
      %v778 = vld [vmem:[%s230 + $0x1078] sm:$0xff]
      %v779 = vld [vmem:[%s230 + $0x1080] sm:$0xff]
      %v780 = vld [vmem:[%s230 + $0x1088] sm:$0xff]
      %v781 = vld [vmem:[%s230 + $0x1090] sm:$0xff]
      %v782 = vld [vmem:[%s230 + $0x1098] sm:$0xff]
      %v783 = vld [vmem:[%s230 + $0x10a0] sm:$0xff]
      %v784 = vld [vmem:[%s230 + $0x10a8] sm:$0xff]
      %v785 = vld [vmem:[%s230 + $0x10b0] sm:$0xff]
      %v786 = vld [vmem:[%s230 + $0x10b8] sm:$0xff]
      %v787 = vld [vmem:[%s230 + $0x10c0] sm:$0xff]
      %v788 = vld [vmem:[%s230 + $0x10c8] sm:$0xff]
      %v789 = vld [vmem:[%s230 + $0x10d0] sm:$0xff]
      %v790 = vld [vmem:[%s230 + $0x10d8] sm:$0xff]
      %v791 = vld [vmem:[%s230 + $0x10e0] sm:$0xff]
      %v792 = vld [vmem:[%s230 + $0x10e8] sm:$0xff]
      %v793 = vld [vmem:[%s230 + $0x10f0] sm:$0xff]
      %v794 = vld [vmem:[%s230 + $0x10f8] sm:$0xff]
      %v795 = vld [vmem:[%s230 + $0x1100] sm:$0xff]
      %v796 = vld [vmem:[%s230 + $0x1108] sm:$0xff]
      %v797 = vld [vmem:[%s230 + $0x1110] sm:$0xff]
      %v798 = vld [vmem:[%s230 + $0x1118] sm:$0xff]
      %v799 = vld [vmem:[%s230 + $0x1120] sm:$0xff]
      %v800 = vld [vmem:[%s230 + $0x1128] sm:$0xff]
      %v801 = vld [vmem:[%s230 + $0x1130] sm:$0xff]
      %v802 = vld [vmem:[%s230 + $0x1138] sm:$0xff]
      %v803 = vld [vmem:[%s230 + $0x1140] sm:$0xff]
      %v804 = vld [vmem:[%s230 + $0x1148] sm:$0xff]
      %v805 = vld [vmem:[%s230 + $0x1150] sm:$0xff]
      %v806 = vld [vmem:[%s230 + $0x1158] sm:$0xff]
      %v807 = vld [vmem:[%s230 + $0x1160] sm:$0xff]
      %v808 = vld [vmem:[%s230 + $0x1168] sm:$0xff]
      %v809 = vld [vmem:[%s230 + $0x1170] sm:$0xff]
      %v810 = vld [vmem:[%s230 + $0x1178] sm:$0xff]
      %v811 = vld [vmem:[%s230 + $0x1180] sm:$0xff]
      %v812 = vld [vmem:[%s230 + $0x1188] sm:$0xff]
      %v813 = vld [vmem:[%s230 + $0x1190] sm:$0xff]
      %v814 = vld [vmem:[%s230 + $0x1198] sm:$0xff]
      %v815 = vld [vmem:[%s230 + $0x11a0] sm:$0xff]
      %v816 = vld [vmem:[%s230 + $0x11a8] sm:$0xff]
      %v817 = vld [vmem:[%s230 + $0x11b0] sm:$0xff]
      %v818 = vld [vmem:[%s230 + $0x11b8] sm:$0xff]
      %v819 = vld [vmem:[%s230 + $0x11c0] sm:$0xff]
      %v820 = vld [vmem:[%s230 + $0x11c8] sm:$0xff]
      %v821 = vld [vmem:[%s230 + $0x11d0] sm:$0xff]
      %v822 = vld [vmem:[%s230 + $0x11d8] sm:$0xff]
      %v823 = vld [vmem:[%s230 + $0x11e0] sm:$0xff]
      %v824 = vld [vmem:[%s230 + $0x11e8] sm:$0xff]
      %v825 = vld [vmem:[%s230 + $0x11f0] sm:$0xff]
      %v826 = vld [vmem:[%s230 + $0x11f8] sm:$0xff]
      %v827 = vld [vmem:[%s230 + $0x1200] sm:$0xff]
      %v828 = vld [vmem:[%s230 + $0x1208] sm:$0xff]
      %v829 = vld [vmem:[%s230 + $0x1210] sm:$0xff]
      %v830 = vld [vmem:[%s230 + $0x1218] sm:$0xff]
      %v831 = vld [vmem:[%s230 + $0x1220] sm:$0xff]
      %v832 = vld [vmem:[%s230 + $0x1228] sm:$0xff]
      %v833 = vld [vmem:[%s230 + $0x1230] sm:$0xff]
      %v834 = vld [vmem:[%s230 + $0x1238] sm:$0xff]
      %v835 = vld [vmem:[%s230 + $0x1240] sm:$0xff]
      %v836 = vld [vmem:[%s230 + $0x1248] sm:$0xff]
      %v837 = vld [vmem:[%s230 + $0x1250] sm:$0xff]
      %v838 = vld [vmem:[%s230 + $0x1258] sm:$0xff]
      %v839 = vld [vmem:[%s230 + $0x1260] sm:$0xff]
      %v840 = vld [vmem:[%s230 + $0x1268] sm:$0xff]
      %v841 = vld [vmem:[%s230 + $0x1270] sm:$0xff]
      %v842 = vld [vmem:[%s230 + $0x1278] sm:$0xff]
      %v843 = vld [vmem:[%s230 + $0x1280] sm:$0xff]
      %v844 = vld [vmem:[%s230 + $0x1288] sm:$0xff]
      %v845 = vld [vmem:[%s230 + $0x1290] sm:$0xff]
      %v846 = vld [vmem:[%s230 + $0x1298] sm:$0xff]
      %v847 = vld [vmem:[%s230 + $0x12a0] sm:$0xff]
      %v848 = vld [vmem:[%s230 + $0x12a8] sm:$0xff]
      %v849 = vld [vmem:[%s230 + $0x12b0] sm:$0xff]
      %v850 = vld [vmem:[%s230 + $0x12b8] sm:$0xff]
      %v851 = vld [vmem:[%s230 + $0x12c0] sm:$0xff]
      %v852 = vld [vmem:[%s230 + $0x12c8] sm:$0xff]
      %v853 = vld [vmem:[%s230 + $0x12d0] sm:$0xff]
      %v854 = vld [vmem:[%s230 + $0x12d8] sm:$0xff]
      %v855 = vld [vmem:[%s230 + $0x12e0] sm:$0xff]
      %v856 = vld [vmem:[%s230 + $0x12e8] sm:$0xff]
      %v857 = vld [vmem:[%s230 + $0x12f0] sm:$0xff]
      %v858 = vld [vmem:[%s230 + $0x12f8] sm:$0xff]
      %v859 = vld [vmem:[%s230 + $0x1300] sm:$0xff]
      %v860 = vld [vmem:[%s230 + $0x1308] sm:$0xff]
      %v861 = vld [vmem:[%s230 + $0x1310] sm:$0xff]
      %v862 = vld [vmem:[%s230 + $0x1318] sm:$0xff]
      %v863 = vld [vmem:[%s230 + $0x1320] sm:$0xff]
      %v864 = vld [vmem:[%s230 + $0x1328] sm:$0xff]
      %v865 = vld [vmem:[%s230 + $0x1330] sm:$0xff]
      %v866 = vld [vmem:[%s230 + $0x1338] sm:$0xff]
      %v867 = vld [vmem:[%s230 + $0x1340] sm:$0xff]
      %v868 = vld [vmem:[%s230 + $0x1348] sm:$0xff]
      %v869 = vld [vmem:[%s230 + $0x1350] sm:$0xff]
      %v870 = vld [vmem:[%s230 + $0x1358] sm:$0xff]
      %v871 = vld [vmem:[%s230 + $0x1360] sm:$0xff]
      %v872 = vld [vmem:[%s230 + $0x1368] sm:$0xff]
      %v873 = vld [vmem:[%s230 + $0x1370] sm:$0xff]
      %v874 = vld [vmem:[%s230 + $0x1378] sm:$0xff]
      %v875 = vld [vmem:[%s230 + $0x1380] sm:$0xff]
      %v876 = vld [vmem:[%s230 + $0x1388] sm:$0xff]
      %v877 = vld [vmem:[%s230 + $0x1390] sm:$0xff]
      %v878 = vld [vmem:[%s230 + $0x1398] sm:$0xff]
      %v879 = vld [vmem:[%s230 + $0x13a0] sm:$0xff]
      %v880 = vld [vmem:[%s230 + $0x13a8] sm:$0xff]
      %v881 = vld [vmem:[%s230 + $0x13b0] sm:$0xff]
      %v882 = vld [vmem:[%s230 + $0x13b8] sm:$0xff]
      %v883 = vld [vmem:[%s230 + $0x13c0] sm:$0xff]
      %v884 = vld [vmem:[%s230 + $0x13c8] sm:$0xff]
      %v885 = vld [vmem:[%s230 + $0x13d0] sm:$0xff]
      %v886 = vld [vmem:[%s230 + $0x13d8] sm:$0xff]
      %v887 = vld [vmem:[%s230 + $0x13e0] sm:$0xff]
      %v888 = vld [vmem:[%s230 + $0x13e8] sm:$0xff]
      %v889 = vld [vmem:[%s230 + $0x13f0] sm:$0xff]
      %v890 = vld [vmem:[%s230 + $0x13f8] sm:$0xff]
      %v891 = vld [vmem:[%s230 + $0x1400] sm:$0xff]
      %v892 = vld [vmem:[%s230 + $0x1408] sm:$0xff]
      %v893 = vld [vmem:[%s230 + $0x1410] sm:$0xff]
      %v894 = vld [vmem:[%s230 + $0x1418] sm:$0xff]
      %v895 = vld [vmem:[%s230 + $0x1420] sm:$0xff]
      %v896 = vld [vmem:[%s230 + $0x1428] sm:$0xff]
      %v897 = vld [vmem:[%s230 + $0x1430] sm:$0xff]
      %v898 = vld [vmem:[%s230 + $0x1438] sm:$0xff]
      %v899 = vld [vmem:[%s230 + $0x1440] sm:$0xff]
      %v900 = vld [vmem:[%s230 + $0x1448] sm:$0xff]
      %v901 = vld [vmem:[%s230 + $0x1450] sm:$0xff]
      %v902 = vld [vmem:[%s230 + $0x1458] sm:$0xff]
      %v903 = vld [vmem:[%s230 + $0x1460] sm:$0xff]
      %v904 = vld [vmem:[%s230 + $0x1468] sm:$0xff]
      %v905 = vld [vmem:[%s230 + $0x1470] sm:$0xff]
      %v906 = vld [vmem:[%s230 + $0x1478] sm:$0xff]
      %v907 = vld [vmem:[%s230 + $0x1480] sm:$0xff]
      %v908 = vld [vmem:[%s230 + $0x1488] sm:$0xff]
      %v909 = vld [vmem:[%s230 + $0x1490] sm:$0xff]
      %v910 = vld [vmem:[%s230 + $0x1498] sm:$0xff]
      %v911 = vld [vmem:[%s230 + $0x14a0] sm:$0xff]
      %v912 = vld [vmem:[%s230 + $0x14a8] sm:$0xff]
      %v913 = vld [vmem:[%s230 + $0x14b0] sm:$0xff]
      %v914 = vld [vmem:[%s230 + $0x14b8] sm:$0xff]
      %v915 = vld [vmem:[%s230 + $0x14c0] sm:$0xff]
      %v916 = vld [vmem:[%s230 + $0x14c8] sm:$0xff]
      %v917 = vld [vmem:[%s230 + $0x14d0] sm:$0xff]
      %v918 = vld [vmem:[%s230 + $0x14d8] sm:$0xff]
      %v919 = vld [vmem:[%s230 + $0x14e0] sm:$0xff]
      %v920 = vld [vmem:[%s230 + $0x14e8] sm:$0xff]
      %v921 = vld [vmem:[%s230 + $0x14f0] sm:$0xff]
      %v922 = vld [vmem:[%s230 + $0x14f8] sm:$0xff]
      %v923 = vld [vmem:[%s230 + $0x1500] sm:$0xff]
      %v924 = vld [vmem:[%s230 + $0x1508] sm:$0xff]
      %v925 = vld [vmem:[%s230 + $0x1510] sm:$0xff]
      %v926 = vld [vmem:[%s230 + $0x1518] sm:$0xff]
      %v927 = vld [vmem:[%s230 + $0x1520] sm:$0xff]
      %v928 = vld [vmem:[%s230 + $0x1528] sm:$0xff]
      %v929 = vld [vmem:[%s230 + $0x1530] sm:$0xff]
      %v930 = vld [vmem:[%s230 + $0x1538] sm:$0xff]
      %v931 = vld [vmem:[%s230 + $0x1540] sm:$0xff]
      %v932 = vld [vmem:[%s230 + $0x1548] sm:$0xff]
      %v933 = vld [vmem:[%s230 + $0x1550] sm:$0xff]
      %v934 = vld [vmem:[%s230 + $0x1558] sm:$0xff]
      %v935 = vld [vmem:[%s230 + $0x1560] sm:$0xff]
      %v936 = vld [vmem:[%s230 + $0x1568] sm:$0xff]
      %v937 = vld [vmem:[%s230 + $0x1570] sm:$0xff]
      %v938 = vld [vmem:[%s230 + $0x1578] sm:$0xff]
      %v939 = vld [vmem:[%s230 + $0x1580] sm:$0xff]
      %v940 = vld [vmem:[%s230 + $0x1588] sm:$0xff]
      %v941 = vld [vmem:[%s230 + $0x1590] sm:$0xff]
      %v942 = vld [vmem:[%s230 + $0x1598] sm:$0xff]
      %v943 = vld [vmem:[%s230 + $0x15a0] sm:$0xff]
      %v944 = vld [vmem:[%s230 + $0x15a8] sm:$0xff]
      %v945 = vld [vmem:[%s230 + $0x15b0] sm:$0xff]
      %v946 = vld [vmem:[%s230 + $0x15b8] sm:$0xff]
      %v947 = vld [vmem:[%s230 + $0x15c0] sm:$0xff]
      %v948 = vld [vmem:[%s230 + $0x15c8] sm:$0xff]
      %v949 = vld [vmem:[%s230 + $0x15d0] sm:$0xff]
      %v950 = vld [vmem:[%s230 + $0x15d8] sm:$0xff]
      %v951 = vld [vmem:[%s230 + $0x15e0] sm:$0xff]
      %v952 = vld [vmem:[%s230 + $0x15e8] sm:$0xff]
      %v953 = vld [vmem:[%s230 + $0x15f0] sm:$0xff]
      %v954 = vld [vmem:[%s230 + $0x15f8] sm:$0xff]
      %v955 = vld [vmem:[%s230 + $0x1600] sm:$0xff]
      %v956 = vld [vmem:[%s230 + $0x1608] sm:$0xff]
      %v957 = vld [vmem:[%s230 + $0x1610] sm:$0xff]
      %v958 = vld [vmem:[%s230 + $0x1618] sm:$0xff]
      %v959 = vld [vmem:[%s230 + $0x1620] sm:$0xff]
      %v960 = vld [vmem:[%s230 + $0x1628] sm:$0xff]
      %v961 = vld [vmem:[%s230 + $0x1630] sm:$0xff]
      %v962 = vld [vmem:[%s230 + $0x1638] sm:$0xff]
      %v963 = vld [vmem:[%s230 + $0x1640] sm:$0xff]
      %v964 = vld [vmem:[%s230 + $0x1648] sm:$0xff]
      %v965 = vld [vmem:[%s230 + $0x1650] sm:$0xff]
      %v966 = vld [vmem:[%s230 + $0x1658] sm:$0xff]
      %v967 = vld [vmem:[%s230 + $0x1660] sm:$0xff]
      %v968 = vld [vmem:[%s230 + $0x1668] sm:$0xff]
      %v969 = vld [vmem:[%s230 + $0x1670] sm:$0xff]
      %v970 = vld [vmem:[%s230 + $0x1678] sm:$0xff]
      %v971 = vld [vmem:[%s230 + $0x1680] sm:$0xff]
      %v972 = vld [vmem:[%s230 + $0x1688] sm:$0xff]
      %v973 = vld [vmem:[%s230 + $0x1690] sm:$0xff]
      %v974 = vld [vmem:[%s230 + $0x1698] sm:$0xff]
      %v975 = vld [vmem:[%s230 + $0x16a0] sm:$0xff]
      %v976 = vld [vmem:[%s230 + $0x16a8] sm:$0xff]
      %v977 = vld [vmem:[%s230 + $0x16b0] sm:$0xff]
      %v978 = vld [vmem:[%s230 + $0x16b8] sm:$0xff]
      %v979 = vld [vmem:[%s230 + $0x16c0] sm:$0xff]
      %v980 = vld [vmem:[%s230 + $0x16c8] sm:$0xff]
      %v981 = vld [vmem:[%s230 + $0x16d0] sm:$0xff]
      %v982 = vld [vmem:[%s230 + $0x16d8] sm:$0xff]
      %v983 = vld [vmem:[%s230 + $0x16e0] sm:$0xff]
      %v984 = vld [vmem:[%s230 + $0x16e8] sm:$0xff]
      %v985 = vld [vmem:[%s230 + $0x16f0] sm:$0xff]
      %v986 = vld [vmem:[%s230 + $0x16f8] sm:$0xff]
      %v987 = vld [vmem:[%s230 + $0x1700] sm:$0xff]
      %v988 = vld [vmem:[%s230 + $0x1708] sm:$0xff]
      %v989 = vld [vmem:[%s230 + $0x1710] sm:$0xff]
      %v990 = vld [vmem:[%s230 + $0x1718] sm:$0xff]
      %v991 = vld [vmem:[%s230 + $0x1720] sm:$0xff]
      %v992 = vld [vmem:[%s230 + $0x1728] sm:$0xff]
      %v993 = vld [vmem:[%s230 + $0x1730] sm:$0xff]
      %v994 = vld [vmem:[%s230 + $0x1738] sm:$0xff]
      %v995 = vld [vmem:[%s230 + $0x1740] sm:$0xff]
      %v996 = vld [vmem:[%s230 + $0x1748] sm:$0xff]
      %v997 = vld [vmem:[%s230 + $0x1750] sm:$0xff]
      %v998 = vld [vmem:[%s230 + $0x1758] sm:$0xff]
      %v999 = vld [vmem:[%s230 + $0x1760] sm:$0xff]
      %v1000 = vld [vmem:[%s230 + $0x1768] sm:$0xff]
      %v1001 = vld [vmem:[%s230 + $0x1770] sm:$0xff]
      %v1002 = vld [vmem:[%s230 + $0x1778] sm:$0xff]
      %v1003 = vld [vmem:[%s230 + $0x1780] sm:$0xff]
      %v1004 = vld [vmem:[%s230 + $0x1788] sm:$0xff]
      %v1005 = vld [vmem:[%s230 + $0x1790] sm:$0xff]
      %v1006 = vld [vmem:[%s230 + $0x1798] sm:$0xff]
      %v1007 = vld [vmem:[%s230 + $0x17a0] sm:$0xff]
      %v1008 = vld [vmem:[%s230 + $0x17a8] sm:$0xff]
      %v1009 = vld [vmem:[%s230 + $0x17b0] sm:$0xff]
      %v1010 = vld [vmem:[%s230 + $0x17b8] sm:$0xff]
      %v1011 = vld [vmem:[%s230 + $0x17c0] sm:$0xff]
      %v1012 = vld [vmem:[%s230 + $0x17c8] sm:$0xff]
      %v1013 = vld [vmem:[%s230 + $0x17d0] sm:$0xff]
      %v1014 = vld [vmem:[%s230 + $0x17d8] sm:$0xff]
      %v1015 = vld [vmem:[%s230 + $0x17e0] sm:$0xff]
      %v1016 = vld [vmem:[%s230 + $0x17e8] sm:$0xff]
      %v1017 = vld [vmem:[%s230 + $0x17f0] sm:$0xff]
      %v1018 = vld [vmem:[%s230 + $0x17f8] sm:$0xff]
      %v1019 = vld [vmem:[%s230 + $0x1800] sm:$0xff]
      %v1020 = vld [vmem:[%s230 + $0x1808] sm:$0xff]
      %v1021 = vld [vmem:[%s230 + $0x1810] sm:$0xff]
      %v1022 = vld [vmem:[%s230 + $0x1818] sm:$0xff]
      %v1023 = vld [vmem:[%s230 + $0x1820] sm:$0xff]
      %v1024 = vld [vmem:[%s230 + $0x1828] sm:$0xff]
      %v1025 = vld [vmem:[%s230 + $0x1830] sm:$0xff]
      %v1026 = vld [vmem:[%s230 + $0x1838] sm:$0xff]
      %v1027 = vld [vmem:[%s230 + $0x1840] sm:$0xff]
      %v1028 = vld [vmem:[%s230 + $0x1848] sm:$0xff]
      %v1029 = vld [vmem:[%s230 + $0x1850] sm:$0xff]
      %v1030 = vld [vmem:[%s230 + $0x1858] sm:$0xff]
      %v1031 = vld [vmem:[%s230 + $0x1860] sm:$0xff]
      %v1032 = vld [vmem:[%s230 + $0x1868] sm:$0xff]
      %v1033 = vld [vmem:[%s230 + $0x1870] sm:$0xff]
      %v1034 = vld [vmem:[%s230 + $0x1878] sm:$0xff]
      %v1035 = vld [vmem:[%s230 + $0x1880] sm:$0xff]
      %v1036 = vld [vmem:[%s230 + $0x1888] sm:$0xff]
      %v1037 = vld [vmem:[%s230 + $0x1890] sm:$0xff]
      %v1038 = vld [vmem:[%s230 + $0x1898] sm:$0xff]
      %v1039 = vld [vmem:[%s230 + $0x18a0] sm:$0xff]
      %v1040 = vld [vmem:[%s230 + $0x18a8] sm:$0xff]
      %v1041 = vld [vmem:[%s230 + $0x18b0] sm:$0xff]
      %v1042 = vld [vmem:[%s230 + $0x18b8] sm:$0xff]
      %v1043 = vld [vmem:[%s230 + $0x18c0] sm:$0xff]
      %v1044 = vld [vmem:[%s230 + $0x18c8] sm:$0xff]
      %v1045 = vld [vmem:[%s230 + $0x18d0] sm:$0xff]
      %v1046 = vld [vmem:[%s230 + $0x18d8] sm:$0xff]
      %v1047 = vld [vmem:[%s230 + $0x18e0] sm:$0xff]
      %v1048 = vld [vmem:[%s230 + $0x18e8] sm:$0xff]
      %v1049 = vld [vmem:[%s230 + $0x18f0] sm:$0xff]
      %v1050 = vld [vmem:[%s230 + $0x18f8] sm:$0xff]
      %v1051 = vld [vmem:[%s230 + $0x1900] sm:$0xff]
      %v1052 = vld [vmem:[%s230 + $0x1908] sm:$0xff]
      %v1053 = vld [vmem:[%s230 + $0x1910] sm:$0xff]
      %v1054 = vld [vmem:[%s230 + $0x1918] sm:$0xff]
      %v1055 = vld [vmem:[%s230 + $0x1920] sm:$0xff]
      %v1056 = vld [vmem:[%s230 + $0x1928] sm:$0xff]
      %v1057 = vld [vmem:[%s230 + $0x1930] sm:$0xff]
      %v1058 = vld [vmem:[%s230 + $0x1938] sm:$0xff]
      %v1059 = vld [vmem:[%s230 + $0x1940] sm:$0xff]
      %v1060 = vld [vmem:[%s230 + $0x1948] sm:$0xff]
      %v1061 = vld [vmem:[%s230 + $0x1950] sm:$0xff]
      %v1062 = vld [vmem:[%s230 + $0x1958] sm:$0xff]
      %v1063 = vld [vmem:[%s230 + $0x1960] sm:$0xff]
      %v1064 = vld [vmem:[%s230 + $0x1968] sm:$0xff]
      %v1065 = vld [vmem:[%s230 + $0x1970] sm:$0xff]
      %v1066 = vld [vmem:[%s230 + $0x1978] sm:$0xff]
      %v1067 = vld [vmem:[%s230 + $0x1980] sm:$0xff]
      %v1068 = vld [vmem:[%s230 + $0x1988] sm:$0xff]
      %v1069 = vld [vmem:[%s230 + $0x1990] sm:$0xff]
      %v1070 = vld [vmem:[%s230 + $0x1998] sm:$0xff]
      %v1071 = vld [vmem:[%s230 + $0x19a0] sm:$0xff]
      %v1072 = vld [vmem:[%s230 + $0x19a8] sm:$0xff]
      %v1073 = vld [vmem:[%s230 + $0x19b0] sm:$0xff]
      %v1074 = vld [vmem:[%s230 + $0x19b8] sm:$0xff]
      %v1075 = vld [vmem:[%s230 + $0x19c0] sm:$0xff]
      %v1076 = vld [vmem:[%s230 + $0x19c8] sm:$0xff]
      %v1077 = vld [vmem:[%s230 + $0x19d0] sm:$0xff]
      %v1078 = vld [vmem:[%s230 + $0x19d8] sm:$0xff]
      %v1079 = vld [vmem:[%s230 + $0x19e0] sm:$0xff]
      %v1080 = vld [vmem:[%s230 + $0x19e8] sm:$0xff]
      %v1081 = vld [vmem:[%s230 + $0x19f0] sm:$0xff]
      %v1082 = vld [vmem:[%s230 + $0x19f8] sm:$0xff]
      %v1083 = vld [vmem:[%s230 + $0x1a00] sm:$0xff]
      %v1084 = vld [vmem:[%s230 + $0x1a08] sm:$0xff]
      %v1085 = vld [vmem:[%s230 + $0x1a10] sm:$0xff]
      %v1086 = vld [vmem:[%s230 + $0x1a18] sm:$0xff]
      %v1087 = vld [vmem:[%s230 + $0x1a20] sm:$0xff]
      %v1088 = vld [vmem:[%s230 + $0x1a28] sm:$0xff]
      %v1089 = vld [vmem:[%s230 + $0x1a30] sm:$0xff]
      %v1090 = vld [vmem:[%s230 + $0x1a38] sm:$0xff]
      %v1091 = vld [vmem:[%s230 + $0x1a40] sm:$0xff]
      %v1092 = vld [vmem:[%s230 + $0x1a48] sm:$0xff]
      %v1093 = vld [vmem:[%s230 + $0x1a50] sm:$0xff]
      %v1094 = vld [vmem:[%s230 + $0x1a58] sm:$0xff]
      %v1095 = vld [vmem:[%s230 + $0x1a60] sm:$0xff]
      %v1096 = vld [vmem:[%s230 + $0x1a68] sm:$0xff]
      %v1097 = vld [vmem:[%s230 + $0x1a70] sm:$0xff]
      %v1098 = vld [vmem:[%s230 + $0x1a78] sm:$0xff]
      %v1099 = vld [vmem:[%s230 + $0x1a80] sm:$0xff]
      %v1100 = vld [vmem:[%s230 + $0x1a88] sm:$0xff]
      %v1101 = vld [vmem:[%s230 + $0x1a90] sm:$0xff]
      %v1102 = vld [vmem:[%s230 + $0x1a98] sm:$0xff]
      %v1103 = vld [vmem:[%s230 + $0x1aa0] sm:$0xff]
      %v1104 = vld [vmem:[%s230 + $0x1aa8] sm:$0xff]
      %v1105 = vld [vmem:[%s230 + $0x1ab0] sm:$0xff]
      %v1106 = vld [vmem:[%s230 + $0x1ab8] sm:$0xff]
      %v1107 = vld [vmem:[%s230 + $0x1ac0] sm:$0xff]
      %v1108 = vld [vmem:[%s230 + $0x1ac8] sm:$0xff]
      %v1109 = vld [vmem:[%s230 + $0x1ad0] sm:$0xff]
      %v1110 = vld [vmem:[%s230 + $0x1ad8] sm:$0xff]
      %v1111 = vld [vmem:[%s230 + $0x1ae0] sm:$0xff]
      %v1112 = vld [vmem:[%s230 + $0x1ae8] sm:$0xff]
      %v1113 = vld [vmem:[%s230 + $0x1af0] sm:$0xff]
      %v1114 = vld [vmem:[%s230 + $0x1af8] sm:$0xff]
      %v1115 = vld [vmem:[%s230 + $0x1b00] sm:$0xff]
      %v1116 = vld [vmem:[%s230 + $0x1b08] sm:$0xff]
      %v1117 = vld [vmem:[%s230 + $0x1b10] sm:$0xff]
      %v1118 = vld [vmem:[%s230 + $0x1b18] sm:$0xff]
      %v1119 = vld [vmem:[%s230 + $0x1b20] sm:$0xff]
      %v1120 = vld [vmem:[%s230 + $0x1b28] sm:$0xff]
      %v1121 = vld [vmem:[%s230 + $0x1b30] sm:$0xff]
      %v1122 = vld [vmem:[%s230 + $0x1b38] sm:$0xff]
      %v1123 = vld [vmem:[%s230 + $0x1b40] sm:$0xff]
      %v1124 = vld [vmem:[%s230 + $0x1b48] sm:$0xff]
      %v1125 = vld [vmem:[%s230 + $0x1b50] sm:$0xff]
      %v1126 = vld [vmem:[%s230 + $0x1b58] sm:$0xff]
      %v1127 = vld [vmem:[%s230 + $0x1b60] sm:$0xff]
      %v1128 = vld [vmem:[%s230 + $0x1b68] sm:$0xff]
      %v1129 = vld [vmem:[%s230 + $0x1b70] sm:$0xff]
      %v1130 = vld [vmem:[%s230 + $0x1b78] sm:$0xff]
      %v1131 = vld [vmem:[%s230 + $0x1b80] sm:$0xff]
      %v1132 = vld [vmem:[%s230 + $0x1b88] sm:$0xff]
      %v1133 = vld [vmem:[%s230 + $0x1b90] sm:$0xff]
      %v1134 = vld [vmem:[%s230 + $0x1b98] sm:$0xff]
      %v1135 = vld [vmem:[%s230 + $0x1ba0] sm:$0xff]
      %v1136 = vld [vmem:[%s230 + $0x1ba8] sm:$0xff]
      %v1137 = vld [vmem:[%s230 + $0x1bb0] sm:$0xff]
      %v1138 = vld [vmem:[%s230 + $0x1bb8] sm:$0xff]
      %v1139 = vld [vmem:[%s230 + $0x1bc0] sm:$0xff]
      %v1140 = vld [vmem:[%s230 + $0x1bc8] sm:$0xff]
      %v1141 = vld [vmem:[%s230 + $0x1bd0] sm:$0xff]
      %v1142 = vld [vmem:[%s230 + $0x1bd8] sm:$0xff]
      %v1143 = vld [vmem:[%s230 + $0x1be0] sm:$0xff]
      %v1144 = vld [vmem:[%s230 + $0x1be8] sm:$0xff]
      %v1145 = vld [vmem:[%s230 + $0x1bf0] sm:$0xff]
      %v1146 = vld [vmem:[%s230 + $0x1bf8] sm:$0xff]
      %v1147 = vld [vmem:[%s230 + $0x1c00] sm:$0xff]
      %v1148 = vld [vmem:[%s230 + $0x1c08] sm:$0xff]
      %v1149 = vld [vmem:[%s230 + $0x1c10] sm:$0xff]
      %v1150 = vld [vmem:[%s230 + $0x1c18] sm:$0xff]
      %v1151 = vld [vmem:[%s230 + $0x1c20] sm:$0xff]
      %v1152 = vld [vmem:[%s230 + $0x1c28] sm:$0xff]
      %v1153 = vld [vmem:[%s230 + $0x1c30] sm:$0xff]
      %v1154 = vld [vmem:[%s230 + $0x1c38] sm:$0xff]
      %v1155 = vld [vmem:[%s230 + $0x1c40] sm:$0xff]
      %v1156 = vld [vmem:[%s230 + $0x1c48] sm:$0xff]
      %v1157 = vld [vmem:[%s230 + $0x1c50] sm:$0xff]
      %v1158 = vld [vmem:[%s230 + $0x1c58] sm:$0xff]
      %v1159 = vld [vmem:[%s230 + $0x1c60] sm:$0xff]
      %v1160 = vld [vmem:[%s230 + $0x1c68] sm:$0xff]
      %v1161 = vld [vmem:[%s230 + $0x1c70] sm:$0xff]
      %v1162 = vld [vmem:[%s230 + $0x1c78] sm:$0xff]
      %v1163 = vld [vmem:[%s230 + $0x1c80] sm:$0xff]
      %v1164 = vld [vmem:[%s230 + $0x1c88] sm:$0xff]
      %v1165 = vld [vmem:[%s230 + $0x1c90] sm:$0xff]
      %v1166 = vld [vmem:[%s230 + $0x1c98] sm:$0xff]
      %v1167 = vld [vmem:[%s230 + $0x1ca0] sm:$0xff]
      %v1168 = vld [vmem:[%s230 + $0x1ca8] sm:$0xff]
      %v1169 = vld [vmem:[%s230 + $0x1cb0] sm:$0xff]
      %v1170 = vld [vmem:[%s230 + $0x1cb8] sm:$0xff]
      %v1171 = vld [vmem:[%s230 + $0x1cc0] sm:$0xff]
      %v1172 = vld [vmem:[%s230 + $0x1cc8] sm:$0xff]
      %v1173 = vld [vmem:[%s230 + $0x1cd0] sm:$0xff]
      %v1174 = vld [vmem:[%s230 + $0x1cd8] sm:$0xff]
      %v1175 = vld [vmem:[%s230 + $0x1ce0] sm:$0xff]
      %v1176 = vld [vmem:[%s230 + $0x1ce8] sm:$0xff]
      %v1177 = vld [vmem:[%s230 + $0x1cf0] sm:$0xff]
      %v1178 = vld [vmem:[%s230 + $0x1cf8] sm:$0xff]
      %v1179 = vld [vmem:[%s230 + $0x1d00] sm:$0xff]
      %v1180 = vld [vmem:[%s230 + $0x1d08] sm:$0xff]
      %v1181 = vld [vmem:[%s230 + $0x1d10] sm:$0xff]
      %v1182 = vld [vmem:[%s230 + $0x1d18] sm:$0xff]
      %v1183 = vld [vmem:[%s230 + $0x1d20] sm:$0xff]
      %v1184 = vld [vmem:[%s230 + $0x1d28] sm:$0xff]
      %v1185 = vld [vmem:[%s230 + $0x1d30] sm:$0xff]
      %v1186 = vld [vmem:[%s230 + $0x1d38] sm:$0xff]
      %v1187 = vld [vmem:[%s230 + $0x1d40] sm:$0xff]
      %v1188 = vld [vmem:[%s230 + $0x1d48] sm:$0xff]
      %v1189 = vld [vmem:[%s230 + $0x1d50] sm:$0xff]
      %v1190 = vld [vmem:[%s230 + $0x1d58] sm:$0xff]
      %v1191 = vld [vmem:[%s230 + $0x1d60] sm:$0xff]
      %v1192 = vld [vmem:[%s230 + $0x1d68] sm:$0xff]
      %v1193 = vld [vmem:[%s230 + $0x1d70] sm:$0xff]
      %v1194 = vld [vmem:[%s230 + $0x1d78] sm:$0xff]
      %v1195 = vld [vmem:[%s230 + $0x1d80] sm:$0xff]
      %v1196 = vld [vmem:[%s230 + $0x1d88] sm:$0xff]
      %v1197 = vld [vmem:[%s230 + $0x1d90] sm:$0xff]
      %v1198 = vld [vmem:[%s230 + $0x1d98] sm:$0xff]
      %v1199 = vld [vmem:[%s230 + $0x1da0] sm:$0xff]
      %v1200 = vld [vmem:[%s230 + $0x1da8] sm:$0xff]
      %v1201 = vld [vmem:[%s230 + $0x1db0] sm:$0xff]
      %v1202 = vld [vmem:[%s230 + $0x1db8] sm:$0xff]
      %v1203 = vld [vmem:[%s230 + $0x1dc0] sm:$0xff]
      %v1204 = vld [vmem:[%s230 + $0x1dc8] sm:$0xff]
      %v1205 = vld [vmem:[%s230 + $0x1dd0] sm:$0xff]
      %v1206 = vld [vmem:[%s230 + $0x1dd8] sm:$0xff]
      %v1207 = vld [vmem:[%s230 + $0x1de0] sm:$0xff]
      %v1208 = vld [vmem:[%s230 + $0x1de8] sm:$0xff]
      %v1209 = vld [vmem:[%s230 + $0x1df0] sm:$0xff]
      %v1210 = vld [vmem:[%s230 + $0x1df8] sm:$0xff]
      %v1211 = vld [vmem:[%s230 + $0x1e00] sm:$0xff]
      %v1212 = vld [vmem:[%s230 + $0x1e08] sm:$0xff]
      %v1213 = vld [vmem:[%s230 + $0x1e10] sm:$0xff]
      %v1214 = vld [vmem:[%s230 + $0x1e18] sm:$0xff]
      %v1215 = vld [vmem:[%s230 + $0x1e20] sm:$0xff]
      %v1216 = vld [vmem:[%s230 + $0x1e28] sm:$0xff]
      %v1217 = vld [vmem:[%s230 + $0x1e30] sm:$0xff]
      %v1218 = vld [vmem:[%s230 + $0x1e38] sm:$0xff]
      %v1219 = vld [vmem:[%s230 + $0x1e40] sm:$0xff]
      %v1220 = vld [vmem:[%s230 + $0x1e48] sm:$0xff]
      %v1221 = vld [vmem:[%s230 + $0x1e50] sm:$0xff]
      %v1222 = vld [vmem:[%s230 + $0x1e58] sm:$0xff]
      %v1223 = vld [vmem:[%s230 + $0x1e60] sm:$0xff]
      %v1224 = vld [vmem:[%s230 + $0x1e68] sm:$0xff]
      %v1225 = vld [vmem:[%s230 + $0x1e70] sm:$0xff]
      %v1226 = vld [vmem:[%s230 + $0x1e78] sm:$0xff]
      %v1227 = vld [vmem:[%s230 + $0x1e80] sm:$0xff]
      %v1228 = vld [vmem:[%s230 + $0x1e88] sm:$0xff]
      %v1229 = vld [vmem:[%s230 + $0x1e90] sm:$0xff]
      %v1230 = vld [vmem:[%s230 + $0x1e98] sm:$0xff]
      %v1231 = vld [vmem:[%s230 + $0x1ea0] sm:$0xff]
      %v1232 = vld [vmem:[%s230 + $0x1ea8] sm:$0xff]
      %v1233 = vld [vmem:[%s230 + $0x1eb0] sm:$0xff]
      %v1234 = vld [vmem:[%s230 + $0x1eb8] sm:$0xff]
      %v1235 = vld [vmem:[%s230 + $0x1ec0] sm:$0xff]
      %v1236 = vld [vmem:[%s230 + $0x1ec8] sm:$0xff]
      %v1237 = vld [vmem:[%s230 + $0x1ed0] sm:$0xff]
      %v1238 = vld [vmem:[%s230 + $0x1ed8] sm:$0xff]
      %v1239 = vld [vmem:[%s230 + $0x1ee0] sm:$0xff]
      %v1240 = vld [vmem:[%s230 + $0x1ee8] sm:$0xff]
      %v1241 = vld [vmem:[%s230 + $0x1ef0] sm:$0xff]
      %v1242 = vld [vmem:[%s230 + $0x1ef8] sm:$0xff]
      %v1243 = vld [vmem:[%s230 + $0x1f00] sm:$0xff]
      %v1244 = vld [vmem:[%s230 + $0x1f08] sm:$0xff]
      %v1245 = vld [vmem:[%s230 + $0x1f10] sm:$0xff]
      %v1246 = vld [vmem:[%s230 + $0x1f18] sm:$0xff]
      %v1247 = vld [vmem:[%s230 + $0x1f20] sm:$0xff]
      %v1248 = vld [vmem:[%s230 + $0x1f28] sm:$0xff]
      %v1249 = vld [vmem:[%s230 + $0x1f30] sm:$0xff]
      %v1250 = vld [vmem:[%s230 + $0x1f38] sm:$0xff]
      %v1251 = vld [vmem:[%s230 + $0x1f40] sm:$0xff]
      %v1252 = vld [vmem:[%s230 + $0x1f48] sm:$0xff]
      %v1253 = vld [vmem:[%s230 + $0x1f50] sm:$0xff]
      %v1254 = vld [vmem:[%s230 + $0x1f58] sm:$0xff]
      %v1255 = vld [vmem:[%s230 + $0x1f60] sm:$0xff]
      %v1256 = vld [vmem:[%s230 + $0x1f68] sm:$0xff]
      %v1257 = vld [vmem:[%s230 + $0x1f70] sm:$0xff]
      %v1258 = vld [vmem:[%s230 + $0x1f78] sm:$0xff]
      %v1259 = vld [vmem:[%s230 + $0x1f80] sm:$0xff]
      %v1260 = vld [vmem:[%s230 + $0x1f88] sm:$0xff]
      %v1261 = vld [vmem:[%s230 + $0x1f90] sm:$0xff]
      %v1262 = vld [vmem:[%s230 + $0x1f98] sm:$0xff]
      %v1263 = vld [vmem:[%s230 + $0x1fa0] sm:$0xff]
      %v1264 = vld [vmem:[%s230 + $0x1fa8] sm:$0xff]
      %v1265 = vld [vmem:[%s230 + $0x1fb0] sm:$0xff]
      %v1266 = vld [vmem:[%s230 + $0x1fb8] sm:$0xff]
      %v1267 = vld [vmem:[%s230 + $0x1fc0] sm:$0xff]
      %v1268 = vld [vmem:[%s230 + $0x1fc8] sm:$0xff]
      %v1269 = vld [vmem:[%s230 + $0x1fd0] sm:$0xff]
      %v1270 = vld [vmem:[%s230 + $0x1fd8] sm:$0xff]
      %v1271 = vld [vmem:[%s230 + $0x1fe0] sm:$0xff]
      %v1272 = vld [vmem:[%s230 + $0x1fe8] sm:$0xff]
      %v1273 = vld [vmem:[%s230 + $0x1ff0] sm:$0xff]
      %v1274 = vld [vmem:[%s230 + $0x1ff8] sm:$0xff]
      %v1275 = vld [vmem:[%s230 + $0x2000] sm:$0xff]
      %v1276 = vld [vmem:[%s230 + $0x2008] sm:$0xff]
      %v1277 = vld [vmem:[%s230 + $0x2010] sm:$0xff]
      %v1278 = vld [vmem:[%s230 + $0x2018] sm:$0xff]
      %v1279 = vld [vmem:[%s230 + $0x2020] sm:$0xff]
      %v1280 = vld [vmem:[%s230 + $0x2028] sm:$0xff]
      %v1281 = vld [vmem:[%s230 + $0x2030] sm:$0xff]
      %v1282 = vld [vmem:[%s230 + $0x2038] sm:$0xff]
      %v1283 = vld [vmem:[%s230 + $0x2040] sm:$0xff]
      %v1284 = vld [vmem:[%s230 + $0x2048] sm:$0xff]
      %v1285 = vld [vmem:[%s230 + $0x2050] sm:$0xff]
      %v1286 = vld [vmem:[%s230 + $0x2058] sm:$0xff]
      %v1287 = vld [vmem:[%s230 + $0x2060] sm:$0xff]
      %v1288 = vld [vmem:[%s230 + $0x2068] sm:$0xff]
      %v1289 = vld [vmem:[%s230 + $0x2070] sm:$0xff]
      %v1290 = vld [vmem:[%s230 + $0x2078] sm:$0xff]
      %v1291 = vld [vmem:[%s230 + $0x2080] sm:$0xff]
      %v1292 = vld [vmem:[%s230 + $0x2088] sm:$0xff]
      %v1293 = vld [vmem:[%s230 + $0x2090] sm:$0xff]
      %v1294 = vld [vmem:[%s230 + $0x2098] sm:$0xff]
      %v1295 = vld [vmem:[%s230 + $0x20a0] sm:$0xff]
      %v1296 = vld [vmem:[%s230 + $0x20a8] sm:$0xff]
      %v1297 = vld [vmem:[%s230 + $0x20b0] sm:$0xff]
      %v1298 = vld [vmem:[%s230 + $0x20b8] sm:$0xff]
      %v1299 = vld [vmem:[%s230 + $0x20c0] sm:$0xff]
      %v1300 = vld [vmem:[%s230 + $0x20c8] sm:$0xff]
      %v1301 = vld [vmem:[%s230 + $0x20d0] sm:$0xff]
      %v1302 = vld [vmem:[%s230 + $0x20d8] sm:$0xff]
      %v1303 = vld [vmem:[%s230 + $0x20e0] sm:$0xff]
      %v1304 = vld [vmem:[%s230 + $0x20e8] sm:$0xff]
      %v1305 = vld [vmem:[%s230 + $0x20f0] sm:$0xff]
      %v1306 = vld [vmem:[%s230 + $0x20f8] sm:$0xff]
      %v1307 = vld [vmem:[%s230 + $0x2100] sm:$0xff]
      %v1308 = vld [vmem:[%s230 + $0x2108] sm:$0xff]
      %v1309 = vld [vmem:[%s230 + $0x2110] sm:$0xff]
      %v1310 = vld [vmem:[%s230 + $0x2118] sm:$0xff]
      %v1311 = vld [vmem:[%s230 + $0x2120] sm:$0xff]
      %v1312 = vld [vmem:[%s230 + $0x2128] sm:$0xff]
      %v1313 = vld [vmem:[%s230 + $0x2130] sm:$0xff]
      %v1314 = vld [vmem:[%s230 + $0x2138] sm:$0xff]
      %v1315 = vld [vmem:[%s230 + $0x2140] sm:$0xff]
      %v1316 = vld [vmem:[%s230 + $0x2148] sm:$0xff]
      %v1317 = vld [vmem:[%s230 + $0x2150] sm:$0xff]
      %v1318 = vld [vmem:[%s230 + $0x2158] sm:$0xff]
      %v1319 = vld [vmem:[%s230 + $0x2160] sm:$0xff]
      %v1320 = vld [vmem:[%s230 + $0x2168] sm:$0xff]
      %v1321 = vld [vmem:[%s230 + $0x2170] sm:$0xff]
      %v1322 = vld [vmem:[%s230 + $0x2178] sm:$0xff]
      %v1323 = vld [vmem:[%s230 + $0x2180] sm:$0xff]
      %v1324 = vld [vmem:[%s230 + $0x2188] sm:$0xff]
      %v1325 = vld [vmem:[%s230 + $0x2190] sm:$0xff]
      %v1326 = vld [vmem:[%s230 + $0x2198] sm:$0xff]
      %v1327 = vld [vmem:[%s230 + $0x21a0] sm:$0xff]
      %v1328 = vld [vmem:[%s230 + $0x21a8] sm:$0xff]
      %v1329 = vld [vmem:[%s230 + $0x21b0] sm:$0xff]
      %v1330 = vld [vmem:[%s230 + $0x21b8] sm:$0xff]
      %v1331 = vld [vmem:[%s230 + $0x21c0] sm:$0xff]
      %v1332 = vld [vmem:[%s230 + $0x21c8] sm:$0xff]
      %v1333 = vld [vmem:[%s230 + $0x21d0] sm:$0xff]
      %v1334 = vld [vmem:[%s230 + $0x21d8] sm:$0xff]
      %v1335 = vld [vmem:[%s230 + $0x21e0] sm:$0xff]
      %v1336 = vld [vmem:[%s230 + $0x21e8] sm:$0xff]
      %v1337 = vld [vmem:[%s230 + $0x21f0] sm:$0xff]
      %v1338 = vld [vmem:[%s230 + $0x21f8] sm:$0xff]
      %v1339 = vld [vmem:[%s230 + $0x2200] sm:$0xff]
      %v1340 = vld [vmem:[%s230 + $0x2208] sm:$0xff]
      %v1341 = vld [vmem:[%s230 + $0x2210] sm:$0xff]
      %v1342 = vld [vmem:[%s230 + $0x2218] sm:$0xff]
      %v1343 = vld [vmem:[%s230 + $0x2220] sm:$0xff]
      %v1344 = vld [vmem:[%s230 + $0x2228] sm:$0xff]
      %v1345 = vld [vmem:[%s230 + $0x2230] sm:$0xff]
      %v1346 = vld [vmem:[%s230 + $0x2238] sm:$0xff]
      %v1347 = vld [vmem:[%s230 + $0x2240] sm:$0xff]
      %v1348 = vld [vmem:[%s230 + $0x2248] sm:$0xff]
      %v1349 = vld [vmem:[%s230 + $0x2250] sm:$0xff]
      %v1350 = vld [vmem:[%s230 + $0x2258] sm:$0xff]
      %v1351 = vld [vmem:[%s230 + $0x2260] sm:$0xff]
      %v1352 = vld [vmem:[%s230 + $0x2268] sm:$0xff]
      %v1353 = vld [vmem:[%s230 + $0x2270] sm:$0xff]
      %v1354 = vld [vmem:[%s230 + $0x2278] sm:$0xff]
      %v1355 = vld [vmem:[%s230 + $0x2280] sm:$0xff]
      %v1356 = vld [vmem:[%s230 + $0x2288] sm:$0xff]
      %v1357 = vld [vmem:[%s230 + $0x2290] sm:$0xff]
      %v1358 = vld [vmem:[%s230 + $0x2298] sm:$0xff]
      %v1359 = vld [vmem:[%s230 + $0x22a0] sm:$0xff]
      %v1360 = vld [vmem:[%s230 + $0x22a8] sm:$0xff]
      %v1361 = vld [vmem:[%s230 + $0x22b0] sm:$0xff]
      %v1362 = vld [vmem:[%s230 + $0x22b8] sm:$0xff]
      %v1363 = vld [vmem:[%s230 + $0x22c0] sm:$0xff]
      %v1364 = vld [vmem:[%s230 + $0x22c8] sm:$0xff]
      %v1365 = vld [vmem:[%s230 + $0x22d0] sm:$0xff]
      %v1366 = vld [vmem:[%s230 + $0x22d8] sm:$0xff]
      %v1367 = vld [vmem:[%s230 + $0x22e0] sm:$0xff]
      %v1368 = vld [vmem:[%s230 + $0x22e8] sm:$0xff]
      %v1369 = vld [vmem:[%s230 + $0x22f0] sm:$0xff]
      %v1370 = vld [vmem:[%s230 + $0x22f8] sm:$0xff]
      %v1371 = vld [vmem:[%s230 + $0x2300] sm:$0xff]
      %v1372 = vld [vmem:[%s230 + $0x2308] sm:$0xff]
      %v1373 = vld [vmem:[%s230 + $0x2310] sm:$0xff]
      %v1374 = vld [vmem:[%s230 + $0x2318] sm:$0xff]
      %v1375 = vld [vmem:[%s230 + $0x2320] sm:$0xff]
      %v1376 = vld [vmem:[%s230 + $0x2328] sm:$0xff]
      %v1377 = vld [vmem:[%s230 + $0x2330] sm:$0xff]
      %v1378 = vld [vmem:[%s230 + $0x2338] sm:$0xff]
      %v1379 = vld [vmem:[%s230 + $0x2340] sm:$0xff]
      %v1380 = vld [vmem:[%s230 + $0x2348] sm:$0xff]
      %v1381 = vld [vmem:[%s230 + $0x2350] sm:$0xff]
      %v1382 = vld [vmem:[%s230 + $0x2358] sm:$0xff]
      %v1383 = vld [vmem:[%s230 + $0x2360] sm:$0xff]
      %v1384 = vld [vmem:[%s230 + $0x2368] sm:$0xff]
      %v1385 = vld [vmem:[%s230 + $0x2370] sm:$0xff]
      %v1386 = vld [vmem:[%s230 + $0x2378] sm:$0xff]
      %v1387 = vld [vmem:[%s230 + $0x2380] sm:$0xff]
      %v1388 = vld [vmem:[%s230 + $0x2388] sm:$0xff]
      %v1389 = vld [vmem:[%s230 + $0x2390] sm:$0xff]
      %v1390 = vld [vmem:[%s230 + $0x2398] sm:$0xff]
      %v1391 = vld [vmem:[%s230 + $0x23a0] sm:$0xff]
      %v1392 = vld [vmem:[%s230 + $0x23a8] sm:$0xff]
      %v1393 = vld [vmem:[%s230 + $0x23b0] sm:$0xff]
      %v1394 = vld [vmem:[%s230 + $0x23b8] sm:$0xff]
      %v1395 = vld [vmem:[%s230 + $0x23c0] sm:$0xff]
      %v1396 = vld [vmem:[%s230 + $0x23c8] sm:$0xff]
      %v1397 = vld [vmem:[%s230 + $0x23d0] sm:$0xff]
      %v1398 = vld [vmem:[%s230 + $0x23d8] sm:$0xff]
      %v1399 = vld [vmem:[%s230 + $0x23e0] sm:$0xff]
      %v1400 = vld [vmem:[%s230 + $0x23e8] sm:$0xff]
      %v1401 = vld [vmem:[%s230 + $0x23f0] sm:$0xff]
      %v1402 = vld [vmem:[%s230 + $0x23f8] sm:$0xff]
      %v1403 = vld [vmem:[%s230 + $0x2400] sm:$0xff]
      %v1404 = vld [vmem:[%s230 + $0x2408] sm:$0xff]
      %v1405 = vld [vmem:[%s230 + $0x2410] sm:$0xff]
      %v1406 = vld [vmem:[%s230 + $0x2418] sm:$0xff]
      %v1407 = vld [vmem:[%s230 + $0x2420] sm:$0xff]
      %v1408 = vld [vmem:[%s230 + $0x2428] sm:$0xff]
      %v1409 = vld [vmem:[%s230 + $0x2430] sm:$0xff]
      %v1410 = vld [vmem:[%s230 + $0x2438] sm:$0xff]
      %v1411 = vld [vmem:[%s230 + $0x2440] sm:$0xff]
      %v1412 = vld [vmem:[%s230 + $0x2448] sm:$0xff]
      %v1413 = vld [vmem:[%s230 + $0x2450] sm:$0xff]
      %v1414 = vld [vmem:[%s230 + $0x2458] sm:$0xff]
      %v1415 = vld [vmem:[%s230 + $0x2460] sm:$0xff]
      %v1416 = vld [vmem:[%s230 + $0x2468] sm:$0xff]
      %v1417 = vld [vmem:[%s230 + $0x2470] sm:$0xff]
      %v1418 = vld [vmem:[%s230 + $0x2478] sm:$0xff]
      %v1419 = vld [vmem:[%s230 + $0x2480] sm:$0xff]
      %v1420 = vld [vmem:[%s230 + $0x2488] sm:$0xff]
      %v1421 = vld [vmem:[%s230 + $0x2490] sm:$0xff]
      %v1422 = vld [vmem:[%s230 + $0x2498] sm:$0xff]
      %v1423 = vld [vmem:[%s230 + $0x24a0] sm:$0xff]
      %v1424 = vld [vmem:[%s230 + $0x24a8] sm:$0xff]
      %v1425 = vld [vmem:[%s230 + $0x24b0] sm:$0xff]
      %v1426 = vld [vmem:[%s230 + $0x24b8] sm:$0xff]
      %v1427 = vld [vmem:[%s230 + $0x24c0] sm:$0xff]
      %v1428 = vld [vmem:[%s230 + $0x24c8] sm:$0xff]
      %v1429 = vld [vmem:[%s230 + $0x24d0] sm:$0xff]
      %v1430 = vld [vmem:[%s230 + $0x24d8] sm:$0xff]
      %v1431 = vld [vmem:[%s230 + $0x24e0] sm:$0xff]
      %v1432 = vld [vmem:[%s230 + $0x24e8] sm:$0xff]
      %v1433 = vld [vmem:[%s230 + $0x24f0] sm:$0xff]
      %v1434 = vld [vmem:[%s230 + $0x24f8] sm:$0xff]
      %v1435 = vld [vmem:[%s230 + $0x2500] sm:$0xff]
      %v1436 = vld [vmem:[%s230 + $0x2508] sm:$0xff]
      %v1437 = vld [vmem:[%s230 + $0x2510] sm:$0xff]
      %v1438 = vld [vmem:[%s230 + $0x2518] sm:$0xff]
      %v1439 = vld [vmem:[%s230 + $0x2520] sm:$0xff]
      %v1440 = vld [vmem:[%s230 + $0x2528] sm:$0xff]
      %v1441 = vld [vmem:[%s230 + $0x2530] sm:$0xff]
      %v1442 = vld [vmem:[%s230 + $0x2538] sm:$0xff]
      %v1443 = vld [vmem:[%s230 + $0x2540] sm:$0xff]
      %v1444 = vld [vmem:[%s230 + $0x2548] sm:$0xff]
      %v1445 = vld [vmem:[%s230 + $0x2550] sm:$0xff]
      %v1446 = vld [vmem:[%s230 + $0x2558] sm:$0xff]
      %v1447 = vld [vmem:[%s230 + $0x2560] sm:$0xff]
      %v1448 = vld [vmem:[%s230 + $0x2568] sm:$0xff]
      %v1449 = vld [vmem:[%s230 + $0x2570] sm:$0xff]
      %v1450 = vld [vmem:[%s230 + $0x2578] sm:$0xff]
      %v1451 = vld [vmem:[%s230 + $0x2580] sm:$0xff]
      %v1452 = vld [vmem:[%s230 + $0x2588] sm:$0xff]
      %v1453 = vld [vmem:[%s230 + $0x2590] sm:$0xff]
      %v1454 = vld [vmem:[%s230 + $0x2598] sm:$0xff]
      %v1455 = vld [vmem:[%s230 + $0x25a0] sm:$0xff]
      %v1456 = vld [vmem:[%s230 + $0x25a8] sm:$0xff]
      %v1457 = vld [vmem:[%s230 + $0x25b0] sm:$0xff]
      %v1458 = vld [vmem:[%s230 + $0x25b8] sm:$0xff]
      %v1459 = vld [vmem:[%s230 + $0x25c0] sm:$0xff]
      %v1460 = vld [vmem:[%s230 + $0x25c8] sm:$0xff]
      %v1461 = vld [vmem:[%s230 + $0x25d0] sm:$0xff]
      %v1462 = vld [vmem:[%s230 + $0x25d8] sm:$0xff]
      %v1463 = vld [vmem:[%s230 + $0x25e0] sm:$0xff]
      %v1464 = vld [vmem:[%s230 + $0x25e8] sm:$0xff]
      %v1465 = vld [vmem:[%s230 + $0x25f0] sm:$0xff]
      %v1466 = vld [vmem:[%s230 + $0x25f8] sm:$0xff]
      %v1467 = vld [vmem:[%s230 + $0x2600] sm:$0xff]
      %v1468 = vld [vmem:[%s230 + $0x2608] sm:$0xff]
      %v1469 = vld [vmem:[%s230 + $0x2610] sm:$0xff]
      %v1470 = vld [vmem:[%s230 + $0x2618] sm:$0xff]
      %v1471 = vld [vmem:[%s230 + $0x2620] sm:$0xff]
      %v1472 = vld [vmem:[%s230 + $0x2628] sm:$0xff]
      %v1473 = vld [vmem:[%s230 + $0x2630] sm:$0xff]
      %v1474 = vld [vmem:[%s230 + $0x2638] sm:$0xff]
      %v1475 = vld [vmem:[%s230 + $0x2640] sm:$0xff]
      %v1476 = vld [vmem:[%s230 + $0x2648] sm:$0xff]
      %v1477 = vld [vmem:[%s230 + $0x2650] sm:$0xff]
      %v1478 = vld [vmem:[%s230 + $0x2658] sm:$0xff]
      %v1479 = vld [vmem:[%s230 + $0x2660] sm:$0xff]
      %v1480 = vld [vmem:[%s230 + $0x2668] sm:$0xff]
      %v1481 = vld [vmem:[%s230 + $0x2670] sm:$0xff]
      %v1482 = vld [vmem:[%s230 + $0x2678] sm:$0xff]
      %v1483 = vld [vmem:[%s230 + $0x2680] sm:$0xff]
      %v1484 = vld [vmem:[%s230 + $0x2688] sm:$0xff]
      %v1485 = vld [vmem:[%s230 + $0x2690] sm:$0xff]
      %v1486 = vld [vmem:[%s230 + $0x2698] sm:$0xff]
      %v1487 = vld [vmem:[%s230 + $0x26a0] sm:$0xff]
      %v1488 = vld [vmem:[%s230 + $0x26a8] sm:$0xff]
      %v1489 = vld [vmem:[%s230 + $0x26b0] sm:$0xff]
      %v1490 = vld [vmem:[%s230 + $0x26b8] sm:$0xff]
      %v1491 = vld [vmem:[%s230 + $0x26c0] sm:$0xff]
      %v1492 = vld [vmem:[%s230 + $0x26c8] sm:$0xff]
      %v1493 = vld [vmem:[%s230 + $0x26d0] sm:$0xff]
      %v1494 = vld [vmem:[%s230 + $0x26d8] sm:$0xff]
      %v1495 = vld [vmem:[%s230 + $0x26e0] sm:$0xff]
      %v1496 = vld [vmem:[%s230 + $0x26e8] sm:$0xff]
      %v1497 = vld [vmem:[%s230 + $0x26f0] sm:$0xff]
      %v1498 = vld [vmem:[%s230 + $0x26f8] sm:$0xff]
      %v1499 = vld [vmem:[%s230 + $0x2700] sm:$0xff]
      %v1500 = vld [vmem:[%s230 + $0x2708] sm:$0xff]
      %v1501 = vld [vmem:[%s230 + $0x2710] sm:$0xff]
      %v1502 = vld [vmem:[%s230 + $0x2718] sm:$0xff]
      %v1503 = vld [vmem:[%s230 + $0x2720] sm:$0xff]
      %v1504 = vld [vmem:[%s230 + $0x2728] sm:$0xff]
      %v1505 = vld [vmem:[%s230 + $0x2730] sm:$0xff]
      %v1506 = vld [vmem:[%s230 + $0x2738] sm:$0xff]
      %v1507 = vld [vmem:[%s230 + $0x2740] sm:$0xff]
      %v1508 = vld [vmem:[%s230 + $0x2748] sm:$0xff]
      %v1509 = vld [vmem:[%s230 + $0x2750] sm:$0xff]
      %v1510 = vld [vmem:[%s230 + $0x2758] sm:$0xff]
      %v1511 = vld [vmem:[%s230 + $0x2760] sm:$0xff]
      %v1512 = vld [vmem:[%s230 + $0x2768] sm:$0xff]
      %v1513 = vld [vmem:[%s230 + $0x2770] sm:$0xff]
      %v1514 = vld [vmem:[%s230 + $0x2778] sm:$0xff]
      %v1515 = vld [vmem:[%s230 + $0x2780] sm:$0xff]
      %v1516 = vld [vmem:[%s230 + $0x2788] sm:$0xff]
      %v1517 = vld [vmem:[%s230 + $0x2790] sm:$0xff]
      %v1518 = vld [vmem:[%s230 + $0x2798] sm:$0xff]
      %v1519 = vld [vmem:[%s230 + $0x27a0] sm:$0xff]
      %v1520 = vld [vmem:[%s230 + $0x27a8] sm:$0xff]
      %v1521 = vld [vmem:[%s230 + $0x27b0] sm:$0xff]
      %v1522 = vld [vmem:[%s230 + $0x27b8] sm:$0xff]
      %v1523 = vld [vmem:[%s230 + $0x27c0] sm:$0xff]
      %v1524 = vld [vmem:[%s230 + $0x27c8] sm:$0xff]
      %v1525 = vld [vmem:[%s230 + $0x27d0] sm:$0xff]
      %v1526 = vld [vmem:[%s230 + $0x27d8] sm:$0xff]
      %v1527 = vld [vmem:[%s230 + $0x27e0] sm:$0xff]
      %v1528 = vld [vmem:[%s230 + $0x27e8] sm:$0xff]
      %v1529 = vld [vmem:[%s230 + $0x27f0] sm:$0xff]
      %v1530 = vld [vmem:[%s230 + $0x27f8] sm:$0xff]
      %v1531 = vld [vmem:[%s230 + $0x2800] sm:$0xff]
      %v1532 = vld [vmem:[%s230 + $0x2808] sm:$0xff]
      %v1533 = vld [vmem:[%s230 + $0x2810] sm:$0xff]
      %v1534 = vld [vmem:[%s230 + $0x2818] sm:$0xff]
      %v1535 = vld [vmem:[%s230 + $0x2820] sm:$0xff]
      %v1536 = vld [vmem:[%s230 + $0x2828] sm:$0xff]
      %v1537 = vld [vmem:[%s230 + $0x2830] sm:$0xff]
      %v1538 = vld [vmem:[%s230 + $0x2838] sm:$0xff]
      %v1539 = vld [vmem:[%s230 + $0x2840] sm:$0xff]
      %v1540 = vld [vmem:[%s230 + $0x2848] sm:$0xff]
      %v1541 = vld [vmem:[%s230 + $0x2850] sm:$0xff]
      %v1542 = vld [vmem:[%s230 + $0x2858] sm:$0xff]
      %v1543 = vld [vmem:[%s230 + $0x2860] sm:$0xff]
      %v1544 = vld [vmem:[%s230 + $0x2868] sm:$0xff]
      %v1545 = vld [vmem:[%s230 + $0x2870] sm:$0xff]
      %v1546 = vld [vmem:[%s230 + $0x2878] sm:$0xff]
      %v1547 = vld [vmem:[%s230 + $0x2880] sm:$0xff]
      %v1548 = vld [vmem:[%s230 + $0x2888] sm:$0xff]
      %v1549 = vld [vmem:[%s230 + $0x2890] sm:$0xff]
      %v1550 = vld [vmem:[%s230 + $0x2898] sm:$0xff]
      %v1551 = vld [vmem:[%s230 + $0x28a0] sm:$0xff]
      %v1552 = vld [vmem:[%s230 + $0x28a8] sm:$0xff]
      %v1553 = vld [vmem:[%s230 + $0x28b0] sm:$0xff]
      %v1554 = vld [vmem:[%s230 + $0x28b8] sm:$0xff]
      %v1555 = vld [vmem:[%s230 + $0x28c0] sm:$0xff]
      %v1556 = vld [vmem:[%s230 + $0x28c8] sm:$0xff]
      %v1557 = vld [vmem:[%s230 + $0x28d0] sm:$0xff]
      %v1558 = vld [vmem:[%s230 + $0x28d8] sm:$0xff]
      %v1559 = vld [vmem:[%s230 + $0x28e0] sm:$0xff]
      %v1560 = vld [vmem:[%s230 + $0x28e8] sm:$0xff]
      %v1561 = vld [vmem:[%s230 + $0x28f0] sm:$0xff]
      %v1562 = vld [vmem:[%s230 + $0x28f8] sm:$0xff]
      %v1563 = vld [vmem:[%s230 + $0x2900] sm:$0xff]
      %v1564 = vld [vmem:[%s230 + $0x2908] sm:$0xff]
      %v1565 = vld [vmem:[%s230 + $0x2910] sm:$0xff]
      %v1566 = vld [vmem:[%s230 + $0x2918] sm:$0xff]
      %v1567 = vld [vmem:[%s230 + $0x2920] sm:$0xff]
      %v1568 = vld [vmem:[%s230 + $0x2928] sm:$0xff]
      %v1569 = vld [vmem:[%s230 + $0x2930] sm:$0xff]
      %v1570 = vld [vmem:[%s230 + $0x2938] sm:$0xff]
      %v1571 = vld [vmem:[%s230 + $0x2940] sm:$0xff]
      %v1572 = vld [vmem:[%s230 + $0x2948] sm:$0xff]
      %v1573 = vld [vmem:[%s230 + $0x2950] sm:$0xff]
      %v1574 = vld [vmem:[%s230 + $0x2958] sm:$0xff]
      %v1575 = vld [vmem:[%s230 + $0x2960] sm:$0xff]
      %v1576 = vld [vmem:[%s230 + $0x2968] sm:$0xff]
      %v1577 = vld [vmem:[%s230 + $0x2970] sm:$0xff]
      %v1578 = vld [vmem:[%s230 + $0x2978] sm:$0xff]
      %v1579 = vld [vmem:[%s230 + $0x2980] sm:$0xff]
      %v1580 = vld [vmem:[%s230 + $0x2988] sm:$0xff]
      %v1581 = vld [vmem:[%s230 + $0x2990] sm:$0xff]
      %v1582 = vld [vmem:[%s230 + $0x2998] sm:$0xff]
      %v1583 = vld [vmem:[%s230 + $0x29a0] sm:$0xff]
      %v1584 = vld [vmem:[%s230 + $0x29a8] sm:$0xff]
      %v1585 = vld [vmem:[%s230 + $0x29b0] sm:$0xff]
      %v1586 = vld [vmem:[%s230 + $0x29b8] sm:$0xff]
      %v1587 = vld [vmem:[%s230 + $0x29c0] sm:$0xff]
      %v1588 = vld [vmem:[%s230 + $0x29c8] sm:$0xff]
      %v1589 = vld [vmem:[%s230 + $0x29d0] sm:$0xff]
      %v1590 = vld [vmem:[%s230 + $0x29d8] sm:$0xff]
      %v1591 = vld [vmem:[%s230 + $0x29e0] sm:$0xff]
      %v1592 = vld [vmem:[%s230 + $0x29e8] sm:$0xff]
      %v1593 = vld [vmem:[%s230 + $0x29f0] sm:$0xff]
      %v1594 = vld [vmem:[%s230 + $0x29f8] sm:$0xff]
      %v1595 = vld [vmem:[%s230 + $0x2a00] sm:$0xff]
      %v1596 = vld [vmem:[%s230 + $0x2a08] sm:$0xff]
      %v1597 = vld [vmem:[%s230 + $0x2a10] sm:$0xff]
      %v1598 = vld [vmem:[%s230 + $0x2a18] sm:$0xff]
      %v1599 = vld [vmem:[%s230 + $0x2a20] sm:$0xff]
      %v1600 = vld [vmem:[%s230 + $0x2a28] sm:$0xff]
      %v1601 = vld [vmem:[%s230 + $0x2a30] sm:$0xff]
      %v1602 = vld [vmem:[%s230 + $0x2a38] sm:$0xff]
      %v1603 = vld [vmem:[%s230 + $0x2a40] sm:$0xff]
      %v1604 = vld [vmem:[%s230 + $0x2a48] sm:$0xff]
      %v1605 = vld [vmem:[%s230 + $0x2a50] sm:$0xff]
      %v1606 = vld [vmem:[%s230 + $0x2a58] sm:$0xff]
      %v1607 = vld [vmem:[%s230 + $0x2a60] sm:$0xff]
      %v1608 = vld [vmem:[%s230 + $0x2a68] sm:$0xff]
      %v1609 = vld [vmem:[%s230 + $0x2a70] sm:$0xff]
      %v1610 = vld [vmem:[%s230 + $0x2a78] sm:$0xff]
      %v1611 = vld [vmem:[%s230 + $0x2a80] sm:$0xff]
      %v1612 = vld [vmem:[%s230 + $0x2a88] sm:$0xff]
      %v1613 = vld [vmem:[%s230 + $0x2a90] sm:$0xff]
      %v1614 = vld [vmem:[%s230 + $0x2a98] sm:$0xff]
      %v1615 = vld [vmem:[%s230 + $0x2aa0] sm:$0xff]
      %v1616 = vld [vmem:[%s230 + $0x2aa8] sm:$0xff]
      %v1617 = vld [vmem:[%s230 + $0x2ab0] sm:$0xff]
      %v1618 = vld [vmem:[%s230 + $0x2ab8] sm:$0xff]
      %v1619 = vld [vmem:[%s230 + $0x2ac0] sm:$0xff]
      %v1620 = vld [vmem:[%s230 + $0x2ac8] sm:$0xff]
      %v1621 = vld [vmem:[%s230 + $0x2ad0] sm:$0xff]
      %v1622 = vld [vmem:[%s230 + $0x2ad8] sm:$0xff]
      %v1623 = vld [vmem:[%s230 + $0x2ae0] sm:$0xff]
      %v1624 = vld [vmem:[%s230 + $0x2ae8] sm:$0xff]
      %v1625 = vld [vmem:[%s230 + $0x2af0] sm:$0xff]
      %v1626 = vld [vmem:[%s230 + $0x2af8] sm:$0xff]
      %v1627 = vld [vmem:[%s230 + $0x2b00] sm:$0xff]
      %v1628 = vld [vmem:[%s230 + $0x2b08] sm:$0xff]
      %v1629 = vld [vmem:[%s230 + $0x2b10] sm:$0xff]
      %v1630 = vld [vmem:[%s230 + $0x2b18] sm:$0xff]
      %v1631 = vld [vmem:[%s230 + $0x2b20] sm:$0xff]
      %v1632 = vld [vmem:[%s230 + $0x2b28] sm:$0xff]
      %v1633 = vld [vmem:[%s230 + $0x2b30] sm:$0xff]
      %v1634 = vld [vmem:[%s230 + $0x2b38] sm:$0xff]
      %v1635 = vld [vmem:[%s230 + $0x2b40] sm:$0xff]
      %v1636 = vld [vmem:[%s230 + $0x2b48] sm:$0xff]
      %v1637 = vld [vmem:[%s230 + $0x2b50] sm:$0xff]
      %v1638 = vld [vmem:[%s230 + $0x2b58] sm:$0xff]
      %v1639 = vld [vmem:[%s230 + $0x2b60] sm:$0xff]
      %v1640 = vld [vmem:[%s230 + $0x2b68] sm:$0xff]
      %v1641 = vld [vmem:[%s230 + $0x2b70] sm:$0xff]
      %v1642 = vld [vmem:[%s230 + $0x2b78] sm:$0xff]
      %v1643 = vld [vmem:[%s230 + $0x2b80] sm:$0xff]
      %v1644 = vld [vmem:[%s230 + $0x2b88] sm:$0xff]
      %v1645 = vld [vmem:[%s230 + $0x2b90] sm:$0xff]
      %v1646 = vld [vmem:[%s230 + $0x2b98] sm:$0xff]
      %v1647 = vld [vmem:[%s230 + $0x2ba0] sm:$0xff]
      %v1648 = vld [vmem:[%s230 + $0x2ba8] sm:$0xff]
      %v1649 = vld [vmem:[%s230 + $0x2bb0] sm:$0xff]
      %v1650 = vld [vmem:[%s230 + $0x2bb8] sm:$0xff]
      %v1651 = vld [vmem:[%s230 + $0x2bc0] sm:$0xff]
      %v1652 = vld [vmem:[%s230 + $0x2bc8] sm:$0xff]
      %v1653 = vld [vmem:[%s230 + $0x2bd0] sm:$0xff]
      %v1654 = vld [vmem:[%s230 + $0x2bd8] sm:$0xff]
      %v1655 = vld [vmem:[%s230 + $0x2be0] sm:$0xff]
      %v1656 = vld [vmem:[%s230 + $0x2be8] sm:$0xff]
      %v1657 = vld [vmem:[%s230 + $0x2bf0] sm:$0xff]
      %v1658 = vld [vmem:[%s230 + $0x2bf8] sm:$0xff]
      %v1659 = vld [vmem:[%s230 + $0x2c00] sm:$0xff]
      %v1660 = vld [vmem:[%s230 + $0x2c08] sm:$0xff]
      %v1661 = vld [vmem:[%s230 + $0x2c10] sm:$0xff]
      %v1662 = vld [vmem:[%s230 + $0x2c18] sm:$0xff]
      %v1663 = vld [vmem:[%s230 + $0x2c20] sm:$0xff]
      %v1664 = vld [vmem:[%s230 + $0x2c28] sm:$0xff]
      %v1665 = vld [vmem:[%s230 + $0x2c30] sm:$0xff]
      %v1666 = vld [vmem:[%s230 + $0x2c38] sm:$0xff]
      %v1667 = vld [vmem:[%s230 + $0x2c40] sm:$0xff]
      %v1668 = vld [vmem:[%s230 + $0x2c48] sm:$0xff]
      %v1669 = vld [vmem:[%s230 + $0x2c50] sm:$0xff]
      %v1670 = vld [vmem:[%s230 + $0x2c58] sm:$0xff]
      %v1671 = vld [vmem:[%s230 + $0x2c60] sm:$0xff]
      %v1672 = vld [vmem:[%s230 + $0x2c68] sm:$0xff]
      %v1673 = vld [vmem:[%s230 + $0x2c70] sm:$0xff]
      %v1674 = vld [vmem:[%s230 + $0x2c78] sm:$0xff]
      %v1675 = vld [vmem:[%s230 + $0x2c80] sm:$0xff]
      %v1676 = vld [vmem:[%s230 + $0x2c88] sm:$0xff]
      %v1677 = vld [vmem:[%s230 + $0x2c90] sm:$0xff]
      %v1678 = vld [vmem:[%s230 + $0x2c98] sm:$0xff]
      %v1679 = vld [vmem:[%s230 + $0x2ca0] sm:$0xff]
      %v1680 = vld [vmem:[%s230 + $0x2ca8] sm:$0xff]
      %v1681 = vld [vmem:[%s230 + $0x2cb0] sm:$0xff]
      %v1682 = vld [vmem:[%s230 + $0x2cb8] sm:$0xff]
      %v1683 = vld [vmem:[%s230 + $0x2cc0] sm:$0xff]
      %v1684 = vld [vmem:[%s230 + $0x2cc8] sm:$0xff]
      %v1685 = vld [vmem:[%s230 + $0x2cd0] sm:$0xff]
      %v1686 = vld [vmem:[%s230 + $0x2cd8] sm:$0xff]
      %v1687 = vld [vmem:[%s230 + $0x2ce0] sm:$0xff]
      %v1688 = vld [vmem:[%s230 + $0x2ce8] sm:$0xff]
      %v1689 = vld [vmem:[%s230 + $0x2cf0] sm:$0xff]
      %v1690 = vld [vmem:[%s230 + $0x2cf8] sm:$0xff]
      %v1691 = vld [vmem:[%s230 + $0x2d00] sm:$0xff]
      %v1692 = vld [vmem:[%s230 + $0x2d08] sm:$0xff]
      %v1693 = vld [vmem:[%s230 + $0x2d10] sm:$0xff]
      %v1694 = vld [vmem:[%s230 + $0x2d18] sm:$0xff]
      %v1695 = vld [vmem:[%s230 + $0x2d20] sm:$0xff]
      %v1696 = vld [vmem:[%s230 + $0x2d28] sm:$0xff]
      %v1697 = vld [vmem:[%s230 + $0x2d30] sm:$0xff]
      %v1698 = vld [vmem:[%s230 + $0x2d38] sm:$0xff]
      %v1699 = vld [vmem:[%s230 + $0x2d40] sm:$0xff]
      %v1700 = vld [vmem:[%s230 + $0x2d48] sm:$0xff]
      %v1701 = vld [vmem:[%s230 + $0x2d50] sm:$0xff]
      %v1702 = vld [vmem:[%s230 + $0x2d58] sm:$0xff]
      %v1703 = vld [vmem:[%s230 + $0x2d60] sm:$0xff]
      %v1704 = vld [vmem:[%s230 + $0x2d68] sm:$0xff]
      %v1705 = vld [vmem:[%s230 + $0x2d70] sm:$0xff]
      %v1706 = vld [vmem:[%s230 + $0x2d78] sm:$0xff]
      %v1707 = vld [vmem:[%s230 + $0x2d80] sm:$0xff]
      %v1708 = vld [vmem:[%s230 + $0x2d88] sm:$0xff]
      %v1709 = vld [vmem:[%s230 + $0x2d90] sm:$0xff]
      %v1710 = vld [vmem:[%s230 + $0x2d98] sm:$0xff]
      %v1711 = vld [vmem:[%s230 + $0x2da0] sm:$0xff]
      %v1712 = vld [vmem:[%s230 + $0x2da8] sm:$0xff]
      %v1713 = vld [vmem:[%s230 + $0x2db0] sm:$0xff]
      %v1714 = vld [vmem:[%s230 + $0x2db8] sm:$0xff]
      %v1715 = vld [vmem:[%s230 + $0x2dc0] sm:$0xff]
      %v1716 = vld [vmem:[%s230 + $0x2dc8] sm:$0xff]
      %v1717 = vld [vmem:[%s230 + $0x2dd0] sm:$0xff]
      %v1718 = vld [vmem:[%s230 + $0x2dd8] sm:$0xff]
      %v1719 = vld [vmem:[%s230 + $0x2de0] sm:$0xff]
      %v1720 = vld [vmem:[%s230 + $0x2de8] sm:$0xff]
      %v1721 = vld [vmem:[%s230 + $0x2df0] sm:$0xff]
      %v1722 = vld [vmem:[%s230 + $0x2df8] sm:$0xff]
      %v1723 = vld [vmem:[%s230 + $0x2e00] sm:$0xff]
      %v1724 = vld [vmem:[%s230 + $0x2e08] sm:$0xff]
      %v1725 = vld [vmem:[%s230 + $0x2e10] sm:$0xff]
      %v1726 = vld [vmem:[%s230 + $0x2e18] sm:$0xff]
      %v1727 = vld [vmem:[%s230 + $0x2e20] sm:$0xff]
      %v1728 = vld [vmem:[%s230 + $0x2e28] sm:$0xff]
      %v1729 = vld [vmem:[%s230 + $0x2e30] sm:$0xff]
      %v1730 = vld [vmem:[%s230 + $0x2e38] sm:$0xff]
      %v1731 = vld [vmem:[%s230 + $0x2e40] sm:$0xff]
      %v1732 = vld [vmem:[%s230 + $0x2e48] sm:$0xff]
      %v1733 = vld [vmem:[%s230 + $0x2e50] sm:$0xff]
      %v1734 = vld [vmem:[%s230 + $0x2e58] sm:$0xff]
      %v1735 = vld [vmem:[%s230 + $0x2e60] sm:$0xff]
      %v1736 = vld [vmem:[%s230 + $0x2e68] sm:$0xff]
      %v1737 = vld [vmem:[%s230 + $0x2e70] sm:$0xff]
      %v1738 = vld [vmem:[%s230 + $0x2e78] sm:$0xff]
      %v1739 = vld [vmem:[%s230 + $0x2e80] sm:$0xff]
      %v1740 = vld [vmem:[%s230 + $0x2e88] sm:$0xff]
      %v1741 = vld [vmem:[%s230 + $0x2e90] sm:$0xff]
      %v1742 = vld [vmem:[%s230 + $0x2e98] sm:$0xff]
      %v1743 = vld [vmem:[%s230 + $0x2ea0] sm:$0xff]
      %v1744 = vld [vmem:[%s230 + $0x2ea8] sm:$0xff]
      %v1745 = vld [vmem:[%s230 + $0x2eb0] sm:$0xff]
      %v1746 = vld [vmem:[%s230 + $0x2eb8] sm:$0xff]
      %v1747 = vld [vmem:[%s230 + $0x2ec0] sm:$0xff]
      %v1748 = vld [vmem:[%s230 + $0x2ec8] sm:$0xff]
      %v1749 = vld [vmem:[%s230 + $0x2ed0] sm:$0xff]
      %v1750 = vld [vmem:[%s230 + $0x2ed8] sm:$0xff]
      %v1751 = vld [vmem:[%s230 + $0x2ee0] sm:$0xff]
      %v1752 = vld [vmem:[%s230 + $0x2ee8] sm:$0xff]
      %v1753 = vld [vmem:[%s230 + $0x2ef0] sm:$0xff]
      %v1754 = vld [vmem:[%s230 + $0x2ef8] sm:$0xff]
      %v1755 = vld [vmem:[%s230 + $0x2f00] sm:$0xff]
      %v1756 = vld [vmem:[%s230 + $0x2f08] sm:$0xff]
      %v1757 = vld [vmem:[%s230 + $0x2f10] sm:$0xff]
      %v1758 = vld [vmem:[%s230 + $0x2f18] sm:$0xff]
      %v1759 = vld [vmem:[%s230 + $0x2f20] sm:$0xff]
      %v1760 = vld [vmem:[%s230 + $0x2f28] sm:$0xff]
      %v1761 = vld [vmem:[%s230 + $0x2f30] sm:$0xff]
      %v1762 = vld [vmem:[%s230 + $0x2f38] sm:$0xff]
      %v1763 = vld [vmem:[%s230 + $0x2f40] sm:$0xff]
      %v1764 = vld [vmem:[%s230 + $0x2f48] sm:$0xff]
      %v1765 = vld [vmem:[%s230 + $0x2f50] sm:$0xff]
      %v1766 = vld [vmem:[%s230 + $0x2f58] sm:$0xff]
      %v1767 = vld [vmem:[%s230 + $0x2f60] sm:$0xff]
      %v1768 = vld [vmem:[%s230 + $0x2f68] sm:$0xff]
      %v1769 = vld [vmem:[%s230 + $0x2f70] sm:$0xff]
      %v1770 = vld [vmem:[%s230 + $0x2f78] sm:$0xff]
      %v1771 = vld [vmem:[%s230 + $0x2f80] sm:$0xff]
      %v1772 = vld [vmem:[%s230 + $0x2f88] sm:$0xff]
      %v1773 = vld [vmem:[%s230 + $0x2f90] sm:$0xff]
      %v1774 = vld [vmem:[%s230 + $0x2f98] sm:$0xff]
      %v1775 = vld [vmem:[%s230 + $0x2fa0] sm:$0xff]
      %v1776 = vld [vmem:[%s230 + $0x2fa8] sm:$0xff]
      %v1777 = vld [vmem:[%s230 + $0x2fb0] sm:$0xff]
      %v1778 = vld [vmem:[%s230 + $0x2fb8] sm:$0xff]
      %v1779 = vld [vmem:[%s230 + $0x2fc0] sm:$0xff]
      %v1780 = vld [vmem:[%s230 + $0x2fc8] sm:$0xff]
      %v1781 = vld [vmem:[%s230 + $0x2fd0] sm:$0xff]
      %v1782 = vld [vmem:[%s230 + $0x2fd8] sm:$0xff]
      %v1783 = vld [vmem:[%s230 + $0x2fe0] sm:$0xff]
      %v1784 = vld [vmem:[%s230 + $0x2fe8] sm:$0xff]
      %v1785 = vld [vmem:[%s230 + $0x2ff0] sm:$0xff]
      %v1786 = vld [vmem:[%s230 + $0x2ff8] sm:$0xff]
      %v1787 = vld [vmem:[%s230 + $0x3000] sm:$0xff]
      %v1788 = vld [vmem:[%s230 + $0x3008] sm:$0xff]
      %v1789 = vld [vmem:[%s230 + $0x3010] sm:$0xff]
      %v1790 = vld [vmem:[%s230 + $0x3018] sm:$0xff]
      %v1791 = vld [vmem:[%s230 + $0x3020] sm:$0xff]
      %v1792 = vld [vmem:[%s230 + $0x3028] sm:$0xff]
      %v1793 = vld [vmem:[%s230 + $0x3030] sm:$0xff]
      %v1794 = vld [vmem:[%s230 + $0x3038] sm:$0xff]
      %v1795 = vld [vmem:[%s230 + $0x3040] sm:$0xff]
      %v1796 = vld [vmem:[%s230 + $0x3048] sm:$0xff]
      %v1797 = vld [vmem:[%s230 + $0x3050] sm:$0xff]
      %v1798 = vld [vmem:[%s230 + $0x3058] sm:$0xff]
      %v1799 = vld [vmem:[%s230 + $0x3060] sm:$0xff]
      %v1800 = vld [vmem:[%s230 + $0x3068] sm:$0xff]
      %v1801 = vld [vmem:[%s230 + $0x3070] sm:$0xff]
      %v1802 = vld [vmem:[%s230 + $0x3078] sm:$0xff]
      %v1803 = vld [vmem:[%s230 + $0x3080] sm:$0xff]
      %v1804 = vld [vmem:[%s230 + $0x3088] sm:$0xff]
      %v1805 = vld [vmem:[%s230 + $0x3090] sm:$0xff]
      %v1806 = vld [vmem:[%s230 + $0x3098] sm:$0xff]
      %v1807 = vld [vmem:[%s230 + $0x30a0] sm:$0xff]
      %v1808 = vld [vmem:[%s230 + $0x30a8] sm:$0xff]
      %v1809 = vld [vmem:[%s230 + $0x30b0] sm:$0xff]
      %v1810 = vld [vmem:[%s230 + $0x30b8] sm:$0xff]
      %v1811 = vld [vmem:[%s230 + $0x30c0] sm:$0xff]
      %v1812 = vld [vmem:[%s230 + $0x30c8] sm:$0xff]
      %v1813 = vld [vmem:[%s230 + $0x30d0] sm:$0xff]
      %v1814 = vld [vmem:[%s230 + $0x30d8] sm:$0xff]
      %v1815 = vld [vmem:[%s230 + $0x30e0] sm:$0xff]
      %v1816 = vld [vmem:[%s230 + $0x30e8] sm:$0xff]
      %v1817 = vld [vmem:[%s230 + $0x30f0] sm:$0xff]
      %v1818 = vld [vmem:[%s230 + $0x30f8] sm:$0xff]
      %v1819 = vld [vmem:[%s234] sm:$0xf]
      %v1821 = vperm.slane %v1819, 0
      %v1822 = vperm.slane %v1819, 1
      %v1823 = vperm.slane %v1819, 2
      %v1824 = vperm.slane %v1819, 3
      %1836 = vst [vmem:[#allocation1] ss:$4 sm:$0xff] %v244
      %s1837 = scalar_lea.vmem [#allocation1], 32
      %1838 = vst [vmem:[%s1837] ss:$4 sm:$0xff] %v245
      %v1839 = vld.sshfl [vmem:[#allocation1] sm:$0xff pattern:$0x73625140]
      %v1840 = vld.sshfl [vmem:[#allocation1 + $0x8] sm:$0xff pattern:$0x73625140]
      %v1841 = vld.sshfl [vmem:[#allocation1 + $0x10] sm:$0xff pattern:$0x73625140]
      %v1842 = vld.sshfl [vmem:[#allocation1 + $0x18] sm:$0xff pattern:$0x73625140]
      %v1843 = vld.sshfl [vmem:[#allocation1 + $0x20] sm:$0xff pattern:$0x73625140]
      %v1844 = vld.sshfl [vmem:[#allocation1 + $0x28] sm:$0xff pattern:$0x73625140]
      %v1845 = vld.sshfl [vmem:[#allocation1 + $0x30] sm:$0xff pattern:$0x73625140]
      %v1846 = vld.sshfl [vmem:[#allocation1 + $0x38] sm:$0xff pattern:$0x73625140]
      %1847 = vst [vmem:[#allocation1] ss:$4 sm:$0xff] %v246
      %1848 = vst [vmem:[%s1837] ss:$4 sm:$0xff] %v247
      %v1849 = vld.sshfl [vmem:[#allocation1] sm:$0xff pattern:$0x73625140]
      %v1850 = vld.sshfl [vmem:[#allocation1 + $0x8] sm:$0xff pattern:$0x73625140]
      %v1851 = vld.sshfl [vmem:[#allocation1 + $0x10] sm:$0xff pattern:$0x73625140]
      %v1852 = vld.sshfl [vmem:[#allocation1 + $0x18] sm:$0xff pattern:$0x73625140]
      %v1853 = vld.sshfl [vmem:[#allocation1 + $0x20] sm:$0xff pattern:$0x73625140]
      %v1854 = vld.sshfl [vmem:[#allocation1 + $0x28] sm:$0xff pattern:$0x73625140]
      %v1855 = vld.sshfl [vmem:[#allocation1 + $0x30] sm:$0xff pattern:$0x73625140]
      %v1856 = vld.sshfl [vmem:[#allocation1 + $0x38] sm:$0xff pattern:$0x73625140]
      %1857 = vst [vmem:[#allocation1] ss:$4 sm:$0xff] %v248
      %1858 = vst [vmem:[%s1837] ss:$4 sm:$0xff] %v249
      %v1859 = vld.sshfl [vmem:[#allocation1] sm:$0xff pattern:$0x73625140]
      %v1860 = vld.sshfl [vmem:[#allocation1 + $0x8] sm:$0xff pattern:$0x73625140]
      %v1861 = vld.sshfl [vmem:[#allocation1 + $0x10] sm:$0xff pattern:$0x73625140]
      %v1862 = vld.sshfl [vmem:[#allocation1 + $0x18] sm:$0xff pattern:$0x73625140]
      %v1863 = vld.sshfl [vmem:[#allocation1 + $0x20] sm:$0xff pattern:$0x73625140]
      %v1864 = vld.sshfl [vmem:[#allocation1 + $0x28] sm:$0xff pattern:$0x73625140]
      %v1865 = vld.sshfl [vmem:[#allocation1 + $0x30] sm:$0xff pattern:$0x73625140]
      %v1866 = vld.sshfl [vmem:[#allocation1 + $0x38] sm:$0xff pattern:$0x73625140]
      %1867 = vst [vmem:[#allocation1] ss:$4 sm:$0xff] %v250
      %v1868 = vld.sshfl [vmem:[#allocation1] sm:$0xff pattern:$0x73625140]
      %vm1893 = vcmask 523264
      %v1894 = vsel %vm1893, %v1868, 0
      %1896 = vmatpush.msra.mxu0 %v311
      %1897 = vmatpush.msra.mxu0 %v307
      %1898 = vmatpush.msra.mxu0 %v303
      %1899 = vmatpush.msra.mxu0 %v299
      %1900 = vmatpush.msra.mxu0 %v295
      %1901 = vmatpush.msra.mxu0 %v291
      %1902 = vmatpush.msra.mxu0 %v287
      %1903 = vmatpush.msra.mxu0 %v283
      %1904 = vmatpush.msra.mxu0 %v279
      %1905 = vmatpush.msra.mxu0 %v275
      %1906 = vmatpush.msra.mxu0 %v271
      %1907 = vmatpush.msra.mxu0 %v267
      %1908 = vmatpush.msra.mxu0 %v263
      %1909 = vmatpush.msra.mxu0 %v259
      %1910 = vmatpush.msra.mxu0 %v255
      %1911 = vmatpush.msra.mxu0 %v251
      %1912 = vmatmul.f32.gmra.mxu0 %v1839
      %v1913 = vpop.f32.mrf.mxu0
      %v1914 = vadd.f32 %v1821, %v1913
      %1915 = vdwg.mxu0
      %1916 = vmatpush.msra.mxu0 %v375
      %1917 = vmatpush.msra.mxu0 %v371
      %1918 = vmatpush.msra.mxu0 %v367
      %1919 = vmatpush.msra.mxu0 %v363
      %1920 = vmatpush.msra.mxu0 %v359
      %1921 = vmatpush.msra.mxu0 %v355
      %1922 = vmatpush.msra.mxu0 %v351
      %1923 = vmatpush.msra.mxu0 %v347
      %1924 = vmatpush.msra.mxu0 %v343
      %1925 = vmatpush.msra.mxu0 %v339
      %1926 = vmatpush.msra.mxu0 %v335
      %1927 = vmatpush.msra.mxu0 %v331
      %1928 = vmatpush.msra.mxu0 %v327
      %1929 = vmatpush.msra.mxu0 %v323
      %1930 = vmatpush.msra.mxu0 %v319
      %1931 = vmatpush.msra.mxu0 %v315
      %1932 = vmatmul.f32.gmra.mxu0 %v1840
      %v1933 = vpop.f32.mrf.mxu0
      %v1934 = vadd.f32 %v1914, %v1933
      %1935 = vdwg.mxu0
      %1936 = vmatpush.msra.mxu0 %v439
      %1937 = vmatpush.msra.mxu0 %v435
      %1938 = vmatpush.msra.mxu0 %v431
      %1939 = vmatpush.msra.mxu0 %v427
      %1940 = vmatpush.msra.mxu0 %v423
      %1941 = vmatpush.msra.mxu0 %v419
      %1942 = vmatpush.msra.mxu0 %v415
      %1943 = vmatpush.msra.mxu0 %v411
      %1944 = vmatpush.msra.mxu0 %v407
      %1945 = vmatpush.msra.mxu0 %v403
      %1946 = vmatpush.msra.mxu0 %v399
      %1947 = vmatpush.msra.mxu0 %v395
      %1948 = vmatpush.msra.mxu0 %v391
      %1949 = vmatpush.msra.mxu0 %v387
      %1950 = vmatpush.msra.mxu0 %v383
      %1951 = vmatpush.msra.mxu0 %v379
      %1952 = vmatmul.f32.gmra.mxu0 %v1841
      %v1953 = vpop.f32.mrf.mxu0
      %v1954 = vadd.f32 %v1934, %v1953
      %1955 = vdwg.mxu0
      %1956 = vmatpush.msra.mxu0 %v503
      %1957 = vmatpush.msra.mxu0 %v499
      %1958 = vmatpush.msra.mxu0 %v495
      %1959 = vmatpush.msra.mxu0 %v491
      %1960 = vmatpush.msra.mxu0 %v487
      %1961 = vmatpush.msra.mxu0 %v483
      %1962 = vmatpush.msra.mxu0 %v479
      %1963 = vmatpush.msra.mxu0 %v475
      %1964 = vmatpush.msra.mxu0 %v471
      %1965 = vmatpush.msra.mxu0 %v467
      %1966 = vmatpush.msra.mxu0 %v463
      %1967 = vmatpush.msra.mxu0 %v459
      %1968 = vmatpush.msra.mxu0 %v455
      %1969 = vmatpush.msra.mxu0 %v451
      %1970 = vmatpush.msra.mxu0 %v447
      %1971 = vmatpush.msra.mxu0 %v443
      %1972 = vmatmul.f32.gmra.mxu0 %v1842
      %v1973 = vpop.f32.mrf.mxu0
      %v1974 = vadd.f32 %v1954, %v1973
      %1975 = vdwg.mxu0
      %1976 = vmatpush.msra.mxu0 %v567
      %1977 = vmatpush.msra.mxu0 %v563
      %1978 = vmatpush.msra.mxu0 %v559
      %1979 = vmatpush.msra.mxu0 %v555
      %1980 = vmatpush.msra.mxu0 %v551
      %1981 = vmatpush.msra.mxu0 %v547
      %1982 = vmatpush.msra.mxu0 %v543
      %1983 = vmatpush.msra.mxu0 %v539
      %1984 = vmatpush.msra.mxu0 %v535
      %1985 = vmatpush.msra.mxu0 %v531
      %1986 = vmatpush.msra.mxu0 %v527
      %1987 = vmatpush.msra.mxu0 %v523
      %1988 = vmatpush.msra.mxu0 %v519
      %1989 = vmatpush.msra.mxu0 %v515
      %1990 = vmatpush.msra.mxu0 %v511
      %1991 = vmatpush.msra.mxu0 %v507
      %1992 = vmatmul.f32.gmra.mxu0 %v1843
      %v1993 = vpop.f32.mrf.mxu0
      %v1994 = vadd.f32 %v1974, %v1993
      %1995 = vdwg.mxu0
      %1996 = vmatpush.msra.mxu0 %v631
      %1997 = vmatpush.msra.mxu0 %v627
      %1998 = vmatpush.msra.mxu0 %v623
      %1999 = vmatpush.msra.mxu0 %v619
      %2000 = vmatpush.msra.mxu0 %v615
      %2001 = vmatpush.msra.mxu0 %v611
      %2002 = vmatpush.msra.mxu0 %v607
      %2003 = vmatpush.msra.mxu0 %v603
      %2004 = vmatpush.msra.mxu0 %v599
      %2005 = vmatpush.msra.mxu0 %v595
      %2006 = vmatpush.msra.mxu0 %v591
      %2007 = vmatpush.msra.mxu0 %v587
      %2008 = vmatpush.msra.mxu0 %v583
      %2009 = vmatpush.msra.mxu0 %v579
      %2010 = vmatpush.msra.mxu0 %v575
      %2011 = vmatpush.msra.mxu0 %v571
      %2012 = vmatmul.f32.gmra.mxu0 %v1844
      %v2013 = vpop.f32.mrf.mxu0
      %v2014 = vadd.f32 %v1994, %v2013
      %2015 = vdwg.mxu0
      %2016 = vmatpush.msra.mxu0 %v695
      %2017 = vmatpush.msra.mxu0 %v691
      %2018 = vmatpush.msra.mxu0 %v687
      %2019 = vmatpush.msra.mxu0 %v683
      %2020 = vmatpush.msra.mxu0 %v679
      %2021 = vmatpush.msra.mxu0 %v675
      %2022 = vmatpush.msra.mxu0 %v671
      %2023 = vmatpush.msra.mxu0 %v667
      %2024 = vmatpush.msra.mxu0 %v663
      %2025 = vmatpush.msra.mxu0 %v659
      %2026 = vmatpush.msra.mxu0 %v655
      %2027 = vmatpush.msra.mxu0 %v651
      %2028 = vmatpush.msra.mxu0 %v647
      %2029 = vmatpush.msra.mxu0 %v643
      %2030 = vmatpush.msra.mxu0 %v639
      %2031 = vmatpush.msra.mxu0 %v635
      %2032 = vmatmul.f32.gmra.mxu0 %v1845
      %v2033 = vpop.f32.mrf.mxu0
      %v2034 = vadd.f32 %v2014, %v2033
      %2035 = vdwg.mxu0
      %2036 = vmatpush.msra.mxu0 %v759
      %2037 = vmatpush.msra.mxu0 %v755
      %2038 = vmatpush.msra.mxu0 %v751
      %2039 = vmatpush.msra.mxu0 %v747
      %2040 = vmatpush.msra.mxu0 %v743
      %2041 = vmatpush.msra.mxu0 %v739
      %2042 = vmatpush.msra.mxu0 %v735
      %2043 = vmatpush.msra.mxu0 %v731
      %2044 = vmatpush.msra.mxu0 %v727
      %2045 = vmatpush.msra.mxu0 %v723
      %2046 = vmatpush.msra.mxu0 %v719
      %2047 = vmatpush.msra.mxu0 %v715
      %2048 = vmatpush.msra.mxu0 %v711
      %2049 = vmatpush.msra.mxu0 %v707
      %2050 = vmatpush.msra.mxu0 %v703
      %2051 = vmatpush.msra.mxu0 %v699
      %2052 = vmatmul.f32.gmra.mxu0 %v1846
      %v2053 = vpop.f32.mrf.mxu0
      %v2054 = vadd.f32 %v2034, %v2053
      %2055 = vdwg.mxu0
      %2056 = vmatpush.msra.mxu0 %v823
      %2057 = vmatpush.msra.mxu0 %v819
      %2058 = vmatpush.msra.mxu0 %v815
      %2059 = vmatpush.msra.mxu0 %v811
      %2060 = vmatpush.msra.mxu0 %v807
      %2061 = vmatpush.msra.mxu0 %v803
      %2062 = vmatpush.msra.mxu0 %v799
      %2063 = vmatpush.msra.mxu0 %v795
      %2064 = vmatpush.msra.mxu0 %v791
      %2065 = vmatpush.msra.mxu0 %v787
      %2066 = vmatpush.msra.mxu0 %v783
      %2067 = vmatpush.msra.mxu0 %v779
      %2068 = vmatpush.msra.mxu0 %v775
      %2069 = vmatpush.msra.mxu0 %v771
      %2070 = vmatpush.msra.mxu0 %v767
      %2071 = vmatpush.msra.mxu0 %v763
      %2072 = vmatmul.f32.gmra.mxu0 %v1849
      %v2073 = vpop.f32.mrf.mxu0
      %v2074 = vadd.f32 %v2054, %v2073
      %2075 = vdwg.mxu0
      %2076 = vmatpush.msra.mxu0 %v887
      %2077 = vmatpush.msra.mxu0 %v883
      %2078 = vmatpush.msra.mxu0 %v879
      %2079 = vmatpush.msra.mxu0 %v875
      %2080 = vmatpush.msra.mxu0 %v871
      %2081 = vmatpush.msra.mxu0 %v867
      %2082 = vmatpush.msra.mxu0 %v863
      %2083 = vmatpush.msra.mxu0 %v859
      %2084 = vmatpush.msra.mxu0 %v855
      %2085 = vmatpush.msra.mxu0 %v851
      %2086 = vmatpush.msra.mxu0 %v847
      %2087 = vmatpush.msra.mxu0 %v843
      %2088 = vmatpush.msra.mxu0 %v839
      %2089 = vmatpush.msra.mxu0 %v835
      %2090 = vmatpush.msra.mxu0 %v831
      %2091 = vmatpush.msra.mxu0 %v827
      %2092 = vmatmul.f32.gmra.mxu0 %v1850
      %v2093 = vpop.f32.mrf.mxu0
      %v2094 = vadd.f32 %v2074, %v2093
      %2095 = vdwg.mxu0
      %2096 = vmatpush.msra.mxu0 %v951
      %2097 = vmatpush.msra.mxu0 %v947
      %2098 = vmatpush.msra.mxu0 %v943
      %2099 = vmatpush.msra.mxu0 %v939
      %2100 = vmatpush.msra.mxu0 %v935
      %2101 = vmatpush.msra.mxu0 %v931
      %2102 = vmatpush.msra.mxu0 %v927
      %2103 = vmatpush.msra.mxu0 %v923
      %2104 = vmatpush.msra.mxu0 %v919
      %2105 = vmatpush.msra.mxu0 %v915
      %2106 = vmatpush.msra.mxu0 %v911
      %2107 = vmatpush.msra.mxu0 %v907
      %2108 = vmatpush.msra.mxu0 %v903
      %2109 = vmatpush.msra.mxu0 %v899
      %2110 = vmatpush.msra.mxu0 %v895
      %2111 = vmatpush.msra.mxu0 %v891
      %2112 = vmatmul.f32.gmra.mxu0 %v1851
      %v2113 = vpop.f32.mrf.mxu0
      %v2114 = vadd.f32 %v2094, %v2113
      %2115 = vdwg.mxu0
      %2116 = vmatpush.msra.mxu0 %v1015
      %2117 = vmatpush.msra.mxu0 %v1011
      %2118 = vmatpush.msra.mxu0 %v1007
      %2119 = vmatpush.msra.mxu0 %v1003
      %2120 = vmatpush.msra.mxu0 %v999
      %2121 = vmatpush.msra.mxu0 %v995
      %2122 = vmatpush.msra.mxu0 %v991
      %2123 = vmatpush.msra.mxu0 %v987
      %2124 = vmatpush.msra.mxu0 %v983
      %2125 = vmatpush.msra.mxu0 %v979
      %2126 = vmatpush.msra.mxu0 %v975
      %2127 = vmatpush.msra.mxu0 %v971
      %2128 = vmatpush.msra.mxu0 %v967
      %2129 = vmatpush.msra.mxu0 %v963
      %2130 = vmatpush.msra.mxu0 %v959
      %2131 = vmatpush.msra.mxu0 %v955
      %2132 = vmatmul.f32.gmra.mxu0 %v1852
      %v2133 = vpop.f32.mrf.mxu0
      %v2134 = vadd.f32 %v2114, %v2133
      %2135 = vdwg.mxu0
      %2136 = vmatpush.msra.mxu0 %v1079
      %2137 = vmatpush.msra.mxu0 %v1075
      %2138 = vmatpush.msra.mxu0 %v1071
      %2139 = vmatpush.msra.mxu0 %v1067
      %2140 = vmatpush.msra.mxu0 %v1063
      %2141 = vmatpush.msra.mxu0 %v1059
      %2142 = vmatpush.msra.mxu0 %v1055
      %2143 = vmatpush.msra.mxu0 %v1051
      %2144 = vmatpush.msra.mxu0 %v1047
      %2145 = vmatpush.msra.mxu0 %v1043
      %2146 = vmatpush.msra.mxu0 %v1039
      %2147 = vmatpush.msra.mxu0 %v1035
      %2148 = vmatpush.msra.mxu0 %v1031
      %2149 = vmatpush.msra.mxu0 %v1027
      %2150 = vmatpush.msra.mxu0 %v1023
      %2151 = vmatpush.msra.mxu0 %v1019
      %2152 = vmatmul.f32.gmra.mxu0 %v1853
      %v2153 = vpop.f32.mrf.mxu0
      %v2154 = vadd.f32 %v2134, %v2153
      %2155 = vdwg.mxu0
      %2156 = vmatpush.msra.mxu0 %v1143
      %2157 = vmatpush.msra.mxu0 %v1139
      %2158 = vmatpush.msra.mxu0 %v1135
      %2159 = vmatpush.msra.mxu0 %v1131
      %2160 = vmatpush.msra.mxu0 %v1127
      %2161 = vmatpush.msra.mxu0 %v1123
      %2162 = vmatpush.msra.mxu0 %v1119
      %2163 = vmatpush.msra.mxu0 %v1115
      %2164 = vmatpush.msra.mxu0 %v1111
      %2165 = vmatpush.msra.mxu0 %v1107
      %2166 = vmatpush.msra.mxu0 %v1103
      %2167 = vmatpush.msra.mxu0 %v1099
      %2168 = vmatpush.msra.mxu0 %v1095
      %2169 = vmatpush.msra.mxu0 %v1091
      %2170 = vmatpush.msra.mxu0 %v1087
      %2171 = vmatpush.msra.mxu0 %v1083
      %2172 = vmatmul.f32.gmra.mxu0 %v1854
      %v2173 = vpop.f32.mrf.mxu0
      %v2174 = vadd.f32 %v2154, %v2173
      %2175 = vdwg.mxu0
      %2176 = vmatpush.msra.mxu0 %v1207
      %2177 = vmatpush.msra.mxu0 %v1203
      %2178 = vmatpush.msra.mxu0 %v1199
      %2179 = vmatpush.msra.mxu0 %v1195
      %2180 = vmatpush.msra.mxu0 %v1191
      %2181 = vmatpush.msra.mxu0 %v1187
      %2182 = vmatpush.msra.mxu0 %v1183
      %2183 = vmatpush.msra.mxu0 %v1179
      %2184 = vmatpush.msra.mxu0 %v1175
      %2185 = vmatpush.msra.mxu0 %v1171
      %2186 = vmatpush.msra.mxu0 %v1167
      %2187 = vmatpush.msra.mxu0 %v1163
      %2188 = vmatpush.msra.mxu0 %v1159
      %2189 = vmatpush.msra.mxu0 %v1155
      %2190 = vmatpush.msra.mxu0 %v1151
      %2191 = vmatpush.msra.mxu0 %v1147
      %2192 = vmatmul.f32.gmra.mxu0 %v1855
      %v2193 = vpop.f32.mrf.mxu0
      %v2194 = vadd.f32 %v2174, %v2193
      %2195 = vdwg.mxu0
      %2196 = vmatpush.msra.mxu0 %v1271
      %2197 = vmatpush.msra.mxu0 %v1267
      %2198 = vmatpush.msra.mxu0 %v1263
      %2199 = vmatpush.msra.mxu0 %v1259
      %2200 = vmatpush.msra.mxu0 %v1255
      %2201 = vmatpush.msra.mxu0 %v1251
      %2202 = vmatpush.msra.mxu0 %v1247
      %2203 = vmatpush.msra.mxu0 %v1243
      %2204 = vmatpush.msra.mxu0 %v1239
      %2205 = vmatpush.msra.mxu0 %v1235
      %2206 = vmatpush.msra.mxu0 %v1231
      %2207 = vmatpush.msra.mxu0 %v1227
      %2208 = vmatpush.msra.mxu0 %v1223
      %2209 = vmatpush.msra.mxu0 %v1219
      %2210 = vmatpush.msra.mxu0 %v1215
      %2211 = vmatpush.msra.mxu0 %v1211
      %2212 = vmatmul.f32.gmra.mxu0 %v1856
      %v2213 = vpop.f32.mrf.mxu0
      %v2214 = vadd.f32 %v2194, %v2213
      %2215 = vdwg.mxu0
      %2216 = vmatpush.msra.mxu0 %v1335
      %2217 = vmatpush.msra.mxu0 %v1331
      %2218 = vmatpush.msra.mxu0 %v1327
      %2219 = vmatpush.msra.mxu0 %v1323
      %2220 = vmatpush.msra.mxu0 %v1319
      %2221 = vmatpush.msra.mxu0 %v1315
      %2222 = vmatpush.msra.mxu0 %v1311
      %2223 = vmatpush.msra.mxu0 %v1307
      %2224 = vmatpush.msra.mxu0 %v1303
      %2225 = vmatpush.msra.mxu0 %v1299
      %2226 = vmatpush.msra.mxu0 %v1295
      %2227 = vmatpush.msra.mxu0 %v1291
      %2228 = vmatpush.msra.mxu0 %v1287
      %2229 = vmatpush.msra.mxu0 %v1283
      %2230 = vmatpush.msra.mxu0 %v1279
      %2231 = vmatpush.msra.mxu0 %v1275
      %2232 = vmatmul.f32.gmra.mxu0 %v1859
      %v2233 = vpop.f32.mrf.mxu0
      %v2234 = vadd.f32 %v2214, %v2233
      %2235 = vdwg.mxu0
      %2236 = vmatpush.msra.mxu0 %v1399
      %2237 = vmatpush.msra.mxu0 %v1395
      %2238 = vmatpush.msra.mxu0 %v1391
      %2239 = vmatpush.msra.mxu0 %v1387
      %2240 = vmatpush.msra.mxu0 %v1383
      %2241 = vmatpush.msra.mxu0 %v1379
      %2242 = vmatpush.msra.mxu0 %v1375
      %2243 = vmatpush.msra.mxu0 %v1371
      %2244 = vmatpush.msra.mxu0 %v1367
      %2245 = vmatpush.msra.mxu0 %v1363
      %2246 = vmatpush.msra.mxu0 %v1359
      %2247 = vmatpush.msra.mxu0 %v1355
      %2248 = vmatpush.msra.mxu0 %v1351
      %2249 = vmatpush.msra.mxu0 %v1347
      %2250 = vmatpush.msra.mxu0 %v1343
      %2251 = vmatpush.msra.mxu0 %v1339
      %2252 = vmatmul.f32.gmra.mxu0 %v1860
      %v2253 = vpop.f32.mrf.mxu0
      %v2254 = vadd.f32 %v2234, %v2253
      %2255 = vdwg.mxu0
      %2256 = vmatpush.msra.mxu0 %v1463
      %2257 = vmatpush.msra.mxu0 %v1459
      %2258 = vmatpush.msra.mxu0 %v1455
      %2259 = vmatpush.msra.mxu0 %v1451
      %2260 = vmatpush.msra.mxu0 %v1447
      %2261 = vmatpush.msra.mxu0 %v1443
      %2262 = vmatpush.msra.mxu0 %v1439
      %2263 = vmatpush.msra.mxu0 %v1435
      %2264 = vmatpush.msra.mxu0 %v1431
      %2265 = vmatpush.msra.mxu0 %v1427
      %2266 = vmatpush.msra.mxu0 %v1423
      %2267 = vmatpush.msra.mxu0 %v1419
      %2268 = vmatpush.msra.mxu0 %v1415
      %2269 = vmatpush.msra.mxu0 %v1411
      %2270 = vmatpush.msra.mxu0 %v1407
      %2271 = vmatpush.msra.mxu0 %v1403
      %2272 = vmatmul.f32.gmra.mxu0 %v1861
      %v2273 = vpop.f32.mrf.mxu0
      %v2274 = vadd.f32 %v2254, %v2273
      %2275 = vdwg.mxu0
      %2276 = vmatpush.msra.mxu0 %v1527
      %2277 = vmatpush.msra.mxu0 %v1523
      %2278 = vmatpush.msra.mxu0 %v1519
      %2279 = vmatpush.msra.mxu0 %v1515
      %2280 = vmatpush.msra.mxu0 %v1511
      %2281 = vmatpush.msra.mxu0 %v1507
      %2282 = vmatpush.msra.mxu0 %v1503
      %2283 = vmatpush.msra.mxu0 %v1499
      %2284 = vmatpush.msra.mxu0 %v1495
      %2285 = vmatpush.msra.mxu0 %v1491
      %2286 = vmatpush.msra.mxu0 %v1487
      %2287 = vmatpush.msra.mxu0 %v1483
      %2288 = vmatpush.msra.mxu0 %v1479
      %2289 = vmatpush.msra.mxu0 %v1475
      %2290 = vmatpush.msra.mxu0 %v1471
      %2291 = vmatpush.msra.mxu0 %v1467
      %2292 = vmatmul.f32.gmra.mxu0 %v1862
      %v2293 = vpop.f32.mrf.mxu0
      %v2294 = vadd.f32 %v2274, %v2293
      %2295 = vdwg.mxu0
      %2296 = vmatpush.msra.mxu0 %v1591
      %2297 = vmatpush.msra.mxu0 %v1587
      %2298 = vmatpush.msra.mxu0 %v1583
      %2299 = vmatpush.msra.mxu0 %v1579
      %2300 = vmatpush.msra.mxu0 %v1575
      %2301 = vmatpush.msra.mxu0 %v1571
      %2302 = vmatpush.msra.mxu0 %v1567
      %2303 = vmatpush.msra.mxu0 %v1563
      %2304 = vmatpush.msra.mxu0 %v1559
      %2305 = vmatpush.msra.mxu0 %v1555
      %2306 = vmatpush.msra.mxu0 %v1551
      %2307 = vmatpush.msra.mxu0 %v1547
      %2308 = vmatpush.msra.mxu0 %v1543
      %2309 = vmatpush.msra.mxu0 %v1539
      %2310 = vmatpush.msra.mxu0 %v1535
      %2311 = vmatpush.msra.mxu0 %v1531
      %2312 = vmatmul.f32.gmra.mxu0 %v1863
      %v2313 = vpop.f32.mrf.mxu0
      %v2314 = vadd.f32 %v2294, %v2313
      %2315 = vdwg.mxu0
      %2316 = vmatpush.msra.mxu0 %v1655
      %2317 = vmatpush.msra.mxu0 %v1651
      %2318 = vmatpush.msra.mxu0 %v1647
      %2319 = vmatpush.msra.mxu0 %v1643
      %2320 = vmatpush.msra.mxu0 %v1639
      %2321 = vmatpush.msra.mxu0 %v1635
      %2322 = vmatpush.msra.mxu0 %v1631
      %2323 = vmatpush.msra.mxu0 %v1627
      %2324 = vmatpush.msra.mxu0 %v1623
      %2325 = vmatpush.msra.mxu0 %v1619
      %2326 = vmatpush.msra.mxu0 %v1615
      %2327 = vmatpush.msra.mxu0 %v1611
      %2328 = vmatpush.msra.mxu0 %v1607
      %2329 = vmatpush.msra.mxu0 %v1603
      %2330 = vmatpush.msra.mxu0 %v1599
      %2331 = vmatpush.msra.mxu0 %v1595
      %2332 = vmatmul.f32.gmra.mxu0 %v1864
      %v2333 = vpop.f32.mrf.mxu0
      %v2334 = vadd.f32 %v2314, %v2333
      %2335 = vdwg.mxu0
      %2336 = vmatpush.msra.mxu0 %v1719
      %2337 = vmatpush.msra.mxu0 %v1715
      %2338 = vmatpush.msra.mxu0 %v1711
      %2339 = vmatpush.msra.mxu0 %v1707
      %2340 = vmatpush.msra.mxu0 %v1703
      %2341 = vmatpush.msra.mxu0 %v1699
      %2342 = vmatpush.msra.mxu0 %v1695
      %2343 = vmatpush.msra.mxu0 %v1691
      %2344 = vmatpush.msra.mxu0 %v1687
      %2345 = vmatpush.msra.mxu0 %v1683
      %2346 = vmatpush.msra.mxu0 %v1679
      %2347 = vmatpush.msra.mxu0 %v1675
      %2348 = vmatpush.msra.mxu0 %v1671
      %2349 = vmatpush.msra.mxu0 %v1667
      %2350 = vmatpush.msra.mxu0 %v1663
      %2351 = vmatpush.msra.mxu0 %v1659
      %2352 = vmatmul.f32.gmra.mxu0 %v1865
      %v2353 = vpop.f32.mrf.mxu0
      %v2354 = vadd.f32 %v2334, %v2353
      %2355 = vdwg.mxu0
      %2356 = vmatpush.msra.mxu0 %v1783
      %2357 = vmatpush.msra.mxu0 %v1779
      %2358 = vmatpush.msra.mxu0 %v1775
      %2359 = vmatpush.msra.mxu0 %v1771
      %2360 = vmatpush.msra.mxu0 %v1767
      %2361 = vmatpush.msra.mxu0 %v1763
      %2362 = vmatpush.msra.mxu0 %v1759
      %2363 = vmatpush.msra.mxu0 %v1755
      %2364 = vmatpush.msra.mxu0 %v1751
      %2365 = vmatpush.msra.mxu0 %v1747
      %2366 = vmatpush.msra.mxu0 %v1743
      %2367 = vmatpush.msra.mxu0 %v1739
      %2368 = vmatpush.msra.mxu0 %v1735
      %2369 = vmatpush.msra.mxu0 %v1731
      %2370 = vmatpush.msra.mxu0 %v1727
      %2371 = vmatpush.msra.mxu0 %v1723
      %2372 = vmatmul.f32.gmra.mxu0 %v1866
      %v2373 = vpop.f32.mrf.mxu0
      %v2374 = vadd.f32 %v2354, %v2373
      %2375 = vdwg.mxu0
      %2376 = vmatpush.msra.mxu0 0.0
      %2377 = vmatpush.msra.mxu0 0.0
      %2378 = vmatpush.msra.mxu0 0.0
      %2379 = vmatpush.msra.mxu0 0.0
      %2380 = vmatpush.msra.mxu0 0.0
      %2381 = vmatpush.msra.mxu0 0.0
      %2382 = vmatpush.msra.mxu0 0.0
      %2383 = vmatpush.msra.mxu0 0.0
      %2384 = vmatpush.msra.mxu0 %v1815
      %2385 = vmatpush.msra.mxu0 %v1811
      %2386 = vmatpush.msra.mxu0 %v1807
      %2387 = vmatpush.msra.mxu0 %v1803
      %2388 = vmatpush.msra.mxu0 %v1799
      %2389 = vmatpush.msra.mxu0 %v1795
      %2390 = vmatpush.msra.mxu0 %v1791
      %2391 = vmatpush.msra.mxu0 %v1787
      %2392 = vmatmul.f32.gmra.mxu0 %v1894
      %v2393 = vpop.f32.mrf.mxu0
      %v2394 = vadd.f32 %v2374, %v2393
      %2395 = vdwg.mxu0
      %2396 = vmatpush.msra.mxu0 %v312
      %2397 = vmatpush.msra.mxu0 %v308
      %2398 = vmatpush.msra.mxu0 %v304
      %2399 = vmatpush.msra.mxu0 %v300
      %2400 = vmatpush.msra.mxu0 %v296
      %2401 = vmatpush.msra.mxu0 %v292
      %2402 = vmatpush.msra.mxu0 %v288
      %2403 = vmatpush.msra.mxu0 %v284
      %2404 = vmatpush.msra.mxu0 %v280
      %2405 = vmatpush.msra.mxu0 %v276
      %2406 = vmatpush.msra.mxu0 %v272
      %2407 = vmatpush.msra.mxu0 %v268
      %2408 = vmatpush.msra.mxu0 %v264
      %2409 = vmatpush.msra.mxu0 %v260
      %2410 = vmatpush.msra.mxu0 %v256
      %2411 = vmatpush.msra.mxu0 %v252
      %2412 = vmatmul.f32.gmra.mxu0 %v1839
      %v2413 = vpop.f32.mrf.mxu0
      %v2414 = vadd.f32 %v1822, %v2413
      %2415 = vdwg.mxu0
      %2416 = vmatpush.msra.mxu0 %v376
      %2417 = vmatpush.msra.mxu0 %v372
      %2418 = vmatpush.msra.mxu0 %v368
      %2419 = vmatpush.msra.mxu0 %v364
      %2420 = vmatpush.msra.mxu0 %v360
      %2421 = vmatpush.msra.mxu0 %v356
      %2422 = vmatpush.msra.mxu0 %v352
      %2423 = vmatpush.msra.mxu0 %v348
      %2424 = vmatpush.msra.mxu0 %v344
      %2425 = vmatpush.msra.mxu0 %v340
      %2426 = vmatpush.msra.mxu0 %v336
      %2427 = vmatpush.msra.mxu0 %v332
      %2428 = vmatpush.msra.mxu0 %v328
      %2429 = vmatpush.msra.mxu0 %v324
      %2430 = vmatpush.msra.mxu0 %v320
      %2431 = vmatpush.msra.mxu0 %v316
      %2432 = vmatmul.f32.gmra.mxu0 %v1840
      %v2433 = vpop.f32.mrf.mxu0
      %v2434 = vadd.f32 %v2414, %v2433
      %2435 = vdwg.mxu0
      %2436 = vmatpush.msra.mxu0 %v440
      %2437 = vmatpush.msra.mxu0 %v436
      %2438 = vmatpush.msra.mxu0 %v432
      %2439 = vmatpush.msra.mxu0 %v428
      %2440 = vmatpush.msra.mxu0 %v424
      %2441 = vmatpush.msra.mxu0 %v420
      %2442 = vmatpush.msra.mxu0 %v416
      %2443 = vmatpush.msra.mxu0 %v412
      %2444 = vmatpush.msra.mxu0 %v408
      %2445 = vmatpush.msra.mxu0 %v404
      %2446 = vmatpush.msra.mxu0 %v400
      %2447 = vmatpush.msra.mxu0 %v396
      %2448 = vmatpush.msra.mxu0 %v392
      %2449 = vmatpush.msra.mxu0 %v388
      %2450 = vmatpush.msra.mxu0 %v384
      %2451 = vmatpush.msra.mxu0 %v380
      %2452 = vmatmul.f32.gmra.mxu0 %v1841
      %v2453 = vpop.f32.mrf.mxu0
      %v2454 = vadd.f32 %v2434, %v2453
      %2455 = vdwg.mxu0
      %2456 = vmatpush.msra.mxu0 %v504
      %2457 = vmatpush.msra.mxu0 %v500
      %2458 = vmatpush.msra.mxu0 %v496
      %2459 = vmatpush.msra.mxu0 %v492
      %2460 = vmatpush.msra.mxu0 %v488
      %2461 = vmatpush.msra.mxu0 %v484
      %2462 = vmatpush.msra.mxu0 %v480
      %2463 = vmatpush.msra.mxu0 %v476
      %2464 = vmatpush.msra.mxu0 %v472
      %2465 = vmatpush.msra.mxu0 %v468
      %2466 = vmatpush.msra.mxu0 %v464
      %2467 = vmatpush.msra.mxu0 %v460
      %2468 = vmatpush.msra.mxu0 %v456
      %2469 = vmatpush.msra.mxu0 %v452
      %2470 = vmatpush.msra.mxu0 %v448
      %2471 = vmatpush.msra.mxu0 %v444
      %2472 = vmatmul.f32.gmra.mxu0 %v1842
      %v2473 = vpop.f32.mrf.mxu0
      %v2474 = vadd.f32 %v2454, %v2473
      %2475 = vdwg.mxu0
      %2476 = vmatpush.msra.mxu0 %v568
      %2477 = vmatpush.msra.mxu0 %v564
      %2478 = vmatpush.msra.mxu0 %v560
      %2479 = vmatpush.msra.mxu0 %v556
      %2480 = vmatpush.msra.mxu0 %v552
      %2481 = vmatpush.msra.mxu0 %v548
      %2482 = vmatpush.msra.mxu0 %v544
      %2483 = vmatpush.msra.mxu0 %v540
      %2484 = vmatpush.msra.mxu0 %v536
      %2485 = vmatpush.msra.mxu0 %v532
      %2486 = vmatpush.msra.mxu0 %v528
      %2487 = vmatpush.msra.mxu0 %v524
      %2488 = vmatpush.msra.mxu0 %v520
      %2489 = vmatpush.msra.mxu0 %v516
      %2490 = vmatpush.msra.mxu0 %v512
      %2491 = vmatpush.msra.mxu0 %v508
      %2492 = vmatmul.f32.gmra.mxu0 %v1843
      %v2493 = vpop.f32.mrf.mxu0
      %v2494 = vadd.f32 %v2474, %v2493
      %2495 = vdwg.mxu0
      %2496 = vmatpush.msra.mxu0 %v632
      %2497 = vmatpush.msra.mxu0 %v628
      %2498 = vmatpush.msra.mxu0 %v624
      %2499 = vmatpush.msra.mxu0 %v620
      %2500 = vmatpush.msra.mxu0 %v616
      %2501 = vmatpush.msra.mxu0 %v612
      %2502 = vmatpush.msra.mxu0 %v608
      %2503 = vmatpush.msra.mxu0 %v604
      %2504 = vmatpush.msra.mxu0 %v600
      %2505 = vmatpush.msra.mxu0 %v596
      %2506 = vmatpush.msra.mxu0 %v592
      %2507 = vmatpush.msra.mxu0 %v588
      %2508 = vmatpush.msra.mxu0 %v584
      %2509 = vmatpush.msra.mxu0 %v580
      %2510 = vmatpush.msra.mxu0 %v576
      %2511 = vmatpush.msra.mxu0 %v572
      %2512 = vmatmul.f32.gmra.mxu0 %v1844
      %v2513 = vpop.f32.mrf.mxu0
      %v2514 = vadd.f32 %v2494, %v2513
      %2515 = vdwg.mxu0
      %2516 = vmatpush.msra.mxu0 %v696
      %2517 = vmatpush.msra.mxu0 %v692
      %2518 = vmatpush.msra.mxu0 %v688
      %2519 = vmatpush.msra.mxu0 %v684
      %2520 = vmatpush.msra.mxu0 %v680
      %2521 = vmatpush.msra.mxu0 %v676
      %2522 = vmatpush.msra.mxu0 %v672
      %2523 = vmatpush.msra.mxu0 %v668
      %2524 = vmatpush.msra.mxu0 %v664
      %2525 = vmatpush.msra.mxu0 %v660
      %2526 = vmatpush.msra.mxu0 %v656
      %2527 = vmatpush.msra.mxu0 %v652
      %2528 = vmatpush.msra.mxu0 %v648
      %2529 = vmatpush.msra.mxu0 %v644
      %2530 = vmatpush.msra.mxu0 %v640
      %2531 = vmatpush.msra.mxu0 %v636
      %2532 = vmatmul.f32.gmra.mxu0 %v1845
      %v2533 = vpop.f32.mrf.mxu0
      %v2534 = vadd.f32 %v2514, %v2533
      %2535 = vdwg.mxu0
      %2536 = vmatpush.msra.mxu0 %v760
      %2537 = vmatpush.msra.mxu0 %v756
      %2538 = vmatpush.msra.mxu0 %v752
      %2539 = vmatpush.msra.mxu0 %v748
      %2540 = vmatpush.msra.mxu0 %v744
      %2541 = vmatpush.msra.mxu0 %v740
      %2542 = vmatpush.msra.mxu0 %v736
      %2543 = vmatpush.msra.mxu0 %v732
      %2544 = vmatpush.msra.mxu0 %v728
      %2545 = vmatpush.msra.mxu0 %v724
      %2546 = vmatpush.msra.mxu0 %v720
      %2547 = vmatpush.msra.mxu0 %v716
      %2548 = vmatpush.msra.mxu0 %v712
      %2549 = vmatpush.msra.mxu0 %v708
      %2550 = vmatpush.msra.mxu0 %v704
      %2551 = vmatpush.msra.mxu0 %v700
      %2552 = vmatmul.f32.gmra.mxu0 %v1846
      %v2553 = vpop.f32.mrf.mxu0
      %v2554 = vadd.f32 %v2534, %v2553
      %2555 = vdwg.mxu0
      %2556 = vmatpush.msra.mxu0 %v824
      %2557 = vmatpush.msra.mxu0 %v820
      %2558 = vmatpush.msra.mxu0 %v816
      %2559 = vmatpush.msra.mxu0 %v812
      %2560 = vmatpush.msra.mxu0 %v808
      %2561 = vmatpush.msra.mxu0 %v804
      %2562 = vmatpush.msra.mxu0 %v800
      %2563 = vmatpush.msra.mxu0 %v796
      %2564 = vmatpush.msra.mxu0 %v792
      %2565 = vmatpush.msra.mxu0 %v788
      %2566 = vmatpush.msra.mxu0 %v784
      %2567 = vmatpush.msra.mxu0 %v780
      %2568 = vmatpush.msra.mxu0 %v776
      %2569 = vmatpush.msra.mxu0 %v772
      %2570 = vmatpush.msra.mxu0 %v768
      %2571 = vmatpush.msra.mxu0 %v764
      %2572 = vmatmul.f32.gmra.mxu0 %v1849
      %v2573 = vpop.f32.mrf.mxu0
      %v2574 = vadd.f32 %v2554, %v2573
      %2575 = vdwg.mxu0
      %2576 = vmatpush.msra.mxu0 %v888
      %2577 = vmatpush.msra.mxu0 %v884
      %2578 = vmatpush.msra.mxu0 %v880
      %2579 = vmatpush.msra.mxu0 %v876
      %2580 = vmatpush.msra.mxu0 %v872
      %2581 = vmatpush.msra.mxu0 %v868
      %2582 = vmatpush.msra.mxu0 %v864
      %2583 = vmatpush.msra.mxu0 %v860
      %2584 = vmatpush.msra.mxu0 %v856
      %2585 = vmatpush.msra.mxu0 %v852
      %2586 = vmatpush.msra.mxu0 %v848
      %2587 = vmatpush.msra.mxu0 %v844
      %2588 = vmatpush.msra.mxu0 %v840
      %2589 = vmatpush.msra.mxu0 %v836
      %2590 = vmatpush.msra.mxu0 %v832
      %2591 = vmatpush.msra.mxu0 %v828
      %2592 = vmatmul.f32.gmra.mxu0 %v1850
      %v2593 = vpop.f32.mrf.mxu0
      %v2594 = vadd.f32 %v2574, %v2593
      %2595 = vdwg.mxu0
      %2596 = vmatpush.msra.mxu0 %v952
      %2597 = vmatpush.msra.mxu0 %v948
      %2598 = vmatpush.msra.mxu0 %v944
      %2599 = vmatpush.msra.mxu0 %v940
      %2600 = vmatpush.msra.mxu0 %v936
      %2601 = vmatpush.msra.mxu0 %v932
      %2602 = vmatpush.msra.mxu0 %v928
      %2603 = vmatpush.msra.mxu0 %v924
      %2604 = vmatpush.msra.mxu0 %v920
      %2605 = vmatpush.msra.mxu0 %v916
      %2606 = vmatpush.msra.mxu0 %v912
      %2607 = vmatpush.msra.mxu0 %v908
      %2608 = vmatpush.msra.mxu0 %v904
      %2609 = vmatpush.msra.mxu0 %v900
      %2610 = vmatpush.msra.mxu0 %v896
      %2611 = vmatpush.msra.mxu0 %v892
      %2612 = vmatmul.f32.gmra.mxu0 %v1851
      %v2613 = vpop.f32.mrf.mxu0
      %v2614 = vadd.f32 %v2594, %v2613
      %2615 = vdwg.mxu0
      %2616 = vmatpush.msra.mxu0 %v1016
      %2617 = vmatpush.msra.mxu0 %v1012
      %2618 = vmatpush.msra.mxu0 %v1008
      %2619 = vmatpush.msra.mxu0 %v1004
      %2620 = vmatpush.msra.mxu0 %v1000
      %2621 = vmatpush.msra.mxu0 %v996
      %2622 = vmatpush.msra.mxu0 %v992
      %2623 = vmatpush.msra.mxu0 %v988
      %2624 = vmatpush.msra.mxu0 %v984
      %2625 = vmatpush.msra.mxu0 %v980
      %2626 = vmatpush.msra.mxu0 %v976
      %2627 = vmatpush.msra.mxu0 %v972
      %2628 = vmatpush.msra.mxu0 %v968
      %2629 = vmatpush.msra.mxu0 %v964
      %2630 = vmatpush.msra.mxu0 %v960
      %2631 = vmatpush.msra.mxu0 %v956
      %2632 = vmatmul.f32.gmra.mxu0 %v1852
      %v2633 = vpop.f32.mrf.mxu0
      %v2634 = vadd.f32 %v2614, %v2633
      %2635 = vdwg.mxu0
      %2636 = vmatpush.msra.mxu0 %v1080
      %2637 = vmatpush.msra.mxu0 %v1076
      %2638 = vmatpush.msra.mxu0 %v1072
      %2639 = vmatpush.msra.mxu0 %v1068
      %2640 = vmatpush.msra.mxu0 %v1064
      %2641 = vmatpush.msra.mxu0 %v1060
      %2642 = vmatpush.msra.mxu0 %v1056
      %2643 = vmatpush.msra.mxu0 %v1052
      %2644 = vmatpush.msra.mxu0 %v1048
      %2645 = vmatpush.msra.mxu0 %v1044
      %2646 = vmatpush.msra.mxu0 %v1040
      %2647 = vmatpush.msra.mxu0 %v1036
      %2648 = vmatpush.msra.mxu0 %v1032
      %2649 = vmatpush.msra.mxu0 %v1028
      %2650 = vmatpush.msra.mxu0 %v1024
      %2651 = vmatpush.msra.mxu0 %v1020
      %2652 = vmatmul.f32.gmra.mxu0 %v1853
      %v2653 = vpop.f32.mrf.mxu0
      %v2654 = vadd.f32 %v2634, %v2653
      %2655 = vdwg.mxu0
      %2656 = vmatpush.msra.mxu0 %v1144
      %2657 = vmatpush.msra.mxu0 %v1140
      %2658 = vmatpush.msra.mxu0 %v1136
      %2659 = vmatpush.msra.mxu0 %v1132
      %2660 = vmatpush.msra.mxu0 %v1128
      %2661 = vmatpush.msra.mxu0 %v1124
      %2662 = vmatpush.msra.mxu0 %v1120
      %2663 = vmatpush.msra.mxu0 %v1116
      %2664 = vmatpush.msra.mxu0 %v1112
      %2665 = vmatpush.msra.mxu0 %v1108
      %2666 = vmatpush.msra.mxu0 %v1104
      %2667 = vmatpush.msra.mxu0 %v1100
      %2668 = vmatpush.msra.mxu0 %v1096
      %2669 = vmatpush.msra.mxu0 %v1092
      %2670 = vmatpush.msra.mxu0 %v1088
      %2671 = vmatpush.msra.mxu0 %v1084
      %2672 = vmatmul.f32.gmra.mxu0 %v1854
      %v2673 = vpop.f32.mrf.mxu0
      %v2674 = vadd.f32 %v2654, %v2673
      %2675 = vdwg.mxu0
      %2676 = vmatpush.msra.mxu0 %v1208
      %2677 = vmatpush.msra.mxu0 %v1204
      %2678 = vmatpush.msra.mxu0 %v1200
      %2679 = vmatpush.msra.mxu0 %v1196
      %2680 = vmatpush.msra.mxu0 %v1192
      %2681 = vmatpush.msra.mxu0 %v1188
      %2682 = vmatpush.msra.mxu0 %v1184
      %2683 = vmatpush.msra.mxu0 %v1180
      %2684 = vmatpush.msra.mxu0 %v1176
      %2685 = vmatpush.msra.mxu0 %v1172
      %2686 = vmatpush.msra.mxu0 %v1168
      %2687 = vmatpush.msra.mxu0 %v1164
      %2688 = vmatpush.msra.mxu0 %v1160
      %2689 = vmatpush.msra.mxu0 %v1156
      %2690 = vmatpush.msra.mxu0 %v1152
      %2691 = vmatpush.msra.mxu0 %v1148
      %2692 = vmatmul.f32.gmra.mxu0 %v1855
      %v2693 = vpop.f32.mrf.mxu0
      %v2694 = vadd.f32 %v2674, %v2693
      %2695 = vdwg.mxu0
      %2696 = vmatpush.msra.mxu0 %v1272
      %2697 = vmatpush.msra.mxu0 %v1268
      %2698 = vmatpush.msra.mxu0 %v1264
      %2699 = vmatpush.msra.mxu0 %v1260
      %2700 = vmatpush.msra.mxu0 %v1256
      %2701 = vmatpush.msra.mxu0 %v1252
      %2702 = vmatpush.msra.mxu0 %v1248
      %2703 = vmatpush.msra.mxu0 %v1244
      %2704 = vmatpush.msra.mxu0 %v1240
      %2705 = vmatpush.msra.mxu0 %v1236
      %2706 = vmatpush.msra.mxu0 %v1232
      %2707 = vmatpush.msra.mxu0 %v1228
      %2708 = vmatpush.msra.mxu0 %v1224
      %2709 = vmatpush.msra.mxu0 %v1220
      %2710 = vmatpush.msra.mxu0 %v1216
      %2711 = vmatpush.msra.mxu0 %v1212
      %2712 = vmatmul.f32.gmra.mxu0 %v1856
      %v2713 = vpop.f32.mrf.mxu0
      %v2714 = vadd.f32 %v2694, %v2713
      %2715 = vdwg.mxu0
      %2716 = vmatpush.msra.mxu0 %v1336
      %2717 = vmatpush.msra.mxu0 %v1332
      %2718 = vmatpush.msra.mxu0 %v1328
      %2719 = vmatpush.msra.mxu0 %v1324
      %2720 = vmatpush.msra.mxu0 %v1320
      %2721 = vmatpush.msra.mxu0 %v1316
      %2722 = vmatpush.msra.mxu0 %v1312
      %2723 = vmatpush.msra.mxu0 %v1308
      %2724 = vmatpush.msra.mxu0 %v1304
      %2725 = vmatpush.msra.mxu0 %v1300
      %2726 = vmatpush.msra.mxu0 %v1296
      %2727 = vmatpush.msra.mxu0 %v1292
      %2728 = vmatpush.msra.mxu0 %v1288
      %2729 = vmatpush.msra.mxu0 %v1284
      %2730 = vmatpush.msra.mxu0 %v1280
      %2731 = vmatpush.msra.mxu0 %v1276
      %2732 = vmatmul.f32.gmra.mxu0 %v1859
      %v2733 = vpop.f32.mrf.mxu0
      %v2734 = vadd.f32 %v2714, %v2733
      %2735 = vdwg.mxu0
      %2736 = vmatpush.msra.mxu0 %v1400
      %2737 = vmatpush.msra.mxu0 %v1396
      %2738 = vmatpush.msra.mxu0 %v1392
      %2739 = vmatpush.msra.mxu0 %v1388
      %2740 = vmatpush.msra.mxu0 %v1384
      %2741 = vmatpush.msra.mxu0 %v1380
      %2742 = vmatpush.msra.mxu0 %v1376
      %2743 = vmatpush.msra.mxu0 %v1372
      %2744 = vmatpush.msra.mxu0 %v1368
      %2745 = vmatpush.msra.mxu0 %v1364
      %2746 = vmatpush.msra.mxu0 %v1360
      %2747 = vmatpush.msra.mxu0 %v1356
      %2748 = vmatpush.msra.mxu0 %v1352
      %2749 = vmatpush.msra.mxu0 %v1348
      %2750 = vmatpush.msra.mxu0 %v1344
      %2751 = vmatpush.msra.mxu0 %v1340
      %2752 = vmatmul.f32.gmra.mxu0 %v1860
      %v2753 = vpop.f32.mrf.mxu0
      %v2754 = vadd.f32 %v2734, %v2753
      %2755 = vdwg.mxu0
      %2756 = vmatpush.msra.mxu0 %v1464
      %2757 = vmatpush.msra.mxu0 %v1460
      %2758 = vmatpush.msra.mxu0 %v1456
      %2759 = vmatpush.msra.mxu0 %v1452
      %2760 = vmatpush.msra.mxu0 %v1448
      %2761 = vmatpush.msra.mxu0 %v1444
      %2762 = vmatpush.msra.mxu0 %v1440
      %2763 = vmatpush.msra.mxu0 %v1436
      %2764 = vmatpush.msra.mxu0 %v1432
      %2765 = vmatpush.msra.mxu0 %v1428
      %2766 = vmatpush.msra.mxu0 %v1424
      %2767 = vmatpush.msra.mxu0 %v1420
      %2768 = vmatpush.msra.mxu0 %v1416
      %2769 = vmatpush.msra.mxu0 %v1412
      %2770 = vmatpush.msra.mxu0 %v1408
      %2771 = vmatpush.msra.mxu0 %v1404
      %2772 = vmatmul.f32.gmra.mxu0 %v1861
      %v2773 = vpop.f32.mrf.mxu0
      %v2774 = vadd.f32 %v2754, %v2773
      %2775 = vdwg.mxu0
      %2776 = vmatpush.msra.mxu0 %v1528
      %2777 = vmatpush.msra.mxu0 %v1524
      %2778 = vmatpush.msra.mxu0 %v1520
      %2779 = vmatpush.msra.mxu0 %v1516
      %2780 = vmatpush.msra.mxu0 %v1512
      %2781 = vmatpush.msra.mxu0 %v1508
      %2782 = vmatpush.msra.mxu0 %v1504
      %2783 = vmatpush.msra.mxu0 %v1500
      %2784 = vmatpush.msra.mxu0 %v1496
      %2785 = vmatpush.msra.mxu0 %v1492
      %2786 = vmatpush.msra.mxu0 %v1488
      %2787 = vmatpush.msra.mxu0 %v1484
      %2788 = vmatpush.msra.mxu0 %v1480
      %2789 = vmatpush.msra.mxu0 %v1476
      %2790 = vmatpush.msra.mxu0 %v1472
      %2791 = vmatpush.msra.mxu0 %v1468
      %2792 = vmatmul.f32.gmra.mxu0 %v1862
      %v2793 = vpop.f32.mrf.mxu0
      %v2794 = vadd.f32 %v2774, %v2793
      %2795 = vdwg.mxu0
      %2796 = vmatpush.msra.mxu0 %v1592
      %2797 = vmatpush.msra.mxu0 %v1588
      %2798 = vmatpush.msra.mxu0 %v1584
      %2799 = vmatpush.msra.mxu0 %v1580
      %2800 = vmatpush.msra.mxu0 %v1576
      %2801 = vmatpush.msra.mxu0 %v1572
      %2802 = vmatpush.msra.mxu0 %v1568
      %2803 = vmatpush.msra.mxu0 %v1564
      %2804 = vmatpush.msra.mxu0 %v1560
      %2805 = vmatpush.msra.mxu0 %v1556
      %2806 = vmatpush.msra.mxu0 %v1552
      %2807 = vmatpush.msra.mxu0 %v1548
      %2808 = vmatpush.msra.mxu0 %v1544
      %2809 = vmatpush.msra.mxu0 %v1540
      %2810 = vmatpush.msra.mxu0 %v1536
      %2811 = vmatpush.msra.mxu0 %v1532
      %2812 = vmatmul.f32.gmra.mxu0 %v1863
      %v2813 = vpop.f32.mrf.mxu0
      %v2814 = vadd.f32 %v2794, %v2813
      %2815 = vdwg.mxu0
      %2816 = vmatpush.msra.mxu0 %v1656
      %2817 = vmatpush.msra.mxu0 %v1652
      %2818 = vmatpush.msra.mxu0 %v1648
      %2819 = vmatpush.msra.mxu0 %v1644
      %2820 = vmatpush.msra.mxu0 %v1640
      %2821 = vmatpush.msra.mxu0 %v1636
      %2822 = vmatpush.msra.mxu0 %v1632
      %2823 = vmatpush.msra.mxu0 %v1628
      %2824 = vmatpush.msra.mxu0 %v1624
      %2825 = vmatpush.msra.mxu0 %v1620
      %2826 = vmatpush.msra.mxu0 %v1616
      %2827 = vmatpush.msra.mxu0 %v1612
      %2828 = vmatpush.msra.mxu0 %v1608
      %2829 = vmatpush.msra.mxu0 %v1604
      %2830 = vmatpush.msra.mxu0 %v1600
      %2831 = vmatpush.msra.mxu0 %v1596
      %2832 = vmatmul.f32.gmra.mxu0 %v1864
      %v2833 = vpop.f32.mrf.mxu0
      %v2834 = vadd.f32 %v2814, %v2833
      %2835 = vdwg.mxu0
      %2836 = vmatpush.msra.mxu0 %v1720
      %2837 = vmatpush.msra.mxu0 %v1716
      %2838 = vmatpush.msra.mxu0 %v1712
      %2839 = vmatpush.msra.mxu0 %v1708
      %2840 = vmatpush.msra.mxu0 %v1704
      %2841 = vmatpush.msra.mxu0 %v1700
      %2842 = vmatpush.msra.mxu0 %v1696
      %2843 = vmatpush.msra.mxu0 %v1692
      %2844 = vmatpush.msra.mxu0 %v1688
      %2845 = vmatpush.msra.mxu0 %v1684
      %2846 = vmatpush.msra.mxu0 %v1680
      %2847 = vmatpush.msra.mxu0 %v1676
      %2848 = vmatpush.msra.mxu0 %v1672
      %2849 = vmatpush.msra.mxu0 %v1668
      %2850 = vmatpush.msra.mxu0 %v1664
      %2851 = vmatpush.msra.mxu0 %v1660
      %2852 = vmatmul.f32.gmra.mxu0 %v1865
      %v2853 = vpop.f32.mrf.mxu0
      %v2854 = vadd.f32 %v2834, %v2853
      %2855 = vdwg.mxu0
      %2856 = vmatpush.msra.mxu0 %v1784
      %2857 = vmatpush.msra.mxu0 %v1780
      %2858 = vmatpush.msra.mxu0 %v1776
      %2859 = vmatpush.msra.mxu0 %v1772
      %2860 = vmatpush.msra.mxu0 %v1768
      %2861 = vmatpush.msra.mxu0 %v1764
      %2862 = vmatpush.msra.mxu0 %v1760
      %2863 = vmatpush.msra.mxu0 %v1756
      %2864 = vmatpush.msra.mxu0 %v1752
      %2865 = vmatpush.msra.mxu0 %v1748
      %2866 = vmatpush.msra.mxu0 %v1744
      %2867 = vmatpush.msra.mxu0 %v1740
      %2868 = vmatpush.msra.mxu0 %v1736
      %2869 = vmatpush.msra.mxu0 %v1732
      %2870 = vmatpush.msra.mxu0 %v1728
      %2871 = vmatpush.msra.mxu0 %v1724
      %2872 = vmatmul.f32.gmra.mxu0 %v1866
      %v2873 = vpop.f32.mrf.mxu0
      %v2874 = vadd.f32 %v2854, %v2873
      %2875 = vdwg.mxu0
      %2876 = vmatpush.msra.mxu0 0.0
      %2877 = vmatpush.msra.mxu0 0.0
      %2878 = vmatpush.msra.mxu0 0.0
      %2879 = vmatpush.msra.mxu0 0.0
      %2880 = vmatpush.msra.mxu0 0.0
      %2881 = vmatpush.msra.mxu0 0.0
      %2882 = vmatpush.msra.mxu0 0.0
      %2883 = vmatpush.msra.mxu0 0.0
      %2884 = vmatpush.msra.mxu0 %v1816
      %2885 = vmatpush.msra.mxu0 %v1812
      %2886 = vmatpush.msra.mxu0 %v1808
      %2887 = vmatpush.msra.mxu0 %v1804
      %2888 = vmatpush.msra.mxu0 %v1800
      %2889 = vmatpush.msra.mxu0 %v1796
      %2890 = vmatpush.msra.mxu0 %v1792
      %2891 = vmatpush.msra.mxu0 %v1788
      %2892 = vmatmul.f32.gmra.mxu0 %v1894
      %v2893 = vpop.f32.mrf.mxu0
      %v2894 = vadd.f32 %v2874, %v2893
      %2895 = vdwg.mxu0
      %2896 = vmatpush.msra.mxu0 %v313
      %2897 = vmatpush.msra.mxu0 %v309
      %2898 = vmatpush.msra.mxu0 %v305
      %2899 = vmatpush.msra.mxu0 %v301
      %2900 = vmatpush.msra.mxu0 %v297
      %2901 = vmatpush.msra.mxu0 %v293
      %2902 = vmatpush.msra.mxu0 %v289
      %2903 = vmatpush.msra.mxu0 %v285
      %2904 = vmatpush.msra.mxu0 %v281
      %2905 = vmatpush.msra.mxu0 %v277
      %2906 = vmatpush.msra.mxu0 %v273
      %2907 = vmatpush.msra.mxu0 %v269
      %2908 = vmatpush.msra.mxu0 %v265
      %2909 = vmatpush.msra.mxu0 %v261
      %2910 = vmatpush.msra.mxu0 %v257
      %2911 = vmatpush.msra.mxu0 %v253
      %2912 = vmatmul.f32.gmra.mxu0 %v1839
      %v2913 = vpop.f32.mrf.mxu0
      %v2914 = vadd.f32 %v1823, %v2913
      %2915 = vdwg.mxu0
      %2916 = vmatpush.msra.mxu0 %v377
      %2917 = vmatpush.msra.mxu0 %v373
      %2918 = vmatpush.msra.mxu0 %v369
      %2919 = vmatpush.msra.mxu0 %v365
      %2920 = vmatpush.msra.mxu0 %v361
      %2921 = vmatpush.msra.mxu0 %v357
      %2922 = vmatpush.msra.mxu0 %v353
      %2923 = vmatpush.msra.mxu0 %v349
      %2924 = vmatpush.msra.mxu0 %v345
      %2925 = vmatpush.msra.mxu0 %v341
      %2926 = vmatpush.msra.mxu0 %v337
      %2927 = vmatpush.msra.mxu0 %v333
      %2928 = vmatpush.msra.mxu0 %v329
      %2929 = vmatpush.msra.mxu0 %v325
      %2930 = vmatpush.msra.mxu0 %v321
      %2931 = vmatpush.msra.mxu0 %v317
      %2932 = vmatmul.f32.gmra.mxu0 %v1840
      %v2933 = vpop.f32.mrf.mxu0
      %v2934 = vadd.f32 %v2914, %v2933
      %2935 = vdwg.mxu0
      %2936 = vmatpush.msra.mxu0 %v441
      %2937 = vmatpush.msra.mxu0 %v437
      %2938 = vmatpush.msra.mxu0 %v433
      %2939 = vmatpush.msra.mxu0 %v429
      %2940 = vmatpush.msra.mxu0 %v425
      %2941 = vmatpush.msra.mxu0 %v421
      %2942 = vmatpush.msra.mxu0 %v417
      %2943 = vmatpush.msra.mxu0 %v413
      %2944 = vmatpush.msra.mxu0 %v409
      %2945 = vmatpush.msra.mxu0 %v405
      %2946 = vmatpush.msra.mxu0 %v401
      %2947 = vmatpush.msra.mxu0 %v397
      %2948 = vmatpush.msra.mxu0 %v393
      %2949 = vmatpush.msra.mxu0 %v389
      %2950 = vmatpush.msra.mxu0 %v385
      %2951 = vmatpush.msra.mxu0 %v381
      %2952 = vmatmul.f32.gmra.mxu0 %v1841
      %v2953 = vpop.f32.mrf.mxu0
      %v2954 = vadd.f32 %v2934, %v2953
      %2955 = vdwg.mxu0
      %2956 = vmatpush.msra.mxu0 %v505
      %2957 = vmatpush.msra.mxu0 %v501
      %2958 = vmatpush.msra.mxu0 %v497
      %2959 = vmatpush.msra.mxu0 %v493
      %2960 = vmatpush.msra.mxu0 %v489
      %2961 = vmatpush.msra.mxu0 %v485
      %2962 = vmatpush.msra.mxu0 %v481
      %2963 = vmatpush.msra.mxu0 %v477
      %2964 = vmatpush.msra.mxu0 %v473
      %2965 = vmatpush.msra.mxu0 %v469
      %2966 = vmatpush.msra.mxu0 %v465
      %2967 = vmatpush.msra.mxu0 %v461
      %2968 = vmatpush.msra.mxu0 %v457
      %2969 = vmatpush.msra.mxu0 %v453
      %2970 = vmatpush.msra.mxu0 %v449
      %2971 = vmatpush.msra.mxu0 %v445
      %2972 = vmatmul.f32.gmra.mxu0 %v1842
      %v2973 = vpop.f32.mrf.mxu0
      %v2974 = vadd.f32 %v2954, %v2973
      %2975 = vdwg.mxu0
      %2976 = vmatpush.msra.mxu0 %v569
      %2977 = vmatpush.msra.mxu0 %v565
      %2978 = vmatpush.msra.mxu0 %v561
      %2979 = vmatpush.msra.mxu0 %v557
      %2980 = vmatpush.msra.mxu0 %v553
      %2981 = vmatpush.msra.mxu0 %v549
      %2982 = vmatpush.msra.mxu0 %v545
      %2983 = vmatpush.msra.mxu0 %v541
      %2984 = vmatpush.msra.mxu0 %v537
      %2985 = vmatpush.msra.mxu0 %v533
      %2986 = vmatpush.msra.mxu0 %v529
      %2987 = vmatpush.msra.mxu0 %v525
      %2988 = vmatpush.msra.mxu0 %v521
      %2989 = vmatpush.msra.mxu0 %v517
      %2990 = vmatpush.msra.mxu0 %v513
      %2991 = vmatpush.msra.mxu0 %v509
      %2992 = vmatmul.f32.gmra.mxu0 %v1843
      %v2993 = vpop.f32.mrf.mxu0
      %v2994 = vadd.f32 %v2974, %v2993
      %2995 = vdwg.mxu0
      %2996 = vmatpush.msra.mxu0 %v633
      %2997 = vmatpush.msra.mxu0 %v629
      %2998 = vmatpush.msra.mxu0 %v625
      %2999 = vmatpush.msra.mxu0 %v621
      %3000 = vmatpush.msra.mxu0 %v617
      %3001 = vmatpush.msra.mxu0 %v613
      %3002 = vmatpush.msra.mxu0 %v609
      %3003 = vmatpush.msra.mxu0 %v605
      %3004 = vmatpush.msra.mxu0 %v601
      %3005 = vmatpush.msra.mxu0 %v597
      %3006 = vmatpush.msra.mxu0 %v593
      %3007 = vmatpush.msra.mxu0 %v589
      %3008 = vmatpush.msra.mxu0 %v585
      %3009 = vmatpush.msra.mxu0 %v581
      %3010 = vmatpush.msra.mxu0 %v577
      %3011 = vmatpush.msra.mxu0 %v573
      %3012 = vmatmul.f32.gmra.mxu0 %v1844
      %v3013 = vpop.f32.mrf.mxu0
      %v3014 = vadd.f32 %v2994, %v3013
      %3015 = vdwg.mxu0
      %3016 = vmatpush.msra.mxu0 %v697
      %3017 = vmatpush.msra.mxu0 %v693
      %3018 = vmatpush.msra.mxu0 %v689
      %3019 = vmatpush.msra.mxu0 %v685
      %3020 = vmatpush.msra.mxu0 %v681
      %3021 = vmatpush.msra.mxu0 %v677
      %3022 = vmatpush.msra.mxu0 %v673
      %3023 = vmatpush.msra.mxu0 %v669
      %3024 = vmatpush.msra.mxu0 %v665
      %3025 = vmatpush.msra.mxu0 %v661
      %3026 = vmatpush.msra.mxu0 %v657
      %3027 = vmatpush.msra.mxu0 %v653
      %3028 = vmatpush.msra.mxu0 %v649
      %3029 = vmatpush.msra.mxu0 %v645
      %3030 = vmatpush.msra.mxu0 %v641
      %3031 = vmatpush.msra.mxu0 %v637
      %3032 = vmatmul.f32.gmra.mxu0 %v1845
      %v3033 = vpop.f32.mrf.mxu0
      %v3034 = vadd.f32 %v3014, %v3033
      %3035 = vdwg.mxu0
      %3036 = vmatpush.msra.mxu0 %v761
      %3037 = vmatpush.msra.mxu0 %v757
      %3038 = vmatpush.msra.mxu0 %v753
      %3039 = vmatpush.msra.mxu0 %v749
      %3040 = vmatpush.msra.mxu0 %v745
      %3041 = vmatpush.msra.mxu0 %v741
      %3042 = vmatpush.msra.mxu0 %v737
      %3043 = vmatpush.msra.mxu0 %v733
      %3044 = vmatpush.msra.mxu0 %v729
      %3045 = vmatpush.msra.mxu0 %v725
      %3046 = vmatpush.msra.mxu0 %v721
      %3047 = vmatpush.msra.mxu0 %v717
      %3048 = vmatpush.msra.mxu0 %v713
      %3049 = vmatpush.msra.mxu0 %v709
      %3050 = vmatpush.msra.mxu0 %v705
      %3051 = vmatpush.msra.mxu0 %v701
      %3052 = vmatmul.f32.gmra.mxu0 %v1846
      %v3053 = vpop.f32.mrf.mxu0
      %v3054 = vadd.f32 %v3034, %v3053
      %3055 = vdwg.mxu0
      %3056 = vmatpush.msra.mxu0 %v825
      %3057 = vmatpush.msra.mxu0 %v821
      %3058 = vmatpush.msra.mxu0 %v817
      %3059 = vmatpush.msra.mxu0 %v813
      %3060 = vmatpush.msra.mxu0 %v809
      %3061 = vmatpush.msra.mxu0 %v805
      %3062 = vmatpush.msra.mxu0 %v801
      %3063 = vmatpush.msra.mxu0 %v797
      %3064 = vmatpush.msra.mxu0 %v793
      %3065 = vmatpush.msra.mxu0 %v789
      %3066 = vmatpush.msra.mxu0 %v785
      %3067 = vmatpush.msra.mxu0 %v781
      %3068 = vmatpush.msra.mxu0 %v777
      %3069 = vmatpush.msra.mxu0 %v773
      %3070 = vmatpush.msra.mxu0 %v769
      %3071 = vmatpush.msra.mxu0 %v765
      %3072 = vmatmul.f32.gmra.mxu0 %v1849
      %v3073 = vpop.f32.mrf.mxu0
      %v3074 = vadd.f32 %v3054, %v3073
      %3075 = vdwg.mxu0
      %3076 = vmatpush.msra.mxu0 %v889
      %3077 = vmatpush.msra.mxu0 %v885
      %3078 = vmatpush.msra.mxu0 %v881
      %3079 = vmatpush.msra.mxu0 %v877
      %3080 = vmatpush.msra.mxu0 %v873
      %3081 = vmatpush.msra.mxu0 %v869
      %3082 = vmatpush.msra.mxu0 %v865
      %3083 = vmatpush.msra.mxu0 %v861
      %3084 = vmatpush.msra.mxu0 %v857
      %3085 = vmatpush.msra.mxu0 %v853
      %3086 = vmatpush.msra.mxu0 %v849
      %3087 = vmatpush.msra.mxu0 %v845
      %3088 = vmatpush.msra.mxu0 %v841
      %3089 = vmatpush.msra.mxu0 %v837
      %3090 = vmatpush.msra.mxu0 %v833
      %3091 = vmatpush.msra.mxu0 %v829
      %3092 = vmatmul.f32.gmra.mxu0 %v1850
      %v3093 = vpop.f32.mrf.mxu0
      %v3094 = vadd.f32 %v3074, %v3093
      %3095 = vdwg.mxu0
      %3096 = vmatpush.msra.mxu0 %v953
      %3097 = vmatpush.msra.mxu0 %v949
      %3098 = vmatpush.msra.mxu0 %v945
      %3099 = vmatpush.msra.mxu0 %v941
      %3100 = vmatpush.msra.mxu0 %v937
      %3101 = vmatpush.msra.mxu0 %v933
      %3102 = vmatpush.msra.mxu0 %v929
      %3103 = vmatpush.msra.mxu0 %v925
      %3104 = vmatpush.msra.mxu0 %v921
      %3105 = vmatpush.msra.mxu0 %v917
      %3106 = vmatpush.msra.mxu0 %v913
      %3107 = vmatpush.msra.mxu0 %v909
      %3108 = vmatpush.msra.mxu0 %v905
      %3109 = vmatpush.msra.mxu0 %v901
      %3110 = vmatpush.msra.mxu0 %v897
      %3111 = vmatpush.msra.mxu0 %v893
      %3112 = vmatmul.f32.gmra.mxu0 %v1851
      %v3113 = vpop.f32.mrf.mxu0
      %v3114 = vadd.f32 %v3094, %v3113
      %3115 = vdwg.mxu0
      %3116 = vmatpush.msra.mxu0 %v1017
      %3117 = vmatpush.msra.mxu0 %v1013
      %3118 = vmatpush.msra.mxu0 %v1009
      %3119 = vmatpush.msra.mxu0 %v1005
      %3120 = vmatpush.msra.mxu0 %v1001
      %3121 = vmatpush.msra.mxu0 %v997
      %3122 = vmatpush.msra.mxu0 %v993
      %3123 = vmatpush.msra.mxu0 %v989
      %3124 = vmatpush.msra.mxu0 %v985
      %3125 = vmatpush.msra.mxu0 %v981
      %3126 = vmatpush.msra.mxu0 %v977
      %3127 = vmatpush.msra.mxu0 %v973
      %3128 = vmatpush.msra.mxu0 %v969
      %3129 = vmatpush.msra.mxu0 %v965
      %3130 = vmatpush.msra.mxu0 %v961
      %3131 = vmatpush.msra.mxu0 %v957
      %3132 = vmatmul.f32.gmra.mxu0 %v1852
      %v3133 = vpop.f32.mrf.mxu0
      %v3134 = vadd.f32 %v3114, %v3133
      %3135 = vdwg.mxu0
      %3136 = vmatpush.msra.mxu0 %v1081
      %3137 = vmatpush.msra.mxu0 %v1077
      %3138 = vmatpush.msra.mxu0 %v1073
      %3139 = vmatpush.msra.mxu0 %v1069
      %3140 = vmatpush.msra.mxu0 %v1065
      %3141 = vmatpush.msra.mxu0 %v1061
      %3142 = vmatpush.msra.mxu0 %v1057
      %3143 = vmatpush.msra.mxu0 %v1053
      %3144 = vmatpush.msra.mxu0 %v1049
      %3145 = vmatpush.msra.mxu0 %v1045
      %3146 = vmatpush.msra.mxu0 %v1041
      %3147 = vmatpush.msra.mxu0 %v1037
      %3148 = vmatpush.msra.mxu0 %v1033
      %3149 = vmatpush.msra.mxu0 %v1029
      %3150 = vmatpush.msra.mxu0 %v1025
      %3151 = vmatpush.msra.mxu0 %v1021
      %3152 = vmatmul.f32.gmra.mxu0 %v1853
      %v3153 = vpop.f32.mrf.mxu0
      %v3154 = vadd.f32 %v3134, %v3153
      %3155 = vdwg.mxu0
      %3156 = vmatpush.msra.mxu0 %v1145
      %3157 = vmatpush.msra.mxu0 %v1141
      %3158 = vmatpush.msra.mxu0 %v1137
      %3159 = vmatpush.msra.mxu0 %v1133
      %3160 = vmatpush.msra.mxu0 %v1129
      %3161 = vmatpush.msra.mxu0 %v1125
      %3162 = vmatpush.msra.mxu0 %v1121
      %3163 = vmatpush.msra.mxu0 %v1117
      %3164 = vmatpush.msra.mxu0 %v1113
      %3165 = vmatpush.msra.mxu0 %v1109
      %3166 = vmatpush.msra.mxu0 %v1105
      %3167 = vmatpush.msra.mxu0 %v1101
      %3168 = vmatpush.msra.mxu0 %v1097
      %3169 = vmatpush.msra.mxu0 %v1093
      %3170 = vmatpush.msra.mxu0 %v1089
      %3171 = vmatpush.msra.mxu0 %v1085
      %3172 = vmatmul.f32.gmra.mxu0 %v1854
      %v3173 = vpop.f32.mrf.mxu0
      %v3174 = vadd.f32 %v3154, %v3173
      %3175 = vdwg.mxu0
      %3176 = vmatpush.msra.mxu0 %v1209
      %3177 = vmatpush.msra.mxu0 %v1205
      %3178 = vmatpush.msra.mxu0 %v1201
      %3179 = vmatpush.msra.mxu0 %v1197
      %3180 = vmatpush.msra.mxu0 %v1193
      %3181 = vmatpush.msra.mxu0 %v1189
      %3182 = vmatpush.msra.mxu0 %v1185
      %3183 = vmatpush.msra.mxu0 %v1181
      %3184 = vmatpush.msra.mxu0 %v1177
      %3185 = vmatpush.msra.mxu0 %v1173
      %3186 = vmatpush.msra.mxu0 %v1169
      %3187 = vmatpush.msra.mxu0 %v1165
      %3188 = vmatpush.msra.mxu0 %v1161
      %3189 = vmatpush.msra.mxu0 %v1157
      %3190 = vmatpush.msra.mxu0 %v1153
      %3191 = vmatpush.msra.mxu0 %v1149
      %3192 = vmatmul.f32.gmra.mxu0 %v1855
      %v3193 = vpop.f32.mrf.mxu0
      %v3194 = vadd.f32 %v3174, %v3193
      %3195 = vdwg.mxu0
      %3196 = vmatpush.msra.mxu0 %v1273
      %3197 = vmatpush.msra.mxu0 %v1269
      %3198 = vmatpush.msra.mxu0 %v1265
      %3199 = vmatpush.msra.mxu0 %v1261
      %3200 = vmatpush.msra.mxu0 %v1257
      %3201 = vmatpush.msra.mxu0 %v1253
      %3202 = vmatpush.msra.mxu0 %v1249
      %3203 = vmatpush.msra.mxu0 %v1245
      %3204 = vmatpush.msra.mxu0 %v1241
      %3205 = vmatpush.msra.mxu0 %v1237
      %3206 = vmatpush.msra.mxu0 %v1233
      %3207 = vmatpush.msra.mxu0 %v1229
      %3208 = vmatpush.msra.mxu0 %v1225
      %3209 = vmatpush.msra.mxu0 %v1221
      %3210 = vmatpush.msra.mxu0 %v1217
      %3211 = vmatpush.msra.mxu0 %v1213
      %3212 = vmatmul.f32.gmra.mxu0 %v1856
      %v3213 = vpop.f32.mrf.mxu0
      %v3214 = vadd.f32 %v3194, %v3213
      %3215 = vdwg.mxu0
      %3216 = vmatpush.msra.mxu0 %v1337
      %3217 = vmatpush.msra.mxu0 %v1333
      %3218 = vmatpush.msra.mxu0 %v1329
      %3219 = vmatpush.msra.mxu0 %v1325
      %3220 = vmatpush.msra.mxu0 %v1321
      %3221 = vmatpush.msra.mxu0 %v1317
      %3222 = vmatpush.msra.mxu0 %v1313
      %3223 = vmatpush.msra.mxu0 %v1309
      %3224 = vmatpush.msra.mxu0 %v1305
      %3225 = vmatpush.msra.mxu0 %v1301
      %3226 = vmatpush.msra.mxu0 %v1297
      %3227 = vmatpush.msra.mxu0 %v1293
      %3228 = vmatpush.msra.mxu0 %v1289
      %3229 = vmatpush.msra.mxu0 %v1285
      %3230 = vmatpush.msra.mxu0 %v1281
      %3231 = vmatpush.msra.mxu0 %v1277
      %3232 = vmatmul.f32.gmra.mxu0 %v1859
      %v3233 = vpop.f32.mrf.mxu0
      %v3234 = vadd.f32 %v3214, %v3233
      %3235 = vdwg.mxu0
      %3236 = vmatpush.msra.mxu0 %v1401
      %3237 = vmatpush.msra.mxu0 %v1397
      %3238 = vmatpush.msra.mxu0 %v1393
      %3239 = vmatpush.msra.mxu0 %v1389
      %3240 = vmatpush.msra.mxu0 %v1385
      %3241 = vmatpush.msra.mxu0 %v1381
      %3242 = vmatpush.msra.mxu0 %v1377
      %3243 = vmatpush.msra.mxu0 %v1373
      %3244 = vmatpush.msra.mxu0 %v1369
      %3245 = vmatpush.msra.mxu0 %v1365
      %3246 = vmatpush.msra.mxu0 %v1361
      %3247 = vmatpush.msra.mxu0 %v1357
      %3248 = vmatpush.msra.mxu0 %v1353
      %3249 = vmatpush.msra.mxu0 %v1349
      %3250 = vmatpush.msra.mxu0 %v1345
      %3251 = vmatpush.msra.mxu0 %v1341
      %3252 = vmatmul.f32.gmra.mxu0 %v1860
      %v3253 = vpop.f32.mrf.mxu0
      %v3254 = vadd.f32 %v3234, %v3253
      %3255 = vdwg.mxu0
      %3256 = vmatpush.msra.mxu0 %v1465
      %3257 = vmatpush.msra.mxu0 %v1461
      %3258 = vmatpush.msra.mxu0 %v1457
      %3259 = vmatpush.msra.mxu0 %v1453
      %3260 = vmatpush.msra.mxu0 %v1449
      %3261 = vmatpush.msra.mxu0 %v1445
      %3262 = vmatpush.msra.mxu0 %v1441
      %3263 = vmatpush.msra.mxu0 %v1437
      %3264 = vmatpush.msra.mxu0 %v1433
      %3265 = vmatpush.msra.mxu0 %v1429
      %3266 = vmatpush.msra.mxu0 %v1425
      %3267 = vmatpush.msra.mxu0 %v1421
      %3268 = vmatpush.msra.mxu0 %v1417
      %3269 = vmatpush.msra.mxu0 %v1413
      %3270 = vmatpush.msra.mxu0 %v1409
      %3271 = vmatpush.msra.mxu0 %v1405
      %3272 = vmatmul.f32.gmra.mxu0 %v1861
      %v3273 = vpop.f32.mrf.mxu0
      %v3274 = vadd.f32 %v3254, %v3273
      %3275 = vdwg.mxu0
      %3276 = vmatpush.msra.mxu0 %v1529
      %3277 = vmatpush.msra.mxu0 %v1525
      %3278 = vmatpush.msra.mxu0 %v1521
      %3279 = vmatpush.msra.mxu0 %v1517
      %3280 = vmatpush.msra.mxu0 %v1513
      %3281 = vmatpush.msra.mxu0 %v1509
      %3282 = vmatpush.msra.mxu0 %v1505
      %3283 = vmatpush.msra.mxu0 %v1501
      %3284 = vmatpush.msra.mxu0 %v1497
      %3285 = vmatpush.msra.mxu0 %v1493
      %3286 = vmatpush.msra.mxu0 %v1489
      %3287 = vmatpush.msra.mxu0 %v1485
      %3288 = vmatpush.msra.mxu0 %v1481
      %3289 = vmatpush.msra.mxu0 %v1477
      %3290 = vmatpush.msra.mxu0 %v1473
      %3291 = vmatpush.msra.mxu0 %v1469
      %3292 = vmatmul.f32.gmra.mxu0 %v1862
      %v3293 = vpop.f32.mrf.mxu0
      %v3294 = vadd.f32 %v3274, %v3293
      %3295 = vdwg.mxu0
      %3296 = vmatpush.msra.mxu0 %v1593
      %3297 = vmatpush.msra.mxu0 %v1589
      %3298 = vmatpush.msra.mxu0 %v1585
      %3299 = vmatpush.msra.mxu0 %v1581
      %3300 = vmatpush.msra.mxu0 %v1577
      %3301 = vmatpush.msra.mxu0 %v1573
      %3302 = vmatpush.msra.mxu0 %v1569
      %3303 = vmatpush.msra.mxu0 %v1565
      %3304 = vmatpush.msra.mxu0 %v1561
      %3305 = vmatpush.msra.mxu0 %v1557
      %3306 = vmatpush.msra.mxu0 %v1553
      %3307 = vmatpush.msra.mxu0 %v1549
      %3308 = vmatpush.msra.mxu0 %v1545
      %3309 = vmatpush.msra.mxu0 %v1541
      %3310 = vmatpush.msra.mxu0 %v1537
      %3311 = vmatpush.msra.mxu0 %v1533
      %3312 = vmatmul.f32.gmra.mxu0 %v1863
      %v3313 = vpop.f32.mrf.mxu0
      %v3314 = vadd.f32 %v3294, %v3313
      %3315 = vdwg.mxu0
      %3316 = vmatpush.msra.mxu0 %v1657
      %3317 = vmatpush.msra.mxu0 %v1653
      %3318 = vmatpush.msra.mxu0 %v1649
      %3319 = vmatpush.msra.mxu0 %v1645
      %3320 = vmatpush.msra.mxu0 %v1641
      %3321 = vmatpush.msra.mxu0 %v1637
      %3322 = vmatpush.msra.mxu0 %v1633
      %3323 = vmatpush.msra.mxu0 %v1629
      %3324 = vmatpush.msra.mxu0 %v1625
      %3325 = vmatpush.msra.mxu0 %v1621
      %3326 = vmatpush.msra.mxu0 %v1617
      %3327 = vmatpush.msra.mxu0 %v1613
      %3328 = vmatpush.msra.mxu0 %v1609
      %3329 = vmatpush.msra.mxu0 %v1605
      %3330 = vmatpush.msra.mxu0 %v1601
      %3331 = vmatpush.msra.mxu0 %v1597
      %3332 = vmatmul.f32.gmra.mxu0 %v1864
      %v3333 = vpop.f32.mrf.mxu0
      %v3334 = vadd.f32 %v3314, %v3333
      %3335 = vdwg.mxu0
      %3336 = vmatpush.msra.mxu0 %v1721
      %3337 = vmatpush.msra.mxu0 %v1717
      %3338 = vmatpush.msra.mxu0 %v1713
      %3339 = vmatpush.msra.mxu0 %v1709
      %3340 = vmatpush.msra.mxu0 %v1705
      %3341 = vmatpush.msra.mxu0 %v1701
      %3342 = vmatpush.msra.mxu0 %v1697
      %3343 = vmatpush.msra.mxu0 %v1693
      %3344 = vmatpush.msra.mxu0 %v1689
      %3345 = vmatpush.msra.mxu0 %v1685
      %3346 = vmatpush.msra.mxu0 %v1681
      %3347 = vmatpush.msra.mxu0 %v1677
      %3348 = vmatpush.msra.mxu0 %v1673
      %3349 = vmatpush.msra.mxu0 %v1669
      %3350 = vmatpush.msra.mxu0 %v1665
      %3351 = vmatpush.msra.mxu0 %v1661
      %3352 = vmatmul.f32.gmra.mxu0 %v1865
      %v3353 = vpop.f32.mrf.mxu0
      %v3354 = vadd.f32 %v3334, %v3353
      %3355 = vdwg.mxu0
      %3356 = vmatpush.msra.mxu0 %v1785
      %3357 = vmatpush.msra.mxu0 %v1781
      %3358 = vmatpush.msra.mxu0 %v1777
      %3359 = vmatpush.msra.mxu0 %v1773
      %3360 = vmatpush.msra.mxu0 %v1769
      %3361 = vmatpush.msra.mxu0 %v1765
      %3362 = vmatpush.msra.mxu0 %v1761
      %3363 = vmatpush.msra.mxu0 %v1757
      %3364 = vmatpush.msra.mxu0 %v1753
      %3365 = vmatpush.msra.mxu0 %v1749
      %3366 = vmatpush.msra.mxu0 %v1745
      %3367 = vmatpush.msra.mxu0 %v1741
      %3368 = vmatpush.msra.mxu0 %v1737
      %3369 = vmatpush.msra.mxu0 %v1733
      %3370 = vmatpush.msra.mxu0 %v1729
      %3371 = vmatpush.msra.mxu0 %v1725
      %3372 = vmatmul.f32.gmra.mxu0 %v1866
      %v3373 = vpop.f32.mrf.mxu0
      %v3374 = vadd.f32 %v3354, %v3373
      %3375 = vdwg.mxu0
      %3376 = vmatpush.msra.mxu0 0.0
      %3377 = vmatpush.msra.mxu0 0.0
      %3378 = vmatpush.msra.mxu0 0.0
      %3379 = vmatpush.msra.mxu0 0.0
      %3380 = vmatpush.msra.mxu0 0.0
      %3381 = vmatpush.msra.mxu0 0.0
      %3382 = vmatpush.msra.mxu0 0.0
      %3383 = vmatpush.msra.mxu0 0.0
      %3384 = vmatpush.msra.mxu0 %v1817
      %3385 = vmatpush.msra.mxu0 %v1813
      %3386 = vmatpush.msra.mxu0 %v1809
      %3387 = vmatpush.msra.mxu0 %v1805
      %3388 = vmatpush.msra.mxu0 %v1801
      %3389 = vmatpush.msra.mxu0 %v1797
      %3390 = vmatpush.msra.mxu0 %v1793
      %3391 = vmatpush.msra.mxu0 %v1789
      %3392 = vmatmul.f32.gmra.mxu0 %v1894
      %v3393 = vpop.f32.mrf.mxu0
      %v3394 = vadd.f32 %v3374, %v3393
      %3395 = vdwg.mxu0
      %3396 = vmatpush.msra.mxu0 %v314
      %3397 = vmatpush.msra.mxu0 %v310
      %3398 = vmatpush.msra.mxu0 %v306
      %3399 = vmatpush.msra.mxu0 %v302
      %3400 = vmatpush.msra.mxu0 %v298
      %3401 = vmatpush.msra.mxu0 %v294
      %3402 = vmatpush.msra.mxu0 %v290
      %3403 = vmatpush.msra.mxu0 %v286
      %3404 = vmatpush.msra.mxu0 %v282
      %3405 = vmatpush.msra.mxu0 %v278
      %3406 = vmatpush.msra.mxu0 %v274
      %3407 = vmatpush.msra.mxu0 %v270
      %3408 = vmatpush.msra.mxu0 %v266
      %3409 = vmatpush.msra.mxu0 %v262
      %3410 = vmatpush.msra.mxu0 %v258
      %3411 = vmatpush.msra.mxu0 %v254
      %3412 = vmatmul.f32.gmra.mxu0 %v1839
      %v3413 = vpop.f32.mrf.mxu0
      %v3414 = vadd.f32 %v1824, %v3413
      %3415 = vdwg.mxu0
      %3416 = vmatpush.msra.mxu0 %v378
      %3417 = vmatpush.msra.mxu0 %v374
      %3418 = vmatpush.msra.mxu0 %v370
      %3419 = vmatpush.msra.mxu0 %v366
      %3420 = vmatpush.msra.mxu0 %v362
      %3421 = vmatpush.msra.mxu0 %v358
      %3422 = vmatpush.msra.mxu0 %v354
      %3423 = vmatpush.msra.mxu0 %v350
      %3424 = vmatpush.msra.mxu0 %v346
      %3425 = vmatpush.msra.mxu0 %v342
      %3426 = vmatpush.msra.mxu0 %v338
      %3427 = vmatpush.msra.mxu0 %v334
      %3428 = vmatpush.msra.mxu0 %v330
      %3429 = vmatpush.msra.mxu0 %v326
      %3430 = vmatpush.msra.mxu0 %v322
      %3431 = vmatpush.msra.mxu0 %v318
      %3432 = vmatmul.f32.gmra.mxu0 %v1840
      %v3433 = vpop.f32.mrf.mxu0
      %v3434 = vadd.f32 %v3414, %v3433
      %3435 = vdwg.mxu0
      %3436 = vmatpush.msra.mxu0 %v442
      %3437 = vmatpush.msra.mxu0 %v438
      %3438 = vmatpush.msra.mxu0 %v434
      %3439 = vmatpush.msra.mxu0 %v430
      %3440 = vmatpush.msra.mxu0 %v426
      %3441 = vmatpush.msra.mxu0 %v422
      %3442 = vmatpush.msra.mxu0 %v418
      %3443 = vmatpush.msra.mxu0 %v414
      %3444 = vmatpush.msra.mxu0 %v410
      %3445 = vmatpush.msra.mxu0 %v406
      %3446 = vmatpush.msra.mxu0 %v402
      %3447 = vmatpush.msra.mxu0 %v398
      %3448 = vmatpush.msra.mxu0 %v394
      %3449 = vmatpush.msra.mxu0 %v390
      %3450 = vmatpush.msra.mxu0 %v386
      %3451 = vmatpush.msra.mxu0 %v382
      %3452 = vmatmul.f32.gmra.mxu0 %v1841
      %v3453 = vpop.f32.mrf.mxu0
      %v3454 = vadd.f32 %v3434, %v3453
      %3455 = vdwg.mxu0
      %3456 = vmatpush.msra.mxu0 %v506
      %3457 = vmatpush.msra.mxu0 %v502
      %3458 = vmatpush.msra.mxu0 %v498
      %3459 = vmatpush.msra.mxu0 %v494
      %3460 = vmatpush.msra.mxu0 %v490
      %3461 = vmatpush.msra.mxu0 %v486
      %3462 = vmatpush.msra.mxu0 %v482
      %3463 = vmatpush.msra.mxu0 %v478
      %3464 = vmatpush.msra.mxu0 %v474
      %3465 = vmatpush.msra.mxu0 %v470
      %3466 = vmatpush.msra.mxu0 %v466
      %3467 = vmatpush.msra.mxu0 %v462
      %3468 = vmatpush.msra.mxu0 %v458
      %3469 = vmatpush.msra.mxu0 %v454
      %3470 = vmatpush.msra.mxu0 %v450
      %3471 = vmatpush.msra.mxu0 %v446
      %3472 = vmatmul.f32.gmra.mxu0 %v1842
      %v3473 = vpop.f32.mrf.mxu0
      %v3474 = vadd.f32 %v3454, %v3473
      %3475 = vdwg.mxu0
      %3476 = vmatpush.msra.mxu0 %v570
      %3477 = vmatpush.msra.mxu0 %v566
      %3478 = vmatpush.msra.mxu0 %v562
      %3479 = vmatpush.msra.mxu0 %v558
      %3480 = vmatpush.msra.mxu0 %v554
      %3481 = vmatpush.msra.mxu0 %v550
      %3482 = vmatpush.msra.mxu0 %v546
      %3483 = vmatpush.msra.mxu0 %v542
      %3484 = vmatpush.msra.mxu0 %v538
      %3485 = vmatpush.msra.mxu0 %v534
      %3486 = vmatpush.msra.mxu0 %v530
      %3487 = vmatpush.msra.mxu0 %v526
      %3488 = vmatpush.msra.mxu0 %v522
      %3489 = vmatpush.msra.mxu0 %v518
      %3490 = vmatpush.msra.mxu0 %v514
      %3491 = vmatpush.msra.mxu0 %v510
      %3492 = vmatmul.f32.gmra.mxu0 %v1843
      %v3493 = vpop.f32.mrf.mxu0
      %v3494 = vadd.f32 %v3474, %v3493
      %3495 = vdwg.mxu0
      %3496 = vmatpush.msra.mxu0 %v634
      %3497 = vmatpush.msra.mxu0 %v630
      %3498 = vmatpush.msra.mxu0 %v626
      %3499 = vmatpush.msra.mxu0 %v622
      %3500 = vmatpush.msra.mxu0 %v618
      %3501 = vmatpush.msra.mxu0 %v614
      %3502 = vmatpush.msra.mxu0 %v610
      %3503 = vmatpush.msra.mxu0 %v606
      %3504 = vmatpush.msra.mxu0 %v602
      %3505 = vmatpush.msra.mxu0 %v598
      %3506 = vmatpush.msra.mxu0 %v594
      %3507 = vmatpush.msra.mxu0 %v590
      %3508 = vmatpush.msra.mxu0 %v586
      %3509 = vmatpush.msra.mxu0 %v582
      %3510 = vmatpush.msra.mxu0 %v578
      %3511 = vmatpush.msra.mxu0 %v574
      %3512 = vmatmul.f32.gmra.mxu0 %v1844
      %v3513 = vpop.f32.mrf.mxu0
      %v3514 = vadd.f32 %v3494, %v3513
      %3515 = vdwg.mxu0
      %3516 = vmatpush.msra.mxu0 %v698
      %3517 = vmatpush.msra.mxu0 %v694
      %3518 = vmatpush.msra.mxu0 %v690
      %3519 = vmatpush.msra.mxu0 %v686
      %3520 = vmatpush.msra.mxu0 %v682
      %3521 = vmatpush.msra.mxu0 %v678
      %3522 = vmatpush.msra.mxu0 %v674
      %3523 = vmatpush.msra.mxu0 %v670
      %3524 = vmatpush.msra.mxu0 %v666
      %3525 = vmatpush.msra.mxu0 %v662
      %3526 = vmatpush.msra.mxu0 %v658
      %3527 = vmatpush.msra.mxu0 %v654
      %3528 = vmatpush.msra.mxu0 %v650
      %3529 = vmatpush.msra.mxu0 %v646
      %3530 = vmatpush.msra.mxu0 %v642
      %3531 = vmatpush.msra.mxu0 %v638
      %3532 = vmatmul.f32.gmra.mxu0 %v1845
      %v3533 = vpop.f32.mrf.mxu0
      %v3534 = vadd.f32 %v3514, %v3533
      %3535 = vdwg.mxu0
      %3536 = vmatpush.msra.mxu0 %v762
      %3537 = vmatpush.msra.mxu0 %v758
      %3538 = vmatpush.msra.mxu0 %v754
      %3539 = vmatpush.msra.mxu0 %v750
      %3540 = vmatpush.msra.mxu0 %v746
      %3541 = vmatpush.msra.mxu0 %v742
      %3542 = vmatpush.msra.mxu0 %v738
      %3543 = vmatpush.msra.mxu0 %v734
      %3544 = vmatpush.msra.mxu0 %v730
      %3545 = vmatpush.msra.mxu0 %v726
      %3546 = vmatpush.msra.mxu0 %v722
      %3547 = vmatpush.msra.mxu0 %v718
      %3548 = vmatpush.msra.mxu0 %v714
      %3549 = vmatpush.msra.mxu0 %v710
      %3550 = vmatpush.msra.mxu0 %v706
      %3551 = vmatpush.msra.mxu0 %v702
      %3552 = vmatmul.f32.gmra.mxu0 %v1846
      %v3553 = vpop.f32.mrf.mxu0
      %v3554 = vadd.f32 %v3534, %v3553
      %3555 = vdwg.mxu0
      %3556 = vmatpush.msra.mxu0 %v826
      %3557 = vmatpush.msra.mxu0 %v822
      %3558 = vmatpush.msra.mxu0 %v818
      %3559 = vmatpush.msra.mxu0 %v814
      %3560 = vmatpush.msra.mxu0 %v810
      %3561 = vmatpush.msra.mxu0 %v806
      %3562 = vmatpush.msra.mxu0 %v802
      %3563 = vmatpush.msra.mxu0 %v798
      %3564 = vmatpush.msra.mxu0 %v794
      %3565 = vmatpush.msra.mxu0 %v790
      %3566 = vmatpush.msra.mxu0 %v786
      %3567 = vmatpush.msra.mxu0 %v782
      %3568 = vmatpush.msra.mxu0 %v778
      %3569 = vmatpush.msra.mxu0 %v774
      %3570 = vmatpush.msra.mxu0 %v770
      %3571 = vmatpush.msra.mxu0 %v766
      %3572 = vmatmul.f32.gmra.mxu0 %v1849
      %v3573 = vpop.f32.mrf.mxu0
      %v3574 = vadd.f32 %v3554, %v3573
      %3575 = vdwg.mxu0
      %3576 = vmatpush.msra.mxu0 %v890
      %3577 = vmatpush.msra.mxu0 %v886
      %3578 = vmatpush.msra.mxu0 %v882
      %3579 = vmatpush.msra.mxu0 %v878
      %3580 = vmatpush.msra.mxu0 %v874
      %3581 = vmatpush.msra.mxu0 %v870
      %3582 = vmatpush.msra.mxu0 %v866
      %3583 = vmatpush.msra.mxu0 %v862
      %3584 = vmatpush.msra.mxu0 %v858
      %3585 = vmatpush.msra.mxu0 %v854
      %3586 = vmatpush.msra.mxu0 %v850
      %3587 = vmatpush.msra.mxu0 %v846
      %3588 = vmatpush.msra.mxu0 %v842
      %3589 = vmatpush.msra.mxu0 %v838
      %3590 = vmatpush.msra.mxu0 %v834
      %3591 = vmatpush.msra.mxu0 %v830
      %3592 = vmatmul.f32.gmra.mxu0 %v1850
      %v3593 = vpop.f32.mrf.mxu0
      %v3594 = vadd.f32 %v3574, %v3593
      %3595 = vdwg.mxu0
      %3596 = vmatpush.msra.mxu0 %v954
      %3597 = vmatpush.msra.mxu0 %v950
      %3598 = vmatpush.msra.mxu0 %v946
      %3599 = vmatpush.msra.mxu0 %v942
      %3600 = vmatpush.msra.mxu0 %v938
      %3601 = vmatpush.msra.mxu0 %v934
      %3602 = vmatpush.msra.mxu0 %v930
      %3603 = vmatpush.msra.mxu0 %v926
      %3604 = vmatpush.msra.mxu0 %v922
      %3605 = vmatpush.msra.mxu0 %v918
      %3606 = vmatpush.msra.mxu0 %v914
      %3607 = vmatpush.msra.mxu0 %v910
      %3608 = vmatpush.msra.mxu0 %v906
      %3609 = vmatpush.msra.mxu0 %v902
      %3610 = vmatpush.msra.mxu0 %v898
      %3611 = vmatpush.msra.mxu0 %v894
      %3612 = vmatmul.f32.gmra.mxu0 %v1851
      %v3613 = vpop.f32.mrf.mxu0
      %v3614 = vadd.f32 %v3594, %v3613
      %3615 = vdwg.mxu0
      %3616 = vmatpush.msra.mxu0 %v1018
      %3617 = vmatpush.msra.mxu0 %v1014
      %3618 = vmatpush.msra.mxu0 %v1010
      %3619 = vmatpush.msra.mxu0 %v1006
      %3620 = vmatpush.msra.mxu0 %v1002
      %3621 = vmatpush.msra.mxu0 %v998
      %3622 = vmatpush.msra.mxu0 %v994
      %3623 = vmatpush.msra.mxu0 %v990
      %3624 = vmatpush.msra.mxu0 %v986
      %3625 = vmatpush.msra.mxu0 %v982
      %3626 = vmatpush.msra.mxu0 %v978
      %3627 = vmatpush.msra.mxu0 %v974
      %3628 = vmatpush.msra.mxu0 %v970
      %3629 = vmatpush.msra.mxu0 %v966
      %3630 = vmatpush.msra.mxu0 %v962
      %3631 = vmatpush.msra.mxu0 %v958
      %3632 = vmatmul.f32.gmra.mxu0 %v1852
      %v3633 = vpop.f32.mrf.mxu0
      %v3634 = vadd.f32 %v3614, %v3633
      %3635 = vdwg.mxu0
      %3636 = vmatpush.msra.mxu0 %v1082
      %3637 = vmatpush.msra.mxu0 %v1078
      %3638 = vmatpush.msra.mxu0 %v1074
      %3639 = vmatpush.msra.mxu0 %v1070
      %3640 = vmatpush.msra.mxu0 %v1066
      %3641 = vmatpush.msra.mxu0 %v1062
      %3642 = vmatpush.msra.mxu0 %v1058
      %3643 = vmatpush.msra.mxu0 %v1054
      %3644 = vmatpush.msra.mxu0 %v1050
      %3645 = vmatpush.msra.mxu0 %v1046
      %3646 = vmatpush.msra.mxu0 %v1042
      %3647 = vmatpush.msra.mxu0 %v1038
      %3648 = vmatpush.msra.mxu0 %v1034
      %3649 = vmatpush.msra.mxu0 %v1030
      %3650 = vmatpush.msra.mxu0 %v1026
      %3651 = vmatpush.msra.mxu0 %v1022
      %3652 = vmatmul.f32.gmra.mxu0 %v1853
      %v3653 = vpop.f32.mrf.mxu0
      %v3654 = vadd.f32 %v3634, %v3653
      %3655 = vdwg.mxu0
      %3656 = vmatpush.msra.mxu0 %v1146
      %3657 = vmatpush.msra.mxu0 %v1142
      %3658 = vmatpush.msra.mxu0 %v1138
      %3659 = vmatpush.msra.mxu0 %v1134
      %3660 = vmatpush.msra.mxu0 %v1130
      %3661 = vmatpush.msra.mxu0 %v1126
      %3662 = vmatpush.msra.mxu0 %v1122
      %3663 = vmatpush.msra.mxu0 %v1118
      %3664 = vmatpush.msra.mxu0 %v1114
      %3665 = vmatpush.msra.mxu0 %v1110
      %3666 = vmatpush.msra.mxu0 %v1106
      %3667 = vmatpush.msra.mxu0 %v1102
      %3668 = vmatpush.msra.mxu0 %v1098
      %3669 = vmatpush.msra.mxu0 %v1094
      %3670 = vmatpush.msra.mxu0 %v1090
      %3671 = vmatpush.msra.mxu0 %v1086
      %3672 = vmatmul.f32.gmra.mxu0 %v1854
      %v3673 = vpop.f32.mrf.mxu0
      %v3674 = vadd.f32 %v3654, %v3673
      %3675 = vdwg.mxu0
      %3676 = vmatpush.msra.mxu0 %v1210
      %3677 = vmatpush.msra.mxu0 %v1206
      %3678 = vmatpush.msra.mxu0 %v1202
      %3679 = vmatpush.msra.mxu0 %v1198
      %3680 = vmatpush.msra.mxu0 %v1194
      %3681 = vmatpush.msra.mxu0 %v1190
      %3682 = vmatpush.msra.mxu0 %v1186
      %3683 = vmatpush.msra.mxu0 %v1182
      %3684 = vmatpush.msra.mxu0 %v1178
      %3685 = vmatpush.msra.mxu0 %v1174
      %3686 = vmatpush.msra.mxu0 %v1170
      %3687 = vmatpush.msra.mxu0 %v1166
      %3688 = vmatpush.msra.mxu0 %v1162
      %3689 = vmatpush.msra.mxu0 %v1158
      %3690 = vmatpush.msra.mxu0 %v1154
      %3691 = vmatpush.msra.mxu0 %v1150
      %3692 = vmatmul.f32.gmra.mxu0 %v1855
      %v3693 = vpop.f32.mrf.mxu0
      %v3694 = vadd.f32 %v3674, %v3693
      %3695 = vdwg.mxu0
      %3696 = vmatpush.msra.mxu0 %v1274
      %3697 = vmatpush.msra.mxu0 %v1270
      %3698 = vmatpush.msra.mxu0 %v1266
      %3699 = vmatpush.msra.mxu0 %v1262
      %3700 = vmatpush.msra.mxu0 %v1258
      %3701 = vmatpush.msra.mxu0 %v1254
      %3702 = vmatpush.msra.mxu0 %v1250
      %3703 = vmatpush.msra.mxu0 %v1246
      %3704 = vmatpush.msra.mxu0 %v1242
      %3705 = vmatpush.msra.mxu0 %v1238
      %3706 = vmatpush.msra.mxu0 %v1234
      %3707 = vmatpush.msra.mxu0 %v1230
      %3708 = vmatpush.msra.mxu0 %v1226
      %3709 = vmatpush.msra.mxu0 %v1222
      %3710 = vmatpush.msra.mxu0 %v1218
      %3711 = vmatpush.msra.mxu0 %v1214
      %3712 = vmatmul.f32.gmra.mxu0 %v1856
      %v3713 = vpop.f32.mrf.mxu0
      %v3714 = vadd.f32 %v3694, %v3713
      %3715 = vdwg.mxu0
      %3716 = vmatpush.msra.mxu0 %v1338
      %3717 = vmatpush.msra.mxu0 %v1334
      %3718 = vmatpush.msra.mxu0 %v1330
      %3719 = vmatpush.msra.mxu0 %v1326
      %3720 = vmatpush.msra.mxu0 %v1322
      %3721 = vmatpush.msra.mxu0 %v1318
      %3722 = vmatpush.msra.mxu0 %v1314
      %3723 = vmatpush.msra.mxu0 %v1310
      %3724 = vmatpush.msra.mxu0 %v1306
      %3725 = vmatpush.msra.mxu0 %v1302
      %3726 = vmatpush.msra.mxu0 %v1298
      %3727 = vmatpush.msra.mxu0 %v1294
      %3728 = vmatpush.msra.mxu0 %v1290
      %3729 = vmatpush.msra.mxu0 %v1286
      %3730 = vmatpush.msra.mxu0 %v1282
      %3731 = vmatpush.msra.mxu0 %v1278
      %3732 = vmatmul.f32.gmra.mxu0 %v1859
      %v3733 = vpop.f32.mrf.mxu0
      %v3734 = vadd.f32 %v3714, %v3733
      %3735 = vdwg.mxu0
      %3736 = vmatpush.msra.mxu0 %v1402
      %3737 = vmatpush.msra.mxu0 %v1398
      %3738 = vmatpush.msra.mxu0 %v1394
      %3739 = vmatpush.msra.mxu0 %v1390
      %3740 = vmatpush.msra.mxu0 %v1386
      %3741 = vmatpush.msra.mxu0 %v1382
      %3742 = vmatpush.msra.mxu0 %v1378
      %3743 = vmatpush.msra.mxu0 %v1374
      %3744 = vmatpush.msra.mxu0 %v1370
      %3745 = vmatpush.msra.mxu0 %v1366
      %3746 = vmatpush.msra.mxu0 %v1362
      %3747 = vmatpush.msra.mxu0 %v1358
      %3748 = vmatpush.msra.mxu0 %v1354
      %3749 = vmatpush.msra.mxu0 %v1350
      %3750 = vmatpush.msra.mxu0 %v1346
      %3751 = vmatpush.msra.mxu0 %v1342
      %3752 = vmatmul.f32.gmra.mxu0 %v1860
      %v3753 = vpop.f32.mrf.mxu0
      %v3754 = vadd.f32 %v3734, %v3753
      %3755 = vdwg.mxu0
      %3756 = vmatpush.msra.mxu0 %v1466
      %3757 = vmatpush.msra.mxu0 %v1462
      %3758 = vmatpush.msra.mxu0 %v1458
      %3759 = vmatpush.msra.mxu0 %v1454
      %3760 = vmatpush.msra.mxu0 %v1450
      %3761 = vmatpush.msra.mxu0 %v1446
      %3762 = vmatpush.msra.mxu0 %v1442
      %3763 = vmatpush.msra.mxu0 %v1438
      %3764 = vmatpush.msra.mxu0 %v1434
      %3765 = vmatpush.msra.mxu0 %v1430
      %3766 = vmatpush.msra.mxu0 %v1426
      %3767 = vmatpush.msra.mxu0 %v1422
      %3768 = vmatpush.msra.mxu0 %v1418
      %3769 = vmatpush.msra.mxu0 %v1414
      %3770 = vmatpush.msra.mxu0 %v1410
      %3771 = vmatpush.msra.mxu0 %v1406
      %3772 = vmatmul.f32.gmra.mxu0 %v1861
      %v3773 = vpop.f32.mrf.mxu0
      %v3774 = vadd.f32 %v3754, %v3773
      %3775 = vdwg.mxu0
      %3776 = vmatpush.msra.mxu0 %v1530
      %3777 = vmatpush.msra.mxu0 %v1526
      %3778 = vmatpush.msra.mxu0 %v1522
      %3779 = vmatpush.msra.mxu0 %v1518
      %3780 = vmatpush.msra.mxu0 %v1514
      %3781 = vmatpush.msra.mxu0 %v1510
      %3782 = vmatpush.msra.mxu0 %v1506
      %3783 = vmatpush.msra.mxu0 %v1502
      %3784 = vmatpush.msra.mxu0 %v1498
      %3785 = vmatpush.msra.mxu0 %v1494
      %3786 = vmatpush.msra.mxu0 %v1490
      %3787 = vmatpush.msra.mxu0 %v1486
      %3788 = vmatpush.msra.mxu0 %v1482
      %3789 = vmatpush.msra.mxu0 %v1478
      %3790 = vmatpush.msra.mxu0 %v1474
      %3791 = vmatpush.msra.mxu0 %v1470
      %3792 = vmatmul.f32.gmra.mxu0 %v1862
      %v3793 = vpop.f32.mrf.mxu0
      %v3794 = vadd.f32 %v3774, %v3793
      %3795 = vdwg.mxu0
      %3796 = vmatpush.msra.mxu0 %v1594
      %3797 = vmatpush.msra.mxu0 %v1590
      %3798 = vmatpush.msra.mxu0 %v1586
      %3799 = vmatpush.msra.mxu0 %v1582
      %3800 = vmatpush.msra.mxu0 %v1578
      %3801 = vmatpush.msra.mxu0 %v1574
      %3802 = vmatpush.msra.mxu0 %v1570
      %3803 = vmatpush.msra.mxu0 %v1566
      %3804 = vmatpush.msra.mxu0 %v1562
      %3805 = vmatpush.msra.mxu0 %v1558
      %3806 = vmatpush.msra.mxu0 %v1554
      %3807 = vmatpush.msra.mxu0 %v1550
      %3808 = vmatpush.msra.mxu0 %v1546
      %3809 = vmatpush.msra.mxu0 %v1542
      %3810 = vmatpush.msra.mxu0 %v1538
      %3811 = vmatpush.msra.mxu0 %v1534
      %3812 = vmatmul.f32.gmra.mxu0 %v1863
      %v3813 = vpop.f32.mrf.mxu0
      %v3814 = vadd.f32 %v3794, %v3813
      %3815 = vdwg.mxu0
      %3816 = vmatpush.msra.mxu0 %v1658
      %3817 = vmatpush.msra.mxu0 %v1654
      %3818 = vmatpush.msra.mxu0 %v1650
      %3819 = vmatpush.msra.mxu0 %v1646
      %3820 = vmatpush.msra.mxu0 %v1642
      %3821 = vmatpush.msra.mxu0 %v1638
      %3822 = vmatpush.msra.mxu0 %v1634
      %3823 = vmatpush.msra.mxu0 %v1630
      %3824 = vmatpush.msra.mxu0 %v1626
      %3825 = vmatpush.msra.mxu0 %v1622
      %3826 = vmatpush.msra.mxu0 %v1618
      %3827 = vmatpush.msra.mxu0 %v1614
      %3828 = vmatpush.msra.mxu0 %v1610
      %3829 = vmatpush.msra.mxu0 %v1606
      %3830 = vmatpush.msra.mxu0 %v1602
      %3831 = vmatpush.msra.mxu0 %v1598
      %3832 = vmatmul.f32.gmra.mxu0 %v1864
      %v3833 = vpop.f32.mrf.mxu0
      %v3834 = vadd.f32 %v3814, %v3833
      %3835 = vdwg.mxu0
      %3836 = vmatpush.msra.mxu0 %v1722
      %3837 = vmatpush.msra.mxu0 %v1718
      %3838 = vmatpush.msra.mxu0 %v1714
      %3839 = vmatpush.msra.mxu0 %v1710
      %3840 = vmatpush.msra.mxu0 %v1706
      %3841 = vmatpush.msra.mxu0 %v1702
      %3842 = vmatpush.msra.mxu0 %v1698
      %3843 = vmatpush.msra.mxu0 %v1694
      %3844 = vmatpush.msra.mxu0 %v1690
      %3845 = vmatpush.msra.mxu0 %v1686
      %3846 = vmatpush.msra.mxu0 %v1682
      %3847 = vmatpush.msra.mxu0 %v1678
      %3848 = vmatpush.msra.mxu0 %v1674
      %3849 = vmatpush.msra.mxu0 %v1670
      %3850 = vmatpush.msra.mxu0 %v1666
      %3851 = vmatpush.msra.mxu0 %v1662
      %3852 = vmatmul.f32.gmra.mxu0 %v1865
      %v3853 = vpop.f32.mrf.mxu0
      %v3854 = vadd.f32 %v3834, %v3853
      %3855 = vdwg.mxu0
      %3856 = vmatpush.msra.mxu0 %v1786
      %3857 = vmatpush.msra.mxu0 %v1782
      %3858 = vmatpush.msra.mxu0 %v1778
      %3859 = vmatpush.msra.mxu0 %v1774
      %3860 = vmatpush.msra.mxu0 %v1770
      %3861 = vmatpush.msra.mxu0 %v1766
      %3862 = vmatpush.msra.mxu0 %v1762
      %3863 = vmatpush.msra.mxu0 %v1758
      %3864 = vmatpush.msra.mxu0 %v1754
      %3865 = vmatpush.msra.mxu0 %v1750
      %3866 = vmatpush.msra.mxu0 %v1746
      %3867 = vmatpush.msra.mxu0 %v1742
      %3868 = vmatpush.msra.mxu0 %v1738
      %3869 = vmatpush.msra.mxu0 %v1734
      %3870 = vmatpush.msra.mxu0 %v1730
      %3871 = vmatpush.msra.mxu0 %v1726
      %3872 = vmatmul.f32.gmra.mxu0 %v1866
      %v3873 = vpop.f32.mrf.mxu0
      %v3874 = vadd.f32 %v3854, %v3873
      %3875 = vdwg.mxu0
      %3876 = vmatpush.msra.mxu0 0.0
      %3877 = vmatpush.msra.mxu0 0.0
      %3878 = vmatpush.msra.mxu0 0.0
      %3879 = vmatpush.msra.mxu0 0.0
      %3880 = vmatpush.msra.mxu0 0.0
      %3881 = vmatpush.msra.mxu0 0.0
      %3882 = vmatpush.msra.mxu0 0.0
      %3883 = vmatpush.msra.mxu0 0.0
      %3884 = vmatpush.msra.mxu0 %v1818
      %3885 = vmatpush.msra.mxu0 %v1814
      %3886 = vmatpush.msra.mxu0 %v1810
      %3887 = vmatpush.msra.mxu0 %v1806
      %3888 = vmatpush.msra.mxu0 %v1802
      %3889 = vmatpush.msra.mxu0 %v1798
      %3890 = vmatpush.msra.mxu0 %v1794
      %3891 = vmatpush.msra.mxu0 %v1790
      %3892 = vmatmul.f32.gmra.mxu0 %v1894
      %v3893 = vpop.f32.mrf.mxu0
      %v3894 = vadd.f32 %v3874, %v3893
      %3895 = vdwg.mxu0
      %v3896 = vmax.f32 %v2394, 0.0
      %v3897 = vmax.f32 %v2894, 0.0
      %v3898 = vmax.f32 %v3394, 0.0
      %v3899 = vmax.f32 %v3894, 0.0
      %v3904 = vrot.slane %v3897, 6
      %v3905 = vrot.slane %v3898, 4
      %v3906 = vrot.slane %v3899, 2
      %vm3907 = vcmask 1041408
      %v3908 = vsel %vm3907, %v3896, %v3904
      %vm3909 = vcmask 1045508
      %v3910 = vsel %vm3909, %v3905, %v3906
      %vm3911 = vcmask 1043456
      %v3912 = vsel %vm3911, %v3908, %v3910
      %3914 = vst [vmem:[%s243] sm:$0xff] %v3912
      %p3915 = scmp.lt.s32.totalorder %s18, 4
      %s3916 = scalar_select %p3915, %s18, 4
      %p3917 = scmp.lt.s32.totalorder %s19, 0
      %s3918 = scalar_select %p3917, %s19, 0
      %s3919 = smul.addr %s3918, 4
      %s3920 = smul.addr %s3916, 4
      %s3921 = sadd.s32 %s3919, %s3920
      %s3922 = smul.addr %s3921, 2
      %s3923 = scalar_lea.vmem %s3, %s3922
      // Predicated region
      $region33: #{ens_dqn_forward.8} parent=31 // pred_check
        %p3924 = pneg %p126
      $region34: #{ens_dqn_forward.8} parent=31 // pred_check_branch
        %3926 = sbr.rel (%p3924) target = $region36
      $region35: #{ens_dqn_forward.8} parent=31 // pred_region
        _
      $region36: #{ens_dqn_forward.8} parent=31 // pred_fallthru
        _
    $region32: #{ens_dqn_forward.8} parent=5 // pred_fallthru
      _
    %p3927 = scmp.le.s32.totalorder 2, %s9
    // Predicated region
    $region37: #{ens_dqn_forward.8} parent=5 // pred_check
      %p3928 = pneg %p3927
    $region38: #{ens_dqn_forward.8} parent=5 // pred_check_branch
      %3930 = sbr.rel (%p3928) target = $region40
    $region39: #{ens_dqn_forward.8} parent=5 // pred_region
      %s3931 = ssub.s32 %s9, 2
      // Predicated region
      $region41: #{ens_dqn_forward.8} parent=39 // pred_check
        %p3932 = pneg %p132
      $region42: #{ens_dqn_forward.8} parent=39 // pred_check_branch
        %3934 = sbr.rel (%p3932) target = $region44
      $region43: #{ens_dqn_forward.8} parent=39 // pred_region
        %p3935 = scmp.lt.s32.totalorder %s20, 4
        %s3936 = scalar_select %p3935, %s20, 4
        %p3937 = scmp.lt.s32.totalorder %s21, 0
        %s3938 = scalar_select %p3937, %s21, 0
        %s3939 = smul.addr %s3938, 4
        %s3940 = smul.addr %s3936, 4
        %s3941 = sadd.s32 %s3939, %s3940
        %s3942 = smul.addr %s3941, 2
        %s3943 = scalar_lea.vmem %s3, %s3942
      $region44: #{ens_dqn_forward.8} parent=39 // pred_fallthru
        _
    $region40: #{ens_dqn_forward.8} parent=5 // pred_fallthru
      _
  $region6: #{ens_dqn_forward.8} parent=0 // loop_footer
    %s13 = sadd.s32 1, %s9
  $region7: #{ens_dqn_forward.8} parent=0 // loop_footer_branch
    %8 = sbr.rel target = $region3
  $region8: #{ens_dqn_forward.8} parent=0 // loop_exit
    _

</llo_original>
